<compile_context>
chip_gen: v5e
topology: v5e:2x2
jax: 0.10.0
libtpu: 0.0.40
codegen_flags: <defaults>
</compile_context>

<pallas_src>
import jax
import jax.numpy as jnp
from jax import lax
from jax.experimental import pallas as pl
from jax.experimental.pallas import tpu as pltpu
from functools import partial

EPS = 1e-7
HIGH = lax.Precision.HIGHEST  # kept: matmul is a rounding error here (memory-bound),
                              # and it preserves f32 parity with the PyTorch module.


def _make_kernel(H, W, C, Dnc, D, kh, kw):
    """Fused (folded 3x3 conv as 9 lane-shifted matmuls) + bias + squash epilogue."""
    HW = H * W
    pw = kw // 2

    def kernel(x_ref, w_ref, b_ref, g_ref, gt_ref, o_ref):
        # x_ref : (1, C, R)        padded image, spatial flattened onto lanes
        # w_ref : (Dnc, kh*kw*C)   folded per-tap weights (resident)
        # b_ref : (Dnc, 1)         folded bias            (resident)
        # g_ref : (HW, HW//D)      capsule-group indicator (resident)
        # gt_ref: (HW//D, HW)      its transpose           (resident)
        # o_ref : (1, Dnc, HW)     squashed output in final (b, o, h*W+w) order
        w_of_l = lax.broadcasted_iota(jnp.int32, (1, HW), 1) % W  # w coordinate per lane
        masks = {}
        acc = jnp.zeros((Dnc, HW), jnp.float32)
        for dh in range(kh):
            for dw in range(kw):
                t = dh * kw + dw
                start = dh * W + dw                      # static lane offset of this tap
                tap = x_ref[0, :, start:start + HW]      # (C, HW)
                lo, hi = pw - dw, W + pw - dw            # valid iff lo <= w < hi
                if lo > 0 or hi < W:                     # mask w-edge wrap-around taps
                    if dw not in masks:
                        masks[dw] = jnp.logical_and(w_of_l >= lo, w_of_l < hi)
                    tap = jnp.where(masks[dw], tap, 0.0)
                acc = acc + jnp.dot(w_ref[:, t * C:(t + 1) * C], tap,
                                    preferred_element_type=jnp.float32, precision=HIGH)
        y = acc + b_ref[...]                             # (Dnc, HW)

        # squash(): capsules are D consecutive lanes of each channel row.
        # group-sum / group-broadcast via tiny 0/1 matmuls (no lane reshapes needed).
        sq = jnp.dot(y * y, g_ref[...],
                     preferred_element_type=jnp.float32, precision=HIGH) + D * EPS
        factor = jnp.sqrt(sq) / (1.0 + sq)               # (Dnc, HW//D), exact math
        factor_full = jnp.dot(factor, gt_ref[...],
                              preferred_element_type=jnp.float32, precision=HIGH)
        o_ref[0] = (y * factor_full).astype(o_ref.dtype)

    return kernel


@partial(jax.jit, static_argnames=("dim_capsule",))
def primary_cap_forward(x, w1, b1, w2, b2, dim_capsule):
    """x: (B, C, H, W) f32.  Returns (B, n_caps, dim_capsule) matching PrimaryCap('v2')."""
    B, C, H, W = x.shape
    Dnc, C1, kh, kw = w1.shape
    D = dim_capsule
    HW = H * W
    assert C1 == C and w2.shape == (Dnc, C + Dnc, 1, 1)
    assert kh % 2 == 1 and kw % 2 == 1    # module config: kernel_size=3, padding=1, stride=1
    assert HW % D == 0, "H*W must be a multiple of dim_capsule"
    ph, pw = kh // 2, kw // 2

    # ---- algebraic fold: conv -> concat -> 1x1 conv  ==  one folded 3x3 conv ----------
    # out2 = (conv3x3(x, w1)+b1) @ w2o + x @ w2x + b2  ==  conv3x3(x, w_fold) + b_fold
    # (x is the centre tap of every patch, so w2x folds into the centre tap weights).
    # TODO(synk): precompute this fold once outside the forward when weights are static.
    w2_mat = w2.reshape(Dnc, C + Dnc).T                       # (C+Dnc, Dnc), concat=[x,out1]
    w2x, w2o = w2_mat[:C], w2_mat[C:]
    w_fold = jnp.einsum('mcij,mn->nijc', w1, w2o, precision=HIGH)   # (Dnc, kh, kw, C)
    w_fold = w_fold.at[:, ph, pw, :].add(w2x.T)
    w_fold = w_fold.reshape(Dnc, kh * kw * C)
    b_fold = (jnp.dot(b1[None, :], w2o, precision=HIGH) + b2[None, :]).T   # (Dnc, 1)

    # ---- layout glue (pads only, ~1.2x |x| of HBM traffic; no im2col, no transpose) ---
    # per image: lanes l = pw + hp*W + w'  (hp includes the 'same' H padding rows), plus
    # pw / kw-1-pw extra zero lanes so every tap slice [dh*W+dw : +H*W) stays in bounds.
    x_rows = jnp.pad(x, ((0, 0), (0, 0), (ph, ph), (0, 0)))          # (B, C, H+2ph, W)
    x_rows = x_rows.reshape(B, C, (H + 2 * ph) * W)
    x_rows = jnp.pad(x_rows, ((0, 0), (0, 0), (pw, kw - 1 - pw)))    # (B, C, R)
    R = (H + kh - 1) * W + kw - 1
    assert x_rows.shape == (B, C, R)

    # capsule-group indicator matrices for the fused squash (resident, tiny).
    # TODO(synk): for very large H*W, chunk the spatial axis (kw-lane halo) so these stay small.
    grp = jnp.arange(HW, dtype=jnp.int32) // D
    G = (grp[:, None] == jnp.arange(HW // D, dtype=jnp.int32)[None, :]).astype(jnp.float32)
    GT = G.T

    out = pl.pallas_call(
        _make_kernel(H, W, C, Dnc, D, kh, kw),
        out_shape=jax.ShapeDtypeStruct((B, Dnc, HW), jnp.float32),
        grid=(B,),
        in_specs=[
            pl.BlockSpec((1, C, R), lambda b: (b, 0, 0)),            # streamed image
            pl.BlockSpec((Dnc, kh * kw * C), lambda b: (0, 0)),      # folded weight (resident)
            pl.BlockSpec((Dnc, 1), lambda b: (0, 0)),                # folded bias   (resident)
            pl.BlockSpec((HW, HW // D), lambda b: (0, 0)),           # group matrix  (resident)
            pl.BlockSpec((HW // D, HW), lambda b: (0, 0)),           # group matrix^T(resident)
        ],
        out_specs=pl.BlockSpec((1, Dnc, HW), lambda b: (b, 0, 0)),   # lane-dense, final order
        compiler_params=pltpu.CompilerParams(dimension_semantics=("parallel",)),
    )(x_rows, w_fold, b_fold, G, GT)

    # (B, Dnc, H*W) is already the PyTorch NCHW flattening -> reshape is metadata-only.
    return out.reshape(B, (Dnc * HW) // D, D)


def _reference_forward(x, w1, b1, w2, b2, dim_capsule):
    """Pure-JAX reference mirroring the PyTorch module (model_version='v2')."""
    out = lax.conv_general_dilated(
        x, w1, (1, 1), ((1, 1), (1, 1)),
        dimension_numbers=('NCHW', 'OIHW', 'NCHW'), precision=HIGH) + b1[None, :, None, None]
    out = jnp.concatenate([x, out], axis=1)
    out = lax.conv_general_dilated(
        out, w2, (1, 1), ((0, 0), (0, 0)),
        dimension_numbers=('NCHW', 'OIHW', 'NCHW'), precision=HIGH) + b2[None, :, None, None]
    out = out.reshape(out.shape[0], -1, dim_capsule)
    sq = jnp.sum(out ** 2 + EPS, axis=-1, keepdims=True)
    return sq * out / ((1.0 + sq) * jnp.sqrt(sq))


if __name__ == "__main__":
    # PrimaryCap(inputs=4, dim_capsule=8, n_channels=4, kernel_size=3,
    #            strides=1, padding=1, model_version='v2')
    B, C_in, H, W = 2, 4, 16, 16
    dim_capsule, n_channels, ksz = 8, 4, 3
    Dnc = dim_capsule * n_channels

    key = jax.random.PRNGKey(0)
    kx, kw1, kb1, kw2, kb2 = jax.random.split(key, 5)
    x = jax.random.normal(kx, (B, C_in, H, W), dtype=jnp.float32)
    w1 = 0.1 * jax.random.normal(kw1, (Dnc, C_in, ksz, ksz), dtype=jnp.float32)
    b1 = 0.1 * jax.random.normal(kb1, (Dnc,), dtype=jnp.float32)
    w2 = 0.1 * jax.random.normal(kw2, (Dnc, C_in + Dnc, 1, 1), dtype=jnp.float32)
    b2 = 0.1 * jax.random.normal(kb2, (Dnc,), dtype=jnp.float32)

    out = primary_cap_forward(x, w1, b1, w2, b2, dim_capsule=dim_capsule)
    out = jax.block_until_ready(out)

    ref = jax.block_until_ready(_reference_forward(x, w1, b1, w2, b2, dim_capsule))
    assert out.shape == ref.shape == (B, Dnc * H * W // dim_capsule, dim_capsule)
    # everything stays in f32 with HIGHEST-precision matmuls; the only deviation from the
    # reference is the (tiny) weight-fold re-association, so 2e-4 is comfortable headroom.
    assert jnp.allclose(out, ref, atol=2e-4, rtol=2e-4), "mismatch vs pure-JAX reference"

    print("KERNEL_OK")
</pallas_src>

<mosaic_0001>
module attributes {stable_mosaic.version = 11 : i64} {
  func.func @kernel(%arg0: i32, %arg1: memref<1x4x290xf32, #tpu.memory_space<vmem>>, %arg2: memref<32x36xf32, #tpu.memory_space<vmem>>, %arg3: memref<32x1xf32, #tpu.memory_space<vmem>>, %arg4: memref<256x32xf32, #tpu.memory_space<vmem>>, %arg5: memref<32x256xf32, #tpu.memory_space<vmem>>, %arg6: memref<1x32x256xf32, #tpu.memory_space<vmem>>) attributes {dimension_semantics = [#tpu.dimension_semantics<parallel>], iteration_bounds = array<i64: 2>, scalar_prefetch = 0 : i64, scratch_operands = 0 : i64, tpu.core_type = #tpu.core_type<tc>, window_params = [{transform_indices = @transform_0, window_bounds = array<i64: 1, 4, 290>}, {pipeline_mode = #tpu.pipeline_mode<synchronous>, transform_indices = @transform_1, window_bounds = array<i64: 32, 36>}, {pipeline_mode = #tpu.pipeline_mode<synchronous>, transform_indices = @transform_2, window_bounds = array<i64: 32, 1>}, {pipeline_mode = #tpu.pipeline_mode<synchronous>, transform_indices = @transform_3, window_bounds = array<i64: 256, 32>}, {pipeline_mode = #tpu.pipeline_mode<synchronous>, transform_indices = @transform_4, window_bounds = array<i64: 32, 256>}, {transform_indices = @transform_5, window_bounds = array<i64: 1, 32, 256>}]} {
    %0 = tpu.iota {dimensions = array<i32: 1>} : vector<1x256xi32>
    %c16_i32 = arith.constant 16 : i32
    %c0_i32 = arith.constant 0 : i32
    %1 = arith.cmpi eq, %c16_i32, %c0_i32 : i32
    %c1_i32 = arith.constant 1 : i32
    %2 = arith.select %1, %c1_i32, %c16_i32 : i32
    %3 = vector.broadcast %2 : i32 to vector<1x256xi32>
    %4 = arith.remsi %0, %3 : vector<1x256xi32>
    %c0_i32_0 = arith.constant 0 : i32
    %5 = vector.broadcast %c0_i32_0 : i32 to vector<1x256xi32>
    %6 = arith.cmpi ne, %4, %5 : vector<1x256xi32>
    %c0_i32_1 = arith.constant 0 : i32
    %7 = vector.broadcast %c0_i32_1 : i32 to vector<1x256xi32>
    %8 = arith.cmpi slt, %4, %7 : vector<1x256xi32>
    %c0_i32_2 = arith.constant 0 : i32
    %9 = arith.cmpi slt, %2, %c0_i32_2 : i32
    %10 = vector.broadcast %9 : i1 to vector<1x256xi1>
    %11 = vector.broadcast %10 : vector<1x256xi1> to vector<1x256xi1>
    %12 = arith.xori %8, %11 : vector<1x256xi1>
    %13 = arith.andi %12, %6 : vector<1x256xi1>
    %14 = vector.broadcast %2 : i32 to vector<1x256xi32>
    %15 = arith.addi %4, %14 : vector<1x256xi32>
    %16 = arith.select %13, %15, %4 : vector<1x256xi1>, vector<1x256xi32>
    %cst = arith.constant 0.000000e+00 : f32
    %17 = vector.broadcast %cst : f32 to vector<32x256xf32>
    %c0 = arith.constant 0 : index
    %c0_3 = arith.constant 0 : index
    %c0_4 = arith.constant 0 : index
    %18 = vector.load %arg1[%c0, %c0_3, %c0_4] : memref<1x4x290xf32, #tpu.memory_space<vmem>>, vector<1x4x256xf32>
    %19 = vector.shape_cast %18 : vector<1x4x256xf32> to vector<4x256xf32>
    %c1_i32_5 = arith.constant 1 : i32
    %20 = vector.broadcast %c1_i32_5 : i32 to vector<1x256xi32>
    %21 = arith.cmpi sge, %16, %20 : vector<1x256xi32>
    %c17_i32 = arith.constant 17 : i32
    %22 = vector.broadcast %c17_i32 : i32 to vector<1x256xi32>
    %23 = arith.cmpi slt, %16, %22 : vector<1x256xi32>
    %24 = arith.andi %21, %23 : vector<1x256xi1>
    %cst_6 = arith.constant 0.000000e+00 : f32
    %25 = vector.shape_cast %24 : vector<1x256xi1> to vector<1x256xi1>
    %26 = vector.broadcast %25 : vector<1x256xi1> to vector<4x256xi1>
    %27 = vector.broadcast %cst_6 : f32 to vector<4x256xf32>
    %28 = arith.select %26, %19, %27 : vector<4x256xi1>, vector<4x256xf32>
    %c0_7 = arith.constant 0 : index
    %c0_8 = arith.constant 0 : index
    %29 = vector.load %arg2[%c0_7, %c0_8] : memref<32x36xf32, #tpu.memory_space<vmem>>, vector<32x4xf32>
    %cst_9 = arith.constant dense<0.000000e+00> : vector<32x256xf32>
    %30 = tpu.matmul %29, %28, %cst_9 {dimension_numbers = #tpu.dot_dimension_numbers<[1], [0], [0], [1], [0, 0, 1, 1], [], []>, precision = #tpu.contract_precision<fp32>} : vector<32x4xf32>, vector<4x256xf32>, vector<32x256xf32> -> vector<32x256xf32>
    %31 = arith.addf %17, %30 : vector<32x256xf32>
    %c0_10 = arith.constant 0 : index
    %c0_11 = arith.constant 0 : index
    %c1 = arith.constant 1 : index
    %32 = vector.load %arg1[%c0_10, %c0_11, %c1] : memref<1x4x290xf32, #tpu.memory_space<vmem>>, vector<1x4x256xf32>
    %33 = vector.shape_cast %32 : vector<1x4x256xf32> to vector<4x256xf32>
    %c0_12 = arith.constant 0 : index
    %c4 = arith.constant 4 : index
    %34 = vector.load %arg2[%c0_12, %c4] : memref<32x36xf32, #tpu.memory_space<vmem>>, vector<32x4xf32>
    %cst_13 = arith.constant dense<0.000000e+00> : vector<32x256xf32>
    %35 = tpu.matmul %34, %33, %cst_13 {dimension_numbers = #tpu.dot_dimension_numbers<[1], [0], [0], [1], [0, 0, 1, 1], [], []>, precision = #tpu.contract_precision<fp32>} : vector<32x4xf32>, vector<4x256xf32>, vector<32x256xf32> -> vector<32x256xf32>
    %36 = arith.addf %31, %35 : vector<32x256xf32>
    %c0_14 = arith.constant 0 : index
    %c0_15 = arith.constant 0 : index
    %c2 = arith.constant 2 : index
    %37 = vector.load %arg1[%c0_14, %c0_15, %c2] : memref<1x4x290xf32, #tpu.memory_space<vmem>>, vector<1x4x256xf32>
    %38 = vector.shape_cast %37 : vector<1x4x256xf32> to vector<4x256xf32>
    %c-1_i32 = arith.constant -1 : i32
    %39 = vector.broadcast %c-1_i32 : i32 to vector<1x256xi32>
    %40 = arith.cmpi sge, %16, %39 : vector<1x256xi32>
    %c15_i32 = arith.constant 15 : i32
    %41 = vector.broadcast %c15_i32 : i32 to vector<1x256xi32>
    %42 = arith.cmpi slt, %16, %41 : vector<1x256xi32>
    %43 = arith.andi %40, %42 : vector<1x256xi1>
    %cst_16 = arith.constant 0.000000e+00 : f32
    %44 = vector.shape_cast %43 : vector<1x256xi1> to vector<1x256xi1>
    %45 = vector.broadcast %44 : vector<1x256xi1> to vector<4x256xi1>
    %46 = vector.broadcast %cst_16 : f32 to vector<4x256xf32>
    %47 = arith.select %45, %38, %46 : vector<4x256xi1>, vector<4x256xf32>
    %c0_17 = arith.constant 0 : index
    %c8 = arith.constant 8 : index
    %48 = vector.load %arg2[%c0_17, %c8] : memref<32x36xf32, #tpu.memory_space<vmem>>, vector<32x4xf32>
    %cst_18 = arith.constant dense<0.000000e+00> : vector<32x256xf32>
    %49 = tpu.matmul %48, %47, %cst_18 {dimension_numbers = #tpu.dot_dimension_numbers<[1], [0], [0], [1], [0, 0, 1, 1], [], []>, precision = #tpu.contract_precision<fp32>} : vector<32x4xf32>, vector<4x256xf32>, vector<32x256xf32> -> vector<32x256xf32>
    %50 = arith.addf %36, %49 : vector<32x256xf32>
    %c0_19 = arith.constant 0 : index
    %c0_20 = arith.constant 0 : index
    %c16 = arith.constant 16 : index
    %51 = vector.load %arg1[%c0_19, %c0_20, %c16] : memref<1x4x290xf32, #tpu.memory_space<vmem>>, vector<1x4x256xf32>
    %52 = vector.shape_cast %51 : vector<1x4x256xf32> to vector<4x256xf32>
    %cst_21 = arith.constant 0.000000e+00 : f32
    %53 = vector.shape_cast %24 : vector<1x256xi1> to vector<1x256xi1>
    %54 = vector.broadcast %53 : vector<1x256xi1> to vector<4x256xi1>
    %55 = vector.broadcast %cst_21 : f32 to vector<4x256xf32>
    %56 = arith.select %54, %52, %55 : vector<4x256xi1>, vector<4x256xf32>
    %c0_22 = arith.constant 0 : index
    %c12 = arith.constant 12 : index
    %57 = vector.load %arg2[%c0_22, %c12] : memref<32x36xf32, #tpu.memory_space<vmem>>, vector<32x4xf32>
    %cst_23 = arith.constant dense<0.000000e+00> : vector<32x256xf32>
    %58 = tpu.matmul %57, %56, %cst_23 {dimension_numbers = #tpu.dot_dimension_numbers<[1], [0], [0], [1], [0, 0, 1, 1], [], []>, precision = #tpu.contract_precision<fp32>} : vector<32x4xf32>, vector<4x256xf32>, vector<32x256xf32> -> vector<32x256xf32>
    %59 = arith.addf %50, %58 : vector<32x256xf32>
    %c0_24 = arith.constant 0 : index
    %c0_25 = arith.constant 0 : index
    %c17 = arith.constant 17 : index
    %60 = vector.load %arg1[%c0_24, %c0_25, %c17] : memref<1x4x290xf32, #tpu.memory_space<vmem>>, vector<1x4x256xf32>
    %61 = vector.shape_cast %60 : vector<1x4x256xf32> to vector<4x256xf32>
    %c0_26 = arith.constant 0 : index
    %c16_27 = arith.constant 16 : index
    %62 = vector.load %arg2[%c0_26, %c16_27] : memref<32x36xf32, #tpu.memory_space<vmem>>, vector<32x4xf32>
    %cst_28 = arith.constant dense<0.000000e+00> : vector<32x256xf32>
    %63 = tpu.matmul %62, %61, %cst_28 {dimension_numbers = #tpu.dot_dimension_numbers<[1], [0], [0], [1], [0, 0, 1, 1], [], []>, precision = #tpu.contract_precision<fp32>} : vector<32x4xf32>, vector<4x256xf32>, vector<32x256xf32> -> vector<32x256xf32>
    %64 = arith.addf %59, %63 : vector<32x256xf32>
    %c0_29 = arith.constant 0 : index
    %c0_30 = arith.constant 0 : index
    %c18 = arith.constant 18 : index
    %65 = vector.load %arg1[%c0_29, %c0_30, %c18] : memref<1x4x290xf32, #tpu.memory_space<vmem>>, vector<1x4x256xf32>
    %66 = vector.shape_cast %65 : vector<1x4x256xf32> to vector<4x256xf32>
    %cst_31 = arith.constant 0.000000e+00 : f32
    %67 = vector.shape_cast %43 : vector<1x256xi1> to vector<1x256xi1>
    %68 = vector.broadcast %67 : vector<1x256xi1> to vector<4x256xi1>
    %69 = vector.broadcast %cst_31 : f32 to vector<4x256xf32>
    %70 = arith.select %68, %66, %69 : vector<4x256xi1>, vector<4x256xf32>
    %c0_32 = arith.constant 0 : index
    %c20 = arith.constant 20 : index
    %71 = vector.load %arg2[%c0_32, %c20] : memref<32x36xf32, #tpu.memory_space<vmem>>, vector<32x4xf32>
    %cst_33 = arith.constant dense<0.000000e+00> : vector<32x256xf32>
    %72 = tpu.matmul %71, %70, %cst_33 {dimension_numbers = #tpu.dot_dimension_numbers<[1], [0], [0], [1], [0, 0, 1, 1], [], []>, precision = #tpu.contract_precision<fp32>} : vector<32x4xf32>, vector<4x256xf32>, vector<32x256xf32> -> vector<32x256xf32>
    %73 = arith.addf %64, %72 : vector<32x256xf32>
    %c0_34 = arith.constant 0 : index
    %c0_35 = arith.constant 0 : index
    %c32 = arith.constant 32 : index
    %74 = vector.load %arg1[%c0_34, %c0_35, %c32] : memref<1x4x290xf32, #tpu.memory_space<vmem>>, vector<1x4x256xf32>
    %75 = vector.shape_cast %74 : vector<1x4x256xf32> to vector<4x256xf32>
    %cst_36 = arith.constant 0.000000e+00 : f32
    %76 = vector.shape_cast %24 : vector<1x256xi1> to vector<1x256xi1>
    %77 = vector.broadcast %76 : vector<1x256xi1> to vector<4x256xi1>
    %78 = vector.broadcast %cst_36 : f32 to vector<4x256xf32>
    %79 = arith.select %77, %75, %78 : vector<4x256xi1>, vector<4x256xf32>
    %c0_37 = arith.constant 0 : index
    %c24 = arith.constant 24 : index
    %80 = vector.load %arg2[%c0_37, %c24] : memref<32x36xf32, #tpu.memory_space<vmem>>, vector<32x4xf32>
    %cst_38 = arith.constant dense<0.000000e+00> : vector<32x256xf32>
    %81 = tpu.matmul %80, %79, %cst_38 {dimension_numbers = #tpu.dot_dimension_numbers<[1], [0], [0], [1], [0, 0, 1, 1], [], []>, precision = #tpu.contract_precision<fp32>} : vector<32x4xf32>, vector<4x256xf32>, vector<32x256xf32> -> vector<32x256xf32>
    %82 = arith.addf %73, %81 : vector<32x256xf32>
    %c0_39 = arith.constant 0 : index
    %c0_40 = arith.constant 0 : index
    %c33 = arith.constant 33 : index
    %83 = vector.load %arg1[%c0_39, %c0_40, %c33] : memref<1x4x290xf32, #tpu.memory_space<vmem>>, vector<1x4x256xf32>
    %84 = vector.shape_cast %83 : vector<1x4x256xf32> to vector<4x256xf32>
    %c0_41 = arith.constant 0 : index
    %c28 = arith.constant 28 : index
    %85 = vector.load %arg2[%c0_41, %c28] : memref<32x36xf32, #tpu.memory_space<vmem>>, vector<32x4xf32>
    %cst_42 = arith.constant dense<0.000000e+00> : vector<32x256xf32>
    %86 = tpu.matmul %85, %84, %cst_42 {dimension_numbers = #tpu.dot_dimension_numbers<[1], [0], [0], [1], [0, 0, 1, 1], [], []>, precision = #tpu.contract_precision<fp32>} : vector<32x4xf32>, vector<4x256xf32>, vector<32x256xf32> -> vector<32x256xf32>
    %87 = arith.addf %82, %86 : vector<32x256xf32>
    %c0_43 = arith.constant 0 : index
    %c0_44 = arith.constant 0 : index
    %c34 = arith.constant 34 : index
    %88 = vector.load %arg1[%c0_43, %c0_44, %c34] : memref<1x4x290xf32, #tpu.memory_space<vmem>>, vector<1x4x256xf32>
    %89 = vector.shape_cast %88 : vector<1x4x256xf32> to vector<4x256xf32>
    %cst_45 = arith.constant 0.000000e+00 : f32
    %90 = vector.shape_cast %43 : vector<1x256xi1> to vector<1x256xi1>
    %91 = vector.broadcast %90 : vector<1x256xi1> to vector<4x256xi1>
    %92 = vector.broadcast %cst_45 : f32 to vector<4x256xf32>
    %93 = arith.select %91, %89, %92 : vector<4x256xi1>, vector<4x256xf32>
    %c0_46 = arith.constant 0 : index
    %c32_47 = arith.constant 32 : index
    %94 = vector.load %arg2[%c0_46, %c32_47] : memref<32x36xf32, #tpu.memory_space<vmem>>, vector<32x4xf32>
    %cst_48 = arith.constant dense<0.000000e+00> : vector<32x256xf32>
    %95 = tpu.matmul %94, %93, %cst_48 {dimension_numbers = #tpu.dot_dimension_numbers<[1], [0], [0], [1], [0, 0, 1, 1], [], []>, precision = #tpu.contract_precision<fp32>} : vector<32x4xf32>, vector<4x256xf32>, vector<32x256xf32> -> vector<32x256xf32>
    %96 = arith.addf %87, %95 : vector<32x256xf32>
    %c0_49 = arith.constant 0 : index
    %c0_50 = arith.constant 0 : index
    %97 = vector.load %arg3[%c0_49, %c0_50] : memref<32x1xf32, #tpu.memory_space<vmem>>, vector<32x1xf32>
    %98 = vector.broadcast %97 : vector<32x1xf32> to vector<32x256xf32>
    %99 = arith.addf %96, %98 : vector<32x256xf32>
    %100 = arith.mulf %99, %99 : vector<32x256xf32>
    %c0_51 = arith.constant 0 : index
    %c0_52 = arith.constant 0 : index
    %101 = vector.load %arg4[%c0_51, %c0_52] : memref<256x32xf32, #tpu.memory_space<vmem>>, vector<256x32xf32>
    %cst_53 = arith.constant dense<0.000000e+00> : vector<32x32xf32>
    %102 = tpu.matmul %100, %101, %cst_53 {dimension_numbers = #tpu.dot_dimension_numbers<[1], [0], [0], [1], [0, 0, 1, 1], [], []>, precision = #tpu.contract_precision<fp32>} : vector<32x256xf32>, vector<256x32xf32>, vector<32x32xf32> -> vector<32x32xf32>
    %cst_54 = arith.constant 8.000000e-07 : f32
    %103 = vector.broadcast %cst_54 : f32 to vector<32x32xf32>
    %104 = arith.addf %102, %103 : vector<32x32xf32>
    %105 = math.sqrt %104 : vector<32x32xf32>
    %cst_55 = arith.constant 1.000000e+00 : f32
    %106 = vector.broadcast %cst_55 : f32 to vector<32x32xf32>
    %107 = arith.addf %106, %104 : vector<32x32xf32>
    %108 = arith.divf %105, %107 : vector<32x32xf32>
    %c0_56 = arith.constant 0 : index
    %c0_57 = arith.constant 0 : index
    %109 = vector.load %arg5[%c0_56, %c0_57] : memref<32x256xf32, #tpu.memory_space<vmem>>, vector<32x256xf32>
    %cst_58 = arith.constant dense<0.000000e+00> : vector<32x256xf32>
    %110 = tpu.matmul %108, %109, %cst_58 {dimension_numbers = #tpu.dot_dimension_numbers<[1], [0], [0], [1], [0, 0, 1, 1], [], []>, precision = #tpu.contract_precision<fp32>} : vector<32x32xf32>, vector<32x256xf32>, vector<32x256xf32> -> vector<32x256xf32>
    %111 = arith.mulf %99, %110 : vector<32x256xf32>
    %c0_59 = arith.constant 0 : index
    %c0_60 = arith.constant 0 : index
    %c0_61 = arith.constant 0 : index
    %112 = vector.load %arg6[%c0_59, %c0_60, %c0_61] : memref<1x32x256xf32, #tpu.memory_space<vmem>>, vector<1x32x256xf32>
    %113 = vector.shape_cast %112 : vector<1x32x256xf32> to vector<32x256xf32>
    %114 = vector.shape_cast %111 : vector<32x256xf32> to vector<1x32x256xf32>
    tpu.vector_store %arg6[%c0_59, %c0_60, %c0_61], %114 {strides = array<i32>} : memref<1x32x256xf32, #tpu.memory_space<vmem>>, vector<1x32x256xf32>,
    return
  }
  func.func @transform_0(%arg0: i32) -> (i32, i32, i32) {
    %c0_i32 = arith.constant 0 : i32
    %c0_i32_0 = arith.constant 0 : i32
    %c0_i32_1 = arith.constant 0 : i32
    return %arg0, %c0_i32, %c0_i32_0 : i32, i32, i32
  }
  func.func @transform_1(%arg0: i32) -> (i32, i32) {
    %c0_i32 = arith.constant 0 : i32
    %c0_i32_0 = arith.constant 0 : i32
    %c0_i32_1 = arith.constant 0 : i32
    return %c0_i32, %c0_i32_0 : i32, i32
  }
  func.func @transform_2(%arg0: i32) -> (i32, i32) {
    %c0_i32 = arith.constant 0 : i32
    %c0_i32_0 = arith.constant 0 : i32
    %c0_i32_1 = arith.constant 0 : i32
    return %c0_i32, %c0_i32_0 : i32, i32
  }
  func.func @transform_3(%arg0: i32) -> (i32, i32) {
    %c0_i32 = arith.constant 0 : i32
    %c0_i32_0 = arith.constant 0 : i32
    %c0_i32_1 = arith.constant 0 : i32
    return %c0_i32, %c0_i32_0 : i32, i32
  }
  func.func @transform_4(%arg0: i32) -> (i32, i32) {
    %c0_i32 = arith.constant 0 : i32
    %c0_i32_0 = arith.constant 0 : i32
    %c0_i32_1 = arith.constant 0 : i32
    return %c0_i32, %c0_i32_0 : i32, i32
  }
  func.func @transform_5(%arg0: i32) -> (i32, i32, i32) {
    %c0_i32 = arith.constant 0 : i32
    %c0_i32_0 = arith.constant 0 : i32
    %c0_i32_1 = arith.constant 0 : i32
    return %arg0, %c0_i32, %c0_i32_0 : i32, i32, i32
  }
}

</mosaic_0001>

<llo_original>
// kernel: primary_cap_forward.1
$region0: #{primary_cap_forward.1}
  #allocation0 [shape = 'u32[]', space=smem, size = 0x4, offset = 0x4, fixed_abs, tag = 'smem constant byte address 0x4 - core index']
  #allocation1 [shape = 'u32[72,128]{1,0:T(1,128)}', space=vmem, size = 0x9000, scoped, tag = 'internal scratch']
  %s0 = inlined_call_operand.vmem [shape: f32[2,4,290], index: 0, kind: input, shape index: {}]
  %s1 = inlined_call_operand.vmem [shape: f32[32,36], index: 1, kind: input, shape index: {}]
  %s2 = inlined_call_operand.vmem [shape: f32[32,1], index: 2, kind: input, shape index: {}]
  %s3 = inlined_call_operand.vmem [shape: f32[256,32], index: 3, kind: input, shape index: {}]
  %s4 = inlined_call_operand.vmem [shape: f32[32,256], index: 4, kind: input, shape index: {}]
  %s5 = inlined_call_operand.vmem [shape: f32[2,32,256], index: 5, kind: output, shape index: {}]
  %s6 = sld [smem:[#allocation0]]
  $region53: #{primary_cap_forward.1} parent=0
    _
  %s8 = ssub.s32 1, %s6
  %s9 = scalar_select 0, %s8, %s6
  loop: start=0, step=1, limit=4
  $region2: #{primary_cap_forward.1} parent=0 // loop_pre_header
    _
  $region3: #{primary_cap_forward.1} parent=0 // loop_header
    %s11 = sphi 0, %s15
    %p12 = scmp.ge.s32.totalorder %s11, 4
    %s21 = sphi 0, %s23
    %s24 = sphi 0, %s21
    %s25 = sphi 0, %s24
    %s41 = sphi 0, %s25
    %s45 = sphi 0, %s45
    %s47 = sphi 0, %s45
    %s48 = sphi 0, %s47
    %s62 = sphi 0, %s48
    %s66 = sphi 0, %s66
    %s68 = sphi 0, %s66
    %s69 = sphi 0, %s68
    %s83 = sphi 0, %s69
    %s87 = sphi 0, %s87
    %s89 = sphi 0, %s87
    %s90 = sphi 0, %s89
    %s104 = sphi 0, %s90
    %s108 = sphi 0, %s108
    %s110 = sphi 0, %s108
    %s111 = sphi 0, %s110
    %s125 = sphi 0, %s111
    %s131 = sphi 0, %s133
    %s134 = sphi 0, %s131
    %s135 = sphi 0, %s134
    %s151 = sphi 0, %s135
  $region4: #{primary_cap_forward.1} parent=0 // loop_header_branch
    %14 = sbr.rel (%p12) target = $region8
  $region5: #{primary_cap_forward.1} parent=0 // loop_body
    %s16 = ssub.s32 %s11, 1
    %s17 = ssub.s32 %s11, 2
    %s18 = sadd.s32 %s11, 1
    %s19 = ssub.s32 %s11, %s18
    %p20 = scmp.eq.s32.totalorder %s19, 0
    %s22 = sadd.s32 %s21, 1
    %s23 = scalar_select %p20, %s21, %s22
    %p26 = pneg %p20
    %p27 = scmp.eq.s32.totalorder %s11, 1
    %p28 = por %p26, %p27
    %p29 = scmp.ne.s32.totalorder %s21, %s24
    %p30 = scmp.eq.s32.totalorder %s11, 0
    %p31 = por %p29, %p30
    %p32 = scmp.ne.s32.totalorder %s21, %s24
    %p33 = scmp.eq.s32.totalorder %s16, 1
    %p34 = por %p32, %p33
    %p35 = scmp.ne.s32.totalorder %s24, %s25
    %p36 = scmp.eq.s32.totalorder %s16, 0
    %p37 = por %p35, %p36
    %p38 = scmp.ne.s32.totalorder %s24, %s25
    %p39 = scmp.eq.s32.totalorder %s17, 1
    %p40 = por %p38, %p39
    %p42 = scmp.ne.s32.totalorder %s25, %s41
    %p43 = scmp.eq.s32.totalorder %s17, 0
    %p44 = por %p42, %p43
    %s46 = sadd.s32 %s45, 1
    %p49 = scmp.eq.s32.totalorder %s11, 1
    %p50 = scmp.ne.s32.totalorder %s45, %s47
    %p51 = scmp.eq.s32.totalorder %s11, 0
    %p52 = por %p50, %p51
    %p53 = scmp.ne.s32.totalorder %s45, %s47
    %p54 = scmp.eq.s32.totalorder %s16, 1
    %p55 = por %p53, %p54
    %p56 = scmp.ne.s32.totalorder %s47, %s48
    %p57 = scmp.eq.s32.totalorder %s16, 0
    %p58 = por %p56, %p57
    %p59 = scmp.ne.s32.totalorder %s47, %s48
    %p60 = scmp.eq.s32.totalorder %s17, 1
    %p61 = por %p59, %p60
    %p63 = scmp.ne.s32.totalorder %s48, %s62
    %p64 = scmp.eq.s32.totalorder %s17, 0
    %p65 = por %p63, %p64
    %s67 = sadd.s32 %s66, 1
    %p70 = scmp.eq.s32.totalorder %s11, 1
    %p71 = scmp.ne.s32.totalorder %s66, %s68
    %p72 = scmp.eq.s32.totalorder %s11, 0
    %p73 = por %p71, %p72
    %p74 = scmp.ne.s32.totalorder %s66, %s68
    %p75 = scmp.eq.s32.totalorder %s16, 1
    %p76 = por %p74, %p75
    %p77 = scmp.ne.s32.totalorder %s68, %s69
    %p78 = scmp.eq.s32.totalorder %s16, 0
    %p79 = por %p77, %p78
    %p80 = scmp.ne.s32.totalorder %s68, %s69
    %p81 = scmp.eq.s32.totalorder %s17, 1
    %p82 = por %p80, %p81
    %p84 = scmp.ne.s32.totalorder %s69, %s83
    %p85 = scmp.eq.s32.totalorder %s17, 0
    %p86 = por %p84, %p85
    %s88 = sadd.s32 %s87, 1
    %p91 = scmp.eq.s32.totalorder %s11, 1
    %p92 = scmp.ne.s32.totalorder %s87, %s89
    %p93 = scmp.eq.s32.totalorder %s11, 0
    %p94 = por %p92, %p93
    %p95 = scmp.ne.s32.totalorder %s87, %s89
    %p96 = scmp.eq.s32.totalorder %s16, 1
    %p97 = por %p95, %p96
    %p98 = scmp.ne.s32.totalorder %s89, %s90
    %p99 = scmp.eq.s32.totalorder %s16, 0
    %p100 = por %p98, %p99
    %p101 = scmp.ne.s32.totalorder %s89, %s90
    %p102 = scmp.eq.s32.totalorder %s17, 1
    %p103 = por %p101, %p102
    %p105 = scmp.ne.s32.totalorder %s90, %s104
    %p106 = scmp.eq.s32.totalorder %s17, 0
    %p107 = por %p105, %p106
    %s109 = sadd.s32 %s108, 1
    %p112 = scmp.eq.s32.totalorder %s11, 1
    %p113 = scmp.ne.s32.totalorder %s108, %s110
    %p114 = scmp.eq.s32.totalorder %s11, 0
    %p115 = por %p113, %p114
    %p116 = scmp.ne.s32.totalorder %s108, %s110
    %p117 = scmp.eq.s32.totalorder %s16, 1
    %p118 = por %p116, %p117
    %p119 = scmp.ne.s32.totalorder %s110, %s111
    %p120 = scmp.eq.s32.totalorder %s16, 0
    %p121 = por %p119, %p120
    %p122 = scmp.ne.s32.totalorder %s110, %s111
    %p123 = scmp.eq.s32.totalorder %s17, 1
    %p124 = por %p122, %p123
    %p126 = scmp.ne.s32.totalorder %s111, %s125
    %p127 = scmp.eq.s32.totalorder %s17, 0
    %p128 = por %p126, %p127
    %s129 = ssub.s32 %s11, %s18
    %p130 = scmp.eq.s32.totalorder %s129, 0
    %s132 = sadd.s32 %s131, 1
    %s133 = scalar_select %p130, %s131, %s132
    %p136 = pneg %p130
    %p137 = scmp.eq.s32.totalorder %s11, 1
    %p138 = por %p136, %p137
    %p139 = scmp.ne.s32.totalorder %s131, %s134
    %p140 = scmp.eq.s32.totalorder %s11, 0
    %p141 = por %p139, %p140
    %p142 = scmp.ne.s32.totalorder %s131, %s134
    %p143 = scmp.eq.s32.totalorder %s16, 1
    %p144 = por %p142, %p143
    %p145 = scmp.ne.s32.totalorder %s134, %s135
    %p146 = scmp.eq.s32.totalorder %s16, 0
    %p147 = por %p145, %p146
    %p148 = scmp.ne.s32.totalorder %s134, %s135
    %p149 = scmp.eq.s32.totalorder %s17, 1
    %p150 = por %p148, %p149
    %p152 = scmp.ne.s32.totalorder %s135, %s151
    %p153 = scmp.eq.s32.totalorder %s17, 0
    %p154 = por %p152, %p153
    %p155 = scmp.le.s32.totalorder 1, %s11
    %p156 = scmp.lt.s32.totalorder %s11, 3
    %p157 = pnand %p155, %p156
    %p158 = pneg %p157
    // Predicated region
    $region9: #{primary_cap_forward.1} parent=5 // pred_check
      _
    $region10: #{primary_cap_forward.1} parent=5 // pred_check_branch
      %160 = sbr.rel (%p157) target = $region12
    $region11: #{primary_cap_forward.1} parent=5 // pred_region
      %s161 = ssub.s32 %s11, 1
      // Predicated region
      $region13: #{primary_cap_forward.1} parent=11 // pred_check
        %p162 = pneg %p58
      $region14: #{primary_cap_forward.1} parent=11 // pred_check_branch
        %164 = sbr.rel (%p162) target = $region16
      $region15: #{primary_cap_forward.1} parent=11 // pred_region
        _
      $region16: #{primary_cap_forward.1} parent=11 // pred_fallthru
        _
      // Predicated region
      $region17: #{primary_cap_forward.1} parent=11 // pred_check
        %p165 = pneg %p79
      $region18: #{primary_cap_forward.1} parent=11 // pred_check_branch
        %167 = sbr.rel (%p165) target = $region20
      $region19: #{primary_cap_forward.1} parent=11 // pred_region
        _
      $region20: #{primary_cap_forward.1} parent=11 // pred_fallthru
        _
      // Predicated region
      $region21: #{primary_cap_forward.1} parent=11 // pred_check
        %p168 = pneg %p100
      $region22: #{primary_cap_forward.1} parent=11 // pred_check_branch
        %170 = sbr.rel (%p168) target = $region24
      $region23: #{primary_cap_forward.1} parent=11 // pred_region
        _
      $region24: #{primary_cap_forward.1} parent=11 // pred_fallthru
        _
      // Predicated region
      $region25: #{primary_cap_forward.1} parent=11 // pred_check
        %p171 = pneg %p121
      $region26: #{primary_cap_forward.1} parent=11 // pred_check_branch
        %173 = sbr.rel (%p171) target = $region28
      $region27: #{primary_cap_forward.1} parent=11 // pred_region
        _
      $region28: #{primary_cap_forward.1} parent=11 // pred_fallthru
        _
    $region12: #{primary_cap_forward.1} parent=5 // pred_fallthru
      _
    %p174 = scmp.lt.s32.totalorder %s11, 2
    // Predicated region
    $region29: #{primary_cap_forward.1} parent=5 // pred_check
      %p175 = pneg %p174
    $region30: #{primary_cap_forward.1} parent=5 // pred_check_branch
      %177 = sbr.rel (%p175) target = $region32
    $region31: #{primary_cap_forward.1} parent=5 // pred_region
      // Predicated region
      $region33: #{primary_cap_forward.1} parent=31 // pred_check
        %p178 = pneg %p31
      $region34: #{primary_cap_forward.1} parent=31 // pred_check_branch
        %180 = sbr.rel (%p178) target = $region36
      $region35: #{primary_cap_forward.1} parent=31 // pred_region
        %p181 = scmp.lt.s32.totalorder %s11, 1
        %s182 = scalar_select %p181, %s11, 1
        %s183 = smul.addr %s182, 3
        %s184 = smul.addr %s183, 4
        %s185 = scalar_lea.vmem %s0, %s184
      $region36: #{primary_cap_forward.1} parent=31 // pred_fallthru
        _
    $region32: #{primary_cap_forward.1} parent=5 // pred_fallthru
      _
    %p186 = scmp.le.s32.totalorder 1, %s11
    %p187 = scmp.lt.s32.totalorder %s11, 3
    %p188 = pnand %p186, %p187
    %p189 = pneg %p188
    // Predicated region
    $region37: #{primary_cap_forward.1} parent=5 // pred_check
      _
    $region38: #{primary_cap_forward.1} parent=5 // pred_check_branch
      %191 = sbr.rel (%p188) target = $region40
    $region39: #{primary_cap_forward.1} parent=5 // pred_region
      %s192 = ssub.s32 %s11, 1
      %p193 = scmp.lt.s32.totalorder %s16, 1
      %s194 = scalar_select %p193, %s16, 1
      %s195 = smul.addr %s194, 3
      %s196 = smul.addr %s195, 4
      %s197 = scalar_lea.vmem %s0, %s196
      %p198 = pneg %p37
      %p199 = pneg %p34
      %p200 = pneg %p58
      %p201 = pneg %p55
      %p202 = pneg %p79
      %p203 = pneg %p76
      %p204 = pneg %p100
      %p205 = pneg %p97
      %p206 = pneg %p121
      %p207 = pneg %p118
      %p208 = pneg %p147
      %p209 = pneg %p144
      %p210 = scmp.lt.s32.totalorder %s16, 1
      %s211 = scalar_select %p210, %s16, 1
      %s212 = smul.addr %s211, 8
      %s213 = smul.addr %s212, 8
      %s214 = scalar_lea.vmem %s5, %s213
      %p215 = scmp.lt.s32.totalorder %s16, 1
      %s216 = scalar_select %p215, %s16, 1
      %s217 = smul.addr %s216, 3
      %s218 = smul.addr %s217, 4
      %s219 = scalar_lea.vmem %s0, %s218
      %p220 = scmp.lt.s32.totalorder %s16, 1
      %s221 = scalar_select %p220, %s16, 1
      %s222 = smul.addr %s221, 8
      %s223 = smul.addr %s222, 8
      %s224 = scalar_lea.vmem %s5, %s223
      %v225 = vlaneseq
      %v226 = vand.u32 %v225, 127
      %v227 = vadd.s32 %v226, 128
      %vm228 = vcmp.lt.s32.totalorder %v226, 0
      %v229 = vsub.s32 0, %v226
      %v230 = vsel %vm228, %v229, %v226
      %v231 = vshrl.u32 %v230, 4
      %v232 = vand.u32 %v230, 15
      %v233 = vsub.s32 0, %v232
      %v234 = vsel %vm228, %v233, %v232
      %vm235 = vcmp.lt.s32.totalorder %v227, 0
      %v236 = vsub.s32 0, %v227
      %v237 = vsel %vm235, %v236, %v227
      %v238 = vshrl.u32 %v237, 4
      %v239 = vand.u32 %v237, 15
      %v240 = vsub.s32 0, %v239
      %v241 = vsel %vm235, %v240, %v239
      %vm242 = vcmp.ne.s32.totalorder %v234, 0
      %vm243 = vcmp.ne.s32.totalorder %v241, 0
      %vm244 = vcmp.lt.s32.totalorder %v234, 0
      %vm245 = vcmp.lt.s32.totalorder %v241, 0
      %vm246 = vmand %vm244, %vm242
      %vm247 = vmand %vm245, %vm243
      %v248 = vadd.s32 %v234, 16
      %v249 = vadd.s32 %v241, 16
      %v250 = vsel %vm246, %v248, %v234
      %v251 = vsel %vm247, %v249, %v241
      %v252 = vld [vmem:[%s219] sm:$0xff]
      %vm253 = vcmp.ge.s32.totalorder %v250, 1
      %vm254 = vcmp.ge.s32.totalorder %v251, 1
      %vm255 = vcmp.lt.s32.totalorder %v250, 17
      %vm256 = vcmp.lt.s32.totalorder %v251, 17
      %vm257 = vmand %vm253, %vm255
      %vm258 = vmand %vm254, %vm256
      %v259 = vsel %vm257, 1, 0
      %v260 = vsel %vm258, 1, 0
      %vm261 = vcmp.eq.s32.totalorder %v259, 1
      %vm262 = vcmp.eq.s32.totalorder %v260, 1
      %264 = vst [vmem:[#allocation1] ss:$2 sm:$0xff] %v252
      %v265 = vld.sshfl [vmem:[#allocation1] sm:$0xff pattern:$0x75316420]
      %v266 = vld.sshfl [vmem:[#allocation1 + $0x8] sm:$0xff pattern:$0x75316420]
      %v269 = vsel %vm261, %v265, 0.0
      %v270 = vsel %vm262, %v266, 0.0
      %v271 = vld [vmem:[%s1] sm:$0xff]
      %v272 = vld [vmem:[%s1 + $0x8] sm:$0xff]
      %v273 = vld [vmem:[%s1 + $0x10] sm:$0xff]
      %v274 = vld [vmem:[%s1 + $0x18] sm:$0xff]
      %v275 = vld [vmem:[%s219] sm:$0xff]
      %v276 = vld [vmem:[%s219 + $0x8] sm:$0xf]
      %281 = vrot.lane.b32.xlu0 %v271, 124
      %v282 = vpop.permute.xlu0 %281
      %283 = vrot.lane.b32.xlu0 %v272, 124
      %v284 = vpop.permute.xlu0 %283
      %285 = vrot.lane.b32.xlu0 %v273, 124
      %v286 = vpop.permute.xlu0 %285
      %287 = vrot.lane.b32.xlu0 %v274, 124
      %v288 = vpop.permute.xlu0 %287
      %291 = vst [vmem:[#allocation1] ss:$2 sm:$0xff] %v275
      %s292 = scalar_lea.vmem [#allocation1], 16
      %293 = vst [vmem:[%s292] ss:$2 sm:$0xff] %v276
      %v294 = vld.sshfl [vmem:[#allocation1] sm:$0xff pattern:$0x75316420]
      %v295 = vld.sshfl [vmem:[#allocation1 + $0x8] sm:$0xff pattern:$0x75316420]
      %v296 = vld.sshfl [vmem:[#allocation1 + $0x10] sm:$0xff pattern:$0x75316420]
      %297 = vrot.lane.b32.xlu0 %v294, 127
      %v298 = vpop.permute.xlu0 %297
      %299 = vrot.lane.b32.xlu0 %v295, 127
      %v300 = vpop.permute.xlu0 %299
      %301 = vrot.lane.b32.xlu0 %v296, 127
      %v302 = vpop.permute.xlu0 %301
      %vm303 = vcmask 1039360
      %v304 = vsel %vm303, %v298, %v300
      %v305 = vsel %vm303, %v300, %v302
      %vm306 = vcmask 31744
      %v307 = vsel %vm306, %v282, 0
      %v309 = vsel %vm306, %v284, 0
      %v311 = vsel %vm306, %v286, 0
      %v313 = vsel %vm306, %v288, 0
      %vm315 = vcmask 1043456
      %v316 = vsel %vm315, %v304, 0
      %v318 = vsel %vm315, %v305, 0
      %320 = vmatpush.msra.mxu0 0.0
      %321 = vmatpush.msra.mxu0 0.0
      %322 = vmatpush.msra.mxu0 0.0
      %323 = vmatpush.msra.mxu0 0.0
      %324 = vmatpush.msra.mxu0 0.0
      %325 = vmatpush.msra.mxu0 0.0
      %326 = vmatpush.msra.mxu0 0.0
      %327 = vmatpush.msra.mxu0 0.0
      %328 = vmatpush.msra.mxu0 0.0
      %329 = vmatpush.msra.mxu0 0.0
      %330 = vmatpush.msra.mxu0 0.0
      %331 = vmatpush.msra.mxu0 0.0
      %332 = vmatpush.msra.mxu0 0.0
      %333 = vmatpush.msra.mxu0 0.0
      %334 = vmatpush.msra.mxu0 0.0
      %v335 = vand.u32 %v316, 4294901760
      %336 = vmatpush.msra.mxu0 %v335
      %v337 = vand.u32 %v307, 4294901760
      %v338 = vsub.f32 %v307, %v337
      %v339 = vand.u32 %v338, 4294901760
      %v340 = vsub.f32 %v338, %v339
      %v341 = vand.u32 %v340, 4294901760
      %342 = vmatmul.f32.gmra.mxu0 %v341
      %v343 = vpop.f32.mrf.mxu0
      %v344 = vadd.f32 0.0, %v343
      %v345 = vand.u32 %v309, 4294901760
      %v346 = vsub.f32 %v309, %v345
      %v347 = vand.u32 %v346, 4294901760
      %v348 = vsub.f32 %v346, %v347
      %v349 = vand.u32 %v348, 4294901760
      %350 = vmatmul.f32.gmra.mxu0 %v349
      %v351 = vpop.f32.mrf.mxu0
      %v352 = vadd.f32 0.0, %v351
      %v353 = vand.u32 %v311, 4294901760
      %v354 = vsub.f32 %v311, %v353
      %v355 = vand.u32 %v354, 4294901760
      %v356 = vsub.f32 %v354, %v355
      %v357 = vand.u32 %v356, 4294901760
      %358 = vmatmul.f32.gmra.mxu0 %v357
      %v359 = vpop.f32.mrf.mxu0
      %v360 = vadd.f32 0.0, %v359
      %v361 = vand.u32 %v313, 4294901760
      %v362 = vsub.f32 %v313, %v361
      %v363 = vand.u32 %v362, 4294901760
      %v364 = vsub.f32 %v362, %v363
      %v365 = vand.u32 %v364, 4294901760
      %366 = vmatmul.f32.gmra.mxu0 %v365
      %v367 = vpop.f32.mrf.mxu0
      %v368 = vadd.f32 0.0, %v367
      %369 = vdwg.mxu0
      %370 = vmatpush.msra.mxu0 0.0
      %371 = vmatpush.msra.mxu0 0.0
      %372 = vmatpush.msra.mxu0 0.0
      %373 = vmatpush.msra.mxu0 0.0
      %374 = vmatpush.msra.mxu0 0.0
      %375 = vmatpush.msra.mxu0 0.0
      %376 = vmatpush.msra.mxu0 0.0
      %377 = vmatpush.msra.mxu0 0.0
      %378 = vmatpush.msra.mxu0 0.0
      %379 = vmatpush.msra.mxu0 0.0
      %380 = vmatpush.msra.mxu0 0.0
      %381 = vmatpush.msra.mxu0 0.0
      %382 = vmatpush.msra.mxu0 0.0
      %383 = vmatpush.msra.mxu0 0.0
      %384 = vmatpush.msra.mxu0 0.0
      %v385 = vand.u32 %v316, 4294901760
      %v386 = vsub.f32 %v316, %v385
      %v387 = vand.u32 %v386, 4294901760
      %v388 = vsub.f32 %v386, %v387
      %v389 = vand.u32 %v388, 4294901760
      %390 = vmatpush.msra.mxu0 %v389
      %v391 = vand.u32 %v307, 4294901760
      %392 = vmatmul.f32.gmra.mxu0 %v391
      %v393 = vpop.f32.mrf.mxu0
      %v394 = vadd.f32 %v344, %v393
      %v395 = vand.u32 %v309, 4294901760
      %396 = vmatmul.f32.gmra.mxu0 %v395
      %v397 = vpop.f32.mrf.mxu0
      %v398 = vadd.f32 %v352, %v397
      %v399 = vand.u32 %v311, 4294901760
      %400 = vmatmul.f32.gmra.mxu0 %v399
      %v401 = vpop.f32.mrf.mxu0
      %v402 = vadd.f32 %v360, %v401
      %v403 = vand.u32 %v313, 4294901760
      %404 = vmatmul.f32.gmra.mxu0 %v403
      %v405 = vpop.f32.mrf.mxu0
      %v406 = vadd.f32 %v368, %v405
      %407 = vdwg.mxu0
      %408 = vmatpush.msra.mxu0 0.0
      %409 = vmatpush.msra.mxu0 0.0
      %410 = vmatpush.msra.mxu0 0.0
      %411 = vmatpush.msra.mxu0 0.0
      %412 = vmatpush.msra.mxu0 0.0
      %413 = vmatpush.msra.mxu0 0.0
      %414 = vmatpush.msra.mxu0 0.0
      %415 = vmatpush.msra.mxu0 0.0
      %416 = vmatpush.msra.mxu0 0.0
      %417 = vmatpush.msra.mxu0 0.0
      %418 = vmatpush.msra.mxu0 0.0
      %419 = vmatpush.msra.mxu0 0.0
      %420 = vmatpush.msra.mxu0 0.0
      %421 = vmatpush.msra.mxu0 0.0
      %422 = vmatpush.msra.mxu0 0.0
      %v423 = vand.u32 %v316, 4294901760
      %v424 = vsub.f32 %v316, %v423
      %425 = vmatpush.msra.mxu0 %v424
      %v426 = vand.u32 %v307, 4294901760
      %v427 = vsub.f32 %v307, %v426
      %428 = vmatmul.f32.gmra.mxu0 %v427
      %v429 = vpop.f32.mrf.mxu0
      %v430 = vadd.f32 %v394, %v429
      %v431 = vand.u32 %v309, 4294901760
      %v432 = vsub.f32 %v309, %v431
      %433 = vmatmul.f32.gmra.mxu0 %v432
      %v434 = vpop.f32.mrf.mxu0
      %v435 = vadd.f32 %v398, %v434
      %v436 = vand.u32 %v311, 4294901760
      %v437 = vsub.f32 %v311, %v436
      %438 = vmatmul.f32.gmra.mxu0 %v437
      %v439 = vpop.f32.mrf.mxu0
      %v440 = vadd.f32 %v402, %v439
      %v441 = vand.u32 %v313, 4294901760
      %v442 = vsub.f32 %v313, %v441
      %443 = vmatmul.f32.gmra.mxu0 %v442
      %v444 = vpop.f32.mrf.mxu0
      %v445 = vadd.f32 %v406, %v444
      %446 = vdwg.mxu0
      %447 = vmatpush.msra.mxu0 0.0
      %448 = vmatpush.msra.mxu0 0.0
      %449 = vmatpush.msra.mxu0 0.0
      %450 = vmatpush.msra.mxu0 0.0
      %451 = vmatpush.msra.mxu0 0.0
      %452 = vmatpush.msra.mxu0 0.0
      %453 = vmatpush.msra.mxu0 0.0
      %454 = vmatpush.msra.mxu0 0.0
      %455 = vmatpush.msra.mxu0 0.0
      %456 = vmatpush.msra.mxu0 0.0
      %457 = vmatpush.msra.mxu0 0.0
      %458 = vmatpush.msra.mxu0 0.0
      %459 = vmatpush.msra.mxu0 0.0
      %460 = vmatpush.msra.mxu0 0.0
      %461 = vmatpush.msra.mxu0 0.0
      %v462 = vand.u32 %v316, 4294901760
      %463 = vmatpush.msra.mxu0 %v462
      %v464 = vand.u32 %v307, 4294901760
      %v465 = vsub.f32 %v307, %v464
      %v466 = vand.u32 %v465, 4294901760
      %467 = vmatmul.f32.gmra.mxu0 %v466
      %v468 = vpop.f32.mrf.mxu0
      %v469 = vadd.f32 %v430, %v468
      %v470 = vand.u32 %v309, 4294901760
      %v471 = vsub.f32 %v309, %v470
      %v472 = vand.u32 %v471, 4294901760
      %473 = vmatmul.f32.gmra.mxu0 %v472
      %v474 = vpop.f32.mrf.mxu0
      %v475 = vadd.f32 %v435, %v474
      %v476 = vand.u32 %v311, 4294901760
      %v477 = vsub.f32 %v311, %v476
      %v478 = vand.u32 %v477, 4294901760
      %479 = vmatmul.f32.gmra.mxu0 %v478
      %v480 = vpop.f32.mrf.mxu0
      %v481 = vadd.f32 %v440, %v480
      %v482 = vand.u32 %v313, 4294901760
      %v483 = vsub.f32 %v313, %v482
      %v484 = vand.u32 %v483, 4294901760
      %485 = vmatmul.f32.gmra.mxu0 %v484
      %v486 = vpop.f32.mrf.mxu0
      %v487 = vadd.f32 %v445, %v486
      %488 = vdwg.mxu0
      %489 = vmatpush.msra.mxu0 0.0
      %490 = vmatpush.msra.mxu0 0.0
      %491 = vmatpush.msra.mxu0 0.0
      %492 = vmatpush.msra.mxu0 0.0
      %493 = vmatpush.msra.mxu0 0.0
      %494 = vmatpush.msra.mxu0 0.0
      %495 = vmatpush.msra.mxu0 0.0
      %496 = vmatpush.msra.mxu0 0.0
      %497 = vmatpush.msra.mxu0 0.0
      %498 = vmatpush.msra.mxu0 0.0
      %499 = vmatpush.msra.mxu0 0.0
      %500 = vmatpush.msra.mxu0 0.0
      %501 = vmatpush.msra.mxu0 0.0
      %502 = vmatpush.msra.mxu0 0.0
      %503 = vmatpush.msra.mxu0 0.0
      %v504 = vand.u32 %v316, 4294901760
      %v505 = vsub.f32 %v316, %v504
      %v506 = vand.u32 %v505, 4294901760
      %507 = vmatpush.msra.mxu0 %v506
      %v508 = vand.u32 %v307, 4294901760
      %509 = vmatmul.f32.gmra.mxu0 %v508
      %v510 = vpop.f32.mrf.mxu0
      %v511 = vadd.f32 %v469, %v510
      %v512 = vand.u32 %v309, 4294901760
      %513 = vmatmul.f32.gmra.mxu0 %v512
      %v514 = vpop.f32.mrf.mxu0
      %v515 = vadd.f32 %v475, %v514
      %v516 = vand.u32 %v311, 4294901760
      %517 = vmatmul.f32.gmra.mxu0 %v516
      %v518 = vpop.f32.mrf.mxu0
      %v519 = vadd.f32 %v481, %v518
      %v520 = vand.u32 %v313, 4294901760
      %521 = vmatmul.f32.gmra.mxu0 %v520
      %v522 = vpop.f32.mrf.mxu0
      %v523 = vadd.f32 %v487, %v522
      %524 = vdwg.mxu0
      %525 = vmatpush.msra.mxu0 0.0
      %526 = vmatpush.msra.mxu0 0.0
      %527 = vmatpush.msra.mxu0 0.0
      %528 = vmatpush.msra.mxu0 0.0
      %529 = vmatpush.msra.mxu0 0.0
      %530 = vmatpush.msra.mxu0 0.0
      %531 = vmatpush.msra.mxu0 0.0
      %532 = vmatpush.msra.mxu0 0.0
      %533 = vmatpush.msra.mxu0 0.0
      %534 = vmatpush.msra.mxu0 0.0
      %535 = vmatpush.msra.mxu0 0.0
      %536 = vmatpush.msra.mxu0 0.0
      %537 = vmatpush.msra.mxu0 0.0
      %538 = vmatpush.msra.mxu0 0.0
      %539 = vmatpush.msra.mxu0 0.0
      %v540 = vand.u32 %v316, 4294901760
      %541 = vmatpush.msra.mxu0 %v540
      %v542 = vand.u32 %v307, 4294901760
      %543 = vmatmul.f32.gmra.mxu0 %v542
      %v544 = vpop.f32.mrf.mxu0
      %v545 = vadd.f32 %v511, %v544
      %v546 = vand.u32 %v309, 4294901760
      %547 = vmatmul.f32.gmra.mxu0 %v546
      %v548 = vpop.f32.mrf.mxu0
      %v549 = vadd.f32 %v515, %v548
      %v550 = vand.u32 %v311, 4294901760
      %551 = vmatmul.f32.gmra.mxu0 %v550
      %v552 = vpop.f32.mrf.mxu0
      %v553 = vadd.f32 %v519, %v552
      %v554 = vand.u32 %v313, 4294901760
      %555 = vmatmul.f32.gmra.mxu0 %v554
      %v556 = vpop.f32.mrf.mxu0
      %v557 = vadd.f32 %v523, %v556
      %558 = vdwg.mxu0
      %559 = vmatpush.msra.mxu0 0.0
      %560 = vmatpush.msra.mxu0 0.0
      %561 = vmatpush.msra.mxu0 0.0
      %562 = vmatpush.msra.mxu0 0.0
      %563 = vmatpush.msra.mxu0 0.0
      %564 = vmatpush.msra.mxu0 0.0
      %565 = vmatpush.msra.mxu0 0.0
      %566 = vmatpush.msra.mxu0 0.0
      %567 = vmatpush.msra.mxu0 0.0
      %568 = vmatpush.msra.mxu0 0.0
      %569 = vmatpush.msra.mxu0 0.0
      %570 = vmatpush.msra.mxu0 0.0
      %571 = vmatpush.msra.mxu0 0.0
      %572 = vmatpush.msra.mxu0 0.0
      %573 = vmatpush.msra.mxu0 0.0
      %v574 = vand.u32 %v318, 4294901760
      %575 = vmatpush.msra.mxu0 %v574
      %v576 = vand.u32 %v307, 4294901760
      %v577 = vsub.f32 %v307, %v576
      %v578 = vand.u32 %v577, 4294901760
      %v579 = vsub.f32 %v577, %v578
      %v580 = vand.u32 %v579, 4294901760
      %581 = vmatmul.f32.gmra.mxu0 %v580
      %v582 = vpop.f32.mrf.mxu0
      %v583 = vadd.f32 0.0, %v582
      %v584 = vand.u32 %v309, 4294901760
      %v585 = vsub.f32 %v309, %v584
      %v586 = vand.u32 %v585, 4294901760
      %v587 = vsub.f32 %v585, %v586
      %v588 = vand.u32 %v587, 4294901760
      %589 = vmatmul.f32.gmra.mxu0 %v588
      %v590 = vpop.f32.mrf.mxu0
      %v591 = vadd.f32 0.0, %v590
      %v592 = vand.u32 %v311, 4294901760
      %v593 = vsub.f32 %v311, %v592
      %v594 = vand.u32 %v593, 4294901760
      %v595 = vsub.f32 %v593, %v594
      %v596 = vand.u32 %v595, 4294901760
      %597 = vmatmul.f32.gmra.mxu0 %v596
      %v598 = vpop.f32.mrf.mxu0
      %v599 = vadd.f32 0.0, %v598
      %v600 = vand.u32 %v313, 4294901760
      %v601 = vsub.f32 %v313, %v600
      %v602 = vand.u32 %v601, 4294901760
      %v603 = vsub.f32 %v601, %v602
      %v604 = vand.u32 %v603, 4294901760
      %605 = vmatmul.f32.gmra.mxu0 %v604
      %v606 = vpop.f32.mrf.mxu0
      %v607 = vadd.f32 0.0, %v606
      %608 = vdwg.mxu0
      %609 = vmatpush.msra.mxu0 0.0
      %610 = vmatpush.msra.mxu0 0.0
      %611 = vmatpush.msra.mxu0 0.0
      %612 = vmatpush.msra.mxu0 0.0
      %613 = vmatpush.msra.mxu0 0.0
      %614 = vmatpush.msra.mxu0 0.0
      %615 = vmatpush.msra.mxu0 0.0
      %616 = vmatpush.msra.mxu0 0.0
      %617 = vmatpush.msra.mxu0 0.0
      %618 = vmatpush.msra.mxu0 0.0
      %619 = vmatpush.msra.mxu0 0.0
      %620 = vmatpush.msra.mxu0 0.0
      %621 = vmatpush.msra.mxu0 0.0
      %622 = vmatpush.msra.mxu0 0.0
      %623 = vmatpush.msra.mxu0 0.0
      %v624 = vand.u32 %v318, 4294901760
      %v625 = vsub.f32 %v318, %v624
      %v626 = vand.u32 %v625, 4294901760
      %v627 = vsub.f32 %v625, %v626
      %v628 = vand.u32 %v627, 4294901760
      %629 = vmatpush.msra.mxu0 %v628
      %v630 = vand.u32 %v307, 4294901760
      %631 = vmatmul.f32.gmra.mxu0 %v630
      %v632 = vpop.f32.mrf.mxu0
      %v633 = vadd.f32 %v583, %v632
      %v634 = vand.u32 %v309, 4294901760
      %635 = vmatmul.f32.gmra.mxu0 %v634
      %v636 = vpop.f32.mrf.mxu0
      %v637 = vadd.f32 %v591, %v636
      %v638 = vand.u32 %v311, 4294901760
      %639 = vmatmul.f32.gmra.mxu0 %v638
      %v640 = vpop.f32.mrf.mxu0
      %v641 = vadd.f32 %v599, %v640
      %v642 = vand.u32 %v313, 4294901760
      %643 = vmatmul.f32.gmra.mxu0 %v642
      %v644 = vpop.f32.mrf.mxu0
      %v645 = vadd.f32 %v607, %v644
      %646 = vdwg.mxu0
      %647 = vmatpush.msra.mxu0 0.0
      %648 = vmatpush.msra.mxu0 0.0
      %649 = vmatpush.msra.mxu0 0.0
      %650 = vmatpush.msra.mxu0 0.0
      %651 = vmatpush.msra.mxu0 0.0
      %652 = vmatpush.msra.mxu0 0.0
      %653 = vmatpush.msra.mxu0 0.0
      %654 = vmatpush.msra.mxu0 0.0
      %655 = vmatpush.msra.mxu0 0.0
      %656 = vmatpush.msra.mxu0 0.0
      %657 = vmatpush.msra.mxu0 0.0
      %658 = vmatpush.msra.mxu0 0.0
      %659 = vmatpush.msra.mxu0 0.0
      %660 = vmatpush.msra.mxu0 0.0
      %661 = vmatpush.msra.mxu0 0.0
      %v662 = vand.u32 %v318, 4294901760
      %v663 = vsub.f32 %v318, %v662
      %664 = vmatpush.msra.mxu0 %v663
      %v665 = vand.u32 %v307, 4294901760
      %v666 = vsub.f32 %v307, %v665
      %667 = vmatmul.f32.gmra.mxu0 %v666
      %v668 = vpop.f32.mrf.mxu0
      %v669 = vadd.f32 %v633, %v668
      %v670 = vand.u32 %v309, 4294901760
      %v671 = vsub.f32 %v309, %v670
      %672 = vmatmul.f32.gmra.mxu0 %v671
      %v673 = vpop.f32.mrf.mxu0
      %v674 = vadd.f32 %v637, %v673
      %v675 = vand.u32 %v311, 4294901760
      %v676 = vsub.f32 %v311, %v675
      %677 = vmatmul.f32.gmra.mxu0 %v676
      %v678 = vpop.f32.mrf.mxu0
      %v679 = vadd.f32 %v641, %v678
      %v680 = vand.u32 %v313, 4294901760
      %v681 = vsub.f32 %v313, %v680
      %682 = vmatmul.f32.gmra.mxu0 %v681
      %v683 = vpop.f32.mrf.mxu0
      %v684 = vadd.f32 %v645, %v683
      %685 = vdwg.mxu0
      %686 = vmatpush.msra.mxu0 0.0
      %687 = vmatpush.msra.mxu0 0.0
      %688 = vmatpush.msra.mxu0 0.0
      %689 = vmatpush.msra.mxu0 0.0
      %690 = vmatpush.msra.mxu0 0.0
      %691 = vmatpush.msra.mxu0 0.0
      %692 = vmatpush.msra.mxu0 0.0
      %693 = vmatpush.msra.mxu0 0.0
      %694 = vmatpush.msra.mxu0 0.0
      %695 = vmatpush.msra.mxu0 0.0
      %696 = vmatpush.msra.mxu0 0.0
      %697 = vmatpush.msra.mxu0 0.0
      %698 = vmatpush.msra.mxu0 0.0
      %699 = vmatpush.msra.mxu0 0.0
      %700 = vmatpush.msra.mxu0 0.0
      %v701 = vand.u32 %v318, 4294901760
      %702 = vmatpush.msra.mxu0 %v701
      %v703 = vand.u32 %v307, 4294901760
      %v704 = vsub.f32 %v307, %v703
      %v705 = vand.u32 %v704, 4294901760
      %706 = vmatmul.f32.gmra.mxu0 %v705
      %v707 = vpop.f32.mrf.mxu0
      %v708 = vadd.f32 %v669, %v707
      %v709 = vand.u32 %v309, 4294901760
      %v710 = vsub.f32 %v309, %v709
      %v711 = vand.u32 %v710, 4294901760
      %712 = vmatmul.f32.gmra.mxu0 %v711
      %v713 = vpop.f32.mrf.mxu0
      %v714 = vadd.f32 %v674, %v713
      %v715 = vand.u32 %v311, 4294901760
      %v716 = vsub.f32 %v311, %v715
      %v717 = vand.u32 %v716, 4294901760
      %718 = vmatmul.f32.gmra.mxu0 %v717
      %v719 = vpop.f32.mrf.mxu0
      %v720 = vadd.f32 %v679, %v719
      %v721 = vand.u32 %v313, 4294901760
      %v722 = vsub.f32 %v313, %v721
      %v723 = vand.u32 %v722, 4294901760
      %724 = vmatmul.f32.gmra.mxu0 %v723
      %v725 = vpop.f32.mrf.mxu0
      %v726 = vadd.f32 %v684, %v725
      %727 = vdwg.mxu0
      %728 = vmatpush.msra.mxu0 0.0
      %729 = vmatpush.msra.mxu0 0.0
      %730 = vmatpush.msra.mxu0 0.0
      %731 = vmatpush.msra.mxu0 0.0
      %732 = vmatpush.msra.mxu0 0.0
      %733 = vmatpush.msra.mxu0 0.0
      %734 = vmatpush.msra.mxu0 0.0
      %735 = vmatpush.msra.mxu0 0.0
      %736 = vmatpush.msra.mxu0 0.0
      %737 = vmatpush.msra.mxu0 0.0
      %738 = vmatpush.msra.mxu0 0.0
      %739 = vmatpush.msra.mxu0 0.0
      %740 = vmatpush.msra.mxu0 0.0
      %741 = vmatpush.msra.mxu0 0.0
      %742 = vmatpush.msra.mxu0 0.0
      %v743 = vand.u32 %v318, 4294901760
      %v744 = vsub.f32 %v318, %v743
      %v745 = vand.u32 %v744, 4294901760
      %746 = vmatpush.msra.mxu0 %v745
      %v747 = vand.u32 %v307, 4294901760
      %748 = vmatmul.f32.gmra.mxu0 %v747
      %v749 = vpop.f32.mrf.mxu0
      %v750 = vadd.f32 %v708, %v749
      %v751 = vand.u32 %v309, 4294901760
      %752 = vmatmul.f32.gmra.mxu0 %v751
      %v753 = vpop.f32.mrf.mxu0
      %v754 = vadd.f32 %v714, %v753
      %v755 = vand.u32 %v311, 4294901760
      %756 = vmatmul.f32.gmra.mxu0 %v755
      %v757 = vpop.f32.mrf.mxu0
      %v758 = vadd.f32 %v720, %v757
      %v759 = vand.u32 %v313, 4294901760
      %760 = vmatmul.f32.gmra.mxu0 %v759
      %v761 = vpop.f32.mrf.mxu0
      %v762 = vadd.f32 %v726, %v761
      %763 = vdwg.mxu0
      %764 = vmatpush.msra.mxu0 0.0
      %765 = vmatpush.msra.mxu0 0.0
      %766 = vmatpush.msra.mxu0 0.0
      %767 = vmatpush.msra.mxu0 0.0
      %768 = vmatpush.msra.mxu0 0.0
      %769 = vmatpush.msra.mxu0 0.0
      %770 = vmatpush.msra.mxu0 0.0
      %771 = vmatpush.msra.mxu0 0.0
      %772 = vmatpush.msra.mxu0 0.0
      %773 = vmatpush.msra.mxu0 0.0
      %774 = vmatpush.msra.mxu0 0.0
      %775 = vmatpush.msra.mxu0 0.0
      %776 = vmatpush.msra.mxu0 0.0
      %777 = vmatpush.msra.mxu0 0.0
      %778 = vmatpush.msra.mxu0 0.0
      %v779 = vand.u32 %v318, 4294901760
      %780 = vmatpush.msra.mxu0 %v779
      %v781 = vand.u32 %v307, 4294901760
      %782 = vmatmul.f32.gmra.mxu0 %v781
      %v783 = vpop.f32.mrf.mxu0
      %v784 = vadd.f32 %v750, %v783
      %v785 = vand.u32 %v309, 4294901760
      %786 = vmatmul.f32.gmra.mxu0 %v785
      %v787 = vpop.f32.mrf.mxu0
      %v788 = vadd.f32 %v754, %v787
      %v789 = vand.u32 %v311, 4294901760
      %790 = vmatmul.f32.gmra.mxu0 %v789
      %v791 = vpop.f32.mrf.mxu0
      %v792 = vadd.f32 %v758, %v791
      %v793 = vand.u32 %v313, 4294901760
      %794 = vmatmul.f32.gmra.mxu0 %v793
      %v795 = vpop.f32.mrf.mxu0
      %v796 = vadd.f32 %v762, %v795
      %797 = vdwg.mxu0
      %v798 = vsel %vm306, %v271, 0
      %v800 = vsel %vm306, %v272, 0
      %v802 = vsel %vm306, %v273, 0
      %v804 = vsel %vm306, %v274, 0
      %v807 = vsel %vm315, %v269, 0
      %v810 = vsel %vm315, %v270, 0
      %812 = vmatpush.msra.mxu0 0.0
      %813 = vmatpush.msra.mxu0 0.0
      %814 = vmatpush.msra.mxu0 0.0
      %815 = vmatpush.msra.mxu0 0.0
      %816 = vmatpush.msra.mxu0 0.0
      %817 = vmatpush.msra.mxu0 0.0
      %818 = vmatpush.msra.mxu0 0.0
      %819 = vmatpush.msra.mxu0 0.0
      %820 = vmatpush.msra.mxu0 0.0
      %821 = vmatpush.msra.mxu0 0.0
      %822 = vmatpush.msra.mxu0 0.0
      %823 = vmatpush.msra.mxu0 0.0
      %824 = vmatpush.msra.mxu0 0.0
      %825 = vmatpush.msra.mxu0 0.0
      %826 = vmatpush.msra.mxu0 0.0
      %v827 = vand.u32 %v807, 4294901760
      %828 = vmatpush.msra.mxu0 %v827
      %v829 = vand.u32 %v798, 4294901760
      %v830 = vsub.f32 %v798, %v829
      %v831 = vand.u32 %v830, 4294901760
      %v832 = vsub.f32 %v830, %v831
      %v833 = vand.u32 %v832, 4294901760
      %834 = vmatmul.f32.gmra.mxu0 %v833
      %v835 = vpop.f32.mrf.mxu0
      %v836 = vadd.f32 %v545, %v835
      %v837 = vand.u32 %v800, 4294901760
      %v838 = vsub.f32 %v800, %v837
      %v839 = vand.u32 %v838, 4294901760
      %v840 = vsub.f32 %v838, %v839
      %v841 = vand.u32 %v840, 4294901760
      %842 = vmatmul.f32.gmra.mxu0 %v841
      %v843 = vpop.f32.mrf.mxu0
      %v844 = vadd.f32 %v549, %v843
      %v845 = vand.u32 %v802, 4294901760
      %v846 = vsub.f32 %v802, %v845
      %v847 = vand.u32 %v846, 4294901760
      %v848 = vsub.f32 %v846, %v847
      %v849 = vand.u32 %v848, 4294901760
      %850 = vmatmul.f32.gmra.mxu0 %v849
      %v851 = vpop.f32.mrf.mxu0
      %v852 = vadd.f32 %v553, %v851
      %v853 = vand.u32 %v804, 4294901760
      %v854 = vsub.f32 %v804, %v853
      %v855 = vand.u32 %v854, 4294901760
      %v856 = vsub.f32 %v854, %v855
      %v857 = vand.u32 %v856, 4294901760
      %858 = vmatmul.f32.gmra.mxu0 %v857
      %v859 = vpop.f32.mrf.mxu0
      %v860 = vadd.f32 %v557, %v859
      %861 = vdwg.mxu0
      %862 = vmatpush.msra.mxu0 0.0
      %863 = vmatpush.msra.mxu0 0.0
      %864 = vmatpush.msra.mxu0 0.0
      %865 = vmatpush.msra.mxu0 0.0
      %866 = vmatpush.msra.mxu0 0.0
      %867 = vmatpush.msra.mxu0 0.0
      %868 = vmatpush.msra.mxu0 0.0
      %869 = vmatpush.msra.mxu0 0.0
      %870 = vmatpush.msra.mxu0 0.0
      %871 = vmatpush.msra.mxu0 0.0
      %872 = vmatpush.msra.mxu0 0.0
      %873 = vmatpush.msra.mxu0 0.0
      %874 = vmatpush.msra.mxu0 0.0
      %875 = vmatpush.msra.mxu0 0.0
      %876 = vmatpush.msra.mxu0 0.0
      %v877 = vand.u32 %v807, 4294901760
      %v878 = vsub.f32 %v807, %v877
      %v879 = vand.u32 %v878, 4294901760
      %v880 = vsub.f32 %v878, %v879
      %v881 = vand.u32 %v880, 4294901760
      %882 = vmatpush.msra.mxu0 %v881
      %v883 = vand.u32 %v798, 4294901760
      %884 = vmatmul.f32.gmra.mxu0 %v883
      %v885 = vpop.f32.mrf.mxu0
      %v886 = vadd.f32 %v836, %v885
      %v887 = vand.u32 %v800, 4294901760
      %888 = vmatmul.f32.gmra.mxu0 %v887
      %v889 = vpop.f32.mrf.mxu0
      %v890 = vadd.f32 %v844, %v889
      %v891 = vand.u32 %v802, 4294901760
      %892 = vmatmul.f32.gmra.mxu0 %v891
      %v893 = vpop.f32.mrf.mxu0
      %v894 = vadd.f32 %v852, %v893
      %v895 = vand.u32 %v804, 4294901760
      %896 = vmatmul.f32.gmra.mxu0 %v895
      %v897 = vpop.f32.mrf.mxu0
      %v898 = vadd.f32 %v860, %v897
      %899 = vdwg.mxu0
      %900 = vmatpush.msra.mxu0 0.0
      %901 = vmatpush.msra.mxu0 0.0
      %902 = vmatpush.msra.mxu0 0.0
      %903 = vmatpush.msra.mxu0 0.0
      %904 = vmatpush.msra.mxu0 0.0
      %905 = vmatpush.msra.mxu0 0.0
      %906 = vmatpush.msra.mxu0 0.0
      %907 = vmatpush.msra.mxu0 0.0
      %908 = vmatpush.msra.mxu0 0.0
      %909 = vmatpush.msra.mxu0 0.0
      %910 = vmatpush.msra.mxu0 0.0
      %911 = vmatpush.msra.mxu0 0.0
      %912 = vmatpush.msra.mxu0 0.0
      %913 = vmatpush.msra.mxu0 0.0
      %914 = vmatpush.msra.mxu0 0.0
      %v915 = vand.u32 %v807, 4294901760
      %v916 = vsub.f32 %v807, %v915
      %917 = vmatpush.msra.mxu0 %v916
      %v918 = vand.u32 %v798, 4294901760
      %v919 = vsub.f32 %v798, %v918
      %920 = vmatmul.f32.gmra.mxu0 %v919
      %v921 = vpop.f32.mrf.mxu0
      %v922 = vadd.f32 %v886, %v921
      %v923 = vand.u32 %v800, 4294901760
      %v924 = vsub.f32 %v800, %v923
      %925 = vmatmul.f32.gmra.mxu0 %v924
      %v926 = vpop.f32.mrf.mxu0
      %v927 = vadd.f32 %v890, %v926
      %v928 = vand.u32 %v802, 4294901760
      %v929 = vsub.f32 %v802, %v928
      %930 = vmatmul.f32.gmra.mxu0 %v929
      %v931 = vpop.f32.mrf.mxu0
      %v932 = vadd.f32 %v894, %v931
      %v933 = vand.u32 %v804, 4294901760
      %v934 = vsub.f32 %v804, %v933
      %935 = vmatmul.f32.gmra.mxu0 %v934
      %v936 = vpop.f32.mrf.mxu0
      %v937 = vadd.f32 %v898, %v936
      %938 = vdwg.mxu0
      %939 = vmatpush.msra.mxu0 0.0
      %940 = vmatpush.msra.mxu0 0.0
      %941 = vmatpush.msra.mxu0 0.0
      %942 = vmatpush.msra.mxu0 0.0
      %943 = vmatpush.msra.mxu0 0.0
      %944 = vmatpush.msra.mxu0 0.0
      %945 = vmatpush.msra.mxu0 0.0
      %946 = vmatpush.msra.mxu0 0.0
      %947 = vmatpush.msra.mxu0 0.0
      %948 = vmatpush.msra.mxu0 0.0
      %949 = vmatpush.msra.mxu0 0.0
      %950 = vmatpush.msra.mxu0 0.0
      %951 = vmatpush.msra.mxu0 0.0
      %952 = vmatpush.msra.mxu0 0.0
      %953 = vmatpush.msra.mxu0 0.0
      %v954 = vand.u32 %v807, 4294901760
      %955 = vmatpush.msra.mxu0 %v954
      %v956 = vand.u32 %v798, 4294901760
      %v957 = vsub.f32 %v798, %v956
      %v958 = vand.u32 %v957, 4294901760
      %959 = vmatmul.f32.gmra.mxu0 %v958
      %v960 = vpop.f32.mrf.mxu0
      %v961 = vadd.f32 %v922, %v960
      %v962 = vand.u32 %v800, 4294901760
      %v963 = vsub.f32 %v800, %v962
      %v964 = vand.u32 %v963, 4294901760
      %965 = vmatmul.f32.gmra.mxu0 %v964
      %v966 = vpop.f32.mrf.mxu0
      %v967 = vadd.f32 %v927, %v966
      %v968 = vand.u32 %v802, 4294901760
      %v969 = vsub.f32 %v802, %v968
      %v970 = vand.u32 %v969, 4294901760
      %971 = vmatmul.f32.gmra.mxu0 %v970
      %v972 = vpop.f32.mrf.mxu0
      %v973 = vadd.f32 %v932, %v972
      %v974 = vand.u32 %v804, 4294901760
      %v975 = vsub.f32 %v804, %v974
      %v976 = vand.u32 %v975, 4294901760
      %977 = vmatmul.f32.gmra.mxu0 %v976
      %v978 = vpop.f32.mrf.mxu0
      %v979 = vadd.f32 %v937, %v978
      %980 = vdwg.mxu0
      %981 = vmatpush.msra.mxu0 0.0
      %982 = vmatpush.msra.mxu0 0.0
      %983 = vmatpush.msra.mxu0 0.0
      %984 = vmatpush.msra.mxu0 0.0
      %985 = vmatpush.msra.mxu0 0.0
      %986 = vmatpush.msra.mxu0 0.0
      %987 = vmatpush.msra.mxu0 0.0
      %988 = vmatpush.msra.mxu0 0.0
      %989 = vmatpush.msra.mxu0 0.0
      %990 = vmatpush.msra.mxu0 0.0
      %991 = vmatpush.msra.mxu0 0.0
      %992 = vmatpush.msra.mxu0 0.0
      %993 = vmatpush.msra.mxu0 0.0
      %994 = vmatpush.msra.mxu0 0.0
      %995 = vmatpush.msra.mxu0 0.0
      %v996 = vand.u32 %v807, 4294901760
      %v997 = vsub.f32 %v807, %v996
      %v998 = vand.u32 %v997, 4294901760
      %999 = vmatpush.msra.mxu0 %v998
      %v1000 = vand.u32 %v798, 4294901760
      %1001 = vmatmul.f32.gmra.mxu0 %v1000
      %v1002 = vpop.f32.mrf.mxu0
      %v1003 = vadd.f32 %v961, %v1002
      %v1004 = vand.u32 %v800, 4294901760
      %1005 = vmatmul.f32.gmra.mxu0 %v1004
      %v1006 = vpop.f32.mrf.mxu0
      %v1007 = vadd.f32 %v967, %v1006
      %v1008 = vand.u32 %v802, 4294901760
      %1009 = vmatmul.f32.gmra.mxu0 %v1008
      %v1010 = vpop.f32.mrf.mxu0
      %v1011 = vadd.f32 %v973, %v1010
      %v1012 = vand.u32 %v804, 4294901760
      %1013 = vmatmul.f32.gmra.mxu0 %v1012
      %v1014 = vpop.f32.mrf.mxu0
      %v1015 = vadd.f32 %v979, %v1014
      %1016 = vdwg.mxu0
      %1017 = vmatpush.msra.mxu0 0.0
      %1018 = vmatpush.msra.mxu0 0.0
      %1019 = vmatpush.msra.mxu0 0.0
      %1020 = vmatpush.msra.mxu0 0.0
      %1021 = vmatpush.msra.mxu0 0.0
      %1022 = vmatpush.msra.mxu0 0.0
      %1023 = vmatpush.msra.mxu0 0.0
      %1024 = vmatpush.msra.mxu0 0.0
      %1025 = vmatpush.msra.mxu0 0.0
      %1026 = vmatpush.msra.mxu0 0.0
      %1027 = vmatpush.msra.mxu0 0.0
      %1028 = vmatpush.msra.mxu0 0.0
      %1029 = vmatpush.msra.mxu0 0.0
      %1030 = vmatpush.msra.mxu0 0.0
      %1031 = vmatpush.msra.mxu0 0.0
      %v1032 = vand.u32 %v807, 4294901760
      %1033 = vmatpush.msra.mxu0 %v1032
      %v1034 = vand.u32 %v798, 4294901760
      %1035 = vmatmul.f32.gmra.mxu0 %v1034
      %v1036 = vpop.f32.mrf.mxu0
      %v1037 = vadd.f32 %v1003, %v1036
      %v1038 = vand.u32 %v800, 4294901760
      %1039 = vmatmul.f32.gmra.mxu0 %v1038
      %v1040 = vpop.f32.mrf.mxu0
      %v1041 = vadd.f32 %v1007, %v1040
      %v1042 = vand.u32 %v802, 4294901760
      %1043 = vmatmul.f32.gmra.mxu0 %v1042
      %v1044 = vpop.f32.mrf.mxu0
      %v1045 = vadd.f32 %v1011, %v1044
      %v1046 = vand.u32 %v804, 4294901760
      %1047 = vmatmul.f32.gmra.mxu0 %v1046
      %v1048 = vpop.f32.mrf.mxu0
      %v1049 = vadd.f32 %v1015, %v1048
      %1050 = vdwg.mxu0
      %1051 = vmatpush.msra.mxu0 0.0
      %1052 = vmatpush.msra.mxu0 0.0
      %1053 = vmatpush.msra.mxu0 0.0
      %1054 = vmatpush.msra.mxu0 0.0
      %1055 = vmatpush.msra.mxu0 0.0
      %1056 = vmatpush.msra.mxu0 0.0
      %1057 = vmatpush.msra.mxu0 0.0
      %1058 = vmatpush.msra.mxu0 0.0
      %1059 = vmatpush.msra.mxu0 0.0
      %1060 = vmatpush.msra.mxu0 0.0
      %1061 = vmatpush.msra.mxu0 0.0
      %1062 = vmatpush.msra.mxu0 0.0
      %1063 = vmatpush.msra.mxu0 0.0
      %1064 = vmatpush.msra.mxu0 0.0
      %1065 = vmatpush.msra.mxu0 0.0
      %v1066 = vand.u32 %v810, 4294901760
      %1067 = vmatpush.msra.mxu0 %v1066
      %v1068 = vand.u32 %v798, 4294901760
      %v1069 = vsub.f32 %v798, %v1068
      %v1070 = vand.u32 %v1069, 4294901760
      %v1071 = vsub.f32 %v1069, %v1070
      %v1072 = vand.u32 %v1071, 4294901760
      %1073 = vmatmul.f32.gmra.mxu0 %v1072
      %v1074 = vpop.f32.mrf.mxu0
      %v1075 = vadd.f32 %v784, %v1074
      %v1076 = vand.u32 %v800, 4294901760
      %v1077 = vsub.f32 %v800, %v1076
      %v1078 = vand.u32 %v1077, 4294901760
      %v1079 = vsub.f32 %v1077, %v1078
      %v1080 = vand.u32 %v1079, 4294901760
      %1081 = vmatmul.f32.gmra.mxu0 %v1080
      %v1082 = vpop.f32.mrf.mxu0
      %v1083 = vadd.f32 %v788, %v1082
      %v1084 = vand.u32 %v802, 4294901760
      %v1085 = vsub.f32 %v802, %v1084
      %v1086 = vand.u32 %v1085, 4294901760
      %v1087 = vsub.f32 %v1085, %v1086
      %v1088 = vand.u32 %v1087, 4294901760
      %1089 = vmatmul.f32.gmra.mxu0 %v1088
      %v1090 = vpop.f32.mrf.mxu0
      %v1091 = vadd.f32 %v792, %v1090
      %v1092 = vand.u32 %v804, 4294901760
      %v1093 = vsub.f32 %v804, %v1092
      %v1094 = vand.u32 %v1093, 4294901760
      %v1095 = vsub.f32 %v1093, %v1094
      %v1096 = vand.u32 %v1095, 4294901760
      %1097 = vmatmul.f32.gmra.mxu0 %v1096
      %v1098 = vpop.f32.mrf.mxu0
      %v1099 = vadd.f32 %v796, %v1098
      %1100 = vdwg.mxu0
      %1101 = vmatpush.msra.mxu0 0.0
      %1102 = vmatpush.msra.mxu0 0.0
      %1103 = vmatpush.msra.mxu0 0.0
      %1104 = vmatpush.msra.mxu0 0.0
      %1105 = vmatpush.msra.mxu0 0.0
      %1106 = vmatpush.msra.mxu0 0.0
      %1107 = vmatpush.msra.mxu0 0.0
      %1108 = vmatpush.msra.mxu0 0.0
      %1109 = vmatpush.msra.mxu0 0.0
      %1110 = vmatpush.msra.mxu0 0.0
      %1111 = vmatpush.msra.mxu0 0.0
      %1112 = vmatpush.msra.mxu0 0.0
      %1113 = vmatpush.msra.mxu0 0.0
      %1114 = vmatpush.msra.mxu0 0.0
      %1115 = vmatpush.msra.mxu0 0.0
      %v1116 = vand.u32 %v810, 4294901760
      %v1117 = vsub.f32 %v810, %v1116
      %v1118 = vand.u32 %v1117, 4294901760
      %v1119 = vsub.f32 %v1117, %v1118
      %v1120 = vand.u32 %v1119, 4294901760
      %1121 = vmatpush.msra.mxu0 %v1120
      %v1122 = vand.u32 %v798, 4294901760
      %1123 = vmatmul.f32.gmra.mxu0 %v1122
      %v1124 = vpop.f32.mrf.mxu0
      %v1125 = vadd.f32 %v1075, %v1124
      %v1126 = vand.u32 %v800, 4294901760
      %1127 = vmatmul.f32.gmra.mxu0 %v1126
      %v1128 = vpop.f32.mrf.mxu0
      %v1129 = vadd.f32 %v1083, %v1128
      %v1130 = vand.u32 %v802, 4294901760
      %1131 = vmatmul.f32.gmra.mxu0 %v1130
      %v1132 = vpop.f32.mrf.mxu0
      %v1133 = vadd.f32 %v1091, %v1132
      %v1134 = vand.u32 %v804, 4294901760
      %1135 = vmatmul.f32.gmra.mxu0 %v1134
      %v1136 = vpop.f32.mrf.mxu0
      %v1137 = vadd.f32 %v1099, %v1136
      %1138 = vdwg.mxu0
      %1139 = vmatpush.msra.mxu0 0.0
      %1140 = vmatpush.msra.mxu0 0.0
      %1141 = vmatpush.msra.mxu0 0.0
      %1142 = vmatpush.msra.mxu0 0.0
      %1143 = vmatpush.msra.mxu0 0.0
      %1144 = vmatpush.msra.mxu0 0.0
      %1145 = vmatpush.msra.mxu0 0.0
      %1146 = vmatpush.msra.mxu0 0.0
      %1147 = vmatpush.msra.mxu0 0.0
      %1148 = vmatpush.msra.mxu0 0.0
      %1149 = vmatpush.msra.mxu0 0.0
      %1150 = vmatpush.msra.mxu0 0.0
      %1151 = vmatpush.msra.mxu0 0.0
      %1152 = vmatpush.msra.mxu0 0.0
      %1153 = vmatpush.msra.mxu0 0.0
      %v1154 = vand.u32 %v810, 4294901760
      %v1155 = vsub.f32 %v810, %v1154
      %1156 = vmatpush.msra.mxu0 %v1155
      %v1157 = vand.u32 %v798, 4294901760
      %v1158 = vsub.f32 %v798, %v1157
      %1159 = vmatmul.f32.gmra.mxu0 %v1158
      %v1160 = vpop.f32.mrf.mxu0
      %v1161 = vadd.f32 %v1125, %v1160
      %v1162 = vand.u32 %v800, 4294901760
      %v1163 = vsub.f32 %v800, %v1162
      %1164 = vmatmul.f32.gmra.mxu0 %v1163
      %v1165 = vpop.f32.mrf.mxu0
      %v1166 = vadd.f32 %v1129, %v1165
      %v1167 = vand.u32 %v802, 4294901760
      %v1168 = vsub.f32 %v802, %v1167
      %1169 = vmatmul.f32.gmra.mxu0 %v1168
      %v1170 = vpop.f32.mrf.mxu0
      %v1171 = vadd.f32 %v1133, %v1170
      %v1172 = vand.u32 %v804, 4294901760
      %v1173 = vsub.f32 %v804, %v1172
      %1174 = vmatmul.f32.gmra.mxu0 %v1173
      %v1175 = vpop.f32.mrf.mxu0
      %v1176 = vadd.f32 %v1137, %v1175
      %1177 = vdwg.mxu0
      %1178 = vmatpush.msra.mxu0 0.0
      %1179 = vmatpush.msra.mxu0 0.0
      %1180 = vmatpush.msra.mxu0 0.0
      %1181 = vmatpush.msra.mxu0 0.0
      %1182 = vmatpush.msra.mxu0 0.0
      %1183 = vmatpush.msra.mxu0 0.0
      %1184 = vmatpush.msra.mxu0 0.0
      %1185 = vmatpush.msra.mxu0 0.0
      %1186 = vmatpush.msra.mxu0 0.0
      %1187 = vmatpush.msra.mxu0 0.0
      %1188 = vmatpush.msra.mxu0 0.0
      %1189 = vmatpush.msra.mxu0 0.0
      %1190 = vmatpush.msra.mxu0 0.0
      %1191 = vmatpush.msra.mxu0 0.0
      %1192 = vmatpush.msra.mxu0 0.0
      %v1193 = vand.u32 %v810, 4294901760
      %1194 = vmatpush.msra.mxu0 %v1193
      %v1195 = vand.u32 %v798, 4294901760
      %v1196 = vsub.f32 %v798, %v1195
      %v1197 = vand.u32 %v1196, 4294901760
      %1198 = vmatmul.f32.gmra.mxu0 %v1197
      %v1199 = vpop.f32.mrf.mxu0
      %v1200 = vadd.f32 %v1161, %v1199
      %v1201 = vand.u32 %v800, 4294901760
      %v1202 = vsub.f32 %v800, %v1201
      %v1203 = vand.u32 %v1202, 4294901760
      %1204 = vmatmul.f32.gmra.mxu0 %v1203
      %v1205 = vpop.f32.mrf.mxu0
      %v1206 = vadd.f32 %v1166, %v1205
      %v1207 = vand.u32 %v802, 4294901760
      %v1208 = vsub.f32 %v802, %v1207
      %v1209 = vand.u32 %v1208, 4294901760
      %1210 = vmatmul.f32.gmra.mxu0 %v1209
      %v1211 = vpop.f32.mrf.mxu0
      %v1212 = vadd.f32 %v1171, %v1211
      %v1213 = vand.u32 %v804, 4294901760
      %v1214 = vsub.f32 %v804, %v1213
      %v1215 = vand.u32 %v1214, 4294901760
      %1216 = vmatmul.f32.gmra.mxu0 %v1215
      %v1217 = vpop.f32.mrf.mxu0
      %v1218 = vadd.f32 %v1176, %v1217
      %1219 = vdwg.mxu0
      %1220 = vmatpush.msra.mxu0 0.0
      %1221 = vmatpush.msra.mxu0 0.0
      %1222 = vmatpush.msra.mxu0 0.0
      %1223 = vmatpush.msra.mxu0 0.0
      %1224 = vmatpush.msra.mxu0 0.0
      %1225 = vmatpush.msra.mxu0 0.0
      %1226 = vmatpush.msra.mxu0 0.0
      %1227 = vmatpush.msra.mxu0 0.0
      %1228 = vmatpush.msra.mxu0 0.0
      %1229 = vmatpush.msra.mxu0 0.0
      %1230 = vmatpush.msra.mxu0 0.0
      %1231 = vmatpush.msra.mxu0 0.0
      %1232 = vmatpush.msra.mxu0 0.0
      %1233 = vmatpush.msra.mxu0 0.0
      %1234 = vmatpush.msra.mxu0 0.0
      %v1235 = vand.u32 %v810, 4294901760
      %v1236 = vsub.f32 %v810, %v1235
      %v1237 = vand.u32 %v1236, 4294901760
      %1238 = vmatpush.msra.mxu0 %v1237
      %v1239 = vand.u32 %v798, 4294901760
      %1240 = vmatmul.f32.gmra.mxu0 %v1239
      %v1241 = vpop.f32.mrf.mxu0
      %v1242 = vadd.f32 %v1200, %v1241
      %v1243 = vand.u32 %v800, 4294901760
      %1244 = vmatmul.f32.gmra.mxu0 %v1243
      %v1245 = vpop.f32.mrf.mxu0
      %v1246 = vadd.f32 %v1206, %v1245
      %v1247 = vand.u32 %v802, 4294901760
      %1248 = vmatmul.f32.gmra.mxu0 %v1247
      %v1249 = vpop.f32.mrf.mxu0
      %v1250 = vadd.f32 %v1212, %v1249
      %v1251 = vand.u32 %v804, 4294901760
      %1252 = vmatmul.f32.gmra.mxu0 %v1251
      %v1253 = vpop.f32.mrf.mxu0
      %v1254 = vadd.f32 %v1218, %v1253
      %1255 = vdwg.mxu0
      %1256 = vmatpush.msra.mxu0 0.0
      %1257 = vmatpush.msra.mxu0 0.0
      %1258 = vmatpush.msra.mxu0 0.0
      %1259 = vmatpush.msra.mxu0 0.0
      %1260 = vmatpush.msra.mxu0 0.0
      %1261 = vmatpush.msra.mxu0 0.0
      %1262 = vmatpush.msra.mxu0 0.0
      %1263 = vmatpush.msra.mxu0 0.0
      %1264 = vmatpush.msra.mxu0 0.0
      %1265 = vmatpush.msra.mxu0 0.0
      %1266 = vmatpush.msra.mxu0 0.0
      %1267 = vmatpush.msra.mxu0 0.0
      %1268 = vmatpush.msra.mxu0 0.0
      %1269 = vmatpush.msra.mxu0 0.0
      %1270 = vmatpush.msra.mxu0 0.0
      %v1271 = vand.u32 %v810, 4294901760
      %1272 = vmatpush.msra.mxu0 %v1271
      %v1273 = vand.u32 %v798, 4294901760
      %1274 = vmatmul.f32.gmra.mxu0 %v1273
      %v1275 = vpop.f32.mrf.mxu0
      %v1276 = vadd.f32 %v1242, %v1275
      %v1277 = vand.u32 %v800, 4294901760
      %1278 = vmatmul.f32.gmra.mxu0 %v1277
      %v1279 = vpop.f32.mrf.mxu0
      %v1280 = vadd.f32 %v1246, %v1279
      %v1281 = vand.u32 %v802, 4294901760
      %1282 = vmatmul.f32.gmra.mxu0 %v1281
      %v1283 = vpop.f32.mrf.mxu0
      %v1284 = vadd.f32 %v1250, %v1283
      %v1285 = vand.u32 %v804, 4294901760
      %1286 = vmatmul.f32.gmra.mxu0 %v1285
      %v1287 = vpop.f32.mrf.mxu0
      %v1288 = vadd.f32 %v1254, %v1287
      %1289 = vdwg.mxu0
      %v1290 = vld [vmem:[%s219] sm:$0xff]
      %v1291 = vld [vmem:[%s219 + $0x8] sm:$0xf]
      %vm1292 = vcmp.ge.s32.totalorder %v250, 4294967295
      %vm1293 = vcmp.ge.s32.totalorder %v251, 4294967295
      %vm1294 = vcmp.lt.s32.totalorder %v250, 15
      %vm1295 = vcmp.lt.s32.totalorder %v251, 15
      %vm1296 = vmand %vm1292, %vm1294
      %vm1297 = vmand %vm1293, %vm1295
      %v1298 = vsel %vm1296, 1, 0
      %v1299 = vsel %vm1297, 1, 0
      %vm1300 = vcmp.eq.s32.totalorder %v1298, 1
      %vm1301 = vcmp.eq.s32.totalorder %v1299, 1
      %1304 = vst [vmem:[#allocation1] ss:$2 sm:$0xff] %v1290
      %s1305 = scalar_lea.vmem [#allocation1], 16
      %1306 = vst [vmem:[%s1305] ss:$2 sm:$0xff] %v1291
      %v1307 = vld.sshfl [vmem:[#allocation1] sm:$0xff pattern:$0x75316420]
      %v1308 = vld.sshfl [vmem:[#allocation1 + $0x8] sm:$0xff pattern:$0x75316420]
      %v1309 = vld.sshfl [vmem:[#allocation1 + $0x10] sm:$0xff pattern:$0x75316420]
      %1310 = vrot.lane.b32.xlu0 %v1307, 126
      %v1311 = vpop.permute.xlu0 %1310
      %1312 = vrot.lane.b32.xlu0 %v1308, 126
      %v1313 = vpop.permute.xlu0 %1312
      %1314 = vrot.lane.b32.xlu0 %v1309, 126
      %v1315 = vpop.permute.xlu0 %1314
      %vm1316 = vcmask 1031168
      %v1317 = vsel %vm1316, %v1311, %v1313
      %v1318 = vsel %vm1316, %v1313, %v1315
      %v1321 = vsel %vm1300, %v1317, 0.0
      %v1322 = vsel %vm1301, %v1318, 0.0
      %v1323 = vld [vmem:[%s1] sm:$0xff]
      %v1324 = vld [vmem:[%s1 + $0x8] sm:$0xff]
      %v1325 = vld [vmem:[%s1 + $0x10] sm:$0xff]
      %v1326 = vld [vmem:[%s1 + $0x18] sm:$0xff]
      %1331 = vrot.lane.b32.xlu0 %v1323, 120
      %v1332 = vpop.permute.xlu0 %1331
      %1333 = vrot.lane.b32.xlu0 %v1324, 120
      %v1334 = vpop.permute.xlu0 %1333
      %1335 = vrot.lane.b32.xlu0 %v1325, 120
      %v1336 = vpop.permute.xlu0 %1335
      %1337 = vrot.lane.b32.xlu0 %v1326, 120
      %v1338 = vpop.permute.xlu0 %1337
      %v1339 = vsel %vm306, %v1332, 0
      %v1341 = vsel %vm306, %v1334, 0
      %v1343 = vsel %vm306, %v1336, 0
      %v1345 = vsel %vm306, %v1338, 0
      %v1348 = vsel %vm315, %v1321, 0
      %v1351 = vsel %vm315, %v1322, 0
      %1353 = vmatpush.msra.mxu0 0.0
      %1354 = vmatpush.msra.mxu0 0.0
      %1355 = vmatpush.msra.mxu0 0.0
      %1356 = vmatpush.msra.mxu0 0.0
      %1357 = vmatpush.msra.mxu0 0.0
      %1358 = vmatpush.msra.mxu0 0.0
      %1359 = vmatpush.msra.mxu0 0.0
      %1360 = vmatpush.msra.mxu0 0.0
      %1361 = vmatpush.msra.mxu0 0.0
      %1362 = vmatpush.msra.mxu0 0.0
      %1363 = vmatpush.msra.mxu0 0.0
      %1364 = vmatpush.msra.mxu0 0.0
      %1365 = vmatpush.msra.mxu0 0.0
      %1366 = vmatpush.msra.mxu0 0.0
      %1367 = vmatpush.msra.mxu0 0.0
      %v1368 = vand.u32 %v1348, 4294901760
      %1369 = vmatpush.msra.mxu0 %v1368
      %v1370 = vand.u32 %v1339, 4294901760
      %v1371 = vsub.f32 %v1339, %v1370
      %v1372 = vand.u32 %v1371, 4294901760
      %v1373 = vsub.f32 %v1371, %v1372
      %v1374 = vand.u32 %v1373, 4294901760
      %1375 = vmatmul.f32.gmra.mxu0 %v1374
      %v1376 = vpop.f32.mrf.mxu0
      %v1377 = vadd.f32 0.0, %v1376
      %v1378 = vand.u32 %v1341, 4294901760
      %v1379 = vsub.f32 %v1341, %v1378
      %v1380 = vand.u32 %v1379, 4294901760
      %v1381 = vsub.f32 %v1379, %v1380
      %v1382 = vand.u32 %v1381, 4294901760
      %1383 = vmatmul.f32.gmra.mxu0 %v1382
      %v1384 = vpop.f32.mrf.mxu0
      %v1385 = vadd.f32 0.0, %v1384
      %v1386 = vand.u32 %v1343, 4294901760
      %v1387 = vsub.f32 %v1343, %v1386
      %v1388 = vand.u32 %v1387, 4294901760
      %v1389 = vsub.f32 %v1387, %v1388
      %v1390 = vand.u32 %v1389, 4294901760
      %1391 = vmatmul.f32.gmra.mxu0 %v1390
      %v1392 = vpop.f32.mrf.mxu0
      %v1393 = vadd.f32 0.0, %v1392
      %v1394 = vand.u32 %v1345, 4294901760
      %v1395 = vsub.f32 %v1345, %v1394
      %v1396 = vand.u32 %v1395, 4294901760
      %v1397 = vsub.f32 %v1395, %v1396
      %v1398 = vand.u32 %v1397, 4294901760
      %1399 = vmatmul.f32.gmra.mxu0 %v1398
      %v1400 = vpop.f32.mrf.mxu0
      %v1401 = vadd.f32 0.0, %v1400
      %1402 = vdwg.mxu0
      %1403 = vmatpush.msra.mxu0 0.0
      %1404 = vmatpush.msra.mxu0 0.0
      %1405 = vmatpush.msra.mxu0 0.0
      %1406 = vmatpush.msra.mxu0 0.0
      %1407 = vmatpush.msra.mxu0 0.0
      %1408 = vmatpush.msra.mxu0 0.0
      %1409 = vmatpush.msra.mxu0 0.0
      %1410 = vmatpush.msra.mxu0 0.0
      %1411 = vmatpush.msra.mxu0 0.0
      %1412 = vmatpush.msra.mxu0 0.0
      %1413 = vmatpush.msra.mxu0 0.0
      %1414 = vmatpush.msra.mxu0 0.0
      %1415 = vmatpush.msra.mxu0 0.0
      %1416 = vmatpush.msra.mxu0 0.0
      %1417 = vmatpush.msra.mxu0 0.0
      %v1418 = vand.u32 %v1348, 4294901760
      %v1419 = vsub.f32 %v1348, %v1418
      %v1420 = vand.u32 %v1419, 4294901760
      %v1421 = vsub.f32 %v1419, %v1420
      %v1422 = vand.u32 %v1421, 4294901760
      %1423 = vmatpush.msra.mxu0 %v1422
      %v1424 = vand.u32 %v1339, 4294901760
      %1425 = vmatmul.f32.gmra.mxu0 %v1424
      %v1426 = vpop.f32.mrf.mxu0
      %v1427 = vadd.f32 %v1377, %v1426
      %v1428 = vand.u32 %v1341, 4294901760
      %1429 = vmatmul.f32.gmra.mxu0 %v1428
      %v1430 = vpop.f32.mrf.mxu0
      %v1431 = vadd.f32 %v1385, %v1430
      %v1432 = vand.u32 %v1343, 4294901760
      %1433 = vmatmul.f32.gmra.mxu0 %v1432
      %v1434 = vpop.f32.mrf.mxu0
      %v1435 = vadd.f32 %v1393, %v1434
      %v1436 = vand.u32 %v1345, 4294901760
      %1437 = vmatmul.f32.gmra.mxu0 %v1436
      %v1438 = vpop.f32.mrf.mxu0
      %v1439 = vadd.f32 %v1401, %v1438
      %1440 = vdwg.mxu0
      %1441 = vmatpush.msra.mxu0 0.0
      %1442 = vmatpush.msra.mxu0 0.0
      %1443 = vmatpush.msra.mxu0 0.0
      %1444 = vmatpush.msra.mxu0 0.0
      %1445 = vmatpush.msra.mxu0 0.0
      %1446 = vmatpush.msra.mxu0 0.0
      %1447 = vmatpush.msra.mxu0 0.0
      %1448 = vmatpush.msra.mxu0 0.0
      %1449 = vmatpush.msra.mxu0 0.0
      %1450 = vmatpush.msra.mxu0 0.0
      %1451 = vmatpush.msra.mxu0 0.0
      %1452 = vmatpush.msra.mxu0 0.0
      %1453 = vmatpush.msra.mxu0 0.0
      %1454 = vmatpush.msra.mxu0 0.0
      %1455 = vmatpush.msra.mxu0 0.0
      %v1456 = vand.u32 %v1348, 4294901760
      %v1457 = vsub.f32 %v1348, %v1456
      %1458 = vmatpush.msra.mxu0 %v1457
      %v1459 = vand.u32 %v1339, 4294901760
      %v1460 = vsub.f32 %v1339, %v1459
      %1461 = vmatmul.f32.gmra.mxu0 %v1460
      %v1462 = vpop.f32.mrf.mxu0
      %v1463 = vadd.f32 %v1427, %v1462
      %v1464 = vand.u32 %v1341, 4294901760
      %v1465 = vsub.f32 %v1341, %v1464
      %1466 = vmatmul.f32.gmra.mxu0 %v1465
      %v1467 = vpop.f32.mrf.mxu0
      %v1468 = vadd.f32 %v1431, %v1467
      %v1469 = vand.u32 %v1343, 4294901760
      %v1470 = vsub.f32 %v1343, %v1469
      %1471 = vmatmul.f32.gmra.mxu0 %v1470
      %v1472 = vpop.f32.mrf.mxu0
      %v1473 = vadd.f32 %v1435, %v1472
      %v1474 = vand.u32 %v1345, 4294901760
      %v1475 = vsub.f32 %v1345, %v1474
      %1476 = vmatmul.f32.gmra.mxu0 %v1475
      %v1477 = vpop.f32.mrf.mxu0
      %v1478 = vadd.f32 %v1439, %v1477
      %1479 = vdwg.mxu0
      %1480 = vmatpush.msra.mxu0 0.0
      %1481 = vmatpush.msra.mxu0 0.0
      %1482 = vmatpush.msra.mxu0 0.0
      %1483 = vmatpush.msra.mxu0 0.0
      %1484 = vmatpush.msra.mxu0 0.0
      %1485 = vmatpush.msra.mxu0 0.0
      %1486 = vmatpush.msra.mxu0 0.0
      %1487 = vmatpush.msra.mxu0 0.0
      %1488 = vmatpush.msra.mxu0 0.0
      %1489 = vmatpush.msra.mxu0 0.0
      %1490 = vmatpush.msra.mxu0 0.0
      %1491 = vmatpush.msra.mxu0 0.0
      %1492 = vmatpush.msra.mxu0 0.0
      %1493 = vmatpush.msra.mxu0 0.0
      %1494 = vmatpush.msra.mxu0 0.0
      %v1495 = vand.u32 %v1348, 4294901760
      %1496 = vmatpush.msra.mxu0 %v1495
      %v1497 = vand.u32 %v1339, 4294901760
      %v1498 = vsub.f32 %v1339, %v1497
      %v1499 = vand.u32 %v1498, 4294901760
      %1500 = vmatmul.f32.gmra.mxu0 %v1499
      %v1501 = vpop.f32.mrf.mxu0
      %v1502 = vadd.f32 %v1463, %v1501
      %v1503 = vand.u32 %v1341, 4294901760
      %v1504 = vsub.f32 %v1341, %v1503
      %v1505 = vand.u32 %v1504, 4294901760
      %1506 = vmatmul.f32.gmra.mxu0 %v1505
      %v1507 = vpop.f32.mrf.mxu0
      %v1508 = vadd.f32 %v1468, %v1507
      %v1509 = vand.u32 %v1343, 4294901760
      %v1510 = vsub.f32 %v1343, %v1509
      %v1511 = vand.u32 %v1510, 4294901760
      %1512 = vmatmul.f32.gmra.mxu0 %v1511
      %v1513 = vpop.f32.mrf.mxu0
      %v1514 = vadd.f32 %v1473, %v1513
      %v1515 = vand.u32 %v1345, 4294901760
      %v1516 = vsub.f32 %v1345, %v1515
      %v1517 = vand.u32 %v1516, 4294901760
      %1518 = vmatmul.f32.gmra.mxu0 %v1517
      %v1519 = vpop.f32.mrf.mxu0
      %v1520 = vadd.f32 %v1478, %v1519
      %1521 = vdwg.mxu0
      %1522 = vmatpush.msra.mxu0 0.0
      %1523 = vmatpush.msra.mxu0 0.0
      %1524 = vmatpush.msra.mxu0 0.0
      %1525 = vmatpush.msra.mxu0 0.0
      %1526 = vmatpush.msra.mxu0 0.0
      %1527 = vmatpush.msra.mxu0 0.0
      %1528 = vmatpush.msra.mxu0 0.0
      %1529 = vmatpush.msra.mxu0 0.0
      %1530 = vmatpush.msra.mxu0 0.0
      %1531 = vmatpush.msra.mxu0 0.0
      %1532 = vmatpush.msra.mxu0 0.0
      %1533 = vmatpush.msra.mxu0 0.0
      %1534 = vmatpush.msra.mxu0 0.0
      %1535 = vmatpush.msra.mxu0 0.0
      %1536 = vmatpush.msra.mxu0 0.0
      %v1537 = vand.u32 %v1348, 4294901760
      %v1538 = vsub.f32 %v1348, %v1537
      %v1539 = vand.u32 %v1538, 4294901760
      %1540 = vmatpush.msra.mxu0 %v1539
      %v1541 = vand.u32 %v1339, 4294901760
      %1542 = vmatmul.f32.gmra.mxu0 %v1541
      %v1543 = vpop.f32.mrf.mxu0
      %v1544 = vadd.f32 %v1502, %v1543
      %v1545 = vand.u32 %v1341, 4294901760
      %1546 = vmatmul.f32.gmra.mxu0 %v1545
      %v1547 = vpop.f32.mrf.mxu0
      %v1548 = vadd.f32 %v1508, %v1547
      %v1549 = vand.u32 %v1343, 4294901760
      %1550 = vmatmul.f32.gmra.mxu0 %v1549
      %v1551 = vpop.f32.mrf.mxu0
      %v1552 = vadd.f32 %v1514, %v1551
      %v1553 = vand.u32 %v1345, 4294901760
      %1554 = vmatmul.f32.gmra.mxu0 %v1553
      %v1555 = vpop.f32.mrf.mxu0
      %v1556 = vadd.f32 %v1520, %v1555
      %1557 = vdwg.mxu0
      %1558 = vmatpush.msra.mxu0 0.0
      %1559 = vmatpush.msra.mxu0 0.0
      %1560 = vmatpush.msra.mxu0 0.0
      %1561 = vmatpush.msra.mxu0 0.0
      %1562 = vmatpush.msra.mxu0 0.0
      %1563 = vmatpush.msra.mxu0 0.0
      %1564 = vmatpush.msra.mxu0 0.0
      %1565 = vmatpush.msra.mxu0 0.0
      %1566 = vmatpush.msra.mxu0 0.0
      %1567 = vmatpush.msra.mxu0 0.0
      %1568 = vmatpush.msra.mxu0 0.0
      %1569 = vmatpush.msra.mxu0 0.0
      %1570 = vmatpush.msra.mxu0 0.0
      %1571 = vmatpush.msra.mxu0 0.0
      %1572 = vmatpush.msra.mxu0 0.0
      %v1573 = vand.u32 %v1348, 4294901760
      %1574 = vmatpush.msra.mxu0 %v1573
      %v1575 = vand.u32 %v1339, 4294901760
      %1576 = vmatmul.f32.gmra.mxu0 %v1575
      %v1577 = vpop.f32.mrf.mxu0
      %v1578 = vadd.f32 %v1544, %v1577
      %v1579 = vand.u32 %v1341, 4294901760
      %1580 = vmatmul.f32.gmra.mxu0 %v1579
      %v1581 = vpop.f32.mrf.mxu0
      %v1582 = vadd.f32 %v1548, %v1581
      %v1583 = vand.u32 %v1343, 4294901760
      %1584 = vmatmul.f32.gmra.mxu0 %v1583
      %v1585 = vpop.f32.mrf.mxu0
      %v1586 = vadd.f32 %v1552, %v1585
      %v1587 = vand.u32 %v1345, 4294901760
      %1588 = vmatmul.f32.gmra.mxu0 %v1587
      %v1589 = vpop.f32.mrf.mxu0
      %v1590 = vadd.f32 %v1556, %v1589
      %1591 = vdwg.mxu0
      %1592 = vmatpush.msra.mxu0 0.0
      %1593 = vmatpush.msra.mxu0 0.0
      %1594 = vmatpush.msra.mxu0 0.0
      %1595 = vmatpush.msra.mxu0 0.0
      %1596 = vmatpush.msra.mxu0 0.0
      %1597 = vmatpush.msra.mxu0 0.0
      %1598 = vmatpush.msra.mxu0 0.0
      %1599 = vmatpush.msra.mxu0 0.0
      %1600 = vmatpush.msra.mxu0 0.0
      %1601 = vmatpush.msra.mxu0 0.0
      %1602 = vmatpush.msra.mxu0 0.0
      %1603 = vmatpush.msra.mxu0 0.0
      %1604 = vmatpush.msra.mxu0 0.0
      %1605 = vmatpush.msra.mxu0 0.0
      %1606 = vmatpush.msra.mxu0 0.0
      %v1607 = vand.u32 %v1351, 4294901760
      %1608 = vmatpush.msra.mxu0 %v1607
      %v1609 = vand.u32 %v1339, 4294901760
      %v1610 = vsub.f32 %v1339, %v1609
      %v1611 = vand.u32 %v1610, 4294901760
      %v1612 = vsub.f32 %v1610, %v1611
      %v1613 = vand.u32 %v1612, 4294901760
      %1614 = vmatmul.f32.gmra.mxu0 %v1613
      %v1615 = vpop.f32.mrf.mxu0
      %v1616 = vadd.f32 0.0, %v1615
      %v1617 = vand.u32 %v1341, 4294901760
      %v1618 = vsub.f32 %v1341, %v1617
      %v1619 = vand.u32 %v1618, 4294901760
      %v1620 = vsub.f32 %v1618, %v1619
      %v1621 = vand.u32 %v1620, 4294901760
      %1622 = vmatmul.f32.gmra.mxu0 %v1621
      %v1623 = vpop.f32.mrf.mxu0
      %v1624 = vadd.f32 0.0, %v1623
      %v1625 = vand.u32 %v1343, 4294901760
      %v1626 = vsub.f32 %v1343, %v1625
      %v1627 = vand.u32 %v1626, 4294901760
      %v1628 = vsub.f32 %v1626, %v1627
      %v1629 = vand.u32 %v1628, 4294901760
      %1630 = vmatmul.f32.gmra.mxu0 %v1629
      %v1631 = vpop.f32.mrf.mxu0
      %v1632 = vadd.f32 0.0, %v1631
      %v1633 = vand.u32 %v1345, 4294901760
      %v1634 = vsub.f32 %v1345, %v1633
      %v1635 = vand.u32 %v1634, 4294901760
      %v1636 = vsub.f32 %v1634, %v1635
      %v1637 = vand.u32 %v1636, 4294901760
      %1638 = vmatmul.f32.gmra.mxu0 %v1637
      %v1639 = vpop.f32.mrf.mxu0
      %v1640 = vadd.f32 0.0, %v1639
      %1641 = vdwg.mxu0
      %1642 = vmatpush.msra.mxu0 0.0
      %1643 = vmatpush.msra.mxu0 0.0
      %1644 = vmatpush.msra.mxu0 0.0
      %1645 = vmatpush.msra.mxu0 0.0
      %1646 = vmatpush.msra.mxu0 0.0
      %1647 = vmatpush.msra.mxu0 0.0
      %1648 = vmatpush.msra.mxu0 0.0
      %1649 = vmatpush.msra.mxu0 0.0
      %1650 = vmatpush.msra.mxu0 0.0
      %1651 = vmatpush.msra.mxu0 0.0
      %1652 = vmatpush.msra.mxu0 0.0
      %1653 = vmatpush.msra.mxu0 0.0
      %1654 = vmatpush.msra.mxu0 0.0
      %1655 = vmatpush.msra.mxu0 0.0
      %1656 = vmatpush.msra.mxu0 0.0
      %v1657 = vand.u32 %v1351, 4294901760
      %v1658 = vsub.f32 %v1351, %v1657
      %v1659 = vand.u32 %v1658, 4294901760
      %v1660 = vsub.f32 %v1658, %v1659
      %v1661 = vand.u32 %v1660, 4294901760
      %1662 = vmatpush.msra.mxu0 %v1661
      %v1663 = vand.u32 %v1339, 4294901760
      %1664 = vmatmul.f32.gmra.mxu0 %v1663
      %v1665 = vpop.f32.mrf.mxu0
      %v1666 = vadd.f32 %v1616, %v1665
      %v1667 = vand.u32 %v1341, 4294901760
      %1668 = vmatmul.f32.gmra.mxu0 %v1667
      %v1669 = vpop.f32.mrf.mxu0
      %v1670 = vadd.f32 %v1624, %v1669
      %v1671 = vand.u32 %v1343, 4294901760
      %1672 = vmatmul.f32.gmra.mxu0 %v1671
      %v1673 = vpop.f32.mrf.mxu0
      %v1674 = vadd.f32 %v1632, %v1673
      %v1675 = vand.u32 %v1345, 4294901760
      %1676 = vmatmul.f32.gmra.mxu0 %v1675
      %v1677 = vpop.f32.mrf.mxu0
      %v1678 = vadd.f32 %v1640, %v1677
      %1679 = vdwg.mxu0
      %1680 = vmatpush.msra.mxu0 0.0
      %1681 = vmatpush.msra.mxu0 0.0
      %1682 = vmatpush.msra.mxu0 0.0
      %1683 = vmatpush.msra.mxu0 0.0
      %1684 = vmatpush.msra.mxu0 0.0
      %1685 = vmatpush.msra.mxu0 0.0
      %1686 = vmatpush.msra.mxu0 0.0
      %1687 = vmatpush.msra.mxu0 0.0
      %1688 = vmatpush.msra.mxu0 0.0
      %1689 = vmatpush.msra.mxu0 0.0
      %1690 = vmatpush.msra.mxu0 0.0
      %1691 = vmatpush.msra.mxu0 0.0
      %1692 = vmatpush.msra.mxu0 0.0
      %1693 = vmatpush.msra.mxu0 0.0
      %1694 = vmatpush.msra.mxu0 0.0
      %v1695 = vand.u32 %v1351, 4294901760
      %v1696 = vsub.f32 %v1351, %v1695
      %1697 = vmatpush.msra.mxu0 %v1696
      %v1698 = vand.u32 %v1339, 4294901760
      %v1699 = vsub.f32 %v1339, %v1698
      %1700 = vmatmul.f32.gmra.mxu0 %v1699
      %v1701 = vpop.f32.mrf.mxu0
      %v1702 = vadd.f32 %v1666, %v1701
      %v1703 = vand.u32 %v1341, 4294901760
      %v1704 = vsub.f32 %v1341, %v1703
      %1705 = vmatmul.f32.gmra.mxu0 %v1704
      %v1706 = vpop.f32.mrf.mxu0
      %v1707 = vadd.f32 %v1670, %v1706
      %v1708 = vand.u32 %v1343, 4294901760
      %v1709 = vsub.f32 %v1343, %v1708
      %1710 = vmatmul.f32.gmra.mxu0 %v1709
      %v1711 = vpop.f32.mrf.mxu0
      %v1712 = vadd.f32 %v1674, %v1711
      %v1713 = vand.u32 %v1345, 4294901760
      %v1714 = vsub.f32 %v1345, %v1713
      %1715 = vmatmul.f32.gmra.mxu0 %v1714
      %v1716 = vpop.f32.mrf.mxu0
      %v1717 = vadd.f32 %v1678, %v1716
      %1718 = vdwg.mxu0
      %1719 = vmatpush.msra.mxu0 0.0
      %1720 = vmatpush.msra.mxu0 0.0
      %1721 = vmatpush.msra.mxu0 0.0
      %1722 = vmatpush.msra.mxu0 0.0
      %1723 = vmatpush.msra.mxu0 0.0
      %1724 = vmatpush.msra.mxu0 0.0
      %1725 = vmatpush.msra.mxu0 0.0
      %1726 = vmatpush.msra.mxu0 0.0
      %1727 = vmatpush.msra.mxu0 0.0
      %1728 = vmatpush.msra.mxu0 0.0
      %1729 = vmatpush.msra.mxu0 0.0
      %1730 = vmatpush.msra.mxu0 0.0
      %1731 = vmatpush.msra.mxu0 0.0
      %1732 = vmatpush.msra.mxu0 0.0
      %1733 = vmatpush.msra.mxu0 0.0
      %v1734 = vand.u32 %v1351, 4294901760
      %1735 = vmatpush.msra.mxu0 %v1734
      %v1736 = vand.u32 %v1339, 4294901760
      %v1737 = vsub.f32 %v1339, %v1736
      %v1738 = vand.u32 %v1737, 4294901760
      %1739 = vmatmul.f32.gmra.mxu0 %v1738
      %v1740 = vpop.f32.mrf.mxu0
      %v1741 = vadd.f32 %v1702, %v1740
      %v1742 = vand.u32 %v1341, 4294901760
      %v1743 = vsub.f32 %v1341, %v1742
      %v1744 = vand.u32 %v1743, 4294901760
      %1745 = vmatmul.f32.gmra.mxu0 %v1744
      %v1746 = vpop.f32.mrf.mxu0
      %v1747 = vadd.f32 %v1707, %v1746
      %v1748 = vand.u32 %v1343, 4294901760
      %v1749 = vsub.f32 %v1343, %v1748
      %v1750 = vand.u32 %v1749, 4294901760
      %1751 = vmatmul.f32.gmra.mxu0 %v1750
      %v1752 = vpop.f32.mrf.mxu0
      %v1753 = vadd.f32 %v1712, %v1752
      %v1754 = vand.u32 %v1345, 4294901760
      %v1755 = vsub.f32 %v1345, %v1754
      %v1756 = vand.u32 %v1755, 4294901760
      %1757 = vmatmul.f32.gmra.mxu0 %v1756
      %v1758 = vpop.f32.mrf.mxu0
      %v1759 = vadd.f32 %v1717, %v1758
      %1760 = vdwg.mxu0
      %1761 = vmatpush.msra.mxu0 0.0
      %1762 = vmatpush.msra.mxu0 0.0
      %1763 = vmatpush.msra.mxu0 0.0
      %1764 = vmatpush.msra.mxu0 0.0
      %1765 = vmatpush.msra.mxu0 0.0
      %1766 = vmatpush.msra.mxu0 0.0
      %1767 = vmatpush.msra.mxu0 0.0
      %1768 = vmatpush.msra.mxu0 0.0
      %1769 = vmatpush.msra.mxu0 0.0
      %1770 = vmatpush.msra.mxu0 0.0
      %1771 = vmatpush.msra.mxu0 0.0
      %1772 = vmatpush.msra.mxu0 0.0
      %1773 = vmatpush.msra.mxu0 0.0
      %1774 = vmatpush.msra.mxu0 0.0
      %1775 = vmatpush.msra.mxu0 0.0
      %v1776 = vand.u32 %v1351, 4294901760
      %v1777 = vsub.f32 %v1351, %v1776
      %v1778 = vand.u32 %v1777, 4294901760
      %1779 = vmatpush.msra.mxu0 %v1778
      %v1780 = vand.u32 %v1339, 4294901760
      %1781 = vmatmul.f32.gmra.mxu0 %v1780
      %v1782 = vpop.f32.mrf.mxu0
      %v1783 = vadd.f32 %v1741, %v1782
      %v1784 = vand.u32 %v1341, 4294901760
      %1785 = vmatmul.f32.gmra.mxu0 %v1784
      %v1786 = vpop.f32.mrf.mxu0
      %v1787 = vadd.f32 %v1747, %v1786
      %v1788 = vand.u32 %v1343, 4294901760
      %1789 = vmatmul.f32.gmra.mxu0 %v1788
      %v1790 = vpop.f32.mrf.mxu0
      %v1791 = vadd.f32 %v1753, %v1790
      %v1792 = vand.u32 %v1345, 4294901760
      %1793 = vmatmul.f32.gmra.mxu0 %v1792
      %v1794 = vpop.f32.mrf.mxu0
      %v1795 = vadd.f32 %v1759, %v1794
      %1796 = vdwg.mxu0
      %1797 = vmatpush.msra.mxu0 0.0
      %1798 = vmatpush.msra.mxu0 0.0
      %1799 = vmatpush.msra.mxu0 0.0
      %1800 = vmatpush.msra.mxu0 0.0
      %1801 = vmatpush.msra.mxu0 0.0
      %1802 = vmatpush.msra.mxu0 0.0
      %1803 = vmatpush.msra.mxu0 0.0
      %1804 = vmatpush.msra.mxu0 0.0
      %1805 = vmatpush.msra.mxu0 0.0
      %1806 = vmatpush.msra.mxu0 0.0
      %1807 = vmatpush.msra.mxu0 0.0
      %1808 = vmatpush.msra.mxu0 0.0
      %1809 = vmatpush.msra.mxu0 0.0
      %1810 = vmatpush.msra.mxu0 0.0
      %1811 = vmatpush.msra.mxu0 0.0
      %v1812 = vand.u32 %v1351, 4294901760
      %1813 = vmatpush.msra.mxu0 %v1812
      %v1814 = vand.u32 %v1339, 4294901760
      %1815 = vmatmul.f32.gmra.mxu0 %v1814
      %v1816 = vpop.f32.mrf.mxu0
      %v1817 = vadd.f32 %v1783, %v1816
      %v1818 = vand.u32 %v1341, 4294901760
      %1819 = vmatmul.f32.gmra.mxu0 %v1818
      %v1820 = vpop.f32.mrf.mxu0
      %v1821 = vadd.f32 %v1787, %v1820
      %v1822 = vand.u32 %v1343, 4294901760
      %1823 = vmatmul.f32.gmra.mxu0 %v1822
      %v1824 = vpop.f32.mrf.mxu0
      %v1825 = vadd.f32 %v1791, %v1824
      %v1826 = vand.u32 %v1345, 4294901760
      %1827 = vmatmul.f32.gmra.mxu0 %v1826
      %v1828 = vpop.f32.mrf.mxu0
      %v1829 = vadd.f32 %v1795, %v1828
      %1830 = vdwg.mxu0
      %v1831 = vadd.f32 %v1037, %v1578
      %v1832 = vadd.f32 %v1276, %v1817
      %v1833 = vadd.f32 %v1041, %v1582
      %v1834 = vadd.f32 %v1280, %v1821
      %v1835 = vadd.f32 %v1045, %v1586
      %v1836 = vadd.f32 %v1284, %v1825
      %v1837 = vadd.f32 %v1049, %v1590
      %v1838 = vadd.f32 %v1288, %v1829
      %v1839 = vld [vmem:[%s219] sm:$0xff]
      %v1840 = vld [vmem:[%s219 + $0x8] sm:$0xf]
      %1843 = vst [vmem:[#allocation1] ss:$2 sm:$0xff] %v1839
      %s1844 = scalar_lea.vmem [#allocation1], 16
      %1845 = vst [vmem:[%s1844] ss:$2 sm:$0xff] %v1840
      %v1846 = vld.sshfl [vmem:[#allocation1] sm:$0xff pattern:$0x75316420]
      %v1847 = vld.sshfl [vmem:[#allocation1 + $0x8] sm:$0xff pattern:$0x75316420]
      %v1848 = vld.sshfl [vmem:[#allocation1 + $0x10] sm:$0xff pattern:$0x75316420]
      %1849 = vrot.lane.b32.xlu0 %v1846, 112
      %v1850 = vpop.permute.xlu0 %1849
      %1851 = vrot.lane.b32.xlu0 %v1847, 112
      %v1852 = vpop.permute.xlu0 %1851
      %1853 = vrot.lane.b32.xlu0 %v1848, 112
      %v1854 = vpop.permute.xlu0 %1853
      %vm1855 = vcmask 916480
      %v1856 = vsel %vm1855, %v1850, %v1852
      %v1857 = vsel %vm1855, %v1852, %v1854
      %v1860 = vsel %vm261, %v1856, 0.0
      %v1861 = vsel %vm262, %v1857, 0.0
      %v1862 = vld [vmem:[%s1] sm:$0xff]
      %v1863 = vld [vmem:[%s1 + $0x8] sm:$0xff]
      %v1864 = vld [vmem:[%s1 + $0x10] sm:$0xff]
      %v1865 = vld [vmem:[%s1 + $0x18] sm:$0xff]
      %1870 = vrot.lane.b32.xlu0 %v1862, 116
      %v1871 = vpop.permute.xlu0 %1870
      %1872 = vrot.lane.b32.xlu0 %v1863, 116
      %v1873 = vpop.permute.xlu0 %1872
      %1874 = vrot.lane.b32.xlu0 %v1864, 116
      %v1875 = vpop.permute.xlu0 %1874
      %1876 = vrot.lane.b32.xlu0 %v1865, 116
      %v1877 = vpop.permute.xlu0 %1876
      %v1878 = vsel %vm306, %v1871, 0
      %v1880 = vsel %vm306, %v1873, 0
      %v1882 = vsel %vm306, %v1875, 0
      %v1884 = vsel %vm306, %v1877, 0
      %v1887 = vsel %vm315, %v1860, 0
      %v1890 = vsel %vm315, %v1861, 0
      %1892 = vmatpush.msra.mxu0 0.0
      %1893 = vmatpush.msra.mxu0 0.0
      %1894 = vmatpush.msra.mxu0 0.0
      %1895 = vmatpush.msra.mxu0 0.0
      %1896 = vmatpush.msra.mxu0 0.0
      %1897 = vmatpush.msra.mxu0 0.0
      %1898 = vmatpush.msra.mxu0 0.0
      %1899 = vmatpush.msra.mxu0 0.0
      %1900 = vmatpush.msra.mxu0 0.0
      %1901 = vmatpush.msra.mxu0 0.0
      %1902 = vmatpush.msra.mxu0 0.0
      %1903 = vmatpush.msra.mxu0 0.0
      %1904 = vmatpush.msra.mxu0 0.0
      %1905 = vmatpush.msra.mxu0 0.0
      %1906 = vmatpush.msra.mxu0 0.0
      %v1907 = vand.u32 %v1887, 4294901760
      %1908 = vmatpush.msra.mxu0 %v1907
      %v1909 = vand.u32 %v1878, 4294901760
      %v1910 = vsub.f32 %v1878, %v1909
      %v1911 = vand.u32 %v1910, 4294901760
      %v1912 = vsub.f32 %v1910, %v1911
      %v1913 = vand.u32 %v1912, 4294901760
      %1914 = vmatmul.f32.gmra.mxu0 %v1913
      %v1915 = vpop.f32.mrf.mxu0
      %v1916 = vadd.f32 0.0, %v1915
      %v1917 = vand.u32 %v1880, 4294901760
      %v1918 = vsub.f32 %v1880, %v1917
      %v1919 = vand.u32 %v1918, 4294901760
      %v1920 = vsub.f32 %v1918, %v1919
      %v1921 = vand.u32 %v1920, 4294901760
      %1922 = vmatmul.f32.gmra.mxu0 %v1921
      %v1923 = vpop.f32.mrf.mxu0
      %v1924 = vadd.f32 0.0, %v1923
      %v1925 = vand.u32 %v1882, 4294901760
      %v1926 = vsub.f32 %v1882, %v1925
      %v1927 = vand.u32 %v1926, 4294901760
      %v1928 = vsub.f32 %v1926, %v1927
      %v1929 = vand.u32 %v1928, 4294901760
      %1930 = vmatmul.f32.gmra.mxu0 %v1929
      %v1931 = vpop.f32.mrf.mxu0
      %v1932 = vadd.f32 0.0, %v1931
      %v1933 = vand.u32 %v1884, 4294901760
      %v1934 = vsub.f32 %v1884, %v1933
      %v1935 = vand.u32 %v1934, 4294901760
      %v1936 = vsub.f32 %v1934, %v1935
      %v1937 = vand.u32 %v1936, 4294901760
      %1938 = vmatmul.f32.gmra.mxu0 %v1937
      %v1939 = vpop.f32.mrf.mxu0
      %v1940 = vadd.f32 0.0, %v1939
      %1941 = vdwg.mxu0
      %1942 = vmatpush.msra.mxu0 0.0
      %1943 = vmatpush.msra.mxu0 0.0
      %1944 = vmatpush.msra.mxu0 0.0
      %1945 = vmatpush.msra.mxu0 0.0
      %1946 = vmatpush.msra.mxu0 0.0
      %1947 = vmatpush.msra.mxu0 0.0
      %1948 = vmatpush.msra.mxu0 0.0
      %1949 = vmatpush.msra.mxu0 0.0
      %1950 = vmatpush.msra.mxu0 0.0
      %1951 = vmatpush.msra.mxu0 0.0
      %1952 = vmatpush.msra.mxu0 0.0
      %1953 = vmatpush.msra.mxu0 0.0
      %1954 = vmatpush.msra.mxu0 0.0
      %1955 = vmatpush.msra.mxu0 0.0
      %1956 = vmatpush.msra.mxu0 0.0
      %v1957 = vand.u32 %v1887, 4294901760
      %v1958 = vsub.f32 %v1887, %v1957
      %v1959 = vand.u32 %v1958, 4294901760
      %v1960 = vsub.f32 %v1958, %v1959
      %v1961 = vand.u32 %v1960, 4294901760
      %1962 = vmatpush.msra.mxu0 %v1961
      %v1963 = vand.u32 %v1878, 4294901760
      %1964 = vmatmul.f32.gmra.mxu0 %v1963
      %v1965 = vpop.f32.mrf.mxu0
      %v1966 = vadd.f32 %v1916, %v1965
      %v1967 = vand.u32 %v1880, 4294901760
      %1968 = vmatmul.f32.gmra.mxu0 %v1967
      %v1969 = vpop.f32.mrf.mxu0
      %v1970 = vadd.f32 %v1924, %v1969
      %v1971 = vand.u32 %v1882, 4294901760
      %1972 = vmatmul.f32.gmra.mxu0 %v1971
      %v1973 = vpop.f32.mrf.mxu0
      %v1974 = vadd.f32 %v1932, %v1973
      %v1975 = vand.u32 %v1884, 4294901760
      %1976 = vmatmul.f32.gmra.mxu0 %v1975
      %v1977 = vpop.f32.mrf.mxu0
      %v1978 = vadd.f32 %v1940, %v1977
      %1979 = vdwg.mxu0
      %1980 = vmatpush.msra.mxu0 0.0
      %1981 = vmatpush.msra.mxu0 0.0
      %1982 = vmatpush.msra.mxu0 0.0
      %1983 = vmatpush.msra.mxu0 0.0
      %1984 = vmatpush.msra.mxu0 0.0
      %1985 = vmatpush.msra.mxu0 0.0
      %1986 = vmatpush.msra.mxu0 0.0
      %1987 = vmatpush.msra.mxu0 0.0
      %1988 = vmatpush.msra.mxu0 0.0
      %1989 = vmatpush.msra.mxu0 0.0
      %1990 = vmatpush.msra.mxu0 0.0
      %1991 = vmatpush.msra.mxu0 0.0
      %1992 = vmatpush.msra.mxu0 0.0
      %1993 = vmatpush.msra.mxu0 0.0
      %1994 = vmatpush.msra.mxu0 0.0
      %v1995 = vand.u32 %v1887, 4294901760
      %v1996 = vsub.f32 %v1887, %v1995
      %1997 = vmatpush.msra.mxu0 %v1996
      %v1998 = vand.u32 %v1878, 4294901760
      %v1999 = vsub.f32 %v1878, %v1998
      %2000 = vmatmul.f32.gmra.mxu0 %v1999
      %v2001 = vpop.f32.mrf.mxu0
      %v2002 = vadd.f32 %v1966, %v2001
      %v2003 = vand.u32 %v1880, 4294901760
      %v2004 = vsub.f32 %v1880, %v2003
      %2005 = vmatmul.f32.gmra.mxu0 %v2004
      %v2006 = vpop.f32.mrf.mxu0
      %v2007 = vadd.f32 %v1970, %v2006
      %v2008 = vand.u32 %v1882, 4294901760
      %v2009 = vsub.f32 %v1882, %v2008
      %2010 = vmatmul.f32.gmra.mxu0 %v2009
      %v2011 = vpop.f32.mrf.mxu0
      %v2012 = vadd.f32 %v1974, %v2011
      %v2013 = vand.u32 %v1884, 4294901760
      %v2014 = vsub.f32 %v1884, %v2013
      %2015 = vmatmul.f32.gmra.mxu0 %v2014
      %v2016 = vpop.f32.mrf.mxu0
      %v2017 = vadd.f32 %v1978, %v2016
      %2018 = vdwg.mxu0
      %2019 = vmatpush.msra.mxu0 0.0
      %2020 = vmatpush.msra.mxu0 0.0
      %2021 = vmatpush.msra.mxu0 0.0
      %2022 = vmatpush.msra.mxu0 0.0
      %2023 = vmatpush.msra.mxu0 0.0
      %2024 = vmatpush.msra.mxu0 0.0
      %2025 = vmatpush.msra.mxu0 0.0
      %2026 = vmatpush.msra.mxu0 0.0
      %2027 = vmatpush.msra.mxu0 0.0
      %2028 = vmatpush.msra.mxu0 0.0
      %2029 = vmatpush.msra.mxu0 0.0
      %2030 = vmatpush.msra.mxu0 0.0
      %2031 = vmatpush.msra.mxu0 0.0
      %2032 = vmatpush.msra.mxu0 0.0
      %2033 = vmatpush.msra.mxu0 0.0
      %v2034 = vand.u32 %v1887, 4294901760
      %2035 = vmatpush.msra.mxu0 %v2034
      %v2036 = vand.u32 %v1878, 4294901760
      %v2037 = vsub.f32 %v1878, %v2036
      %v2038 = vand.u32 %v2037, 4294901760
      %2039 = vmatmul.f32.gmra.mxu0 %v2038
      %v2040 = vpop.f32.mrf.mxu0
      %v2041 = vadd.f32 %v2002, %v2040
      %v2042 = vand.u32 %v1880, 4294901760
      %v2043 = vsub.f32 %v1880, %v2042
      %v2044 = vand.u32 %v2043, 4294901760
      %2045 = vmatmul.f32.gmra.mxu0 %v2044
      %v2046 = vpop.f32.mrf.mxu0
      %v2047 = vadd.f32 %v2007, %v2046
      %v2048 = vand.u32 %v1882, 4294901760
      %v2049 = vsub.f32 %v1882, %v2048
      %v2050 = vand.u32 %v2049, 4294901760
      %2051 = vmatmul.f32.gmra.mxu0 %v2050
      %v2052 = vpop.f32.mrf.mxu0
      %v2053 = vadd.f32 %v2012, %v2052
      %v2054 = vand.u32 %v1884, 4294901760
      %v2055 = vsub.f32 %v1884, %v2054
      %v2056 = vand.u32 %v2055, 4294901760
      %2057 = vmatmul.f32.gmra.mxu0 %v2056
      %v2058 = vpop.f32.mrf.mxu0
      %v2059 = vadd.f32 %v2017, %v2058
      %2060 = vdwg.mxu0
      %2061 = vmatpush.msra.mxu0 0.0
      %2062 = vmatpush.msra.mxu0 0.0
      %2063 = vmatpush.msra.mxu0 0.0
      %2064 = vmatpush.msra.mxu0 0.0
      %2065 = vmatpush.msra.mxu0 0.0
      %2066 = vmatpush.msra.mxu0 0.0
      %2067 = vmatpush.msra.mxu0 0.0
      %2068 = vmatpush.msra.mxu0 0.0
      %2069 = vmatpush.msra.mxu0 0.0
      %2070 = vmatpush.msra.mxu0 0.0
      %2071 = vmatpush.msra.mxu0 0.0
      %2072 = vmatpush.msra.mxu0 0.0
      %2073 = vmatpush.msra.mxu0 0.0
      %2074 = vmatpush.msra.mxu0 0.0
      %2075 = vmatpush.msra.mxu0 0.0
      %v2076 = vand.u32 %v1887, 4294901760
      %v2077 = vsub.f32 %v1887, %v2076
      %v2078 = vand.u32 %v2077, 4294901760
      %2079 = vmatpush.msra.mxu0 %v2078
      %v2080 = vand.u32 %v1878, 4294901760
      %2081 = vmatmul.f32.gmra.mxu0 %v2080
      %v2082 = vpop.f32.mrf.mxu0
      %v2083 = vadd.f32 %v2041, %v2082
      %v2084 = vand.u32 %v1880, 4294901760
      %2085 = vmatmul.f32.gmra.mxu0 %v2084
      %v2086 = vpop.f32.mrf.mxu0
      %v2087 = vadd.f32 %v2047, %v2086
      %v2088 = vand.u32 %v1882, 4294901760
      %2089 = vmatmul.f32.gmra.mxu0 %v2088
      %v2090 = vpop.f32.mrf.mxu0
      %v2091 = vadd.f32 %v2053, %v2090
      %v2092 = vand.u32 %v1884, 4294901760
      %2093 = vmatmul.f32.gmra.mxu0 %v2092
      %v2094 = vpop.f32.mrf.mxu0
      %v2095 = vadd.f32 %v2059, %v2094
      %2096 = vdwg.mxu0
      %2097 = vmatpush.msra.mxu0 0.0
      %2098 = vmatpush.msra.mxu0 0.0
      %2099 = vmatpush.msra.mxu0 0.0
      %2100 = vmatpush.msra.mxu0 0.0
      %2101 = vmatpush.msra.mxu0 0.0
      %2102 = vmatpush.msra.mxu0 0.0
      %2103 = vmatpush.msra.mxu0 0.0
      %2104 = vmatpush.msra.mxu0 0.0
      %2105 = vmatpush.msra.mxu0 0.0
      %2106 = vmatpush.msra.mxu0 0.0
      %2107 = vmatpush.msra.mxu0 0.0
      %2108 = vmatpush.msra.mxu0 0.0
      %2109 = vmatpush.msra.mxu0 0.0
      %2110 = vmatpush.msra.mxu0 0.0
      %2111 = vmatpush.msra.mxu0 0.0
      %v2112 = vand.u32 %v1887, 4294901760
      %2113 = vmatpush.msra.mxu0 %v2112
      %v2114 = vand.u32 %v1878, 4294901760
      %2115 = vmatmul.f32.gmra.mxu0 %v2114
      %v2116 = vpop.f32.mrf.mxu0
      %v2117 = vadd.f32 %v2083, %v2116
      %v2118 = vand.u32 %v1880, 4294901760
      %2119 = vmatmul.f32.gmra.mxu0 %v2118
      %v2120 = vpop.f32.mrf.mxu0
      %v2121 = vadd.f32 %v2087, %v2120
      %v2122 = vand.u32 %v1882, 4294901760
      %2123 = vmatmul.f32.gmra.mxu0 %v2122
      %v2124 = vpop.f32.mrf.mxu0
      %v2125 = vadd.f32 %v2091, %v2124
      %v2126 = vand.u32 %v1884, 4294901760
      %2127 = vmatmul.f32.gmra.mxu0 %v2126
      %v2128 = vpop.f32.mrf.mxu0
      %v2129 = vadd.f32 %v2095, %v2128
      %2130 = vdwg.mxu0
      %2131 = vmatpush.msra.mxu0 0.0
      %2132 = vmatpush.msra.mxu0 0.0
      %2133 = vmatpush.msra.mxu0 0.0
      %2134 = vmatpush.msra.mxu0 0.0
      %2135 = vmatpush.msra.mxu0 0.0
      %2136 = vmatpush.msra.mxu0 0.0
      %2137 = vmatpush.msra.mxu0 0.0
      %2138 = vmatpush.msra.mxu0 0.0
      %2139 = vmatpush.msra.mxu0 0.0
      %2140 = vmatpush.msra.mxu0 0.0
      %2141 = vmatpush.msra.mxu0 0.0
      %2142 = vmatpush.msra.mxu0 0.0
      %2143 = vmatpush.msra.mxu0 0.0
      %2144 = vmatpush.msra.mxu0 0.0
      %2145 = vmatpush.msra.mxu0 0.0
      %v2146 = vand.u32 %v1890, 4294901760
      %2147 = vmatpush.msra.mxu0 %v2146
      %v2148 = vand.u32 %v1878, 4294901760
      %v2149 = vsub.f32 %v1878, %v2148
      %v2150 = vand.u32 %v2149, 4294901760
      %v2151 = vsub.f32 %v2149, %v2150
      %v2152 = vand.u32 %v2151, 4294901760
      %2153 = vmatmul.f32.gmra.mxu0 %v2152
      %v2154 = vpop.f32.mrf.mxu0
      %v2155 = vadd.f32 0.0, %v2154
      %v2156 = vand.u32 %v1880, 4294901760
      %v2157 = vsub.f32 %v1880, %v2156
      %v2158 = vand.u32 %v2157, 4294901760
      %v2159 = vsub.f32 %v2157, %v2158
      %v2160 = vand.u32 %v2159, 4294901760
      %2161 = vmatmul.f32.gmra.mxu0 %v2160
      %v2162 = vpop.f32.mrf.mxu0
      %v2163 = vadd.f32 0.0, %v2162
      %v2164 = vand.u32 %v1882, 4294901760
      %v2165 = vsub.f32 %v1882, %v2164
      %v2166 = vand.u32 %v2165, 4294901760
      %v2167 = vsub.f32 %v2165, %v2166
      %v2168 = vand.u32 %v2167, 4294901760
      %2169 = vmatmul.f32.gmra.mxu0 %v2168
      %v2170 = vpop.f32.mrf.mxu0
      %v2171 = vadd.f32 0.0, %v2170
      %v2172 = vand.u32 %v1884, 4294901760
      %v2173 = vsub.f32 %v1884, %v2172
      %v2174 = vand.u32 %v2173, 4294901760
      %v2175 = vsub.f32 %v2173, %v2174
      %v2176 = vand.u32 %v2175, 4294901760
      %2177 = vmatmul.f32.gmra.mxu0 %v2176
      %v2178 = vpop.f32.mrf.mxu0
      %v2179 = vadd.f32 0.0, %v2178
      %2180 = vdwg.mxu0
      %2181 = vmatpush.msra.mxu0 0.0
      %2182 = vmatpush.msra.mxu0 0.0
      %2183 = vmatpush.msra.mxu0 0.0
      %2184 = vmatpush.msra.mxu0 0.0
      %2185 = vmatpush.msra.mxu0 0.0
      %2186 = vmatpush.msra.mxu0 0.0
      %2187 = vmatpush.msra.mxu0 0.0
      %2188 = vmatpush.msra.mxu0 0.0
      %2189 = vmatpush.msra.mxu0 0.0
      %2190 = vmatpush.msra.mxu0 0.0
      %2191 = vmatpush.msra.mxu0 0.0
      %2192 = vmatpush.msra.mxu0 0.0
      %2193 = vmatpush.msra.mxu0 0.0
      %2194 = vmatpush.msra.mxu0 0.0
      %2195 = vmatpush.msra.mxu0 0.0
      %v2196 = vand.u32 %v1890, 4294901760
      %v2197 = vsub.f32 %v1890, %v2196
      %v2198 = vand.u32 %v2197, 4294901760
      %v2199 = vsub.f32 %v2197, %v2198
      %v2200 = vand.u32 %v2199, 4294901760
      %2201 = vmatpush.msra.mxu0 %v2200
      %v2202 = vand.u32 %v1878, 4294901760
      %2203 = vmatmul.f32.gmra.mxu0 %v2202
      %v2204 = vpop.f32.mrf.mxu0
      %v2205 = vadd.f32 %v2155, %v2204
      %v2206 = vand.u32 %v1880, 4294901760
      %2207 = vmatmul.f32.gmra.mxu0 %v2206
      %v2208 = vpop.f32.mrf.mxu0
      %v2209 = vadd.f32 %v2163, %v2208
      %v2210 = vand.u32 %v1882, 4294901760
      %2211 = vmatmul.f32.gmra.mxu0 %v2210
      %v2212 = vpop.f32.mrf.mxu0
      %v2213 = vadd.f32 %v2171, %v2212
      %v2214 = vand.u32 %v1884, 4294901760
      %2215 = vmatmul.f32.gmra.mxu0 %v2214
      %v2216 = vpop.f32.mrf.mxu0
      %v2217 = vadd.f32 %v2179, %v2216
      %2218 = vdwg.mxu0
      %2219 = vmatpush.msra.mxu0 0.0
      %2220 = vmatpush.msra.mxu0 0.0
      %2221 = vmatpush.msra.mxu0 0.0
      %2222 = vmatpush.msra.mxu0 0.0
      %2223 = vmatpush.msra.mxu0 0.0
      %2224 = vmatpush.msra.mxu0 0.0
      %2225 = vmatpush.msra.mxu0 0.0
      %2226 = vmatpush.msra.mxu0 0.0
      %2227 = vmatpush.msra.mxu0 0.0
      %2228 = vmatpush.msra.mxu0 0.0
      %2229 = vmatpush.msra.mxu0 0.0
      %2230 = vmatpush.msra.mxu0 0.0
      %2231 = vmatpush.msra.mxu0 0.0
      %2232 = vmatpush.msra.mxu0 0.0
      %2233 = vmatpush.msra.mxu0 0.0
      %v2234 = vand.u32 %v1890, 4294901760
      %v2235 = vsub.f32 %v1890, %v2234
      %2236 = vmatpush.msra.mxu0 %v2235
      %v2237 = vand.u32 %v1878, 4294901760
      %v2238 = vsub.f32 %v1878, %v2237
      %2239 = vmatmul.f32.gmra.mxu0 %v2238
      %v2240 = vpop.f32.mrf.mxu0
      %v2241 = vadd.f32 %v2205, %v2240
      %v2242 = vand.u32 %v1880, 4294901760
      %v2243 = vsub.f32 %v1880, %v2242
      %2244 = vmatmul.f32.gmra.mxu0 %v2243
      %v2245 = vpop.f32.mrf.mxu0
      %v2246 = vadd.f32 %v2209, %v2245
      %v2247 = vand.u32 %v1882, 4294901760
      %v2248 = vsub.f32 %v1882, %v2247
      %2249 = vmatmul.f32.gmra.mxu0 %v2248
      %v2250 = vpop.f32.mrf.mxu0
      %v2251 = vadd.f32 %v2213, %v2250
      %v2252 = vand.u32 %v1884, 4294901760
      %v2253 = vsub.f32 %v1884, %v2252
      %2254 = vmatmul.f32.gmra.mxu0 %v2253
      %v2255 = vpop.f32.mrf.mxu0
      %v2256 = vadd.f32 %v2217, %v2255
      %2257 = vdwg.mxu0
      %2258 = vmatpush.msra.mxu0 0.0
      %2259 = vmatpush.msra.mxu0 0.0
      %2260 = vmatpush.msra.mxu0 0.0
      %2261 = vmatpush.msra.mxu0 0.0
      %2262 = vmatpush.msra.mxu0 0.0
      %2263 = vmatpush.msra.mxu0 0.0
      %2264 = vmatpush.msra.mxu0 0.0
      %2265 = vmatpush.msra.mxu0 0.0
      %2266 = vmatpush.msra.mxu0 0.0
      %2267 = vmatpush.msra.mxu0 0.0
      %2268 = vmatpush.msra.mxu0 0.0
      %2269 = vmatpush.msra.mxu0 0.0
      %2270 = vmatpush.msra.mxu0 0.0
      %2271 = vmatpush.msra.mxu0 0.0
      %2272 = vmatpush.msra.mxu0 0.0
      %v2273 = vand.u32 %v1890, 4294901760
      %2274 = vmatpush.msra.mxu0 %v2273
      %v2275 = vand.u32 %v1878, 4294901760
      %v2276 = vsub.f32 %v1878, %v2275
      %v2277 = vand.u32 %v2276, 4294901760
      %2278 = vmatmul.f32.gmra.mxu0 %v2277
      %v2279 = vpop.f32.mrf.mxu0
      %v2280 = vadd.f32 %v2241, %v2279
      %v2281 = vand.u32 %v1880, 4294901760
      %v2282 = vsub.f32 %v1880, %v2281
      %v2283 = vand.u32 %v2282, 4294901760
      %2284 = vmatmul.f32.gmra.mxu0 %v2283
      %v2285 = vpop.f32.mrf.mxu0
      %v2286 = vadd.f32 %v2246, %v2285
      %v2287 = vand.u32 %v1882, 4294901760
      %v2288 = vsub.f32 %v1882, %v2287
      %v2289 = vand.u32 %v2288, 4294901760
      %2290 = vmatmul.f32.gmra.mxu0 %v2289
      %v2291 = vpop.f32.mrf.mxu0
      %v2292 = vadd.f32 %v2251, %v2291
      %v2293 = vand.u32 %v1884, 4294901760
      %v2294 = vsub.f32 %v1884, %v2293
      %v2295 = vand.u32 %v2294, 4294901760
      %2296 = vmatmul.f32.gmra.mxu0 %v2295
      %v2297 = vpop.f32.mrf.mxu0
      %v2298 = vadd.f32 %v2256, %v2297
      %2299 = vdwg.mxu0
      %2300 = vmatpush.msra.mxu0 0.0
      %2301 = vmatpush.msra.mxu0 0.0
      %2302 = vmatpush.msra.mxu0 0.0
      %2303 = vmatpush.msra.mxu0 0.0
      %2304 = vmatpush.msra.mxu0 0.0
      %2305 = vmatpush.msra.mxu0 0.0
      %2306 = vmatpush.msra.mxu0 0.0
      %2307 = vmatpush.msra.mxu0 0.0
      %2308 = vmatpush.msra.mxu0 0.0
      %2309 = vmatpush.msra.mxu0 0.0
      %2310 = vmatpush.msra.mxu0 0.0
      %2311 = vmatpush.msra.mxu0 0.0
      %2312 = vmatpush.msra.mxu0 0.0
      %2313 = vmatpush.msra.mxu0 0.0
      %2314 = vmatpush.msra.mxu0 0.0
      %v2315 = vand.u32 %v1890, 4294901760
      %v2316 = vsub.f32 %v1890, %v2315
      %v2317 = vand.u32 %v2316, 4294901760
      %2318 = vmatpush.msra.mxu0 %v2317
      %v2319 = vand.u32 %v1878, 4294901760
      %2320 = vmatmul.f32.gmra.mxu0 %v2319
      %v2321 = vpop.f32.mrf.mxu0
      %v2322 = vadd.f32 %v2280, %v2321
      %v2323 = vand.u32 %v1880, 4294901760
      %2324 = vmatmul.f32.gmra.mxu0 %v2323
      %v2325 = vpop.f32.mrf.mxu0
      %v2326 = vadd.f32 %v2286, %v2325
      %v2327 = vand.u32 %v1882, 4294901760
      %2328 = vmatmul.f32.gmra.mxu0 %v2327
      %v2329 = vpop.f32.mrf.mxu0
      %v2330 = vadd.f32 %v2292, %v2329
      %v2331 = vand.u32 %v1884, 4294901760
      %2332 = vmatmul.f32.gmra.mxu0 %v2331
      %v2333 = vpop.f32.mrf.mxu0
      %v2334 = vadd.f32 %v2298, %v2333
      %2335 = vdwg.mxu0
      %2336 = vmatpush.msra.mxu0 0.0
      %2337 = vmatpush.msra.mxu0 0.0
      %2338 = vmatpush.msra.mxu0 0.0
      %2339 = vmatpush.msra.mxu0 0.0
      %2340 = vmatpush.msra.mxu0 0.0
      %2341 = vmatpush.msra.mxu0 0.0
      %2342 = vmatpush.msra.mxu0 0.0
      %2343 = vmatpush.msra.mxu0 0.0
      %2344 = vmatpush.msra.mxu0 0.0
      %2345 = vmatpush.msra.mxu0 0.0
      %2346 = vmatpush.msra.mxu0 0.0
      %2347 = vmatpush.msra.mxu0 0.0
      %2348 = vmatpush.msra.mxu0 0.0
      %2349 = vmatpush.msra.mxu0 0.0
      %2350 = vmatpush.msra.mxu0 0.0
      %v2351 = vand.u32 %v1890, 4294901760
      %2352 = vmatpush.msra.mxu0 %v2351
      %v2353 = vand.u32 %v1878, 4294901760
      %2354 = vmatmul.f32.gmra.mxu0 %v2353
      %v2355 = vpop.f32.mrf.mxu0
      %v2356 = vadd.f32 %v2322, %v2355
      %v2357 = vand.u32 %v1880, 4294901760
      %2358 = vmatmul.f32.gmra.mxu0 %v2357
      %v2359 = vpop.f32.mrf.mxu0
      %v2360 = vadd.f32 %v2326, %v2359
      %v2361 = vand.u32 %v1882, 4294901760
      %2362 = vmatmul.f32.gmra.mxu0 %v2361
      %v2363 = vpop.f32.mrf.mxu0
      %v2364 = vadd.f32 %v2330, %v2363
      %v2365 = vand.u32 %v1884, 4294901760
      %2366 = vmatmul.f32.gmra.mxu0 %v2365
      %v2367 = vpop.f32.mrf.mxu0
      %v2368 = vadd.f32 %v2334, %v2367
      %2369 = vdwg.mxu0
      %v2370 = vadd.f32 %v1831, %v2117
      %v2371 = vadd.f32 %v1832, %v2356
      %v2372 = vadd.f32 %v1833, %v2121
      %v2373 = vadd.f32 %v1834, %v2360
      %v2374 = vadd.f32 %v1835, %v2125
      %v2375 = vadd.f32 %v1836, %v2364
      %v2376 = vadd.f32 %v1837, %v2129
      %v2377 = vadd.f32 %v1838, %v2368
      %v2378 = vld [vmem:[%s219] sm:$0xff]
      %v2379 = vld [vmem:[%s219 + $0x8] sm:$0xf]
      %2380 = vrot.lane.b32.xlu0 %v1862, 112
      %v2381 = vpop.permute.xlu0 %2380
      %2382 = vrot.lane.b32.xlu0 %v1863, 112
      %v2383 = vpop.permute.xlu0 %2382
      %2384 = vrot.lane.b32.xlu0 %v1864, 112
      %v2385 = vpop.permute.xlu0 %2384
      %2386 = vrot.lane.b32.xlu0 %v1865, 112
      %v2387 = vpop.permute.xlu0 %2386
      %2390 = vst [vmem:[#allocation1] ss:$2 sm:$0xff] %v2378
      %s2391 = scalar_lea.vmem [#allocation1], 16
      %2392 = vst [vmem:[%s2391] ss:$2 sm:$0xff] %v2379
      %v2393 = vld.sshfl [vmem:[#allocation1] sm:$0xff pattern:$0x75316420]
      %v2394 = vld.sshfl [vmem:[#allocation1 + $0x8] sm:$0xff pattern:$0x75316420]
      %v2395 = vld.sshfl [vmem:[#allocation1 + $0x10] sm:$0xff pattern:$0x75316420]
      %2396 = vrot.lane.b32.xlu0 %v2393, 111
      %v2397 = vpop.permute.xlu0 %2396
      %2398 = vrot.lane.b32.xlu0 %v2394, 111
      %v2399 = vpop.permute.xlu0 %2398
      %2400 = vrot.lane.b32.xlu0 %v2395, 111
      %v2401 = vpop.permute.xlu0 %2400
      %vm2402 = vcmask 908288
      %v2403 = vsel %vm2402, %v2397, %v2399
      %v2404 = vsel %vm2402, %v2399, %v2401
      %v2405 = vsel %vm306, %v2381, 0
      %v2407 = vsel %vm306, %v2383, 0
      %v2409 = vsel %vm306, %v2385, 0
      %v2411 = vsel %vm306, %v2387, 0
      %v2413 = vsel %vm315, %v2403, 0
      %v2415 = vsel %vm315, %v2404, 0
      %2417 = vmatpush.msra.mxu0 0.0
      %2418 = vmatpush.msra.mxu0 0.0
      %2419 = vmatpush.msra.mxu0 0.0
      %2420 = vmatpush.msra.mxu0 0.0
      %2421 = vmatpush.msra.mxu0 0.0
      %2422 = vmatpush.msra.mxu0 0.0
      %2423 = vmatpush.msra.mxu0 0.0
      %2424 = vmatpush.msra.mxu0 0.0
      %2425 = vmatpush.msra.mxu0 0.0
      %2426 = vmatpush.msra.mxu0 0.0
      %2427 = vmatpush.msra.mxu0 0.0
      %2428 = vmatpush.msra.mxu0 0.0
      %2429 = vmatpush.msra.mxu0 0.0
      %2430 = vmatpush.msra.mxu0 0.0
      %2431 = vmatpush.msra.mxu0 0.0
      %v2432 = vand.u32 %v2413, 4294901760
      %2433 = vmatpush.msra.mxu0 %v2432
      %v2434 = vand.u32 %v2405, 4294901760
      %v2435 = vsub.f32 %v2405, %v2434
      %v2436 = vand.u32 %v2435, 4294901760
      %v2437 = vsub.f32 %v2435, %v2436
      %v2438 = vand.u32 %v2437, 4294901760
      %2439 = vmatmul.f32.gmra.mxu0 %v2438
      %v2440 = vpop.f32.mrf.mxu0
      %v2441 = vadd.f32 0.0, %v2440
      %v2442 = vand.u32 %v2407, 4294901760
      %v2443 = vsub.f32 %v2407, %v2442
      %v2444 = vand.u32 %v2443, 4294901760
      %v2445 = vsub.f32 %v2443, %v2444
      %v2446 = vand.u32 %v2445, 4294901760
      %2447 = vmatmul.f32.gmra.mxu0 %v2446
      %v2448 = vpop.f32.mrf.mxu0
      %v2449 = vadd.f32 0.0, %v2448
      %v2450 = vand.u32 %v2409, 4294901760
      %v2451 = vsub.f32 %v2409, %v2450
      %v2452 = vand.u32 %v2451, 4294901760
      %v2453 = vsub.f32 %v2451, %v2452
      %v2454 = vand.u32 %v2453, 4294901760
      %2455 = vmatmul.f32.gmra.mxu0 %v2454
      %v2456 = vpop.f32.mrf.mxu0
      %v2457 = vadd.f32 0.0, %v2456
      %v2458 = vand.u32 %v2411, 4294901760
      %v2459 = vsub.f32 %v2411, %v2458
      %v2460 = vand.u32 %v2459, 4294901760
      %v2461 = vsub.f32 %v2459, %v2460
      %v2462 = vand.u32 %v2461, 4294901760
      %2463 = vmatmul.f32.gmra.mxu0 %v2462
      %v2464 = vpop.f32.mrf.mxu0
      %v2465 = vadd.f32 0.0, %v2464
      %2466 = vdwg.mxu0
      %2467 = vmatpush.msra.mxu0 0.0
      %2468 = vmatpush.msra.mxu0 0.0
      %2469 = vmatpush.msra.mxu0 0.0
      %2470 = vmatpush.msra.mxu0 0.0
      %2471 = vmatpush.msra.mxu0 0.0
      %2472 = vmatpush.msra.mxu0 0.0
      %2473 = vmatpush.msra.mxu0 0.0
      %2474 = vmatpush.msra.mxu0 0.0
      %2475 = vmatpush.msra.mxu0 0.0
      %2476 = vmatpush.msra.mxu0 0.0
      %2477 = vmatpush.msra.mxu0 0.0
      %2478 = vmatpush.msra.mxu0 0.0
      %2479 = vmatpush.msra.mxu0 0.0
      %2480 = vmatpush.msra.mxu0 0.0
      %2481 = vmatpush.msra.mxu0 0.0
      %v2482 = vand.u32 %v2413, 4294901760
      %v2483 = vsub.f32 %v2413, %v2482
      %v2484 = vand.u32 %v2483, 4294901760
      %v2485 = vsub.f32 %v2483, %v2484
      %v2486 = vand.u32 %v2485, 4294901760
      %2487 = vmatpush.msra.mxu0 %v2486
      %v2488 = vand.u32 %v2405, 4294901760
      %2489 = vmatmul.f32.gmra.mxu0 %v2488
      %v2490 = vpop.f32.mrf.mxu0
      %v2491 = vadd.f32 %v2441, %v2490
      %v2492 = vand.u32 %v2407, 4294901760
      %2493 = vmatmul.f32.gmra.mxu0 %v2492
      %v2494 = vpop.f32.mrf.mxu0
      %v2495 = vadd.f32 %v2449, %v2494
      %v2496 = vand.u32 %v2409, 4294901760
      %2497 = vmatmul.f32.gmra.mxu0 %v2496
      %v2498 = vpop.f32.mrf.mxu0
      %v2499 = vadd.f32 %v2457, %v2498
      %v2500 = vand.u32 %v2411, 4294901760
      %2501 = vmatmul.f32.gmra.mxu0 %v2500
      %v2502 = vpop.f32.mrf.mxu0
      %v2503 = vadd.f32 %v2465, %v2502
      %2504 = vdwg.mxu0
      %2505 = vmatpush.msra.mxu0 0.0
      %2506 = vmatpush.msra.mxu0 0.0
      %2507 = vmatpush.msra.mxu0 0.0
      %2508 = vmatpush.msra.mxu0 0.0
      %2509 = vmatpush.msra.mxu0 0.0
      %2510 = vmatpush.msra.mxu0 0.0
      %2511 = vmatpush.msra.mxu0 0.0
      %2512 = vmatpush.msra.mxu0 0.0
      %2513 = vmatpush.msra.mxu0 0.0
      %2514 = vmatpush.msra.mxu0 0.0
      %2515 = vmatpush.msra.mxu0 0.0
      %2516 = vmatpush.msra.mxu0 0.0
      %2517 = vmatpush.msra.mxu0 0.0
      %2518 = vmatpush.msra.mxu0 0.0
      %2519 = vmatpush.msra.mxu0 0.0
      %v2520 = vand.u32 %v2413, 4294901760
      %v2521 = vsub.f32 %v2413, %v2520
      %2522 = vmatpush.msra.mxu0 %v2521
      %v2523 = vand.u32 %v2405, 4294901760
      %v2524 = vsub.f32 %v2405, %v2523
      %2525 = vmatmul.f32.gmra.mxu0 %v2524
      %v2526 = vpop.f32.mrf.mxu0
      %v2527 = vadd.f32 %v2491, %v2526
      %v2528 = vand.u32 %v2407, 4294901760
      %v2529 = vsub.f32 %v2407, %v2528
      %2530 = vmatmul.f32.gmra.mxu0 %v2529
      %v2531 = vpop.f32.mrf.mxu0
      %v2532 = vadd.f32 %v2495, %v2531
      %v2533 = vand.u32 %v2409, 4294901760
      %v2534 = vsub.f32 %v2409, %v2533
      %2535 = vmatmul.f32.gmra.mxu0 %v2534
      %v2536 = vpop.f32.mrf.mxu0
      %v2537 = vadd.f32 %v2499, %v2536
      %v2538 = vand.u32 %v2411, 4294901760
      %v2539 = vsub.f32 %v2411, %v2538
      %2540 = vmatmul.f32.gmra.mxu0 %v2539
      %v2541 = vpop.f32.mrf.mxu0
      %v2542 = vadd.f32 %v2503, %v2541
      %2543 = vdwg.mxu0
      %2544 = vmatpush.msra.mxu0 0.0
      %2545 = vmatpush.msra.mxu0 0.0
      %2546 = vmatpush.msra.mxu0 0.0
      %2547 = vmatpush.msra.mxu0 0.0
      %2548 = vmatpush.msra.mxu0 0.0
      %2549 = vmatpush.msra.mxu0 0.0
      %2550 = vmatpush.msra.mxu0 0.0
      %2551 = vmatpush.msra.mxu0 0.0
      %2552 = vmatpush.msra.mxu0 0.0
      %2553 = vmatpush.msra.mxu0 0.0
      %2554 = vmatpush.msra.mxu0 0.0
      %2555 = vmatpush.msra.mxu0 0.0
      %2556 = vmatpush.msra.mxu0 0.0
      %2557 = vmatpush.msra.mxu0 0.0
      %2558 = vmatpush.msra.mxu0 0.0
      %v2559 = vand.u32 %v2413, 4294901760
      %2560 = vmatpush.msra.mxu0 %v2559
      %v2561 = vand.u32 %v2405, 4294901760
      %v2562 = vsub.f32 %v2405, %v2561
      %v2563 = vand.u32 %v2562, 4294901760
      %2564 = vmatmul.f32.gmra.mxu0 %v2563
      %v2565 = vpop.f32.mrf.mxu0
      %v2566 = vadd.f32 %v2527, %v2565
      %v2567 = vand.u32 %v2407, 4294901760
      %v2568 = vsub.f32 %v2407, %v2567
      %v2569 = vand.u32 %v2568, 4294901760
      %2570 = vmatmul.f32.gmra.mxu0 %v2569
      %v2571 = vpop.f32.mrf.mxu0
      %v2572 = vadd.f32 %v2532, %v2571
      %v2573 = vand.u32 %v2409, 4294901760
      %v2574 = vsub.f32 %v2409, %v2573
      %v2575 = vand.u32 %v2574, 4294901760
      %2576 = vmatmul.f32.gmra.mxu0 %v2575
      %v2577 = vpop.f32.mrf.mxu0
      %v2578 = vadd.f32 %v2537, %v2577
      %v2579 = vand.u32 %v2411, 4294901760
      %v2580 = vsub.f32 %v2411, %v2579
      %v2581 = vand.u32 %v2580, 4294901760
      %2582 = vmatmul.f32.gmra.mxu0 %v2581
      %v2583 = vpop.f32.mrf.mxu0
      %v2584 = vadd.f32 %v2542, %v2583
      %2585 = vdwg.mxu0
      %2586 = vmatpush.msra.mxu0 0.0
      %2587 = vmatpush.msra.mxu0 0.0
      %2588 = vmatpush.msra.mxu0 0.0
      %2589 = vmatpush.msra.mxu0 0.0
      %2590 = vmatpush.msra.mxu0 0.0
      %2591 = vmatpush.msra.mxu0 0.0
      %2592 = vmatpush.msra.mxu0 0.0
      %2593 = vmatpush.msra.mxu0 0.0
      %2594 = vmatpush.msra.mxu0 0.0
      %2595 = vmatpush.msra.mxu0 0.0
      %2596 = vmatpush.msra.mxu0 0.0
      %2597 = vmatpush.msra.mxu0 0.0
      %2598 = vmatpush.msra.mxu0 0.0
      %2599 = vmatpush.msra.mxu0 0.0
      %2600 = vmatpush.msra.mxu0 0.0
      %v2601 = vand.u32 %v2413, 4294901760
      %v2602 = vsub.f32 %v2413, %v2601
      %v2603 = vand.u32 %v2602, 4294901760
      %2604 = vmatpush.msra.mxu0 %v2603
      %v2605 = vand.u32 %v2405, 4294901760
      %2606 = vmatmul.f32.gmra.mxu0 %v2605
      %v2607 = vpop.f32.mrf.mxu0
      %v2608 = vadd.f32 %v2566, %v2607
      %v2609 = vand.u32 %v2407, 4294901760
      %2610 = vmatmul.f32.gmra.mxu0 %v2609
      %v2611 = vpop.f32.mrf.mxu0
      %v2612 = vadd.f32 %v2572, %v2611
      %v2613 = vand.u32 %v2409, 4294901760
      %2614 = vmatmul.f32.gmra.mxu0 %v2613
      %v2615 = vpop.f32.mrf.mxu0
      %v2616 = vadd.f32 %v2578, %v2615
      %v2617 = vand.u32 %v2411, 4294901760
      %2618 = vmatmul.f32.gmra.mxu0 %v2617
      %v2619 = vpop.f32.mrf.mxu0
      %v2620 = vadd.f32 %v2584, %v2619
      %2621 = vdwg.mxu0
      %2622 = vmatpush.msra.mxu0 0.0
      %2623 = vmatpush.msra.mxu0 0.0
      %2624 = vmatpush.msra.mxu0 0.0
      %2625 = vmatpush.msra.mxu0 0.0
      %2626 = vmatpush.msra.mxu0 0.0
      %2627 = vmatpush.msra.mxu0 0.0
      %2628 = vmatpush.msra.mxu0 0.0
      %2629 = vmatpush.msra.mxu0 0.0
      %2630 = vmatpush.msra.mxu0 0.0
      %2631 = vmatpush.msra.mxu0 0.0
      %2632 = vmatpush.msra.mxu0 0.0
      %2633 = vmatpush.msra.mxu0 0.0
      %2634 = vmatpush.msra.mxu0 0.0
      %2635 = vmatpush.msra.mxu0 0.0
      %2636 = vmatpush.msra.mxu0 0.0
      %v2637 = vand.u32 %v2413, 4294901760
      %2638 = vmatpush.msra.mxu0 %v2637
      %v2639 = vand.u32 %v2405, 4294901760
      %2640 = vmatmul.f32.gmra.mxu0 %v2639
      %v2641 = vpop.f32.mrf.mxu0
      %v2642 = vadd.f32 %v2608, %v2641
      %v2643 = vand.u32 %v2407, 4294901760
      %2644 = vmatmul.f32.gmra.mxu0 %v2643
      %v2645 = vpop.f32.mrf.mxu0
      %v2646 = vadd.f32 %v2612, %v2645
      %v2647 = vand.u32 %v2409, 4294901760
      %2648 = vmatmul.f32.gmra.mxu0 %v2647
      %v2649 = vpop.f32.mrf.mxu0
      %v2650 = vadd.f32 %v2616, %v2649
      %v2651 = vand.u32 %v2411, 4294901760
      %2652 = vmatmul.f32.gmra.mxu0 %v2651
      %v2653 = vpop.f32.mrf.mxu0
      %v2654 = vadd.f32 %v2620, %v2653
      %2655 = vdwg.mxu0
      %2656 = vmatpush.msra.mxu0 0.0
      %2657 = vmatpush.msra.mxu0 0.0
      %2658 = vmatpush.msra.mxu0 0.0
      %2659 = vmatpush.msra.mxu0 0.0
      %2660 = vmatpush.msra.mxu0 0.0
      %2661 = vmatpush.msra.mxu0 0.0
      %2662 = vmatpush.msra.mxu0 0.0
      %2663 = vmatpush.msra.mxu0 0.0
      %2664 = vmatpush.msra.mxu0 0.0
      %2665 = vmatpush.msra.mxu0 0.0
      %2666 = vmatpush.msra.mxu0 0.0
      %2667 = vmatpush.msra.mxu0 0.0
      %2668 = vmatpush.msra.mxu0 0.0
      %2669 = vmatpush.msra.mxu0 0.0
      %2670 = vmatpush.msra.mxu0 0.0
      %v2671 = vand.u32 %v2415, 4294901760
      %2672 = vmatpush.msra.mxu0 %v2671
      %v2673 = vand.u32 %v2405, 4294901760
      %v2674 = vsub.f32 %v2405, %v2673
      %v2675 = vand.u32 %v2674, 4294901760
      %v2676 = vsub.f32 %v2674, %v2675
      %v2677 = vand.u32 %v2676, 4294901760
      %2678 = vmatmul.f32.gmra.mxu0 %v2677
      %v2679 = vpop.f32.mrf.mxu0
      %v2680 = vadd.f32 0.0, %v2679
      %v2681 = vand.u32 %v2407, 4294901760
      %v2682 = vsub.f32 %v2407, %v2681
      %v2683 = vand.u32 %v2682, 4294901760
      %v2684 = vsub.f32 %v2682, %v2683
      %v2685 = vand.u32 %v2684, 4294901760
      %2686 = vmatmul.f32.gmra.mxu0 %v2685
      %v2687 = vpop.f32.mrf.mxu0
      %v2688 = vadd.f32 0.0, %v2687
      %v2689 = vand.u32 %v2409, 4294901760
      %v2690 = vsub.f32 %v2409, %v2689
      %v2691 = vand.u32 %v2690, 4294901760
      %v2692 = vsub.f32 %v2690, %v2691
      %v2693 = vand.u32 %v2692, 4294901760
      %2694 = vmatmul.f32.gmra.mxu0 %v2693
      %v2695 = vpop.f32.mrf.mxu0
      %v2696 = vadd.f32 0.0, %v2695
      %v2697 = vand.u32 %v2411, 4294901760
      %v2698 = vsub.f32 %v2411, %v2697
      %v2699 = vand.u32 %v2698, 4294901760
      %v2700 = vsub.f32 %v2698, %v2699
      %v2701 = vand.u32 %v2700, 4294901760
      %2702 = vmatmul.f32.gmra.mxu0 %v2701
      %v2703 = vpop.f32.mrf.mxu0
      %v2704 = vadd.f32 0.0, %v2703
      %2705 = vdwg.mxu0
      %2706 = vmatpush.msra.mxu0 0.0
      %2707 = vmatpush.msra.mxu0 0.0
      %2708 = vmatpush.msra.mxu0 0.0
      %2709 = vmatpush.msra.mxu0 0.0
      %2710 = vmatpush.msra.mxu0 0.0
      %2711 = vmatpush.msra.mxu0 0.0
      %2712 = vmatpush.msra.mxu0 0.0
      %2713 = vmatpush.msra.mxu0 0.0
      %2714 = vmatpush.msra.mxu0 0.0
      %2715 = vmatpush.msra.mxu0 0.0
      %2716 = vmatpush.msra.mxu0 0.0
      %2717 = vmatpush.msra.mxu0 0.0
      %2718 = vmatpush.msra.mxu0 0.0
      %2719 = vmatpush.msra.mxu0 0.0
      %2720 = vmatpush.msra.mxu0 0.0
      %v2721 = vand.u32 %v2415, 4294901760
      %v2722 = vsub.f32 %v2415, %v2721
      %v2723 = vand.u32 %v2722, 4294901760
      %v2724 = vsub.f32 %v2722, %v2723
      %v2725 = vand.u32 %v2724, 4294901760
      %2726 = vmatpush.msra.mxu0 %v2725
      %v2727 = vand.u32 %v2405, 4294901760
      %2728 = vmatmul.f32.gmra.mxu0 %v2727
      %v2729 = vpop.f32.mrf.mxu0
      %v2730 = vadd.f32 %v2680, %v2729
      %v2731 = vand.u32 %v2407, 4294901760
      %2732 = vmatmul.f32.gmra.mxu0 %v2731
      %v2733 = vpop.f32.mrf.mxu0
      %v2734 = vadd.f32 %v2688, %v2733
      %v2735 = vand.u32 %v2409, 4294901760
      %2736 = vmatmul.f32.gmra.mxu0 %v2735
      %v2737 = vpop.f32.mrf.mxu0
      %v2738 = vadd.f32 %v2696, %v2737
      %v2739 = vand.u32 %v2411, 4294901760
      %2740 = vmatmul.f32.gmra.mxu0 %v2739
      %v2741 = vpop.f32.mrf.mxu0
      %v2742 = vadd.f32 %v2704, %v2741
      %2743 = vdwg.mxu0
      %2744 = vmatpush.msra.mxu0 0.0
      %2745 = vmatpush.msra.mxu0 0.0
      %2746 = vmatpush.msra.mxu0 0.0
      %2747 = vmatpush.msra.mxu0 0.0
      %2748 = vmatpush.msra.mxu0 0.0
      %2749 = vmatpush.msra.mxu0 0.0
      %2750 = vmatpush.msra.mxu0 0.0
      %2751 = vmatpush.msra.mxu0 0.0
      %2752 = vmatpush.msra.mxu0 0.0
      %2753 = vmatpush.msra.mxu0 0.0
      %2754 = vmatpush.msra.mxu0 0.0
      %2755 = vmatpush.msra.mxu0 0.0
      %2756 = vmatpush.msra.mxu0 0.0
      %2757 = vmatpush.msra.mxu0 0.0
      %2758 = vmatpush.msra.mxu0 0.0
      %v2759 = vand.u32 %v2415, 4294901760
      %v2760 = vsub.f32 %v2415, %v2759
      %2761 = vmatpush.msra.mxu0 %v2760
      %v2762 = vand.u32 %v2405, 4294901760
      %v2763 = vsub.f32 %v2405, %v2762
      %2764 = vmatmul.f32.gmra.mxu0 %v2763
      %v2765 = vpop.f32.mrf.mxu0
      %v2766 = vadd.f32 %v2730, %v2765
      %v2767 = vand.u32 %v2407, 4294901760
      %v2768 = vsub.f32 %v2407, %v2767
      %2769 = vmatmul.f32.gmra.mxu0 %v2768
      %v2770 = vpop.f32.mrf.mxu0
      %v2771 = vadd.f32 %v2734, %v2770
      %v2772 = vand.u32 %v2409, 4294901760
      %v2773 = vsub.f32 %v2409, %v2772
      %2774 = vmatmul.f32.gmra.mxu0 %v2773
      %v2775 = vpop.f32.mrf.mxu0
      %v2776 = vadd.f32 %v2738, %v2775
      %v2777 = vand.u32 %v2411, 4294901760
      %v2778 = vsub.f32 %v2411, %v2777
      %2779 = vmatmul.f32.gmra.mxu0 %v2778
      %v2780 = vpop.f32.mrf.mxu0
      %v2781 = vadd.f32 %v2742, %v2780
      %2782 = vdwg.mxu0
      %2783 = vmatpush.msra.mxu0 0.0
      %2784 = vmatpush.msra.mxu0 0.0
      %2785 = vmatpush.msra.mxu0 0.0
      %2786 = vmatpush.msra.mxu0 0.0
      %2787 = vmatpush.msra.mxu0 0.0
      %2788 = vmatpush.msra.mxu0 0.0
      %2789 = vmatpush.msra.mxu0 0.0
      %2790 = vmatpush.msra.mxu0 0.0
      %2791 = vmatpush.msra.mxu0 0.0
      %2792 = vmatpush.msra.mxu0 0.0
      %2793 = vmatpush.msra.mxu0 0.0
      %2794 = vmatpush.msra.mxu0 0.0
      %2795 = vmatpush.msra.mxu0 0.0
      %2796 = vmatpush.msra.mxu0 0.0
      %2797 = vmatpush.msra.mxu0 0.0
      %v2798 = vand.u32 %v2415, 4294901760
      %2799 = vmatpush.msra.mxu0 %v2798
      %v2800 = vand.u32 %v2405, 4294901760
      %v2801 = vsub.f32 %v2405, %v2800
      %v2802 = vand.u32 %v2801, 4294901760
      %2803 = vmatmul.f32.gmra.mxu0 %v2802
      %v2804 = vpop.f32.mrf.mxu0
      %v2805 = vadd.f32 %v2766, %v2804
      %v2806 = vand.u32 %v2407, 4294901760
      %v2807 = vsub.f32 %v2407, %v2806
      %v2808 = vand.u32 %v2807, 4294901760
      %2809 = vmatmul.f32.gmra.mxu0 %v2808
      %v2810 = vpop.f32.mrf.mxu0
      %v2811 = vadd.f32 %v2771, %v2810
      %v2812 = vand.u32 %v2409, 4294901760
      %v2813 = vsub.f32 %v2409, %v2812
      %v2814 = vand.u32 %v2813, 4294901760
      %2815 = vmatmul.f32.gmra.mxu0 %v2814
      %v2816 = vpop.f32.mrf.mxu0
      %v2817 = vadd.f32 %v2776, %v2816
      %v2818 = vand.u32 %v2411, 4294901760
      %v2819 = vsub.f32 %v2411, %v2818
      %v2820 = vand.u32 %v2819, 4294901760
      %2821 = vmatmul.f32.gmra.mxu0 %v2820
      %v2822 = vpop.f32.mrf.mxu0
      %v2823 = vadd.f32 %v2781, %v2822
      %2824 = vdwg.mxu0
      %2825 = vmatpush.msra.mxu0 0.0
      %2826 = vmatpush.msra.mxu0 0.0
      %2827 = vmatpush.msra.mxu0 0.0
      %2828 = vmatpush.msra.mxu0 0.0
      %2829 = vmatpush.msra.mxu0 0.0
      %2830 = vmatpush.msra.mxu0 0.0
      %2831 = vmatpush.msra.mxu0 0.0
      %2832 = vmatpush.msra.mxu0 0.0
      %2833 = vmatpush.msra.mxu0 0.0
      %2834 = vmatpush.msra.mxu0 0.0
      %2835 = vmatpush.msra.mxu0 0.0
      %2836 = vmatpush.msra.mxu0 0.0
      %2837 = vmatpush.msra.mxu0 0.0
      %2838 = vmatpush.msra.mxu0 0.0
      %2839 = vmatpush.msra.mxu0 0.0
      %v2840 = vand.u32 %v2415, 4294901760
      %v2841 = vsub.f32 %v2415, %v2840
      %v2842 = vand.u32 %v2841, 4294901760
      %2843 = vmatpush.msra.mxu0 %v2842
      %v2844 = vand.u32 %v2405, 4294901760
      %2845 = vmatmul.f32.gmra.mxu0 %v2844
      %v2846 = vpop.f32.mrf.mxu0
      %v2847 = vadd.f32 %v2805, %v2846
      %v2848 = vand.u32 %v2407, 4294901760
      %2849 = vmatmul.f32.gmra.mxu0 %v2848
      %v2850 = vpop.f32.mrf.mxu0
      %v2851 = vadd.f32 %v2811, %v2850
      %v2852 = vand.u32 %v2409, 4294901760
      %2853 = vmatmul.f32.gmra.mxu0 %v2852
      %v2854 = vpop.f32.mrf.mxu0
      %v2855 = vadd.f32 %v2817, %v2854
      %v2856 = vand.u32 %v2411, 4294901760
      %2857 = vmatmul.f32.gmra.mxu0 %v2856
      %v2858 = vpop.f32.mrf.mxu0
      %v2859 = vadd.f32 %v2823, %v2858
      %2860 = vdwg.mxu0
      %2861 = vmatpush.msra.mxu0 0.0
      %2862 = vmatpush.msra.mxu0 0.0
      %2863 = vmatpush.msra.mxu0 0.0
      %2864 = vmatpush.msra.mxu0 0.0
      %2865 = vmatpush.msra.mxu0 0.0
      %2866 = vmatpush.msra.mxu0 0.0
      %2867 = vmatpush.msra.mxu0 0.0
      %2868 = vmatpush.msra.mxu0 0.0
      %2869 = vmatpush.msra.mxu0 0.0
      %2870 = vmatpush.msra.mxu0 0.0
      %2871 = vmatpush.msra.mxu0 0.0
      %2872 = vmatpush.msra.mxu0 0.0
      %2873 = vmatpush.msra.mxu0 0.0
      %2874 = vmatpush.msra.mxu0 0.0
      %2875 = vmatpush.msra.mxu0 0.0
      %v2876 = vand.u32 %v2415, 4294901760
      %2877 = vmatpush.msra.mxu0 %v2876
      %v2878 = vand.u32 %v2405, 4294901760
      %2879 = vmatmul.f32.gmra.mxu0 %v2878
      %v2880 = vpop.f32.mrf.mxu0
      %v2881 = vadd.f32 %v2847, %v2880
      %v2882 = vand.u32 %v2407, 4294901760
      %2883 = vmatmul.f32.gmra.mxu0 %v2882
      %v2884 = vpop.f32.mrf.mxu0
      %v2885 = vadd.f32 %v2851, %v2884
      %v2886 = vand.u32 %v2409, 4294901760
      %2887 = vmatmul.f32.gmra.mxu0 %v2886
      %v2888 = vpop.f32.mrf.mxu0
      %v2889 = vadd.f32 %v2855, %v2888
      %v2890 = vand.u32 %v2411, 4294901760
      %2891 = vmatmul.f32.gmra.mxu0 %v2890
      %v2892 = vpop.f32.mrf.mxu0
      %v2893 = vadd.f32 %v2859, %v2892
      %2894 = vdwg.mxu0
      %v2895 = vadd.f32 %v2370, %v2642
      %v2896 = vadd.f32 %v2371, %v2881
      %v2897 = vadd.f32 %v2372, %v2646
      %v2898 = vadd.f32 %v2373, %v2885
      %v2899 = vadd.f32 %v2374, %v2650
      %v2900 = vadd.f32 %v2375, %v2889
      %v2901 = vadd.f32 %v2376, %v2654
      %v2902 = vadd.f32 %v2377, %v2893
      %v2903 = vld [vmem:[%s219] sm:$0xff]
      %v2904 = vld [vmem:[%s219 + $0x8] sm:$0xf]
      %2907 = vst [vmem:[#allocation1] ss:$2 sm:$0xff] %v2903
      %s2908 = scalar_lea.vmem [#allocation1], 16
      %2909 = vst [vmem:[%s2908] ss:$2 sm:$0xff] %v2904
      %v2910 = vld.sshfl [vmem:[#allocation1] sm:$0xff pattern:$0x75316420]
      %v2911 = vld.sshfl [vmem:[#allocation1 + $0x8] sm:$0xff pattern:$0x75316420]
      %v2912 = vld.sshfl [vmem:[#allocation1 + $0x10] sm:$0xff pattern:$0x75316420]
      %2913 = vrot.lane.b32.xlu0 %v2910, 110
      %v2914 = vpop.permute.xlu0 %2913
      %2915 = vrot.lane.b32.xlu0 %v2911, 110
      %v2916 = vpop.permute.xlu0 %2915
      %2917 = vrot.lane.b32.xlu0 %v2912, 110
      %v2918 = vpop.permute.xlu0 %2917
      %vm2919 = vcmask 900096
      %v2920 = vsel %vm2919, %v2914, %v2916
      %v2921 = vsel %vm2919, %v2916, %v2918
      %v2924 = vsel %vm1300, %v2920, 0.0
      %v2925 = vsel %vm1301, %v2921, 0.0
      %v2926 = vld [vmem:[%s1] sm:$0xff]
      %v2927 = vld [vmem:[%s1 + $0x8] sm:$0xff]
      %v2928 = vld [vmem:[%s1 + $0x10] sm:$0xff]
      %v2929 = vld [vmem:[%s1 + $0x18] sm:$0xff]
      %2934 = vrot.lane.b32.xlu0 %v2926, 108
      %v2935 = vpop.permute.xlu0 %2934
      %2936 = vrot.lane.b32.xlu0 %v2927, 108
      %v2937 = vpop.permute.xlu0 %2936
      %2938 = vrot.lane.b32.xlu0 %v2928, 108
      %v2939 = vpop.permute.xlu0 %2938
      %2940 = vrot.lane.b32.xlu0 %v2929, 108
      %v2941 = vpop.permute.xlu0 %2940
      %v2942 = vsel %vm306, %v2935, 0
      %v2944 = vsel %vm306, %v2937, 0
      %v2946 = vsel %vm306, %v2939, 0
      %v2948 = vsel %vm306, %v2941, 0
      %v2951 = vsel %vm315, %v2924, 0
      %v2954 = vsel %vm315, %v2925, 0
      %2956 = vmatpush.msra.mxu0 0.0
      %2957 = vmatpush.msra.mxu0 0.0
      %2958 = vmatpush.msra.mxu0 0.0
      %2959 = vmatpush.msra.mxu0 0.0
      %2960 = vmatpush.msra.mxu0 0.0
      %2961 = vmatpush.msra.mxu0 0.0
      %2962 = vmatpush.msra.mxu0 0.0
      %2963 = vmatpush.msra.mxu0 0.0
      %2964 = vmatpush.msra.mxu0 0.0
      %2965 = vmatpush.msra.mxu0 0.0
      %2966 = vmatpush.msra.mxu0 0.0
      %2967 = vmatpush.msra.mxu0 0.0
      %2968 = vmatpush.msra.mxu0 0.0
      %2969 = vmatpush.msra.mxu0 0.0
      %2970 = vmatpush.msra.mxu0 0.0
      %v2971 = vand.u32 %v2951, 4294901760
      %2972 = vmatpush.msra.mxu0 %v2971
      %v2973 = vand.u32 %v2942, 4294901760
      %v2974 = vsub.f32 %v2942, %v2973
      %v2975 = vand.u32 %v2974, 4294901760
      %v2976 = vsub.f32 %v2974, %v2975
      %v2977 = vand.u32 %v2976, 4294901760
      %2978 = vmatmul.f32.gmra.mxu0 %v2977
      %v2979 = vpop.f32.mrf.mxu0
      %v2980 = vadd.f32 0.0, %v2979
      %v2981 = vand.u32 %v2944, 4294901760
      %v2982 = vsub.f32 %v2944, %v2981
      %v2983 = vand.u32 %v2982, 4294901760
      %v2984 = vsub.f32 %v2982, %v2983
      %v2985 = vand.u32 %v2984, 4294901760
      %2986 = vmatmul.f32.gmra.mxu0 %v2985
      %v2987 = vpop.f32.mrf.mxu0
      %v2988 = vadd.f32 0.0, %v2987
      %v2989 = vand.u32 %v2946, 4294901760
      %v2990 = vsub.f32 %v2946, %v2989
      %v2991 = vand.u32 %v2990, 4294901760
      %v2992 = vsub.f32 %v2990, %v2991
      %v2993 = vand.u32 %v2992, 4294901760
      %2994 = vmatmul.f32.gmra.mxu0 %v2993
      %v2995 = vpop.f32.mrf.mxu0
      %v2996 = vadd.f32 0.0, %v2995
      %v2997 = vand.u32 %v2948, 4294901760
      %v2998 = vsub.f32 %v2948, %v2997
      %v2999 = vand.u32 %v2998, 4294901760
      %v3000 = vsub.f32 %v2998, %v2999
      %v3001 = vand.u32 %v3000, 4294901760
      %3002 = vmatmul.f32.gmra.mxu0 %v3001
      %v3003 = vpop.f32.mrf.mxu0
      %v3004 = vadd.f32 0.0, %v3003
      %3005 = vdwg.mxu0
      %3006 = vmatpush.msra.mxu0 0.0
      %3007 = vmatpush.msra.mxu0 0.0
      %3008 = vmatpush.msra.mxu0 0.0
      %3009 = vmatpush.msra.mxu0 0.0
      %3010 = vmatpush.msra.mxu0 0.0
      %3011 = vmatpush.msra.mxu0 0.0
      %3012 = vmatpush.msra.mxu0 0.0
      %3013 = vmatpush.msra.mxu0 0.0
      %3014 = vmatpush.msra.mxu0 0.0
      %3015 = vmatpush.msra.mxu0 0.0
      %3016 = vmatpush.msra.mxu0 0.0
      %3017 = vmatpush.msra.mxu0 0.0
      %3018 = vmatpush.msra.mxu0 0.0
      %3019 = vmatpush.msra.mxu0 0.0
      %3020 = vmatpush.msra.mxu0 0.0
      %v3021 = vand.u32 %v2951, 4294901760
      %v3022 = vsub.f32 %v2951, %v3021
      %v3023 = vand.u32 %v3022, 4294901760
      %v3024 = vsub.f32 %v3022, %v3023
      %v3025 = vand.u32 %v3024, 4294901760
      %3026 = vmatpush.msra.mxu0 %v3025
      %v3027 = vand.u32 %v2942, 4294901760
      %3028 = vmatmul.f32.gmra.mxu0 %v3027
      %v3029 = vpop.f32.mrf.mxu0
      %v3030 = vadd.f32 %v2980, %v3029
      %v3031 = vand.u32 %v2944, 4294901760
      %3032 = vmatmul.f32.gmra.mxu0 %v3031
      %v3033 = vpop.f32.mrf.mxu0
      %v3034 = vadd.f32 %v2988, %v3033
      %v3035 = vand.u32 %v2946, 4294901760
      %3036 = vmatmul.f32.gmra.mxu0 %v3035
      %v3037 = vpop.f32.mrf.mxu0
      %v3038 = vadd.f32 %v2996, %v3037
      %v3039 = vand.u32 %v2948, 4294901760
      %3040 = vmatmul.f32.gmra.mxu0 %v3039
      %v3041 = vpop.f32.mrf.mxu0
      %v3042 = vadd.f32 %v3004, %v3041
      %3043 = vdwg.mxu0
      %3044 = vmatpush.msra.mxu0 0.0
      %3045 = vmatpush.msra.mxu0 0.0
      %3046 = vmatpush.msra.mxu0 0.0
      %3047 = vmatpush.msra.mxu0 0.0
      %3048 = vmatpush.msra.mxu0 0.0
      %3049 = vmatpush.msra.mxu0 0.0
      %3050 = vmatpush.msra.mxu0 0.0
      %3051 = vmatpush.msra.mxu0 0.0
      %3052 = vmatpush.msra.mxu0 0.0
      %3053 = vmatpush.msra.mxu0 0.0
      %3054 = vmatpush.msra.mxu0 0.0
      %3055 = vmatpush.msra.mxu0 0.0
      %3056 = vmatpush.msra.mxu0 0.0
      %3057 = vmatpush.msra.mxu0 0.0
      %3058 = vmatpush.msra.mxu0 0.0
      %v3059 = vand.u32 %v2951, 4294901760
      %v3060 = vsub.f32 %v2951, %v3059
      %3061 = vmatpush.msra.mxu0 %v3060
      %v3062 = vand.u32 %v2942, 4294901760
      %v3063 = vsub.f32 %v2942, %v3062
      %3064 = vmatmul.f32.gmra.mxu0 %v3063
      %v3065 = vpop.f32.mrf.mxu0
      %v3066 = vadd.f32 %v3030, %v3065
      %v3067 = vand.u32 %v2944, 4294901760
      %v3068 = vsub.f32 %v2944, %v3067
      %3069 = vmatmul.f32.gmra.mxu0 %v3068
      %v3070 = vpop.f32.mrf.mxu0
      %v3071 = vadd.f32 %v3034, %v3070
      %v3072 = vand.u32 %v2946, 4294901760
      %v3073 = vsub.f32 %v2946, %v3072
      %3074 = vmatmul.f32.gmra.mxu0 %v3073
      %v3075 = vpop.f32.mrf.mxu0
      %v3076 = vadd.f32 %v3038, %v3075
      %v3077 = vand.u32 %v2948, 4294901760
      %v3078 = vsub.f32 %v2948, %v3077
      %3079 = vmatmul.f32.gmra.mxu0 %v3078
      %v3080 = vpop.f32.mrf.mxu0
      %v3081 = vadd.f32 %v3042, %v3080
      %3082 = vdwg.mxu0
      %3083 = vmatpush.msra.mxu0 0.0
      %3084 = vmatpush.msra.mxu0 0.0
      %3085 = vmatpush.msra.mxu0 0.0
      %3086 = vmatpush.msra.mxu0 0.0
      %3087 = vmatpush.msra.mxu0 0.0
      %3088 = vmatpush.msra.mxu0 0.0
      %3089 = vmatpush.msra.mxu0 0.0
      %3090 = vmatpush.msra.mxu0 0.0
      %3091 = vmatpush.msra.mxu0 0.0
      %3092 = vmatpush.msra.mxu0 0.0
      %3093 = vmatpush.msra.mxu0 0.0
      %3094 = vmatpush.msra.mxu0 0.0
      %3095 = vmatpush.msra.mxu0 0.0
      %3096 = vmatpush.msra.mxu0 0.0
      %3097 = vmatpush.msra.mxu0 0.0
      %v3098 = vand.u32 %v2951, 4294901760
      %3099 = vmatpush.msra.mxu0 %v3098
      %v3100 = vand.u32 %v2942, 4294901760
      %v3101 = vsub.f32 %v2942, %v3100
      %v3102 = vand.u32 %v3101, 4294901760
      %3103 = vmatmul.f32.gmra.mxu0 %v3102
      %v3104 = vpop.f32.mrf.mxu0
      %v3105 = vadd.f32 %v3066, %v3104
      %v3106 = vand.u32 %v2944, 4294901760
      %v3107 = vsub.f32 %v2944, %v3106
      %v3108 = vand.u32 %v3107, 4294901760
      %3109 = vmatmul.f32.gmra.mxu0 %v3108
      %v3110 = vpop.f32.mrf.mxu0
      %v3111 = vadd.f32 %v3071, %v3110
      %v3112 = vand.u32 %v2946, 4294901760
      %v3113 = vsub.f32 %v2946, %v3112
      %v3114 = vand.u32 %v3113, 4294901760
      %3115 = vmatmul.f32.gmra.mxu0 %v3114
      %v3116 = vpop.f32.mrf.mxu0
      %v3117 = vadd.f32 %v3076, %v3116
      %v3118 = vand.u32 %v2948, 4294901760
      %v3119 = vsub.f32 %v2948, %v3118
      %v3120 = vand.u32 %v3119, 4294901760
      %3121 = vmatmul.f32.gmra.mxu0 %v3120
      %v3122 = vpop.f32.mrf.mxu0
      %v3123 = vadd.f32 %v3081, %v3122
      %3124 = vdwg.mxu0
      %3125 = vmatpush.msra.mxu0 0.0
      %3126 = vmatpush.msra.mxu0 0.0
      %3127 = vmatpush.msra.mxu0 0.0
      %3128 = vmatpush.msra.mxu0 0.0
      %3129 = vmatpush.msra.mxu0 0.0
      %3130 = vmatpush.msra.mxu0 0.0
      %3131 = vmatpush.msra.mxu0 0.0
      %3132 = vmatpush.msra.mxu0 0.0
      %3133 = vmatpush.msra.mxu0 0.0
      %3134 = vmatpush.msra.mxu0 0.0
      %3135 = vmatpush.msra.mxu0 0.0
      %3136 = vmatpush.msra.mxu0 0.0
      %3137 = vmatpush.msra.mxu0 0.0
      %3138 = vmatpush.msra.mxu0 0.0
      %3139 = vmatpush.msra.mxu0 0.0
      %v3140 = vand.u32 %v2951, 4294901760
      %v3141 = vsub.f32 %v2951, %v3140
      %v3142 = vand.u32 %v3141, 4294901760
      %3143 = vmatpush.msra.mxu0 %v3142
      %v3144 = vand.u32 %v2942, 4294901760
      %3145 = vmatmul.f32.gmra.mxu0 %v3144
      %v3146 = vpop.f32.mrf.mxu0
      %v3147 = vadd.f32 %v3105, %v3146
      %v3148 = vand.u32 %v2944, 4294901760
      %3149 = vmatmul.f32.gmra.mxu0 %v3148
      %v3150 = vpop.f32.mrf.mxu0
      %v3151 = vadd.f32 %v3111, %v3150
      %v3152 = vand.u32 %v2946, 4294901760
      %3153 = vmatmul.f32.gmra.mxu0 %v3152
      %v3154 = vpop.f32.mrf.mxu0
      %v3155 = vadd.f32 %v3117, %v3154
      %v3156 = vand.u32 %v2948, 4294901760
      %3157 = vmatmul.f32.gmra.mxu0 %v3156
      %v3158 = vpop.f32.mrf.mxu0
      %v3159 = vadd.f32 %v3123, %v3158
      %3160 = vdwg.mxu0
      %3161 = vmatpush.msra.mxu0 0.0
      %3162 = vmatpush.msra.mxu0 0.0
      %3163 = vmatpush.msra.mxu0 0.0
      %3164 = vmatpush.msra.mxu0 0.0
      %3165 = vmatpush.msra.mxu0 0.0
      %3166 = vmatpush.msra.mxu0 0.0
      %3167 = vmatpush.msra.mxu0 0.0
      %3168 = vmatpush.msra.mxu0 0.0
      %3169 = vmatpush.msra.mxu0 0.0
      %3170 = vmatpush.msra.mxu0 0.0
      %3171 = vmatpush.msra.mxu0 0.0
      %3172 = vmatpush.msra.mxu0 0.0
      %3173 = vmatpush.msra.mxu0 0.0
      %3174 = vmatpush.msra.mxu0 0.0
      %3175 = vmatpush.msra.mxu0 0.0
      %v3176 = vand.u32 %v2951, 4294901760
      %3177 = vmatpush.msra.mxu0 %v3176
      %v3178 = vand.u32 %v2942, 4294901760
      %3179 = vmatmul.f32.gmra.mxu0 %v3178
      %v3180 = vpop.f32.mrf.mxu0
      %v3181 = vadd.f32 %v3147, %v3180
      %v3182 = vand.u32 %v2944, 4294901760
      %3183 = vmatmul.f32.gmra.mxu0 %v3182
      %v3184 = vpop.f32.mrf.mxu0
      %v3185 = vadd.f32 %v3151, %v3184
      %v3186 = vand.u32 %v2946, 4294901760
      %3187 = vmatmul.f32.gmra.mxu0 %v3186
      %v3188 = vpop.f32.mrf.mxu0
      %v3189 = vadd.f32 %v3155, %v3188
      %v3190 = vand.u32 %v2948, 4294901760
      %3191 = vmatmul.f32.gmra.mxu0 %v3190
      %v3192 = vpop.f32.mrf.mxu0
      %v3193 = vadd.f32 %v3159, %v3192
      %3194 = vdwg.mxu0
      %3195 = vmatpush.msra.mxu0 0.0
      %3196 = vmatpush.msra.mxu0 0.0
      %3197 = vmatpush.msra.mxu0 0.0
      %3198 = vmatpush.msra.mxu0 0.0
      %3199 = vmatpush.msra.mxu0 0.0
      %3200 = vmatpush.msra.mxu0 0.0
      %3201 = vmatpush.msra.mxu0 0.0
      %3202 = vmatpush.msra.mxu0 0.0
      %3203 = vmatpush.msra.mxu0 0.0
      %3204 = vmatpush.msra.mxu0 0.0
      %3205 = vmatpush.msra.mxu0 0.0
      %3206 = vmatpush.msra.mxu0 0.0
      %3207 = vmatpush.msra.mxu0 0.0
      %3208 = vmatpush.msra.mxu0 0.0
      %3209 = vmatpush.msra.mxu0 0.0
      %v3210 = vand.u32 %v2954, 4294901760
      %3211 = vmatpush.msra.mxu0 %v3210
      %v3212 = vand.u32 %v2942, 4294901760
      %v3213 = vsub.f32 %v2942, %v3212
      %v3214 = vand.u32 %v3213, 4294901760
      %v3215 = vsub.f32 %v3213, %v3214
      %v3216 = vand.u32 %v3215, 4294901760
      %3217 = vmatmul.f32.gmra.mxu0 %v3216
      %v3218 = vpop.f32.mrf.mxu0
      %v3219 = vadd.f32 0.0, %v3218
      %v3220 = vand.u32 %v2944, 4294901760
      %v3221 = vsub.f32 %v2944, %v3220
      %v3222 = vand.u32 %v3221, 4294901760
      %v3223 = vsub.f32 %v3221, %v3222
      %v3224 = vand.u32 %v3223, 4294901760
      %3225 = vmatmul.f32.gmra.mxu0 %v3224
      %v3226 = vpop.f32.mrf.mxu0
      %v3227 = vadd.f32 0.0, %v3226
      %v3228 = vand.u32 %v2946, 4294901760
      %v3229 = vsub.f32 %v2946, %v3228
      %v3230 = vand.u32 %v3229, 4294901760
      %v3231 = vsub.f32 %v3229, %v3230
      %v3232 = vand.u32 %v3231, 4294901760
      %3233 = vmatmul.f32.gmra.mxu0 %v3232
      %v3234 = vpop.f32.mrf.mxu0
      %v3235 = vadd.f32 0.0, %v3234
      %v3236 = vand.u32 %v2948, 4294901760
      %v3237 = vsub.f32 %v2948, %v3236
      %v3238 = vand.u32 %v3237, 4294901760
      %v3239 = vsub.f32 %v3237, %v3238
      %v3240 = vand.u32 %v3239, 4294901760
      %3241 = vmatmul.f32.gmra.mxu0 %v3240
      %v3242 = vpop.f32.mrf.mxu0
      %v3243 = vadd.f32 0.0, %v3242
      %3244 = vdwg.mxu0
      %3245 = vmatpush.msra.mxu0 0.0
      %3246 = vmatpush.msra.mxu0 0.0
      %3247 = vmatpush.msra.mxu0 0.0
      %3248 = vmatpush.msra.mxu0 0.0
      %3249 = vmatpush.msra.mxu0 0.0
      %3250 = vmatpush.msra.mxu0 0.0
      %3251 = vmatpush.msra.mxu0 0.0
      %3252 = vmatpush.msra.mxu0 0.0
      %3253 = vmatpush.msra.mxu0 0.0
      %3254 = vmatpush.msra.mxu0 0.0
      %3255 = vmatpush.msra.mxu0 0.0
      %3256 = vmatpush.msra.mxu0 0.0
      %3257 = vmatpush.msra.mxu0 0.0
      %3258 = vmatpush.msra.mxu0 0.0
      %3259 = vmatpush.msra.mxu0 0.0
      %v3260 = vand.u32 %v2954, 4294901760
      %v3261 = vsub.f32 %v2954, %v3260
      %v3262 = vand.u32 %v3261, 4294901760
      %v3263 = vsub.f32 %v3261, %v3262
      %v3264 = vand.u32 %v3263, 4294901760
      %3265 = vmatpush.msra.mxu0 %v3264
      %v3266 = vand.u32 %v2942, 4294901760
      %3267 = vmatmul.f32.gmra.mxu0 %v3266
      %v3268 = vpop.f32.mrf.mxu0
      %v3269 = vadd.f32 %v3219, %v3268
      %v3270 = vand.u32 %v2944, 4294901760
      %3271 = vmatmul.f32.gmra.mxu0 %v3270
      %v3272 = vpop.f32.mrf.mxu0
      %v3273 = vadd.f32 %v3227, %v3272
      %v3274 = vand.u32 %v2946, 4294901760
      %3275 = vmatmul.f32.gmra.mxu0 %v3274
      %v3276 = vpop.f32.mrf.mxu0
      %v3277 = vadd.f32 %v3235, %v3276
      %v3278 = vand.u32 %v2948, 4294901760
      %3279 = vmatmul.f32.gmra.mxu0 %v3278
      %v3280 = vpop.f32.mrf.mxu0
      %v3281 = vadd.f32 %v3243, %v3280
      %3282 = vdwg.mxu0
      %3283 = vmatpush.msra.mxu0 0.0
      %3284 = vmatpush.msra.mxu0 0.0
      %3285 = vmatpush.msra.mxu0 0.0
      %3286 = vmatpush.msra.mxu0 0.0
      %3287 = vmatpush.msra.mxu0 0.0
      %3288 = vmatpush.msra.mxu0 0.0
      %3289 = vmatpush.msra.mxu0 0.0
      %3290 = vmatpush.msra.mxu0 0.0
      %3291 = vmatpush.msra.mxu0 0.0
      %3292 = vmatpush.msra.mxu0 0.0
      %3293 = vmatpush.msra.mxu0 0.0
      %3294 = vmatpush.msra.mxu0 0.0
      %3295 = vmatpush.msra.mxu0 0.0
      %3296 = vmatpush.msra.mxu0 0.0
      %3297 = vmatpush.msra.mxu0 0.0
      %v3298 = vand.u32 %v2954, 4294901760
      %v3299 = vsub.f32 %v2954, %v3298
      %3300 = vmatpush.msra.mxu0 %v3299
      %v3301 = vand.u32 %v2942, 4294901760
      %v3302 = vsub.f32 %v2942, %v3301
      %3303 = vmatmul.f32.gmra.mxu0 %v3302
      %v3304 = vpop.f32.mrf.mxu0
      %v3305 = vadd.f32 %v3269, %v3304
      %v3306 = vand.u32 %v2944, 4294901760
      %v3307 = vsub.f32 %v2944, %v3306
      %3308 = vmatmul.f32.gmra.mxu0 %v3307
      %v3309 = vpop.f32.mrf.mxu0
      %v3310 = vadd.f32 %v3273, %v3309
      %v3311 = vand.u32 %v2946, 4294901760
      %v3312 = vsub.f32 %v2946, %v3311
      %3313 = vmatmul.f32.gmra.mxu0 %v3312
      %v3314 = vpop.f32.mrf.mxu0
      %v3315 = vadd.f32 %v3277, %v3314
      %v3316 = vand.u32 %v2948, 4294901760
      %v3317 = vsub.f32 %v2948, %v3316
      %3318 = vmatmul.f32.gmra.mxu0 %v3317
      %v3319 = vpop.f32.mrf.mxu0
      %v3320 = vadd.f32 %v3281, %v3319
      %3321 = vdwg.mxu0
      %3322 = vmatpush.msra.mxu0 0.0
      %3323 = vmatpush.msra.mxu0 0.0
      %3324 = vmatpush.msra.mxu0 0.0
      %3325 = vmatpush.msra.mxu0 0.0
      %3326 = vmatpush.msra.mxu0 0.0
      %3327 = vmatpush.msra.mxu0 0.0
      %3328 = vmatpush.msra.mxu0 0.0
      %3329 = vmatpush.msra.mxu0 0.0
      %3330 = vmatpush.msra.mxu0 0.0
      %3331 = vmatpush.msra.mxu0 0.0
      %3332 = vmatpush.msra.mxu0 0.0
      %3333 = vmatpush.msra.mxu0 0.0
      %3334 = vmatpush.msra.mxu0 0.0
      %3335 = vmatpush.msra.mxu0 0.0
      %3336 = vmatpush.msra.mxu0 0.0
      %v3337 = vand.u32 %v2954, 4294901760
      %3338 = vmatpush.msra.mxu0 %v3337
      %v3339 = vand.u32 %v2942, 4294901760
      %v3340 = vsub.f32 %v2942, %v3339
      %v3341 = vand.u32 %v3340, 4294901760
      %3342 = vmatmul.f32.gmra.mxu0 %v3341
      %v3343 = vpop.f32.mrf.mxu0
      %v3344 = vadd.f32 %v3305, %v3343
      %v3345 = vand.u32 %v2944, 4294901760
      %v3346 = vsub.f32 %v2944, %v3345
      %v3347 = vand.u32 %v3346, 4294901760
      %3348 = vmatmul.f32.gmra.mxu0 %v3347
      %v3349 = vpop.f32.mrf.mxu0
      %v3350 = vadd.f32 %v3310, %v3349
      %v3351 = vand.u32 %v2946, 4294901760
      %v3352 = vsub.f32 %v2946, %v3351
      %v3353 = vand.u32 %v3352, 4294901760
      %3354 = vmatmul.f32.gmra.mxu0 %v3353
      %v3355 = vpop.f32.mrf.mxu0
      %v3356 = vadd.f32 %v3315, %v3355
      %v3357 = vand.u32 %v2948, 4294901760
      %v3358 = vsub.f32 %v2948, %v3357
      %v3359 = vand.u32 %v3358, 4294901760
      %3360 = vmatmul.f32.gmra.mxu0 %v3359
      %v3361 = vpop.f32.mrf.mxu0
      %v3362 = vadd.f32 %v3320, %v3361
      %3363 = vdwg.mxu0
      %3364 = vmatpush.msra.mxu0 0.0
      %3365 = vmatpush.msra.mxu0 0.0
      %3366 = vmatpush.msra.mxu0 0.0
      %3367 = vmatpush.msra.mxu0 0.0
      %3368 = vmatpush.msra.mxu0 0.0
      %3369 = vmatpush.msra.mxu0 0.0
      %3370 = vmatpush.msra.mxu0 0.0
      %3371 = vmatpush.msra.mxu0 0.0
      %3372 = vmatpush.msra.mxu0 0.0
      %3373 = vmatpush.msra.mxu0 0.0
      %3374 = vmatpush.msra.mxu0 0.0
      %3375 = vmatpush.msra.mxu0 0.0
      %3376 = vmatpush.msra.mxu0 0.0
      %3377 = vmatpush.msra.mxu0 0.0
      %3378 = vmatpush.msra.mxu0 0.0
      %v3379 = vand.u32 %v2954, 4294901760
      %v3380 = vsub.f32 %v2954, %v3379
      %v3381 = vand.u32 %v3380, 4294901760
      %3382 = vmatpush.msra.mxu0 %v3381
      %v3383 = vand.u32 %v2942, 4294901760
      %3384 = vmatmul.f32.gmra.mxu0 %v3383
      %v3385 = vpop.f32.mrf.mxu0
      %v3386 = vadd.f32 %v3344, %v3385
      %v3387 = vand.u32 %v2944, 4294901760
      %3388 = vmatmul.f32.gmra.mxu0 %v3387
      %v3389 = vpop.f32.mrf.mxu0
      %v3390 = vadd.f32 %v3350, %v3389
      %v3391 = vand.u32 %v2946, 4294901760
      %3392 = vmatmul.f32.gmra.mxu0 %v3391
      %v3393 = vpop.f32.mrf.mxu0
      %v3394 = vadd.f32 %v3356, %v3393
      %v3395 = vand.u32 %v2948, 4294901760
      %3396 = vmatmul.f32.gmra.mxu0 %v3395
      %v3397 = vpop.f32.mrf.mxu0
      %v3398 = vadd.f32 %v3362, %v3397
      %3399 = vdwg.mxu0
      %3400 = vmatpush.msra.mxu0 0.0
      %3401 = vmatpush.msra.mxu0 0.0
      %3402 = vmatpush.msra.mxu0 0.0
      %3403 = vmatpush.msra.mxu0 0.0
      %3404 = vmatpush.msra.mxu0 0.0
      %3405 = vmatpush.msra.mxu0 0.0
      %3406 = vmatpush.msra.mxu0 0.0
      %3407 = vmatpush.msra.mxu0 0.0
      %3408 = vmatpush.msra.mxu0 0.0
      %3409 = vmatpush.msra.mxu0 0.0
      %3410 = vmatpush.msra.mxu0 0.0
      %3411 = vmatpush.msra.mxu0 0.0
      %3412 = vmatpush.msra.mxu0 0.0
      %3413 = vmatpush.msra.mxu0 0.0
      %3414 = vmatpush.msra.mxu0 0.0
      %v3415 = vand.u32 %v2954, 4294901760
      %3416 = vmatpush.msra.mxu0 %v3415
      %v3417 = vand.u32 %v2942, 4294901760
      %3418 = vmatmul.f32.gmra.mxu0 %v3417
      %v3419 = vpop.f32.mrf.mxu0
      %v3420 = vadd.f32 %v3386, %v3419
      %v3421 = vand.u32 %v2944, 4294901760
      %3422 = vmatmul.f32.gmra.mxu0 %v3421
      %v3423 = vpop.f32.mrf.mxu0
      %v3424 = vadd.f32 %v3390, %v3423
      %v3425 = vand.u32 %v2946, 4294901760
      %3426 = vmatmul.f32.gmra.mxu0 %v3425
      %v3427 = vpop.f32.mrf.mxu0
      %v3428 = vadd.f32 %v3394, %v3427
      %v3429 = vand.u32 %v2948, 4294901760
      %3430 = vmatmul.f32.gmra.mxu0 %v3429
      %v3431 = vpop.f32.mrf.mxu0
      %v3432 = vadd.f32 %v3398, %v3431
      %3433 = vdwg.mxu0
      %v3434 = vadd.f32 %v2895, %v3181
      %v3435 = vadd.f32 %v2896, %v3420
      %v3436 = vadd.f32 %v2897, %v3185
      %v3437 = vadd.f32 %v2898, %v3424
      %v3438 = vadd.f32 %v2899, %v3189
      %v3439 = vadd.f32 %v2900, %v3428
      %v3440 = vadd.f32 %v2901, %v3193
      %v3441 = vadd.f32 %v2902, %v3432
      %v3442 = vld [vmem:[%s219] sm:$0xff]
      %v3443 = vld [vmem:[%s219 + $0x8] sm:$0xf]
      %3446 = vst [vmem:[#allocation1] ss:$2 sm:$0xff] %v3442
      %s3447 = scalar_lea.vmem [#allocation1], 16
      %3448 = vst [vmem:[%s3447] ss:$2 sm:$0xff] %v3443
      %v3449 = vld.sshfl [vmem:[#allocation1] sm:$0xff pattern:$0x75316420]
      %v3450 = vld.sshfl [vmem:[#allocation1 + $0x8] sm:$0xff pattern:$0x75316420]
      %v3451 = vld.sshfl [vmem:[#allocation1 + $0x10] sm:$0xff pattern:$0x75316420]
      %3452 = vrot.lane.b32.xlu0 %v3449, 96
      %v3453 = vpop.permute.xlu0 %3452
      %3454 = vrot.lane.b32.xlu0 %v3450, 96
      %v3455 = vpop.permute.xlu0 %3454
      %3456 = vrot.lane.b32.xlu0 %v3451, 96
      %v3457 = vpop.permute.xlu0 %3456
      %vm3458 = vcmask 785408
      %v3459 = vsel %vm3458, %v3453, %v3455
      %v3460 = vsel %vm3458, %v3455, %v3457
      %v3463 = vsel %vm261, %v3459, 0.0
      %v3464 = vsel %vm262, %v3460, 0.0
      %v3465 = vld [vmem:[%s1] sm:$0xff]
      %v3466 = vld [vmem:[%s1 + $0x8] sm:$0xff]
      %v3467 = vld [vmem:[%s1 + $0x10] sm:$0xff]
      %v3468 = vld [vmem:[%s1 + $0x18] sm:$0xff]
      %3473 = vrot.lane.b32.xlu0 %v3465, 104
      %v3474 = vpop.permute.xlu0 %3473
      %3475 = vrot.lane.b32.xlu0 %v3466, 104
      %v3476 = vpop.permute.xlu0 %3475
      %3477 = vrot.lane.b32.xlu0 %v3467, 104
      %v3478 = vpop.permute.xlu0 %3477
      %3479 = vrot.lane.b32.xlu0 %v3468, 104
      %v3480 = vpop.permute.xlu0 %3479
      %v3481 = vsel %vm306, %v3474, 0
      %v3483 = vsel %vm306, %v3476, 0
      %v3485 = vsel %vm306, %v3478, 0
      %v3487 = vsel %vm306, %v3480, 0
      %v3490 = vsel %vm315, %v3463, 0
      %v3493 = vsel %vm315, %v3464, 0
      %3495 = vmatpush.msra.mxu0 0.0
      %3496 = vmatpush.msra.mxu0 0.0
      %3497 = vmatpush.msra.mxu0 0.0
      %3498 = vmatpush.msra.mxu0 0.0
      %3499 = vmatpush.msra.mxu0 0.0
      %3500 = vmatpush.msra.mxu0 0.0
      %3501 = vmatpush.msra.mxu0 0.0
      %3502 = vmatpush.msra.mxu0 0.0
      %3503 = vmatpush.msra.mxu0 0.0
      %3504 = vmatpush.msra.mxu0 0.0
      %3505 = vmatpush.msra.mxu0 0.0
      %3506 = vmatpush.msra.mxu0 0.0
      %3507 = vmatpush.msra.mxu0 0.0
      %3508 = vmatpush.msra.mxu0 0.0
      %3509 = vmatpush.msra.mxu0 0.0
      %v3510 = vand.u32 %v3490, 4294901760
      %3511 = vmatpush.msra.mxu0 %v3510
      %v3512 = vand.u32 %v3481, 4294901760
      %v3513 = vsub.f32 %v3481, %v3512
      %v3514 = vand.u32 %v3513, 4294901760
      %v3515 = vsub.f32 %v3513, %v3514
      %v3516 = vand.u32 %v3515, 4294901760
      %3517 = vmatmul.f32.gmra.mxu0 %v3516
      %v3518 = vpop.f32.mrf.mxu0
      %v3519 = vadd.f32 0.0, %v3518
      %v3520 = vand.u32 %v3483, 4294901760
      %v3521 = vsub.f32 %v3483, %v3520
      %v3522 = vand.u32 %v3521, 4294901760
      %v3523 = vsub.f32 %v3521, %v3522
      %v3524 = vand.u32 %v3523, 4294901760
      %3525 = vmatmul.f32.gmra.mxu0 %v3524
      %v3526 = vpop.f32.mrf.mxu0
      %v3527 = vadd.f32 0.0, %v3526
      %v3528 = vand.u32 %v3485, 4294901760
      %v3529 = vsub.f32 %v3485, %v3528
      %v3530 = vand.u32 %v3529, 4294901760
      %v3531 = vsub.f32 %v3529, %v3530
      %v3532 = vand.u32 %v3531, 4294901760
      %3533 = vmatmul.f32.gmra.mxu0 %v3532
      %v3534 = vpop.f32.mrf.mxu0
      %v3535 = vadd.f32 0.0, %v3534
      %v3536 = vand.u32 %v3487, 4294901760
      %v3537 = vsub.f32 %v3487, %v3536
      %v3538 = vand.u32 %v3537, 4294901760
      %v3539 = vsub.f32 %v3537, %v3538
      %v3540 = vand.u32 %v3539, 4294901760
      %3541 = vmatmul.f32.gmra.mxu0 %v3540
      %v3542 = vpop.f32.mrf.mxu0
      %v3543 = vadd.f32 0.0, %v3542
      %3544 = vdwg.mxu0
      %3545 = vmatpush.msra.mxu0 0.0
      %3546 = vmatpush.msra.mxu0 0.0
      %3547 = vmatpush.msra.mxu0 0.0
      %3548 = vmatpush.msra.mxu0 0.0
      %3549 = vmatpush.msra.mxu0 0.0
      %3550 = vmatpush.msra.mxu0 0.0
      %3551 = vmatpush.msra.mxu0 0.0
      %3552 = vmatpush.msra.mxu0 0.0
      %3553 = vmatpush.msra.mxu0 0.0
      %3554 = vmatpush.msra.mxu0 0.0
      %3555 = vmatpush.msra.mxu0 0.0
      %3556 = vmatpush.msra.mxu0 0.0
      %3557 = vmatpush.msra.mxu0 0.0
      %3558 = vmatpush.msra.mxu0 0.0
      %3559 = vmatpush.msra.mxu0 0.0
      %v3560 = vand.u32 %v3490, 4294901760
      %v3561 = vsub.f32 %v3490, %v3560
      %v3562 = vand.u32 %v3561, 4294901760
      %v3563 = vsub.f32 %v3561, %v3562
      %v3564 = vand.u32 %v3563, 4294901760
      %3565 = vmatpush.msra.mxu0 %v3564
      %v3566 = vand.u32 %v3481, 4294901760
      %3567 = vmatmul.f32.gmra.mxu0 %v3566
      %v3568 = vpop.f32.mrf.mxu0
      %v3569 = vadd.f32 %v3519, %v3568
      %v3570 = vand.u32 %v3483, 4294901760
      %3571 = vmatmul.f32.gmra.mxu0 %v3570
      %v3572 = vpop.f32.mrf.mxu0
      %v3573 = vadd.f32 %v3527, %v3572
      %v3574 = vand.u32 %v3485, 4294901760
      %3575 = vmatmul.f32.gmra.mxu0 %v3574
      %v3576 = vpop.f32.mrf.mxu0
      %v3577 = vadd.f32 %v3535, %v3576
      %v3578 = vand.u32 %v3487, 4294901760
      %3579 = vmatmul.f32.gmra.mxu0 %v3578
      %v3580 = vpop.f32.mrf.mxu0
      %v3581 = vadd.f32 %v3543, %v3580
      %3582 = vdwg.mxu0
      %3583 = vmatpush.msra.mxu0 0.0
      %3584 = vmatpush.msra.mxu0 0.0
      %3585 = vmatpush.msra.mxu0 0.0
      %3586 = vmatpush.msra.mxu0 0.0
      %3587 = vmatpush.msra.mxu0 0.0
      %3588 = vmatpush.msra.mxu0 0.0
      %3589 = vmatpush.msra.mxu0 0.0
      %3590 = vmatpush.msra.mxu0 0.0
      %3591 = vmatpush.msra.mxu0 0.0
      %3592 = vmatpush.msra.mxu0 0.0
      %3593 = vmatpush.msra.mxu0 0.0
      %3594 = vmatpush.msra.mxu0 0.0
      %3595 = vmatpush.msra.mxu0 0.0
      %3596 = vmatpush.msra.mxu0 0.0
      %3597 = vmatpush.msra.mxu0 0.0
      %v3598 = vand.u32 %v3490, 4294901760
      %v3599 = vsub.f32 %v3490, %v3598
      %3600 = vmatpush.msra.mxu0 %v3599
      %v3601 = vand.u32 %v3481, 4294901760
      %v3602 = vsub.f32 %v3481, %v3601
      %3603 = vmatmul.f32.gmra.mxu0 %v3602
      %v3604 = vpop.f32.mrf.mxu0
      %v3605 = vadd.f32 %v3569, %v3604
      %v3606 = vand.u32 %v3483, 4294901760
      %v3607 = vsub.f32 %v3483, %v3606
      %3608 = vmatmul.f32.gmra.mxu0 %v3607
      %v3609 = vpop.f32.mrf.mxu0
      %v3610 = vadd.f32 %v3573, %v3609
      %v3611 = vand.u32 %v3485, 4294901760
      %v3612 = vsub.f32 %v3485, %v3611
      %3613 = vmatmul.f32.gmra.mxu0 %v3612
      %v3614 = vpop.f32.mrf.mxu0
      %v3615 = vadd.f32 %v3577, %v3614
      %v3616 = vand.u32 %v3487, 4294901760
      %v3617 = vsub.f32 %v3487, %v3616
      %3618 = vmatmul.f32.gmra.mxu0 %v3617
      %v3619 = vpop.f32.mrf.mxu0
      %v3620 = vadd.f32 %v3581, %v3619
      %3621 = vdwg.mxu0
      %3622 = vmatpush.msra.mxu0 0.0
      %3623 = vmatpush.msra.mxu0 0.0
      %3624 = vmatpush.msra.mxu0 0.0
      %3625 = vmatpush.msra.mxu0 0.0
      %3626 = vmatpush.msra.mxu0 0.0
      %3627 = vmatpush.msra.mxu0 0.0
      %3628 = vmatpush.msra.mxu0 0.0
      %3629 = vmatpush.msra.mxu0 0.0
      %3630 = vmatpush.msra.mxu0 0.0
      %3631 = vmatpush.msra.mxu0 0.0
      %3632 = vmatpush.msra.mxu0 0.0
      %3633 = vmatpush.msra.mxu0 0.0
      %3634 = vmatpush.msra.mxu0 0.0
      %3635 = vmatpush.msra.mxu0 0.0
      %3636 = vmatpush.msra.mxu0 0.0
      %v3637 = vand.u32 %v3490, 4294901760
      %3638 = vmatpush.msra.mxu0 %v3637
      %v3639 = vand.u32 %v3481, 4294901760
      %v3640 = vsub.f32 %v3481, %v3639
      %v3641 = vand.u32 %v3640, 4294901760
      %3642 = vmatmul.f32.gmra.mxu0 %v3641
      %v3643 = vpop.f32.mrf.mxu0
      %v3644 = vadd.f32 %v3605, %v3643
      %v3645 = vand.u32 %v3483, 4294901760
      %v3646 = vsub.f32 %v3483, %v3645
      %v3647 = vand.u32 %v3646, 4294901760
      %3648 = vmatmul.f32.gmra.mxu0 %v3647
      %v3649 = vpop.f32.mrf.mxu0
      %v3650 = vadd.f32 %v3610, %v3649
      %v3651 = vand.u32 %v3485, 4294901760
      %v3652 = vsub.f32 %v3485, %v3651
      %v3653 = vand.u32 %v3652, 4294901760
      %3654 = vmatmul.f32.gmra.mxu0 %v3653
      %v3655 = vpop.f32.mrf.mxu0
      %v3656 = vadd.f32 %v3615, %v3655
      %v3657 = vand.u32 %v3487, 4294901760
      %v3658 = vsub.f32 %v3487, %v3657
      %v3659 = vand.u32 %v3658, 4294901760
      %3660 = vmatmul.f32.gmra.mxu0 %v3659
      %v3661 = vpop.f32.mrf.mxu0
      %v3662 = vadd.f32 %v3620, %v3661
      %3663 = vdwg.mxu0
      %3664 = vmatpush.msra.mxu0 0.0
      %3665 = vmatpush.msra.mxu0 0.0
      %3666 = vmatpush.msra.mxu0 0.0
      %3667 = vmatpush.msra.mxu0 0.0
      %3668 = vmatpush.msra.mxu0 0.0
      %3669 = vmatpush.msra.mxu0 0.0
      %3670 = vmatpush.msra.mxu0 0.0
      %3671 = vmatpush.msra.mxu0 0.0
      %3672 = vmatpush.msra.mxu0 0.0
      %3673 = vmatpush.msra.mxu0 0.0
      %3674 = vmatpush.msra.mxu0 0.0
      %3675 = vmatpush.msra.mxu0 0.0
      %3676 = vmatpush.msra.mxu0 0.0
      %3677 = vmatpush.msra.mxu0 0.0
      %3678 = vmatpush.msra.mxu0 0.0
      %v3679 = vand.u32 %v3490, 4294901760
      %v3680 = vsub.f32 %v3490, %v3679
      %v3681 = vand.u32 %v3680, 4294901760
      %3682 = vmatpush.msra.mxu0 %v3681
      %v3683 = vand.u32 %v3481, 4294901760
      %3684 = vmatmul.f32.gmra.mxu0 %v3683
      %v3685 = vpop.f32.mrf.mxu0
      %v3686 = vadd.f32 %v3644, %v3685
      %v3687 = vand.u32 %v3483, 4294901760
      %3688 = vmatmul.f32.gmra.mxu0 %v3687
      %v3689 = vpop.f32.mrf.mxu0
      %v3690 = vadd.f32 %v3650, %v3689
      %v3691 = vand.u32 %v3485, 4294901760
      %3692 = vmatmul.f32.gmra.mxu0 %v3691
      %v3693 = vpop.f32.mrf.mxu0
      %v3694 = vadd.f32 %v3656, %v3693
      %v3695 = vand.u32 %v3487, 4294901760
      %3696 = vmatmul.f32.gmra.mxu0 %v3695
      %v3697 = vpop.f32.mrf.mxu0
      %v3698 = vadd.f32 %v3662, %v3697
      %3699 = vdwg.mxu0
      %3700 = vmatpush.msra.mxu0 0.0
      %3701 = vmatpush.msra.mxu0 0.0
      %3702 = vmatpush.msra.mxu0 0.0
      %3703 = vmatpush.msra.mxu0 0.0
      %3704 = vmatpush.msra.mxu0 0.0
      %3705 = vmatpush.msra.mxu0 0.0
      %3706 = vmatpush.msra.mxu0 0.0
      %3707 = vmatpush.msra.mxu0 0.0
      %3708 = vmatpush.msra.mxu0 0.0
      %3709 = vmatpush.msra.mxu0 0.0
      %3710 = vmatpush.msra.mxu0 0.0
      %3711 = vmatpush.msra.mxu0 0.0
      %3712 = vmatpush.msra.mxu0 0.0
      %3713 = vmatpush.msra.mxu0 0.0
      %3714 = vmatpush.msra.mxu0 0.0
      %v3715 = vand.u32 %v3490, 4294901760
      %3716 = vmatpush.msra.mxu0 %v3715
      %v3717 = vand.u32 %v3481, 4294901760
      %3718 = vmatmul.f32.gmra.mxu0 %v3717
      %v3719 = vpop.f32.mrf.mxu0
      %v3720 = vadd.f32 %v3686, %v3719
      %v3721 = vand.u32 %v3483, 4294901760
      %3722 = vmatmul.f32.gmra.mxu0 %v3721
      %v3723 = vpop.f32.mrf.mxu0
      %v3724 = vadd.f32 %v3690, %v3723
      %v3725 = vand.u32 %v3485, 4294901760
      %3726 = vmatmul.f32.gmra.mxu0 %v3725
      %v3727 = vpop.f32.mrf.mxu0
      %v3728 = vadd.f32 %v3694, %v3727
      %v3729 = vand.u32 %v3487, 4294901760
      %3730 = vmatmul.f32.gmra.mxu0 %v3729
      %v3731 = vpop.f32.mrf.mxu0
      %v3732 = vadd.f32 %v3698, %v3731
      %3733 = vdwg.mxu0
      %3734 = vmatpush.msra.mxu0 0.0
      %3735 = vmatpush.msra.mxu0 0.0
      %3736 = vmatpush.msra.mxu0 0.0
      %3737 = vmatpush.msra.mxu0 0.0
      %3738 = vmatpush.msra.mxu0 0.0
      %3739 = vmatpush.msra.mxu0 0.0
      %3740 = vmatpush.msra.mxu0 0.0
      %3741 = vmatpush.msra.mxu0 0.0
      %3742 = vmatpush.msra.mxu0 0.0
      %3743 = vmatpush.msra.mxu0 0.0
      %3744 = vmatpush.msra.mxu0 0.0
      %3745 = vmatpush.msra.mxu0 0.0
      %3746 = vmatpush.msra.mxu0 0.0
      %3747 = vmatpush.msra.mxu0 0.0
      %3748 = vmatpush.msra.mxu0 0.0
      %v3749 = vand.u32 %v3493, 4294901760
      %3750 = vmatpush.msra.mxu0 %v3749
      %v3751 = vand.u32 %v3481, 4294901760
      %v3752 = vsub.f32 %v3481, %v3751
      %v3753 = vand.u32 %v3752, 4294901760
      %v3754 = vsub.f32 %v3752, %v3753
      %v3755 = vand.u32 %v3754, 4294901760
      %3756 = vmatmul.f32.gmra.mxu0 %v3755
      %v3757 = vpop.f32.mrf.mxu0
      %v3758 = vadd.f32 0.0, %v3757
      %v3759 = vand.u32 %v3483, 4294901760
      %v3760 = vsub.f32 %v3483, %v3759
      %v3761 = vand.u32 %v3760, 4294901760
      %v3762 = vsub.f32 %v3760, %v3761
      %v3763 = vand.u32 %v3762, 4294901760
      %3764 = vmatmul.f32.gmra.mxu0 %v3763
      %v3765 = vpop.f32.mrf.mxu0
      %v3766 = vadd.f32 0.0, %v3765
      %v3767 = vand.u32 %v3485, 4294901760
      %v3768 = vsub.f32 %v3485, %v3767
      %v3769 = vand.u32 %v3768, 4294901760
      %v3770 = vsub.f32 %v3768, %v3769
      %v3771 = vand.u32 %v3770, 4294901760
      %3772 = vmatmul.f32.gmra.mxu0 %v3771
      %v3773 = vpop.f32.mrf.mxu0
      %v3774 = vadd.f32 0.0, %v3773
      %v3775 = vand.u32 %v3487, 4294901760
      %v3776 = vsub.f32 %v3487, %v3775
      %v3777 = vand.u32 %v3776, 4294901760
      %v3778 = vsub.f32 %v3776, %v3777
      %v3779 = vand.u32 %v3778, 4294901760
      %3780 = vmatmul.f32.gmra.mxu0 %v3779
      %v3781 = vpop.f32.mrf.mxu0
      %v3782 = vadd.f32 0.0, %v3781
      %3783 = vdwg.mxu0
      %3784 = vmatpush.msra.mxu0 0.0
      %3785 = vmatpush.msra.mxu0 0.0
      %3786 = vmatpush.msra.mxu0 0.0
      %3787 = vmatpush.msra.mxu0 0.0
      %3788 = vmatpush.msra.mxu0 0.0
      %3789 = vmatpush.msra.mxu0 0.0
      %3790 = vmatpush.msra.mxu0 0.0
      %3791 = vmatpush.msra.mxu0 0.0
      %3792 = vmatpush.msra.mxu0 0.0
      %3793 = vmatpush.msra.mxu0 0.0
      %3794 = vmatpush.msra.mxu0 0.0
      %3795 = vmatpush.msra.mxu0 0.0
      %3796 = vmatpush.msra.mxu0 0.0
      %3797 = vmatpush.msra.mxu0 0.0
      %3798 = vmatpush.msra.mxu0 0.0
      %v3799 = vand.u32 %v3493, 4294901760
      %v3800 = vsub.f32 %v3493, %v3799
      %v3801 = vand.u32 %v3800, 4294901760
      %v3802 = vsub.f32 %v3800, %v3801
      %v3803 = vand.u32 %v3802, 4294901760
      %3804 = vmatpush.msra.mxu0 %v3803
      %v3805 = vand.u32 %v3481, 4294901760
      %3806 = vmatmul.f32.gmra.mxu0 %v3805
      %v3807 = vpop.f32.mrf.mxu0
      %v3808 = vadd.f32 %v3758, %v3807
      %v3809 = vand.u32 %v3483, 4294901760
      %3810 = vmatmul.f32.gmra.mxu0 %v3809
      %v3811 = vpop.f32.mrf.mxu0
      %v3812 = vadd.f32 %v3766, %v3811
      %v3813 = vand.u32 %v3485, 4294901760
      %3814 = vmatmul.f32.gmra.mxu0 %v3813
      %v3815 = vpop.f32.mrf.mxu0
      %v3816 = vadd.f32 %v3774, %v3815
      %v3817 = vand.u32 %v3487, 4294901760
      %3818 = vmatmul.f32.gmra.mxu0 %v3817
      %v3819 = vpop.f32.mrf.mxu0
      %v3820 = vadd.f32 %v3782, %v3819
      %3821 = vdwg.mxu0
      %3822 = vmatpush.msra.mxu0 0.0
      %3823 = vmatpush.msra.mxu0 0.0
      %3824 = vmatpush.msra.mxu0 0.0
      %3825 = vmatpush.msra.mxu0 0.0
      %3826 = vmatpush.msra.mxu0 0.0
      %3827 = vmatpush.msra.mxu0 0.0
      %3828 = vmatpush.msra.mxu0 0.0
      %3829 = vmatpush.msra.mxu0 0.0
      %3830 = vmatpush.msra.mxu0 0.0
      %3831 = vmatpush.msra.mxu0 0.0
      %3832 = vmatpush.msra.mxu0 0.0
      %3833 = vmatpush.msra.mxu0 0.0
      %3834 = vmatpush.msra.mxu0 0.0
      %3835 = vmatpush.msra.mxu0 0.0
      %3836 = vmatpush.msra.mxu0 0.0
      %v3837 = vand.u32 %v3493, 4294901760
      %v3838 = vsub.f32 %v3493, %v3837
      %3839 = vmatpush.msra.mxu0 %v3838
      %v3840 = vand.u32 %v3481, 4294901760
      %v3841 = vsub.f32 %v3481, %v3840
      %3842 = vmatmul.f32.gmra.mxu0 %v3841
      %v3843 = vpop.f32.mrf.mxu0
      %v3844 = vadd.f32 %v3808, %v3843
      %v3845 = vand.u32 %v3483, 4294901760
      %v3846 = vsub.f32 %v3483, %v3845
      %3847 = vmatmul.f32.gmra.mxu0 %v3846
      %v3848 = vpop.f32.mrf.mxu0
      %v3849 = vadd.f32 %v3812, %v3848
      %v3850 = vand.u32 %v3485, 4294901760
      %v3851 = vsub.f32 %v3485, %v3850
      %3852 = vmatmul.f32.gmra.mxu0 %v3851
      %v3853 = vpop.f32.mrf.mxu0
      %v3854 = vadd.f32 %v3816, %v3853
      %v3855 = vand.u32 %v3487, 4294901760
      %v3856 = vsub.f32 %v3487, %v3855
      %3857 = vmatmul.f32.gmra.mxu0 %v3856
      %v3858 = vpop.f32.mrf.mxu0
      %v3859 = vadd.f32 %v3820, %v3858
      %3860 = vdwg.mxu0
      %3861 = vmatpush.msra.mxu0 0.0
      %3862 = vmatpush.msra.mxu0 0.0
      %3863 = vmatpush.msra.mxu0 0.0
      %3864 = vmatpush.msra.mxu0 0.0
      %3865 = vmatpush.msra.mxu0 0.0
      %3866 = vmatpush.msra.mxu0 0.0
      %3867 = vmatpush.msra.mxu0 0.0
      %3868 = vmatpush.msra.mxu0 0.0
      %3869 = vmatpush.msra.mxu0 0.0
      %3870 = vmatpush.msra.mxu0 0.0
      %3871 = vmatpush.msra.mxu0 0.0
      %3872 = vmatpush.msra.mxu0 0.0
      %3873 = vmatpush.msra.mxu0 0.0
      %3874 = vmatpush.msra.mxu0 0.0
      %3875 = vmatpush.msra.mxu0 0.0
      %v3876 = vand.u32 %v3493, 4294901760
      %3877 = vmatpush.msra.mxu0 %v3876
      %v3878 = vand.u32 %v3481, 4294901760
      %v3879 = vsub.f32 %v3481, %v3878
      %v3880 = vand.u32 %v3879, 4294901760
      %3881 = vmatmul.f32.gmra.mxu0 %v3880
      %v3882 = vpop.f32.mrf.mxu0
      %v3883 = vadd.f32 %v3844, %v3882
      %v3884 = vand.u32 %v3483, 4294901760
      %v3885 = vsub.f32 %v3483, %v3884
      %v3886 = vand.u32 %v3885, 4294901760
      %3887 = vmatmul.f32.gmra.mxu0 %v3886
      %v3888 = vpop.f32.mrf.mxu0
      %v3889 = vadd.f32 %v3849, %v3888
      %v3890 = vand.u32 %v3485, 4294901760
      %v3891 = vsub.f32 %v3485, %v3890
      %v3892 = vand.u32 %v3891, 4294901760
      %3893 = vmatmul.f32.gmra.mxu0 %v3892
      %v3894 = vpop.f32.mrf.mxu0
      %v3895 = vadd.f32 %v3854, %v3894
      %v3896 = vand.u32 %v3487, 4294901760
      %v3897 = vsub.f32 %v3487, %v3896
      %v3898 = vand.u32 %v3897, 4294901760
      %3899 = vmatmul.f32.gmra.mxu0 %v3898
      %v3900 = vpop.f32.mrf.mxu0
      %v3901 = vadd.f32 %v3859, %v3900
      %3902 = vdwg.mxu0
      %3903 = vmatpush.msra.mxu0 0.0
      %3904 = vmatpush.msra.mxu0 0.0
      %3905 = vmatpush.msra.mxu0 0.0
      %3906 = vmatpush.msra.mxu0 0.0
      %3907 = vmatpush.msra.mxu0 0.0
      %3908 = vmatpush.msra.mxu0 0.0
      %3909 = vmatpush.msra.mxu0 0.0
      %3910 = vmatpush.msra.mxu0 0.0
      %3911 = vmatpush.msra.mxu0 0.0
      %3912 = vmatpush.msra.mxu0 0.0
      %3913 = vmatpush.msra.mxu0 0.0
      %3914 = vmatpush.msra.mxu0 0.0
      %3915 = vmatpush.msra.mxu0 0.0
      %3916 = vmatpush.msra.mxu0 0.0
      %3917 = vmatpush.msra.mxu0 0.0
      %v3918 = vand.u32 %v3493, 4294901760
      %v3919 = vsub.f32 %v3493, %v3918
      %v3920 = vand.u32 %v3919, 4294901760
      %3921 = vmatpush.msra.mxu0 %v3920
      %v3922 = vand.u32 %v3481, 4294901760
      %3923 = vmatmul.f32.gmra.mxu0 %v3922
      %v3924 = vpop.f32.mrf.mxu0
      %v3925 = vadd.f32 %v3883, %v3924
      %v3926 = vand.u32 %v3483, 4294901760
      %3927 = vmatmul.f32.gmra.mxu0 %v3926
      %v3928 = vpop.f32.mrf.mxu0
      %v3929 = vadd.f32 %v3889, %v3928
      %v3930 = vand.u32 %v3485, 4294901760
      %3931 = vmatmul.f32.gmra.mxu0 %v3930
      %v3932 = vpop.f32.mrf.mxu0
      %v3933 = vadd.f32 %v3895, %v3932
      %v3934 = vand.u32 %v3487, 4294901760
      %3935 = vmatmul.f32.gmra.mxu0 %v3934
      %v3936 = vpop.f32.mrf.mxu0
      %v3937 = vadd.f32 %v3901, %v3936
      %3938 = vdwg.mxu0
      %3939 = vmatpush.msra.mxu0 0.0
      %3940 = vmatpush.msra.mxu0 0.0
      %3941 = vmatpush.msra.mxu0 0.0
      %3942 = vmatpush.msra.mxu0 0.0
      %3943 = vmatpush.msra.mxu0 0.0
      %3944 = vmatpush.msra.mxu0 0.0
      %3945 = vmatpush.msra.mxu0 0.0
      %3946 = vmatpush.msra.mxu0 0.0
      %3947 = vmatpush.msra.mxu0 0.0
      %3948 = vmatpush.msra.mxu0 0.0
      %3949 = vmatpush.msra.mxu0 0.0
      %3950 = vmatpush.msra.mxu0 0.0
      %3951 = vmatpush.msra.mxu0 0.0
      %3952 = vmatpush.msra.mxu0 0.0
      %3953 = vmatpush.msra.mxu0 0.0
      %v3954 = vand.u32 %v3493, 4294901760
      %3955 = vmatpush.msra.mxu0 %v3954
      %v3956 = vand.u32 %v3481, 4294901760
      %3957 = vmatmul.f32.gmra.mxu0 %v3956
      %v3958 = vpop.f32.mrf.mxu0
      %v3959 = vadd.f32 %v3925, %v3958
      %v3960 = vand.u32 %v3483, 4294901760
      %3961 = vmatmul.f32.gmra.mxu0 %v3960
      %v3962 = vpop.f32.mrf.mxu0
      %v3963 = vadd.f32 %v3929, %v3962
      %v3964 = vand.u32 %v3485, 4294901760
      %3965 = vmatmul.f32.gmra.mxu0 %v3964
      %v3966 = vpop.f32.mrf.mxu0
      %v3967 = vadd.f32 %v3933, %v3966
      %v3968 = vand.u32 %v3487, 4294901760
      %3969 = vmatmul.f32.gmra.mxu0 %v3968
      %v3970 = vpop.f32.mrf.mxu0
      %v3971 = vadd.f32 %v3937, %v3970
      %3972 = vdwg.mxu0
      %v3973 = vadd.f32 %v3434, %v3720
      %v3974 = vadd.f32 %v3435, %v3959
      %v3975 = vadd.f32 %v3436, %v3724
      %v3976 = vadd.f32 %v3437, %v3963
      %v3977 = vadd.f32 %v3438, %v3728
      %v3978 = vadd.f32 %v3439, %v3967
      %v3979 = vadd.f32 %v3440, %v3732
      %v3980 = vadd.f32 %v3441, %v3971
      %v3981 = vld [vmem:[%s219] sm:$0xff]
      %v3982 = vld [vmem:[%s219 + $0x8] sm:$0xf]
      %3983 = vrot.lane.b32.xlu0 %v3465, 100
      %v3984 = vpop.permute.xlu0 %3983
      %3985 = vrot.lane.b32.xlu0 %v3466, 100
      %v3986 = vpop.permute.xlu0 %3985
      %3987 = vrot.lane.b32.xlu0 %v3467, 100
      %v3988 = vpop.permute.xlu0 %3987
      %3989 = vrot.lane.b32.xlu0 %v3468, 100
      %v3990 = vpop.permute.xlu0 %3989
      %3993 = vst [vmem:[#allocation1] ss:$2 sm:$0xff] %v3981
      %s3994 = scalar_lea.vmem [#allocation1], 16
      %3995 = vst [vmem:[%s3994] ss:$2 sm:$0xff] %v3982
      %v3996 = vld.sshfl [vmem:[#allocation1] sm:$0xff pattern:$0x75316420]
      %v3997 = vld.sshfl [vmem:[#allocation1 + $0x8] sm:$0xff pattern:$0x75316420]
      %v3998 = vld.sshfl [vmem:[#allocation1 + $0x10] sm:$0xff pattern:$0x75316420]
      %3999 = vrot.lane.b32.xlu0 %v3996, 95
      %v4000 = vpop.permute.xlu0 %3999
      %4001 = vrot.lane.b32.xlu0 %v3997, 95
      %v4002 = vpop.permute.xlu0 %4001
      %4003 = vrot.lane.b32.xlu0 %v3998, 95
      %v4004 = vpop.permute.xlu0 %4003
      %vm4005 = vcmask 777216
      %v4006 = vsel %vm4005, %v4000, %v4002
      %v4007 = vsel %vm4005, %v4002, %v4004
      %v4008 = vsel %vm306, %v3984, 0
      %v4010 = vsel %vm306, %v3986, 0
      %v4012 = vsel %vm306, %v3988, 0
      %v4014 = vsel %vm306, %v3990, 0
      %v4016 = vsel %vm315, %v4006, 0
      %v4018 = vsel %vm315, %v4007, 0
      %4020 = vmatpush.msra.mxu0 0.0
      %4021 = vmatpush.msra.mxu0 0.0
      %4022 = vmatpush.msra.mxu0 0.0
      %4023 = vmatpush.msra.mxu0 0.0
      %4024 = vmatpush.msra.mxu0 0.0
      %4025 = vmatpush.msra.mxu0 0.0
      %4026 = vmatpush.msra.mxu0 0.0
      %4027 = vmatpush.msra.mxu0 0.0
      %4028 = vmatpush.msra.mxu0 0.0
      %4029 = vmatpush.msra.mxu0 0.0
      %4030 = vmatpush.msra.mxu0 0.0
      %4031 = vmatpush.msra.mxu0 0.0
      %4032 = vmatpush.msra.mxu0 0.0
      %4033 = vmatpush.msra.mxu0 0.0
      %4034 = vmatpush.msra.mxu0 0.0
      %v4035 = vand.u32 %v4016, 4294901760
      %4036 = vmatpush.msra.mxu0 %v4035
      %v4037 = vand.u32 %v4008, 4294901760
      %v4038 = vsub.f32 %v4008, %v4037
      %v4039 = vand.u32 %v4038, 4294901760
      %v4040 = vsub.f32 %v4038, %v4039
      %v4041 = vand.u32 %v4040, 4294901760
      %4042 = vmatmul.f32.gmra.mxu0 %v4041
      %v4043 = vpop.f32.mrf.mxu0
      %v4044 = vadd.f32 0.0, %v4043
      %v4045 = vand.u32 %v4010, 4294901760
      %v4046 = vsub.f32 %v4010, %v4045
      %v4047 = vand.u32 %v4046, 4294901760
      %v4048 = vsub.f32 %v4046, %v4047
      %v4049 = vand.u32 %v4048, 4294901760
      %4050 = vmatmul.f32.gmra.mxu0 %v4049
      %v4051 = vpop.f32.mrf.mxu0
      %v4052 = vadd.f32 0.0, %v4051
      %v4053 = vand.u32 %v4012, 4294901760
      %v4054 = vsub.f32 %v4012, %v4053
      %v4055 = vand.u32 %v4054, 4294901760
      %v4056 = vsub.f32 %v4054, %v4055
      %v4057 = vand.u32 %v4056, 4294901760
      %4058 = vmatmul.f32.gmra.mxu0 %v4057
      %v4059 = vpop.f32.mrf.mxu0
      %v4060 = vadd.f32 0.0, %v4059
      %v4061 = vand.u32 %v4014, 4294901760
      %v4062 = vsub.f32 %v4014, %v4061
      %v4063 = vand.u32 %v4062, 4294901760
      %v4064 = vsub.f32 %v4062, %v4063
      %v4065 = vand.u32 %v4064, 4294901760
      %4066 = vmatmul.f32.gmra.mxu0 %v4065
      %v4067 = vpop.f32.mrf.mxu0
      %v4068 = vadd.f32 0.0, %v4067
      %4069 = vdwg.mxu0
      %4070 = vmatpush.msra.mxu0 0.0
      %4071 = vmatpush.msra.mxu0 0.0
      %4072 = vmatpush.msra.mxu0 0.0
      %4073 = vmatpush.msra.mxu0 0.0
      %4074 = vmatpush.msra.mxu0 0.0
      %4075 = vmatpush.msra.mxu0 0.0
      %4076 = vmatpush.msra.mxu0 0.0
      %4077 = vmatpush.msra.mxu0 0.0
      %4078 = vmatpush.msra.mxu0 0.0
      %4079 = vmatpush.msra.mxu0 0.0
      %4080 = vmatpush.msra.mxu0 0.0
      %4081 = vmatpush.msra.mxu0 0.0
      %4082 = vmatpush.msra.mxu0 0.0
      %4083 = vmatpush.msra.mxu0 0.0
      %4084 = vmatpush.msra.mxu0 0.0
      %v4085 = vand.u32 %v4016, 4294901760
      %v4086 = vsub.f32 %v4016, %v4085
      %v4087 = vand.u32 %v4086, 4294901760
      %v4088 = vsub.f32 %v4086, %v4087
      %v4089 = vand.u32 %v4088, 4294901760
      %4090 = vmatpush.msra.mxu0 %v4089
      %v4091 = vand.u32 %v4008, 4294901760
      %4092 = vmatmul.f32.gmra.mxu0 %v4091
      %v4093 = vpop.f32.mrf.mxu0
      %v4094 = vadd.f32 %v4044, %v4093
      %v4095 = vand.u32 %v4010, 4294901760
      %4096 = vmatmul.f32.gmra.mxu0 %v4095
      %v4097 = vpop.f32.mrf.mxu0
      %v4098 = vadd.f32 %v4052, %v4097
      %v4099 = vand.u32 %v4012, 4294901760
      %4100 = vmatmul.f32.gmra.mxu0 %v4099
      %v4101 = vpop.f32.mrf.mxu0
      %v4102 = vadd.f32 %v4060, %v4101
      %v4103 = vand.u32 %v4014, 4294901760
      %4104 = vmatmul.f32.gmra.mxu0 %v4103
      %v4105 = vpop.f32.mrf.mxu0
      %v4106 = vadd.f32 %v4068, %v4105
      %4107 = vdwg.mxu0
      %4108 = vmatpush.msra.mxu0 0.0
      %4109 = vmatpush.msra.mxu0 0.0
      %4110 = vmatpush.msra.mxu0 0.0
      %4111 = vmatpush.msra.mxu0 0.0
      %4112 = vmatpush.msra.mxu0 0.0
      %4113 = vmatpush.msra.mxu0 0.0
      %4114 = vmatpush.msra.mxu0 0.0
      %4115 = vmatpush.msra.mxu0 0.0
      %4116 = vmatpush.msra.mxu0 0.0
      %4117 = vmatpush.msra.mxu0 0.0
      %4118 = vmatpush.msra.mxu0 0.0
      %4119 = vmatpush.msra.mxu0 0.0
      %4120 = vmatpush.msra.mxu0 0.0
      %4121 = vmatpush.msra.mxu0 0.0
      %4122 = vmatpush.msra.mxu0 0.0
      %v4123 = vand.u32 %v4016, 4294901760
      %v4124 = vsub.f32 %v4016, %v4123
      %4125 = vmatpush.msra.mxu0 %v4124
      %v4126 = vand.u32 %v4008, 4294901760
      %v4127 = vsub.f32 %v4008, %v4126
      %4128 = vmatmul.f32.gmra.mxu0 %v4127
      %v4129 = vpop.f32.mrf.mxu0
      %v4130 = vadd.f32 %v4094, %v4129
      %v4131 = vand.u32 %v4010, 4294901760
      %v4132 = vsub.f32 %v4010, %v4131
      %4133 = vmatmul.f32.gmra.mxu0 %v4132
      %v4134 = vpop.f32.mrf.mxu0
      %v4135 = vadd.f32 %v4098, %v4134
      %v4136 = vand.u32 %v4012, 4294901760
      %v4137 = vsub.f32 %v4012, %v4136
      %4138 = vmatmul.f32.gmra.mxu0 %v4137
      %v4139 = vpop.f32.mrf.mxu0
      %v4140 = vadd.f32 %v4102, %v4139
      %v4141 = vand.u32 %v4014, 4294901760
      %v4142 = vsub.f32 %v4014, %v4141
      %4143 = vmatmul.f32.gmra.mxu0 %v4142
      %v4144 = vpop.f32.mrf.mxu0
      %v4145 = vadd.f32 %v4106, %v4144
      %4146 = vdwg.mxu0
      %4147 = vmatpush.msra.mxu0 0.0
      %4148 = vmatpush.msra.mxu0 0.0
      %4149 = vmatpush.msra.mxu0 0.0
      %4150 = vmatpush.msra.mxu0 0.0
      %4151 = vmatpush.msra.mxu0 0.0
      %4152 = vmatpush.msra.mxu0 0.0
      %4153 = vmatpush.msra.mxu0 0.0
      %4154 = vmatpush.msra.mxu0 0.0
      %4155 = vmatpush.msra.mxu0 0.0
      %4156 = vmatpush.msra.mxu0 0.0
      %4157 = vmatpush.msra.mxu0 0.0
      %4158 = vmatpush.msra.mxu0 0.0
      %4159 = vmatpush.msra.mxu0 0.0
      %4160 = vmatpush.msra.mxu0 0.0
      %4161 = vmatpush.msra.mxu0 0.0
      %v4162 = vand.u32 %v4016, 4294901760
      %4163 = vmatpush.msra.mxu0 %v4162
      %v4164 = vand.u32 %v4008, 4294901760
      %v4165 = vsub.f32 %v4008, %v4164
      %v4166 = vand.u32 %v4165, 4294901760
      %4167 = vmatmul.f32.gmra.mxu0 %v4166
      %v4168 = vpop.f32.mrf.mxu0
      %v4169 = vadd.f32 %v4130, %v4168
      %v4170 = vand.u32 %v4010, 4294901760
      %v4171 = vsub.f32 %v4010, %v4170
      %v4172 = vand.u32 %v4171, 4294901760
      %4173 = vmatmul.f32.gmra.mxu0 %v4172
      %v4174 = vpop.f32.mrf.mxu0
      %v4175 = vadd.f32 %v4135, %v4174
      %v4176 = vand.u32 %v4012, 4294901760
      %v4177 = vsub.f32 %v4012, %v4176
      %v4178 = vand.u32 %v4177, 4294901760
      %4179 = vmatmul.f32.gmra.mxu0 %v4178
      %v4180 = vpop.f32.mrf.mxu0
      %v4181 = vadd.f32 %v4140, %v4180
      %v4182 = vand.u32 %v4014, 4294901760
      %v4183 = vsub.f32 %v4014, %v4182
      %v4184 = vand.u32 %v4183, 4294901760
      %4185 = vmatmul.f32.gmra.mxu0 %v4184
      %v4186 = vpop.f32.mrf.mxu0
      %v4187 = vadd.f32 %v4145, %v4186
      %4188 = vdwg.mxu0
      %4189 = vmatpush.msra.mxu0 0.0
      %4190 = vmatpush.msra.mxu0 0.0
      %4191 = vmatpush.msra.mxu0 0.0
      %4192 = vmatpush.msra.mxu0 0.0
      %4193 = vmatpush.msra.mxu0 0.0
      %4194 = vmatpush.msra.mxu0 0.0
      %4195 = vmatpush.msra.mxu0 0.0
      %4196 = vmatpush.msra.mxu0 0.0
      %4197 = vmatpush.msra.mxu0 0.0
      %4198 = vmatpush.msra.mxu0 0.0
      %4199 = vmatpush.msra.mxu0 0.0
      %4200 = vmatpush.msra.mxu0 0.0
      %4201 = vmatpush.msra.mxu0 0.0
      %4202 = vmatpush.msra.mxu0 0.0
      %4203 = vmatpush.msra.mxu0 0.0
      %v4204 = vand.u32 %v4016, 4294901760
      %v4205 = vsub.f32 %v4016, %v4204
      %v4206 = vand.u32 %v4205, 4294901760
      %4207 = vmatpush.msra.mxu0 %v4206
      %v4208 = vand.u32 %v4008, 4294901760
      %4209 = vmatmul.f32.gmra.mxu0 %v4208
      %v4210 = vpop.f32.mrf.mxu0
      %v4211 = vadd.f32 %v4169, %v4210
      %v4212 = vand.u32 %v4010, 4294901760
      %4213 = vmatmul.f32.gmra.mxu0 %v4212
      %v4214 = vpop.f32.mrf.mxu0
      %v4215 = vadd.f32 %v4175, %v4214
      %v4216 = vand.u32 %v4012, 4294901760
      %4217 = vmatmul.f32.gmra.mxu0 %v4216
      %v4218 = vpop.f32.mrf.mxu0
      %v4219 = vadd.f32 %v4181, %v4218
      %v4220 = vand.u32 %v4014, 4294901760
      %4221 = vmatmul.f32.gmra.mxu0 %v4220
      %v4222 = vpop.f32.mrf.mxu0
      %v4223 = vadd.f32 %v4187, %v4222
      %4224 = vdwg.mxu0
      %4225 = vmatpush.msra.mxu0 0.0
      %4226 = vmatpush.msra.mxu0 0.0
      %4227 = vmatpush.msra.mxu0 0.0
      %4228 = vmatpush.msra.mxu0 0.0
      %4229 = vmatpush.msra.mxu0 0.0
      %4230 = vmatpush.msra.mxu0 0.0
      %4231 = vmatpush.msra.mxu0 0.0
      %4232 = vmatpush.msra.mxu0 0.0
      %4233 = vmatpush.msra.mxu0 0.0
      %4234 = vmatpush.msra.mxu0 0.0
      %4235 = vmatpush.msra.mxu0 0.0
      %4236 = vmatpush.msra.mxu0 0.0
      %4237 = vmatpush.msra.mxu0 0.0
      %4238 = vmatpush.msra.mxu0 0.0
      %4239 = vmatpush.msra.mxu0 0.0
      %v4240 = vand.u32 %v4016, 4294901760
      %4241 = vmatpush.msra.mxu0 %v4240
      %v4242 = vand.u32 %v4008, 4294901760
      %4243 = vmatmul.f32.gmra.mxu0 %v4242
      %v4244 = vpop.f32.mrf.mxu0
      %v4245 = vadd.f32 %v4211, %v4244
      %v4246 = vand.u32 %v4010, 4294901760
      %4247 = vmatmul.f32.gmra.mxu0 %v4246
      %v4248 = vpop.f32.mrf.mxu0
      %v4249 = vadd.f32 %v4215, %v4248
      %v4250 = vand.u32 %v4012, 4294901760
      %4251 = vmatmul.f32.gmra.mxu0 %v4250
      %v4252 = vpop.f32.mrf.mxu0
      %v4253 = vadd.f32 %v4219, %v4252
      %v4254 = vand.u32 %v4014, 4294901760
      %4255 = vmatmul.f32.gmra.mxu0 %v4254
      %v4256 = vpop.f32.mrf.mxu0
      %v4257 = vadd.f32 %v4223, %v4256
      %4258 = vdwg.mxu0
      %4259 = vmatpush.msra.mxu0 0.0
      %4260 = vmatpush.msra.mxu0 0.0
      %4261 = vmatpush.msra.mxu0 0.0
      %4262 = vmatpush.msra.mxu0 0.0
      %4263 = vmatpush.msra.mxu0 0.0
      %4264 = vmatpush.msra.mxu0 0.0
      %4265 = vmatpush.msra.mxu0 0.0
      %4266 = vmatpush.msra.mxu0 0.0
      %4267 = vmatpush.msra.mxu0 0.0
      %4268 = vmatpush.msra.mxu0 0.0
      %4269 = vmatpush.msra.mxu0 0.0
      %4270 = vmatpush.msra.mxu0 0.0
      %4271 = vmatpush.msra.mxu0 0.0
      %4272 = vmatpush.msra.mxu0 0.0
      %4273 = vmatpush.msra.mxu0 0.0
      %v4274 = vand.u32 %v4018, 4294901760
      %4275 = vmatpush.msra.mxu0 %v4274
      %v4276 = vand.u32 %v4008, 4294901760
      %v4277 = vsub.f32 %v4008, %v4276
      %v4278 = vand.u32 %v4277, 4294901760
      %v4279 = vsub.f32 %v4277, %v4278
      %v4280 = vand.u32 %v4279, 4294901760
      %4281 = vmatmul.f32.gmra.mxu0 %v4280
      %v4282 = vpop.f32.mrf.mxu0
      %v4283 = vadd.f32 0.0, %v4282
      %v4284 = vand.u32 %v4010, 4294901760
      %v4285 = vsub.f32 %v4010, %v4284
      %v4286 = vand.u32 %v4285, 4294901760
      %v4287 = vsub.f32 %v4285, %v4286
      %v4288 = vand.u32 %v4287, 4294901760
      %4289 = vmatmul.f32.gmra.mxu0 %v4288
      %v4290 = vpop.f32.mrf.mxu0
      %v4291 = vadd.f32 0.0, %v4290
      %v4292 = vand.u32 %v4012, 4294901760
      %v4293 = vsub.f32 %v4012, %v4292
      %v4294 = vand.u32 %v4293, 4294901760
      %v4295 = vsub.f32 %v4293, %v4294
      %v4296 = vand.u32 %v4295, 4294901760
      %4297 = vmatmul.f32.gmra.mxu0 %v4296
      %v4298 = vpop.f32.mrf.mxu0
      %v4299 = vadd.f32 0.0, %v4298
      %v4300 = vand.u32 %v4014, 4294901760
      %v4301 = vsub.f32 %v4014, %v4300
      %v4302 = vand.u32 %v4301, 4294901760
      %v4303 = vsub.f32 %v4301, %v4302
      %v4304 = vand.u32 %v4303, 4294901760
      %4305 = vmatmul.f32.gmra.mxu0 %v4304
      %v4306 = vpop.f32.mrf.mxu0
      %v4307 = vadd.f32 0.0, %v4306
      %4308 = vdwg.mxu0
      %4309 = vmatpush.msra.mxu0 0.0
      %4310 = vmatpush.msra.mxu0 0.0
      %4311 = vmatpush.msra.mxu0 0.0
      %4312 = vmatpush.msra.mxu0 0.0
      %4313 = vmatpush.msra.mxu0 0.0
      %4314 = vmatpush.msra.mxu0 0.0
      %4315 = vmatpush.msra.mxu0 0.0
      %4316 = vmatpush.msra.mxu0 0.0
      %4317 = vmatpush.msra.mxu0 0.0
      %4318 = vmatpush.msra.mxu0 0.0
      %4319 = vmatpush.msra.mxu0 0.0
      %4320 = vmatpush.msra.mxu0 0.0
      %4321 = vmatpush.msra.mxu0 0.0
      %4322 = vmatpush.msra.mxu0 0.0
      %4323 = vmatpush.msra.mxu0 0.0
      %v4324 = vand.u32 %v4018, 4294901760
      %v4325 = vsub.f32 %v4018, %v4324
      %v4326 = vand.u32 %v4325, 4294901760
      %v4327 = vsub.f32 %v4325, %v4326
      %v4328 = vand.u32 %v4327, 4294901760
      %4329 = vmatpush.msra.mxu0 %v4328
      %v4330 = vand.u32 %v4008, 4294901760
      %4331 = vmatmul.f32.gmra.mxu0 %v4330
      %v4332 = vpop.f32.mrf.mxu0
      %v4333 = vadd.f32 %v4283, %v4332
      %v4334 = vand.u32 %v4010, 4294901760
      %4335 = vmatmul.f32.gmra.mxu0 %v4334
      %v4336 = vpop.f32.mrf.mxu0
      %v4337 = vadd.f32 %v4291, %v4336
      %v4338 = vand.u32 %v4012, 4294901760
      %4339 = vmatmul.f32.gmra.mxu0 %v4338
      %v4340 = vpop.f32.mrf.mxu0
      %v4341 = vadd.f32 %v4299, %v4340
      %v4342 = vand.u32 %v4014, 4294901760
      %4343 = vmatmul.f32.gmra.mxu0 %v4342
      %v4344 = vpop.f32.mrf.mxu0
      %v4345 = vadd.f32 %v4307, %v4344
      %4346 = vdwg.mxu0
      %4347 = vmatpush.msra.mxu0 0.0
      %4348 = vmatpush.msra.mxu0 0.0
      %4349 = vmatpush.msra.mxu0 0.0
      %4350 = vmatpush.msra.mxu0 0.0
      %4351 = vmatpush.msra.mxu0 0.0
      %4352 = vmatpush.msra.mxu0 0.0
      %4353 = vmatpush.msra.mxu0 0.0
      %4354 = vmatpush.msra.mxu0 0.0
      %4355 = vmatpush.msra.mxu0 0.0
      %4356 = vmatpush.msra.mxu0 0.0
      %4357 = vmatpush.msra.mxu0 0.0
      %4358 = vmatpush.msra.mxu0 0.0
      %4359 = vmatpush.msra.mxu0 0.0
      %4360 = vmatpush.msra.mxu0 0.0
      %4361 = vmatpush.msra.mxu0 0.0
      %v4362 = vand.u32 %v4018, 4294901760
      %v4363 = vsub.f32 %v4018, %v4362
      %4364 = vmatpush.msra.mxu0 %v4363
      %v4365 = vand.u32 %v4008, 4294901760
      %v4366 = vsub.f32 %v4008, %v4365
      %4367 = vmatmul.f32.gmra.mxu0 %v4366
      %v4368 = vpop.f32.mrf.mxu0
      %v4369 = vadd.f32 %v4333, %v4368
      %v4370 = vand.u32 %v4010, 4294901760
      %v4371 = vsub.f32 %v4010, %v4370
      %4372 = vmatmul.f32.gmra.mxu0 %v4371
      %v4373 = vpop.f32.mrf.mxu0
      %v4374 = vadd.f32 %v4337, %v4373
      %v4375 = vand.u32 %v4012, 4294901760
      %v4376 = vsub.f32 %v4012, %v4375
      %4377 = vmatmul.f32.gmra.mxu0 %v4376
      %v4378 = vpop.f32.mrf.mxu0
      %v4379 = vadd.f32 %v4341, %v4378
      %v4380 = vand.u32 %v4014, 4294901760
      %v4381 = vsub.f32 %v4014, %v4380
      %4382 = vmatmul.f32.gmra.mxu0 %v4381
      %v4383 = vpop.f32.mrf.mxu0
      %v4384 = vadd.f32 %v4345, %v4383
      %4385 = vdwg.mxu0
      %4386 = vmatpush.msra.mxu0 0.0
      %4387 = vmatpush.msra.mxu0 0.0
      %4388 = vmatpush.msra.mxu0 0.0
      %4389 = vmatpush.msra.mxu0 0.0
      %4390 = vmatpush.msra.mxu0 0.0
      %4391 = vmatpush.msra.mxu0 0.0
      %4392 = vmatpush.msra.mxu0 0.0
      %4393 = vmatpush.msra.mxu0 0.0
      %4394 = vmatpush.msra.mxu0 0.0
      %4395 = vmatpush.msra.mxu0 0.0
      %4396 = vmatpush.msra.mxu0 0.0
      %4397 = vmatpush.msra.mxu0 0.0
      %4398 = vmatpush.msra.mxu0 0.0
      %4399 = vmatpush.msra.mxu0 0.0
      %4400 = vmatpush.msra.mxu0 0.0
      %v4401 = vand.u32 %v4018, 4294901760
      %4402 = vmatpush.msra.mxu0 %v4401
      %v4403 = vand.u32 %v4008, 4294901760
      %v4404 = vsub.f32 %v4008, %v4403
      %v4405 = vand.u32 %v4404, 4294901760
      %4406 = vmatmul.f32.gmra.mxu0 %v4405
      %v4407 = vpop.f32.mrf.mxu0
      %v4408 = vadd.f32 %v4369, %v4407
      %v4409 = vand.u32 %v4010, 4294901760
      %v4410 = vsub.f32 %v4010, %v4409
      %v4411 = vand.u32 %v4410, 4294901760
      %4412 = vmatmul.f32.gmra.mxu0 %v4411
      %v4413 = vpop.f32.mrf.mxu0
      %v4414 = vadd.f32 %v4374, %v4413
      %v4415 = vand.u32 %v4012, 4294901760
      %v4416 = vsub.f32 %v4012, %v4415
      %v4417 = vand.u32 %v4416, 4294901760
      %4418 = vmatmul.f32.gmra.mxu0 %v4417
      %v4419 = vpop.f32.mrf.mxu0
      %v4420 = vadd.f32 %v4379, %v4419
      %v4421 = vand.u32 %v4014, 4294901760
      %v4422 = vsub.f32 %v4014, %v4421
      %v4423 = vand.u32 %v4422, 4294901760
      %4424 = vmatmul.f32.gmra.mxu0 %v4423
      %v4425 = vpop.f32.mrf.mxu0
      %v4426 = vadd.f32 %v4384, %v4425
      %4427 = vdwg.mxu0
      %4428 = vmatpush.msra.mxu0 0.0
      %4429 = vmatpush.msra.mxu0 0.0
      %4430 = vmatpush.msra.mxu0 0.0
      %4431 = vmatpush.msra.mxu0 0.0
      %4432 = vmatpush.msra.mxu0 0.0
      %4433 = vmatpush.msra.mxu0 0.0
      %4434 = vmatpush.msra.mxu0 0.0
      %4435 = vmatpush.msra.mxu0 0.0
      %4436 = vmatpush.msra.mxu0 0.0
      %4437 = vmatpush.msra.mxu0 0.0
      %4438 = vmatpush.msra.mxu0 0.0
      %4439 = vmatpush.msra.mxu0 0.0
      %4440 = vmatpush.msra.mxu0 0.0
      %4441 = vmatpush.msra.mxu0 0.0
      %4442 = vmatpush.msra.mxu0 0.0
      %v4443 = vand.u32 %v4018, 4294901760
      %v4444 = vsub.f32 %v4018, %v4443
      %v4445 = vand.u32 %v4444, 4294901760
      %4446 = vmatpush.msra.mxu0 %v4445
      %v4447 = vand.u32 %v4008, 4294901760
      %4448 = vmatmul.f32.gmra.mxu0 %v4447
      %v4449 = vpop.f32.mrf.mxu0
      %v4450 = vadd.f32 %v4408, %v4449
      %v4451 = vand.u32 %v4010, 4294901760
      %4452 = vmatmul.f32.gmra.mxu0 %v4451
      %v4453 = vpop.f32.mrf.mxu0
      %v4454 = vadd.f32 %v4414, %v4453
      %v4455 = vand.u32 %v4012, 4294901760
      %4456 = vmatmul.f32.gmra.mxu0 %v4455
      %v4457 = vpop.f32.mrf.mxu0
      %v4458 = vadd.f32 %v4420, %v4457
      %v4459 = vand.u32 %v4014, 4294901760
      %4460 = vmatmul.f32.gmra.mxu0 %v4459
      %v4461 = vpop.f32.mrf.mxu0
      %v4462 = vadd.f32 %v4426, %v4461
      %4463 = vdwg.mxu0
      %4464 = vmatpush.msra.mxu0 0.0
      %4465 = vmatpush.msra.mxu0 0.0
      %4466 = vmatpush.msra.mxu0 0.0
      %4467 = vmatpush.msra.mxu0 0.0
      %4468 = vmatpush.msra.mxu0 0.0
      %4469 = vmatpush.msra.mxu0 0.0
      %4470 = vmatpush.msra.mxu0 0.0
      %4471 = vmatpush.msra.mxu0 0.0
      %4472 = vmatpush.msra.mxu0 0.0
      %4473 = vmatpush.msra.mxu0 0.0
      %4474 = vmatpush.msra.mxu0 0.0
      %4475 = vmatpush.msra.mxu0 0.0
      %4476 = vmatpush.msra.mxu0 0.0
      %4477 = vmatpush.msra.mxu0 0.0
      %4478 = vmatpush.msra.mxu0 0.0
      %v4479 = vand.u32 %v4018, 4294901760
      %4480 = vmatpush.msra.mxu0 %v4479
      %v4481 = vand.u32 %v4008, 4294901760
      %4482 = vmatmul.f32.gmra.mxu0 %v4481
      %v4483 = vpop.f32.mrf.mxu0
      %v4484 = vadd.f32 %v4450, %v4483
      %v4485 = vand.u32 %v4010, 4294901760
      %4486 = vmatmul.f32.gmra.mxu0 %v4485
      %v4487 = vpop.f32.mrf.mxu0
      %v4488 = vadd.f32 %v4454, %v4487
      %v4489 = vand.u32 %v4012, 4294901760
      %4490 = vmatmul.f32.gmra.mxu0 %v4489
      %v4491 = vpop.f32.mrf.mxu0
      %v4492 = vadd.f32 %v4458, %v4491
      %v4493 = vand.u32 %v4014, 4294901760
      %4494 = vmatmul.f32.gmra.mxu0 %v4493
      %v4495 = vpop.f32.mrf.mxu0
      %v4496 = vadd.f32 %v4462, %v4495
      %4497 = vdwg.mxu0
      %v4498 = vadd.f32 %v3973, %v4245
      %v4499 = vadd.f32 %v3974, %v4484
      %v4500 = vadd.f32 %v3975, %v4249
      %v4501 = vadd.f32 %v3976, %v4488
      %v4502 = vadd.f32 %v3977, %v4253
      %v4503 = vadd.f32 %v3978, %v4492
      %v4504 = vadd.f32 %v3979, %v4257
      %v4505 = vadd.f32 %v3980, %v4496
      %v4506 = vld [vmem:[%s219] sm:$0xff]
      %v4507 = vld [vmem:[%s219 + $0x8] sm:$0xf]
      %4510 = vst [vmem:[#allocation1] ss:$2 sm:$0xff] %v4506
      %s4511 = scalar_lea.vmem [#allocation1], 16
      %4512 = vst [vmem:[%s4511] ss:$2 sm:$0xff] %v4507
      %v4513 = vld.sshfl [vmem:[#allocation1] sm:$0xff pattern:$0x75316420]
      %v4514 = vld.sshfl [vmem:[#allocation1 + $0x8] sm:$0xff pattern:$0x75316420]
      %v4515 = vld.sshfl [vmem:[#allocation1 + $0x10] sm:$0xff pattern:$0x75316420]
      %4516 = vrot.lane.b32.xlu0 %v4513, 94
      %v4517 = vpop.permute.xlu0 %4516
      %4518 = vrot.lane.b32.xlu0 %v4514, 94
      %v4519 = vpop.permute.xlu0 %4518
      %4520 = vrot.lane.b32.xlu0 %v4515, 94
      %v4521 = vpop.permute.xlu0 %4520
      %vm4522 = vcmask 769024
      %v4523 = vsel %vm4522, %v4517, %v4519
      %v4524 = vsel %vm4522, %v4519, %v4521
      %v4527 = vsel %vm1300, %v4523, 0.0
      %v4528 = vsel %vm1301, %v4524, 0.0
      %v4529 = vld [vmem:[%s1] sm:$0xff]
      %v4530 = vld [vmem:[%s1 + $0x8] sm:$0xff]
      %v4531 = vld [vmem:[%s1 + $0x10] sm:$0xff]
      %v4532 = vld [vmem:[%s1 + $0x18] sm:$0xff]
      %4537 = vrot.lane.b32.xlu0 %v4529, 96
      %v4538 = vpop.permute.xlu0 %4537
      %4539 = vrot.lane.b32.xlu0 %v4530, 96
      %v4540 = vpop.permute.xlu0 %4539
      %4541 = vrot.lane.b32.xlu0 %v4531, 96
      %v4542 = vpop.permute.xlu0 %4541
      %4543 = vrot.lane.b32.xlu0 %v4532, 96
      %v4544 = vpop.permute.xlu0 %4543
      %v4545 = vsel %vm306, %v4538, 0
      %v4547 = vsel %vm306, %v4540, 0
      %v4549 = vsel %vm306, %v4542, 0
      %v4551 = vsel %vm306, %v4544, 0
      %v4554 = vsel %vm315, %v4527, 0
      %v4557 = vsel %vm315, %v4528, 0
      %4559 = vmatpush.msra.mxu0 0.0
      %4560 = vmatpush.msra.mxu0 0.0
      %4561 = vmatpush.msra.mxu0 0.0
      %4562 = vmatpush.msra.mxu0 0.0
      %4563 = vmatpush.msra.mxu0 0.0
      %4564 = vmatpush.msra.mxu0 0.0
      %4565 = vmatpush.msra.mxu0 0.0
      %4566 = vmatpush.msra.mxu0 0.0
      %4567 = vmatpush.msra.mxu0 0.0
      %4568 = vmatpush.msra.mxu0 0.0
      %4569 = vmatpush.msra.mxu0 0.0
      %4570 = vmatpush.msra.mxu0 0.0
      %4571 = vmatpush.msra.mxu0 0.0
      %4572 = vmatpush.msra.mxu0 0.0
      %4573 = vmatpush.msra.mxu0 0.0
      %v4574 = vand.u32 %v4554, 4294901760
      %4575 = vmatpush.msra.mxu0 %v4574
      %v4576 = vand.u32 %v4545, 4294901760
      %v4577 = vsub.f32 %v4545, %v4576
      %v4578 = vand.u32 %v4577, 4294901760
      %v4579 = vsub.f32 %v4577, %v4578
      %v4580 = vand.u32 %v4579, 4294901760
      %4581 = vmatmul.f32.gmra.mxu0 %v4580
      %v4582 = vpop.f32.mrf.mxu0
      %v4583 = vadd.f32 0.0, %v4582
      %v4584 = vand.u32 %v4547, 4294901760
      %v4585 = vsub.f32 %v4547, %v4584
      %v4586 = vand.u32 %v4585, 4294901760
      %v4587 = vsub.f32 %v4585, %v4586
      %v4588 = vand.u32 %v4587, 4294901760
      %4589 = vmatmul.f32.gmra.mxu0 %v4588
      %v4590 = vpop.f32.mrf.mxu0
      %v4591 = vadd.f32 0.0, %v4590
      %v4592 = vand.u32 %v4549, 4294901760
      %v4593 = vsub.f32 %v4549, %v4592
      %v4594 = vand.u32 %v4593, 4294901760
      %v4595 = vsub.f32 %v4593, %v4594
      %v4596 = vand.u32 %v4595, 4294901760
      %4597 = vmatmul.f32.gmra.mxu0 %v4596
      %v4598 = vpop.f32.mrf.mxu0
      %v4599 = vadd.f32 0.0, %v4598
      %v4600 = vand.u32 %v4551, 4294901760
      %v4601 = vsub.f32 %v4551, %v4600
      %v4602 = vand.u32 %v4601, 4294901760
      %v4603 = vsub.f32 %v4601, %v4602
      %v4604 = vand.u32 %v4603, 4294901760
      %4605 = vmatmul.f32.gmra.mxu0 %v4604
      %v4606 = vpop.f32.mrf.mxu0
      %v4607 = vadd.f32 0.0, %v4606
      %4608 = vdwg.mxu0
      %4609 = vmatpush.msra.mxu0 0.0
      %4610 = vmatpush.msra.mxu0 0.0
      %4611 = vmatpush.msra.mxu0 0.0
      %4612 = vmatpush.msra.mxu0 0.0
      %4613 = vmatpush.msra.mxu0 0.0
      %4614 = vmatpush.msra.mxu0 0.0
      %4615 = vmatpush.msra.mxu0 0.0
      %4616 = vmatpush.msra.mxu0 0.0
      %4617 = vmatpush.msra.mxu0 0.0
      %4618 = vmatpush.msra.mxu0 0.0
      %4619 = vmatpush.msra.mxu0 0.0
      %4620 = vmatpush.msra.mxu0 0.0
      %4621 = vmatpush.msra.mxu0 0.0
      %4622 = vmatpush.msra.mxu0 0.0
      %4623 = vmatpush.msra.mxu0 0.0
      %v4624 = vand.u32 %v4554, 4294901760
      %v4625 = vsub.f32 %v4554, %v4624
      %v4626 = vand.u32 %v4625, 4294901760
      %v4627 = vsub.f32 %v4625, %v4626
      %v4628 = vand.u32 %v4627, 4294901760
      %4629 = vmatpush.msra.mxu0 %v4628
      %v4630 = vand.u32 %v4545, 4294901760
      %4631 = vmatmul.f32.gmra.mxu0 %v4630
      %v4632 = vpop.f32.mrf.mxu0
      %v4633 = vadd.f32 %v4583, %v4632
      %v4634 = vand.u32 %v4547, 4294901760
      %4635 = vmatmul.f32.gmra.mxu0 %v4634
      %v4636 = vpop.f32.mrf.mxu0
      %v4637 = vadd.f32 %v4591, %v4636
      %v4638 = vand.u32 %v4549, 4294901760
      %4639 = vmatmul.f32.gmra.mxu0 %v4638
      %v4640 = vpop.f32.mrf.mxu0
      %v4641 = vadd.f32 %v4599, %v4640
      %v4642 = vand.u32 %v4551, 4294901760
      %4643 = vmatmul.f32.gmra.mxu0 %v4642
      %v4644 = vpop.f32.mrf.mxu0
      %v4645 = vadd.f32 %v4607, %v4644
      %4646 = vdwg.mxu0
      %4647 = vmatpush.msra.mxu0 0.0
      %4648 = vmatpush.msra.mxu0 0.0
      %4649 = vmatpush.msra.mxu0 0.0
      %4650 = vmatpush.msra.mxu0 0.0
      %4651 = vmatpush.msra.mxu0 0.0
      %4652 = vmatpush.msra.mxu0 0.0
      %4653 = vmatpush.msra.mxu0 0.0
      %4654 = vmatpush.msra.mxu0 0.0
      %4655 = vmatpush.msra.mxu0 0.0
      %4656 = vmatpush.msra.mxu0 0.0
      %4657 = vmatpush.msra.mxu0 0.0
      %4658 = vmatpush.msra.mxu0 0.0
      %4659 = vmatpush.msra.mxu0 0.0
      %4660 = vmatpush.msra.mxu0 0.0
      %4661 = vmatpush.msra.mxu0 0.0
      %v4662 = vand.u32 %v4554, 4294901760
      %v4663 = vsub.f32 %v4554, %v4662
      %4664 = vmatpush.msra.mxu0 %v4663
      %v4665 = vand.u32 %v4545, 4294901760
      %v4666 = vsub.f32 %v4545, %v4665
      %4667 = vmatmul.f32.gmra.mxu0 %v4666
      %v4668 = vpop.f32.mrf.mxu0
      %v4669 = vadd.f32 %v4633, %v4668
      %v4670 = vand.u32 %v4547, 4294901760
      %v4671 = vsub.f32 %v4547, %v4670
      %4672 = vmatmul.f32.gmra.mxu0 %v4671
      %v4673 = vpop.f32.mrf.mxu0
      %v4674 = vadd.f32 %v4637, %v4673
      %v4675 = vand.u32 %v4549, 4294901760
      %v4676 = vsub.f32 %v4549, %v4675
      %4677 = vmatmul.f32.gmra.mxu0 %v4676
      %v4678 = vpop.f32.mrf.mxu0
      %v4679 = vadd.f32 %v4641, %v4678
      %v4680 = vand.u32 %v4551, 4294901760
      %v4681 = vsub.f32 %v4551, %v4680
      %4682 = vmatmul.f32.gmra.mxu0 %v4681
      %v4683 = vpop.f32.mrf.mxu0
      %v4684 = vadd.f32 %v4645, %v4683
      %4685 = vdwg.mxu0
      %4686 = vmatpush.msra.mxu0 0.0
      %4687 = vmatpush.msra.mxu0 0.0
      %4688 = vmatpush.msra.mxu0 0.0
      %4689 = vmatpush.msra.mxu0 0.0
      %4690 = vmatpush.msra.mxu0 0.0
      %4691 = vmatpush.msra.mxu0 0.0
      %4692 = vmatpush.msra.mxu0 0.0
      %4693 = vmatpush.msra.mxu0 0.0
      %4694 = vmatpush.msra.mxu0 0.0
      %4695 = vmatpush.msra.mxu0 0.0
      %4696 = vmatpush.msra.mxu0 0.0
      %4697 = vmatpush.msra.mxu0 0.0
      %4698 = vmatpush.msra.mxu0 0.0
      %4699 = vmatpush.msra.mxu0 0.0
      %4700 = vmatpush.msra.mxu0 0.0
      %v4701 = vand.u32 %v4554, 4294901760
      %4702 = vmatpush.msra.mxu0 %v4701
      %v4703 = vand.u32 %v4545, 4294901760
      %v4704 = vsub.f32 %v4545, %v4703
      %v4705 = vand.u32 %v4704, 4294901760
      %4706 = vmatmul.f32.gmra.mxu0 %v4705
      %v4707 = vpop.f32.mrf.mxu0
      %v4708 = vadd.f32 %v4669, %v4707
      %v4709 = vand.u32 %v4547, 4294901760
      %v4710 = vsub.f32 %v4547, %v4709
      %v4711 = vand.u32 %v4710, 4294901760
      %4712 = vmatmul.f32.gmra.mxu0 %v4711
      %v4713 = vpop.f32.mrf.mxu0
      %v4714 = vadd.f32 %v4674, %v4713
      %v4715 = vand.u32 %v4549, 4294901760
      %v4716 = vsub.f32 %v4549, %v4715
      %v4717 = vand.u32 %v4716, 4294901760
      %4718 = vmatmul.f32.gmra.mxu0 %v4717
      %v4719 = vpop.f32.mrf.mxu0
      %v4720 = vadd.f32 %v4679, %v4719
      %v4721 = vand.u32 %v4551, 4294901760
      %v4722 = vsub.f32 %v4551, %v4721
      %v4723 = vand.u32 %v4722, 4294901760
      %4724 = vmatmul.f32.gmra.mxu0 %v4723
      %v4725 = vpop.f32.mrf.mxu0
      %v4726 = vadd.f32 %v4684, %v4725
      %4727 = vdwg.mxu0
      %4728 = vmatpush.msra.mxu0 0.0
      %4729 = vmatpush.msra.mxu0 0.0
      %4730 = vmatpush.msra.mxu0 0.0
      %4731 = vmatpush.msra.mxu0 0.0
      %4732 = vmatpush.msra.mxu0 0.0
      %4733 = vmatpush.msra.mxu0 0.0
      %4734 = vmatpush.msra.mxu0 0.0
      %4735 = vmatpush.msra.mxu0 0.0
      %4736 = vmatpush.msra.mxu0 0.0
      %4737 = vmatpush.msra.mxu0 0.0
      %4738 = vmatpush.msra.mxu0 0.0
      %4739 = vmatpush.msra.mxu0 0.0
      %4740 = vmatpush.msra.mxu0 0.0
      %4741 = vmatpush.msra.mxu0 0.0
      %4742 = vmatpush.msra.mxu0 0.0
      %v4743 = vand.u32 %v4554, 4294901760
      %v4744 = vsub.f32 %v4554, %v4743
      %v4745 = vand.u32 %v4744, 4294901760
      %4746 = vmatpush.msra.mxu0 %v4745
      %v4747 = vand.u32 %v4545, 4294901760
      %4748 = vmatmul.f32.gmra.mxu0 %v4747
      %v4749 = vpop.f32.mrf.mxu0
      %v4750 = vadd.f32 %v4708, %v4749
      %v4751 = vand.u32 %v4547, 4294901760
      %4752 = vmatmul.f32.gmra.mxu0 %v4751
      %v4753 = vpop.f32.mrf.mxu0
      %v4754 = vadd.f32 %v4714, %v4753
      %v4755 = vand.u32 %v4549, 4294901760
      %4756 = vmatmul.f32.gmra.mxu0 %v4755
      %v4757 = vpop.f32.mrf.mxu0
      %v4758 = vadd.f32 %v4720, %v4757
      %v4759 = vand.u32 %v4551, 4294901760
      %4760 = vmatmul.f32.gmra.mxu0 %v4759
      %v4761 = vpop.f32.mrf.mxu0
      %v4762 = vadd.f32 %v4726, %v4761
      %4763 = vdwg.mxu0
      %4764 = vmatpush.msra.mxu0 0.0
      %4765 = vmatpush.msra.mxu0 0.0
      %4766 = vmatpush.msra.mxu0 0.0
      %4767 = vmatpush.msra.mxu0 0.0
      %4768 = vmatpush.msra.mxu0 0.0
      %4769 = vmatpush.msra.mxu0 0.0
      %4770 = vmatpush.msra.mxu0 0.0
      %4771 = vmatpush.msra.mxu0 0.0
      %4772 = vmatpush.msra.mxu0 0.0
      %4773 = vmatpush.msra.mxu0 0.0
      %4774 = vmatpush.msra.mxu0 0.0
      %4775 = vmatpush.msra.mxu0 0.0
      %4776 = vmatpush.msra.mxu0 0.0
      %4777 = vmatpush.msra.mxu0 0.0
      %4778 = vmatpush.msra.mxu0 0.0
      %v4779 = vand.u32 %v4554, 4294901760
      %4780 = vmatpush.msra.mxu0 %v4779
      %v4781 = vand.u32 %v4545, 4294901760
      %4782 = vmatmul.f32.gmra.mxu0 %v4781
      %v4783 = vpop.f32.mrf.mxu0
      %v4784 = vadd.f32 %v4750, %v4783
      %v4785 = vand.u32 %v4547, 4294901760
      %4786 = vmatmul.f32.gmra.mxu0 %v4785
      %v4787 = vpop.f32.mrf.mxu0
      %v4788 = vadd.f32 %v4754, %v4787
      %v4789 = vand.u32 %v4549, 4294901760
      %4790 = vmatmul.f32.gmra.mxu0 %v4789
      %v4791 = vpop.f32.mrf.mxu0
      %v4792 = vadd.f32 %v4758, %v4791
      %v4793 = vand.u32 %v4551, 4294901760
      %4794 = vmatmul.f32.gmra.mxu0 %v4793
      %v4795 = vpop.f32.mrf.mxu0
      %v4796 = vadd.f32 %v4762, %v4795
      %4797 = vdwg.mxu0
      %4798 = vmatpush.msra.mxu0 0.0
      %4799 = vmatpush.msra.mxu0 0.0
      %4800 = vmatpush.msra.mxu0 0.0
      %4801 = vmatpush.msra.mxu0 0.0
      %4802 = vmatpush.msra.mxu0 0.0
      %4803 = vmatpush.msra.mxu0 0.0
      %4804 = vmatpush.msra.mxu0 0.0
      %4805 = vmatpush.msra.mxu0 0.0
      %4806 = vmatpush.msra.mxu0 0.0
      %4807 = vmatpush.msra.mxu0 0.0
      %4808 = vmatpush.msra.mxu0 0.0
      %4809 = vmatpush.msra.mxu0 0.0
      %4810 = vmatpush.msra.mxu0 0.0
      %4811 = vmatpush.msra.mxu0 0.0
      %4812 = vmatpush.msra.mxu0 0.0
      %v4813 = vand.u32 %v4557, 4294901760
      %4814 = vmatpush.msra.mxu0 %v4813
      %v4815 = vand.u32 %v4545, 4294901760
      %v4816 = vsub.f32 %v4545, %v4815
      %v4817 = vand.u32 %v4816, 4294901760
      %v4818 = vsub.f32 %v4816, %v4817
      %v4819 = vand.u32 %v4818, 4294901760
      %4820 = vmatmul.f32.gmra.mxu0 %v4819
      %v4821 = vpop.f32.mrf.mxu0
      %v4822 = vadd.f32 0.0, %v4821
      %v4823 = vand.u32 %v4547, 4294901760
      %v4824 = vsub.f32 %v4547, %v4823
      %v4825 = vand.u32 %v4824, 4294901760
      %v4826 = vsub.f32 %v4824, %v4825
      %v4827 = vand.u32 %v4826, 4294901760
      %4828 = vmatmul.f32.gmra.mxu0 %v4827
      %v4829 = vpop.f32.mrf.mxu0
      %v4830 = vadd.f32 0.0, %v4829
      %v4831 = vand.u32 %v4549, 4294901760
      %v4832 = vsub.f32 %v4549, %v4831
      %v4833 = vand.u32 %v4832, 4294901760
      %v4834 = vsub.f32 %v4832, %v4833
      %v4835 = vand.u32 %v4834, 4294901760
      %4836 = vmatmul.f32.gmra.mxu0 %v4835
      %v4837 = vpop.f32.mrf.mxu0
      %v4838 = vadd.f32 0.0, %v4837
      %v4839 = vand.u32 %v4551, 4294901760
      %v4840 = vsub.f32 %v4551, %v4839
      %v4841 = vand.u32 %v4840, 4294901760
      %v4842 = vsub.f32 %v4840, %v4841
      %v4843 = vand.u32 %v4842, 4294901760
      %4844 = vmatmul.f32.gmra.mxu0 %v4843
      %v4845 = vpop.f32.mrf.mxu0
      %v4846 = vadd.f32 0.0, %v4845
      %4847 = vdwg.mxu0
      %4848 = vmatpush.msra.mxu0 0.0
      %4849 = vmatpush.msra.mxu0 0.0
      %4850 = vmatpush.msra.mxu0 0.0
      %4851 = vmatpush.msra.mxu0 0.0
      %4852 = vmatpush.msra.mxu0 0.0
      %4853 = vmatpush.msra.mxu0 0.0
      %4854 = vmatpush.msra.mxu0 0.0
      %4855 = vmatpush.msra.mxu0 0.0
      %4856 = vmatpush.msra.mxu0 0.0
      %4857 = vmatpush.msra.mxu0 0.0
      %4858 = vmatpush.msra.mxu0 0.0
      %4859 = vmatpush.msra.mxu0 0.0
      %4860 = vmatpush.msra.mxu0 0.0
      %4861 = vmatpush.msra.mxu0 0.0
      %4862 = vmatpush.msra.mxu0 0.0
      %v4863 = vand.u32 %v4557, 4294901760
      %v4864 = vsub.f32 %v4557, %v4863
      %v4865 = vand.u32 %v4864, 4294901760
      %v4866 = vsub.f32 %v4864, %v4865
      %v4867 = vand.u32 %v4866, 4294901760
      %4868 = vmatpush.msra.mxu0 %v4867
      %v4869 = vand.u32 %v4545, 4294901760
      %4870 = vmatmul.f32.gmra.mxu0 %v4869
      %v4871 = vpop.f32.mrf.mxu0
      %v4872 = vadd.f32 %v4822, %v4871
      %v4873 = vand.u32 %v4547, 4294901760
      %4874 = vmatmul.f32.gmra.mxu0 %v4873
      %v4875 = vpop.f32.mrf.mxu0
      %v4876 = vadd.f32 %v4830, %v4875
      %v4877 = vand.u32 %v4549, 4294901760
      %4878 = vmatmul.f32.gmra.mxu0 %v4877
      %v4879 = vpop.f32.mrf.mxu0
      %v4880 = vadd.f32 %v4838, %v4879
      %v4881 = vand.u32 %v4551, 4294901760
      %4882 = vmatmul.f32.gmra.mxu0 %v4881
      %v4883 = vpop.f32.mrf.mxu0
      %v4884 = vadd.f32 %v4846, %v4883
      %4885 = vdwg.mxu0
      %4886 = vmatpush.msra.mxu0 0.0
      %4887 = vmatpush.msra.mxu0 0.0
      %4888 = vmatpush.msra.mxu0 0.0
      %4889 = vmatpush.msra.mxu0 0.0
      %4890 = vmatpush.msra.mxu0 0.0
      %4891 = vmatpush.msra.mxu0 0.0
      %4892 = vmatpush.msra.mxu0 0.0
      %4893 = vmatpush.msra.mxu0 0.0
      %4894 = vmatpush.msra.mxu0 0.0
      %4895 = vmatpush.msra.mxu0 0.0
      %4896 = vmatpush.msra.mxu0 0.0
      %4897 = vmatpush.msra.mxu0 0.0
      %4898 = vmatpush.msra.mxu0 0.0
      %4899 = vmatpush.msra.mxu0 0.0
      %4900 = vmatpush.msra.mxu0 0.0
      %v4901 = vand.u32 %v4557, 4294901760
      %v4902 = vsub.f32 %v4557, %v4901
      %4903 = vmatpush.msra.mxu0 %v4902
      %v4904 = vand.u32 %v4545, 4294901760
      %v4905 = vsub.f32 %v4545, %v4904
      %4906 = vmatmul.f32.gmra.mxu0 %v4905
      %v4907 = vpop.f32.mrf.mxu0
      %v4908 = vadd.f32 %v4872, %v4907
      %v4909 = vand.u32 %v4547, 4294901760
      %v4910 = vsub.f32 %v4547, %v4909
      %4911 = vmatmul.f32.gmra.mxu0 %v4910
      %v4912 = vpop.f32.mrf.mxu0
      %v4913 = vadd.f32 %v4876, %v4912
      %v4914 = vand.u32 %v4549, 4294901760
      %v4915 = vsub.f32 %v4549, %v4914
      %4916 = vmatmul.f32.gmra.mxu0 %v4915
      %v4917 = vpop.f32.mrf.mxu0
      %v4918 = vadd.f32 %v4880, %v4917
      %v4919 = vand.u32 %v4551, 4294901760
      %v4920 = vsub.f32 %v4551, %v4919
      %4921 = vmatmul.f32.gmra.mxu0 %v4920
      %v4922 = vpop.f32.mrf.mxu0
      %v4923 = vadd.f32 %v4884, %v4922
      %4924 = vdwg.mxu0
      %4925 = vmatpush.msra.mxu0 0.0
      %4926 = vmatpush.msra.mxu0 0.0
      %4927 = vmatpush.msra.mxu0 0.0
      %4928 = vmatpush.msra.mxu0 0.0
      %4929 = vmatpush.msra.mxu0 0.0
      %4930 = vmatpush.msra.mxu0 0.0
      %4931 = vmatpush.msra.mxu0 0.0
      %4932 = vmatpush.msra.mxu0 0.0
      %4933 = vmatpush.msra.mxu0 0.0
      %4934 = vmatpush.msra.mxu0 0.0
      %4935 = vmatpush.msra.mxu0 0.0
      %4936 = vmatpush.msra.mxu0 0.0
      %4937 = vmatpush.msra.mxu0 0.0
      %4938 = vmatpush.msra.mxu0 0.0
      %4939 = vmatpush.msra.mxu0 0.0
      %v4940 = vand.u32 %v4557, 4294901760
      %4941 = vmatpush.msra.mxu0 %v4940
      %v4942 = vand.u32 %v4545, 4294901760
      %v4943 = vsub.f32 %v4545, %v4942
      %v4944 = vand.u32 %v4943, 4294901760
      %4945 = vmatmul.f32.gmra.mxu0 %v4944
      %v4946 = vpop.f32.mrf.mxu0
      %v4947 = vadd.f32 %v4908, %v4946
      %v4948 = vand.u32 %v4547, 4294901760
      %v4949 = vsub.f32 %v4547, %v4948
      %v4950 = vand.u32 %v4949, 4294901760
      %4951 = vmatmul.f32.gmra.mxu0 %v4950
      %v4952 = vpop.f32.mrf.mxu0
      %v4953 = vadd.f32 %v4913, %v4952
      %v4954 = vand.u32 %v4549, 4294901760
      %v4955 = vsub.f32 %v4549, %v4954
      %v4956 = vand.u32 %v4955, 4294901760
      %4957 = vmatmul.f32.gmra.mxu0 %v4956
      %v4958 = vpop.f32.mrf.mxu0
      %v4959 = vadd.f32 %v4918, %v4958
      %v4960 = vand.u32 %v4551, 4294901760
      %v4961 = vsub.f32 %v4551, %v4960
      %v4962 = vand.u32 %v4961, 4294901760
      %4963 = vmatmul.f32.gmra.mxu0 %v4962
      %v4964 = vpop.f32.mrf.mxu0
      %v4965 = vadd.f32 %v4923, %v4964
      %4966 = vdwg.mxu0
      %4967 = vmatpush.msra.mxu0 0.0
      %4968 = vmatpush.msra.mxu0 0.0
      %4969 = vmatpush.msra.mxu0 0.0
      %4970 = vmatpush.msra.mxu0 0.0
      %4971 = vmatpush.msra.mxu0 0.0
      %4972 = vmatpush.msra.mxu0 0.0
      %4973 = vmatpush.msra.mxu0 0.0
      %4974 = vmatpush.msra.mxu0 0.0
      %4975 = vmatpush.msra.mxu0 0.0
      %4976 = vmatpush.msra.mxu0 0.0
      %4977 = vmatpush.msra.mxu0 0.0
      %4978 = vmatpush.msra.mxu0 0.0
      %4979 = vmatpush.msra.mxu0 0.0
      %4980 = vmatpush.msra.mxu0 0.0
      %4981 = vmatpush.msra.mxu0 0.0
      %v4982 = vand.u32 %v4557, 4294901760
      %v4983 = vsub.f32 %v4557, %v4982
      %v4984 = vand.u32 %v4983, 4294901760
      %4985 = vmatpush.msra.mxu0 %v4984
      %v4986 = vand.u32 %v4545, 4294901760
      %4987 = vmatmul.f32.gmra.mxu0 %v4986
      %v4988 = vpop.f32.mrf.mxu0
      %v4989 = vadd.f32 %v4947, %v4988
      %v4990 = vand.u32 %v4547, 4294901760
      %4991 = vmatmul.f32.gmra.mxu0 %v4990
      %v4992 = vpop.f32.mrf.mxu0
      %v4993 = vadd.f32 %v4953, %v4992
      %v4994 = vand.u32 %v4549, 4294901760
      %4995 = vmatmul.f32.gmra.mxu0 %v4994
      %v4996 = vpop.f32.mrf.mxu0
      %v4997 = vadd.f32 %v4959, %v4996
      %v4998 = vand.u32 %v4551, 4294901760
      %4999 = vmatmul.f32.gmra.mxu0 %v4998
      %v5000 = vpop.f32.mrf.mxu0
      %v5001 = vadd.f32 %v4965, %v5000
      %5002 = vdwg.mxu0
      %5003 = vmatpush.msra.mxu0 0.0
      %5004 = vmatpush.msra.mxu0 0.0
      %5005 = vmatpush.msra.mxu0 0.0
      %5006 = vmatpush.msra.mxu0 0.0
      %5007 = vmatpush.msra.mxu0 0.0
      %5008 = vmatpush.msra.mxu0 0.0
      %5009 = vmatpush.msra.mxu0 0.0
      %5010 = vmatpush.msra.mxu0 0.0
      %5011 = vmatpush.msra.mxu0 0.0
      %5012 = vmatpush.msra.mxu0 0.0
      %5013 = vmatpush.msra.mxu0 0.0
      %5014 = vmatpush.msra.mxu0 0.0
      %5015 = vmatpush.msra.mxu0 0.0
      %5016 = vmatpush.msra.mxu0 0.0
      %5017 = vmatpush.msra.mxu0 0.0
      %v5018 = vand.u32 %v4557, 4294901760
      %5019 = vmatpush.msra.mxu0 %v5018
      %v5020 = vand.u32 %v4545, 4294901760
      %5021 = vmatmul.f32.gmra.mxu0 %v5020
      %v5022 = vpop.f32.mrf.mxu0
      %v5023 = vadd.f32 %v4989, %v5022
      %v5024 = vand.u32 %v4547, 4294901760
      %5025 = vmatmul.f32.gmra.mxu0 %v5024
      %v5026 = vpop.f32.mrf.mxu0
      %v5027 = vadd.f32 %v4993, %v5026
      %v5028 = vand.u32 %v4549, 4294901760
      %5029 = vmatmul.f32.gmra.mxu0 %v5028
      %v5030 = vpop.f32.mrf.mxu0
      %v5031 = vadd.f32 %v4997, %v5030
      %v5032 = vand.u32 %v4551, 4294901760
      %5033 = vmatmul.f32.gmra.mxu0 %v5032
      %v5034 = vpop.f32.mrf.mxu0
      %v5035 = vadd.f32 %v5001, %v5034
      %5036 = vdwg.mxu0
      %v5037 = vadd.f32 %v4498, %v4784
      %v5038 = vadd.f32 %v4499, %v5023
      %v5039 = vadd.f32 %v4500, %v4788
      %v5040 = vadd.f32 %v4501, %v5027
      %v5041 = vadd.f32 %v4502, %v4792
      %v5042 = vadd.f32 %v4503, %v5031
      %v5043 = vadd.f32 %v4504, %v4796
      %v5044 = vadd.f32 %v4505, %v5035
      %v5045 = vld [vmem:[%s2] sm:$0xff]
      %v5046 = vld [vmem:[%s2 + $0x8] sm:$0xff]
      %v5047 = vld [vmem:[%s2 + $0x10] sm:$0xff]
      %v5048 = vld [vmem:[%s2 + $0x18] sm:$0xff]
      %5050 = vset.pattern.permute.xlu0 0
      %5051 = vperm.xlu0 %5050, %v5045
      %v5052 = vpop.permute.xlu0 %5051
      %5055 = vset.pattern.permute.xlu0 0
      %5056 = vperm.xlu0 %5055, %v5046
      %v5057 = vpop.permute.xlu0 %5056
      %5060 = vset.pattern.permute.xlu0 0
      %5061 = vperm.xlu0 %5060, %v5047
      %v5062 = vpop.permute.xlu0 %5061
      %5065 = vset.pattern.permute.xlu0 0
      %5066 = vperm.xlu0 %5065, %v5048
      %v5067 = vpop.permute.xlu0 %5066
      %v5069 = vadd.f32 %v5037, %v5052
      %v5070 = vadd.f32 %v5038, %v5052
      %v5071 = vadd.f32 %v5039, %v5057
      %v5072 = vadd.f32 %v5040, %v5057
      %v5073 = vadd.f32 %v5041, %v5062
      %v5074 = vadd.f32 %v5042, %v5062
      %v5075 = vadd.f32 %v5043, %v5067
      %v5076 = vadd.f32 %v5044, %v5067
      %v5077 = vmul.f32 %v5069, %v5069
      %v5078 = vmul.f32 %v5070, %v5070
      %v5079 = vmul.f32 %v5071, %v5071
      %v5080 = vmul.f32 %v5072, %v5072
      %v5081 = vmul.f32 %v5073, %v5073
      %v5082 = vmul.f32 %v5074, %v5074
      %v5083 = vmul.f32 %v5075, %v5075
      %v5084 = vmul.f32 %v5076, %v5076
      %v5085 = vld [vmem:[%s3] sm:$0xff]
      %v5086 = vld [vmem:[%s3 + $0x8] sm:$0xff]
      %v5087 = vld [vmem:[%s3 + $0x10] sm:$0xff]
      %v5088 = vld [vmem:[%s3 + $0x18] sm:$0xff]
      %v5089 = vld [vmem:[%s3 + $0x20] sm:$0xff]
      %v5090 = vld [vmem:[%s3 + $0x28] sm:$0xff]
      %v5091 = vld [vmem:[%s3 + $0x30] sm:$0xff]
      %v5092 = vld [vmem:[%s3 + $0x38] sm:$0xff]
      %v5093 = vld [vmem:[%s3 + $0x40] sm:$0xff]
      %v5094 = vld [vmem:[%s3 + $0x48] sm:$0xff]
      %v5095 = vld [vmem:[%s3 + $0x50] sm:$0xff]
      %v5096 = vld [vmem:[%s3 + $0x58] sm:$0xff]
      %v5097 = vld [vmem:[%s3 + $0x60] sm:$0xff]
      %v5098 = vld [vmem:[%s3 + $0x68] sm:$0xff]
      %v5099 = vld [vmem:[%s3 + $0x70] sm:$0xff]
      %v5100 = vld [vmem:[%s3 + $0x78] sm:$0xff]
      %v5101 = vld [vmem:[%s3 + $0x80] sm:$0xff]
      %v5102 = vld [vmem:[%s3 + $0x88] sm:$0xff]
      %v5103 = vld [vmem:[%s3 + $0x90] sm:$0xff]
      %v5104 = vld [vmem:[%s3 + $0x98] sm:$0xff]
      %v5105 = vld [vmem:[%s3 + $0xa0] sm:$0xff]
      %v5106 = vld [vmem:[%s3 + $0xa8] sm:$0xff]
      %v5107 = vld [vmem:[%s3 + $0xb0] sm:$0xff]
      %v5108 = vld [vmem:[%s3 + $0xb8] sm:$0xff]
      %v5109 = vld [vmem:[%s3 + $0xc0] sm:$0xff]
      %v5110 = vld [vmem:[%s3 + $0xc8] sm:$0xff]
      %v5111 = vld [vmem:[%s3 + $0xd0] sm:$0xff]
      %v5112 = vld [vmem:[%s3 + $0xd8] sm:$0xff]
      %v5113 = vld [vmem:[%s3 + $0xe0] sm:$0xff]
      %v5114 = vld [vmem:[%s3 + $0xe8] sm:$0xff]
      %v5115 = vld [vmem:[%s3 + $0xf0] sm:$0xff]
      %v5116 = vld [vmem:[%s3 + $0xf8] sm:$0xff]
      %v5117 = vand.u32 %v5100, 4294901760
      %5118 = vmatpush.msra.mxu0 %v5117
      %v5119 = vand.u32 %v5099, 4294901760
      %5120 = vmatpush.msra.mxu0 %v5119
      %v5121 = vand.u32 %v5098, 4294901760
      %5122 = vmatpush.msra.mxu0 %v5121
      %v5123 = vand.u32 %v5097, 4294901760
      %5124 = vmatpush.msra.mxu0 %v5123
      %v5125 = vand.u32 %v5096, 4294901760
      %5126 = vmatpush.msra.mxu0 %v5125
      %v5127 = vand.u32 %v5095, 4294901760
      %5128 = vmatpush.msra.mxu0 %v5127
      %v5129 = vand.u32 %v5094, 4294901760
      %5130 = vmatpush.msra.mxu0 %v5129
      %v5131 = vand.u32 %v5093, 4294901760
      %5132 = vmatpush.msra.mxu0 %v5131
      %v5133 = vand.u32 %v5092, 4294901760
      %5134 = vmatpush.msra.mxu0 %v5133
      %v5135 = vand.u32 %v5091, 4294901760
      %5136 = vmatpush.msra.mxu0 %v5135
      %v5137 = vand.u32 %v5090, 4294901760
      %5138 = vmatpush.msra.mxu0 %v5137
      %v5139 = vand.u32 %v5089, 4294901760
      %5140 = vmatpush.msra.mxu0 %v5139
      %v5141 = vand.u32 %v5088, 4294901760
      %5142 = vmatpush.msra.mxu0 %v5141
      %v5143 = vand.u32 %v5087, 4294901760
      %5144 = vmatpush.msra.mxu0 %v5143
      %v5145 = vand.u32 %v5086, 4294901760
      %5146 = vmatpush.msra.mxu0 %v5145
      %v5147 = vand.u32 %v5085, 4294901760
      %5148 = vmatpush.msra.mxu0 %v5147
      %v5149 = vand.u32 %v5077, 4294901760
      %v5150 = vsub.f32 %v5077, %v5149
      %v5151 = vand.u32 %v5150, 4294901760
      %v5152 = vsub.f32 %v5150, %v5151
      %v5153 = vand.u32 %v5152, 4294901760
      %5154 = vmatmul.f32.gmra.mxu0 %v5153
      %v5155 = vpop.f32.mrf.mxu0
      %v5156 = vadd.f32 8e-07, %v5155
      %v5157 = vand.u32 %v5079, 4294901760
      %v5158 = vsub.f32 %v5079, %v5157
      %v5159 = vand.u32 %v5158, 4294901760
      %v5160 = vsub.f32 %v5158, %v5159
      %v5161 = vand.u32 %v5160, 4294901760
      %5162 = vmatmul.f32.gmra.mxu0 %v5161
      %v5163 = vpop.f32.mrf.mxu0
      %v5164 = vadd.f32 8e-07, %v5163
      %v5165 = vand.u32 %v5081, 4294901760
      %v5166 = vsub.f32 %v5081, %v5165
      %v5167 = vand.u32 %v5166, 4294901760
      %v5168 = vsub.f32 %v5166, %v5167
      %v5169 = vand.u32 %v5168, 4294901760
      %5170 = vmatmul.f32.gmra.mxu0 %v5169
      %v5171 = vpop.f32.mrf.mxu0
      %v5172 = vadd.f32 8e-07, %v5171
      %v5173 = vand.u32 %v5083, 4294901760
      %v5174 = vsub.f32 %v5083, %v5173
      %v5175 = vand.u32 %v5174, 4294901760
      %v5176 = vsub.f32 %v5174, %v5175
      %v5177 = vand.u32 %v5176, 4294901760
      %5178 = vmatmul.f32.gmra.mxu0 %v5177
      %v5179 = vpop.f32.mrf.mxu0
      %v5180 = vadd.f32 8e-07, %v5179
      %5181 = vdwg.mxu0
      %v5182 = vand.u32 %v5100, 4294901760
      %v5183 = vsub.f32 %v5100, %v5182
      %v5184 = vand.u32 %v5183, 4294901760
      %v5185 = vsub.f32 %v5183, %v5184
      %v5186 = vand.u32 %v5185, 4294901760
      %5187 = vmatpush.msra.mxu0 %v5186
      %v5188 = vand.u32 %v5099, 4294901760
      %v5189 = vsub.f32 %v5099, %v5188
      %v5190 = vand.u32 %v5189, 4294901760
      %v5191 = vsub.f32 %v5189, %v5190
      %v5192 = vand.u32 %v5191, 4294901760
      %5193 = vmatpush.msra.mxu0 %v5192
      %v5194 = vand.u32 %v5098, 4294901760
      %v5195 = vsub.f32 %v5098, %v5194
      %v5196 = vand.u32 %v5195, 4294901760
      %v5197 = vsub.f32 %v5195, %v5196
      %v5198 = vand.u32 %v5197, 4294901760
      %5199 = vmatpush.msra.mxu0 %v5198
      %v5200 = vand.u32 %v5097, 4294901760
      %v5201 = vsub.f32 %v5097, %v5200
      %v5202 = vand.u32 %v5201, 4294901760
      %v5203 = vsub.f32 %v5201, %v5202
      %v5204 = vand.u32 %v5203, 4294901760
      %5205 = vmatpush.msra.mxu0 %v5204
      %v5206 = vand.u32 %v5096, 4294901760
      %v5207 = vsub.f32 %v5096, %v5206
      %v5208 = vand.u32 %v5207, 4294901760
      %v5209 = vsub.f32 %v5207, %v5208
      %v5210 = vand.u32 %v5209, 4294901760
      %5211 = vmatpush.msra.mxu0 %v5210
      %v5212 = vand.u32 %v5095, 4294901760
      %v5213 = vsub.f32 %v5095, %v5212
      %v5214 = vand.u32 %v5213, 4294901760
      %v5215 = vsub.f32 %v5213, %v5214
      %v5216 = vand.u32 %v5215, 4294901760
      %5217 = vmatpush.msra.mxu0 %v5216
      %v5218 = vand.u32 %v5094, 4294901760
      %v5219 = vsub.f32 %v5094, %v5218
      %v5220 = vand.u32 %v5219, 4294901760
      %v5221 = vsub.f32 %v5219, %v5220
      %v5222 = vand.u32 %v5221, 4294901760
      %5223 = vmatpush.msra.mxu0 %v5222
      %v5224 = vand.u32 %v5093, 4294901760
      %v5225 = vsub.f32 %v5093, %v5224
      %v5226 = vand.u32 %v5225, 4294901760
      %v5227 = vsub.f32 %v5225, %v5226
      %v5228 = vand.u32 %v5227, 4294901760
      %5229 = vmatpush.msra.mxu0 %v5228
      %v5230 = vand.u32 %v5092, 4294901760
      %v5231 = vsub.f32 %v5092, %v5230
      %v5232 = vand.u32 %v5231, 4294901760
      %v5233 = vsub.f32 %v5231, %v5232
      %v5234 = vand.u32 %v5233, 4294901760
      %5235 = vmatpush.msra.mxu0 %v5234
      %v5236 = vand.u32 %v5091, 4294901760
      %v5237 = vsub.f32 %v5091, %v5236
      %v5238 = vand.u32 %v5237, 4294901760
      %v5239 = vsub.f32 %v5237, %v5238
      %v5240 = vand.u32 %v5239, 4294901760
      %5241 = vmatpush.msra.mxu0 %v5240
      %v5242 = vand.u32 %v5090, 4294901760
      %v5243 = vsub.f32 %v5090, %v5242
      %v5244 = vand.u32 %v5243, 4294901760
      %v5245 = vsub.f32 %v5243, %v5244
      %v5246 = vand.u32 %v5245, 4294901760
      %5247 = vmatpush.msra.mxu0 %v5246
      %v5248 = vand.u32 %v5089, 4294901760
      %v5249 = vsub.f32 %v5089, %v5248
      %v5250 = vand.u32 %v5249, 4294901760
      %v5251 = vsub.f32 %v5249, %v5250
      %v5252 = vand.u32 %v5251, 4294901760
      %5253 = vmatpush.msra.mxu0 %v5252
      %v5254 = vand.u32 %v5088, 4294901760
      %v5255 = vsub.f32 %v5088, %v5254
      %v5256 = vand.u32 %v5255, 4294901760
      %v5257 = vsub.f32 %v5255, %v5256
      %v5258 = vand.u32 %v5257, 4294901760
      %5259 = vmatpush.msra.mxu0 %v5258
      %v5260 = vand.u32 %v5087, 4294901760
      %v5261 = vsub.f32 %v5087, %v5260
      %v5262 = vand.u32 %v5261, 4294901760
      %v5263 = vsub.f32 %v5261, %v5262
      %v5264 = vand.u32 %v5263, 4294901760
      %5265 = vmatpush.msra.mxu0 %v5264
      %v5266 = vand.u32 %v5086, 4294901760
      %v5267 = vsub.f32 %v5086, %v5266
      %v5268 = vand.u32 %v5267, 4294901760
      %v5269 = vsub.f32 %v5267, %v5268
      %v5270 = vand.u32 %v5269, 4294901760
      %5271 = vmatpush.msra.mxu0 %v5270
      %v5272 = vand.u32 %v5085, 4294901760
      %v5273 = vsub.f32 %v5085, %v5272
      %v5274 = vand.u32 %v5273, 4294901760
      %v5275 = vsub.f32 %v5273, %v5274
      %v5276 = vand.u32 %v5275, 4294901760
      %5277 = vmatpush.msra.mxu0 %v5276
      %v5278 = vand.u32 %v5077, 4294901760
      %5279 = vmatmul.f32.gmra.mxu0 %v5278
      %v5280 = vpop.f32.mrf.mxu0
      %v5281 = vadd.f32 %v5156, %v5280
      %v5282 = vand.u32 %v5079, 4294901760
      %5283 = vmatmul.f32.gmra.mxu0 %v5282
      %v5284 = vpop.f32.mrf.mxu0
      %v5285 = vadd.f32 %v5164, %v5284
      %v5286 = vand.u32 %v5081, 4294901760
      %5287 = vmatmul.f32.gmra.mxu0 %v5286
      %v5288 = vpop.f32.mrf.mxu0
      %v5289 = vadd.f32 %v5172, %v5288
      %v5290 = vand.u32 %v5083, 4294901760
      %5291 = vmatmul.f32.gmra.mxu0 %v5290
      %v5292 = vpop.f32.mrf.mxu0
      %v5293 = vadd.f32 %v5180, %v5292
      %5294 = vdwg.mxu0
      %v5295 = vand.u32 %v5100, 4294901760
      %v5296 = vsub.f32 %v5100, %v5295
      %5297 = vmatpush.msra.mxu0 %v5296
      %v5298 = vand.u32 %v5099, 4294901760
      %v5299 = vsub.f32 %v5099, %v5298
      %5300 = vmatpush.msra.mxu0 %v5299
      %v5301 = vand.u32 %v5098, 4294901760
      %v5302 = vsub.f32 %v5098, %v5301
      %5303 = vmatpush.msra.mxu0 %v5302
      %v5304 = vand.u32 %v5097, 4294901760
      %v5305 = vsub.f32 %v5097, %v5304
      %5306 = vmatpush.msra.mxu0 %v5305
      %v5307 = vand.u32 %v5096, 4294901760
      %v5308 = vsub.f32 %v5096, %v5307
      %5309 = vmatpush.msra.mxu0 %v5308
      %v5310 = vand.u32 %v5095, 4294901760
      %v5311 = vsub.f32 %v5095, %v5310
      %5312 = vmatpush.msra.mxu0 %v5311
      %v5313 = vand.u32 %v5094, 4294901760
      %v5314 = vsub.f32 %v5094, %v5313
      %5315 = vmatpush.msra.mxu0 %v5314
      %v5316 = vand.u32 %v5093, 4294901760
      %v5317 = vsub.f32 %v5093, %v5316
      %5318 = vmatpush.msra.mxu0 %v5317
      %v5319 = vand.u32 %v5092, 4294901760
      %v5320 = vsub.f32 %v5092, %v5319
      %5321 = vmatpush.msra.mxu0 %v5320
      %v5322 = vand.u32 %v5091, 4294901760
      %v5323 = vsub.f32 %v5091, %v5322
      %5324 = vmatpush.msra.mxu0 %v5323
      %v5325 = vand.u32 %v5090, 4294901760
      %v5326 = vsub.f32 %v5090, %v5325
      %5327 = vmatpush.msra.mxu0 %v5326
      %v5328 = vand.u32 %v5089, 4294901760
      %v5329 = vsub.f32 %v5089, %v5328
      %5330 = vmatpush.msra.mxu0 %v5329
      %v5331 = vand.u32 %v5088, 4294901760
      %v5332 = vsub.f32 %v5088, %v5331
      %5333 = vmatpush.msra.mxu0 %v5332
      %v5334 = vand.u32 %v5087, 4294901760
      %v5335 = vsub.f32 %v5087, %v5334
      %5336 = vmatpush.msra.mxu0 %v5335
      %v5337 = vand.u32 %v5086, 4294901760
      %v5338 = vsub.f32 %v5086, %v5337
      %5339 = vmatpush.msra.mxu0 %v5338
      %v5340 = vand.u32 %v5085, 4294901760
      %v5341 = vsub.f32 %v5085, %v5340
      %5342 = vmatpush.msra.mxu0 %v5341
      %v5343 = vand.u32 %v5077, 4294901760
      %v5344 = vsub.f32 %v5077, %v5343
      %5345 = vmatmul.f32.gmra.mxu0 %v5344
      %v5346 = vpop.f32.mrf.mxu0
      %v5347 = vadd.f32 %v5281, %v5346
      %v5348 = vand.u32 %v5079, 4294901760
      %v5349 = vsub.f32 %v5079, %v5348
      %5350 = vmatmul.f32.gmra.mxu0 %v5349
      %v5351 = vpop.f32.mrf.mxu0
      %v5352 = vadd.f32 %v5285, %v5351
      %v5353 = vand.u32 %v5081, 4294901760
      %v5354 = vsub.f32 %v5081, %v5353
      %5355 = vmatmul.f32.gmra.mxu0 %v5354
      %v5356 = vpop.f32.mrf.mxu0
      %v5357 = vadd.f32 %v5289, %v5356
      %v5358 = vand.u32 %v5083, 4294901760
      %v5359 = vsub.f32 %v5083, %v5358
      %5360 = vmatmul.f32.gmra.mxu0 %v5359
      %v5361 = vpop.f32.mrf.mxu0
      %v5362 = vadd.f32 %v5293, %v5361
      %5363 = vdwg.mxu0
      %v5364 = vand.u32 %v5100, 4294901760
      %5365 = vmatpush.msra.mxu0 %v5364
      %v5366 = vand.u32 %v5099, 4294901760
      %5367 = vmatpush.msra.mxu0 %v5366
      %v5368 = vand.u32 %v5098, 4294901760
      %5369 = vmatpush.msra.mxu0 %v5368
      %v5370 = vand.u32 %v5097, 4294901760
      %5371 = vmatpush.msra.mxu0 %v5370
      %v5372 = vand.u32 %v5096, 4294901760
      %5373 = vmatpush.msra.mxu0 %v5372
      %v5374 = vand.u32 %v5095, 4294901760
      %5375 = vmatpush.msra.mxu0 %v5374
      %v5376 = vand.u32 %v5094, 4294901760
      %5377 = vmatpush.msra.mxu0 %v5376
      %v5378 = vand.u32 %v5093, 4294901760
      %5379 = vmatpush.msra.mxu0 %v5378
      %v5380 = vand.u32 %v5092, 4294901760
      %5381 = vmatpush.msra.mxu0 %v5380
      %v5382 = vand.u32 %v5091, 4294901760
      %5383 = vmatpush.msra.mxu0 %v5382
      %v5384 = vand.u32 %v5090, 4294901760
      %5385 = vmatpush.msra.mxu0 %v5384
      %v5386 = vand.u32 %v5089, 4294901760
      %5387 = vmatpush.msra.mxu0 %v5386
      %v5388 = vand.u32 %v5088, 4294901760
      %5389 = vmatpush.msra.mxu0 %v5388
      %v5390 = vand.u32 %v5087, 4294901760
      %5391 = vmatpush.msra.mxu0 %v5390
      %v5392 = vand.u32 %v5086, 4294901760
      %5393 = vmatpush.msra.mxu0 %v5392
      %v5394 = vand.u32 %v5085, 4294901760
      %5395 = vmatpush.msra.mxu0 %v5394
      %v5396 = vand.u32 %v5077, 4294901760
      %v5397 = vsub.f32 %v5077, %v5396
      %v5398 = vand.u32 %v5397, 4294901760
      %5399 = vmatmul.f32.gmra.mxu0 %v5398
      %v5400 = vpop.f32.mrf.mxu0
      %v5401 = vadd.f32 %v5347, %v5400
      %v5402 = vand.u32 %v5079, 4294901760
      %v5403 = vsub.f32 %v5079, %v5402
      %v5404 = vand.u32 %v5403, 4294901760
      %5405 = vmatmul.f32.gmra.mxu0 %v5404
      %v5406 = vpop.f32.mrf.mxu0
      %v5407 = vadd.f32 %v5352, %v5406
      %v5408 = vand.u32 %v5081, 4294901760
      %v5409 = vsub.f32 %v5081, %v5408
      %v5410 = vand.u32 %v5409, 4294901760
      %5411 = vmatmul.f32.gmra.mxu0 %v5410
      %v5412 = vpop.f32.mrf.mxu0
      %v5413 = vadd.f32 %v5357, %v5412
      %v5414 = vand.u32 %v5083, 4294901760
      %v5415 = vsub.f32 %v5083, %v5414
      %v5416 = vand.u32 %v5415, 4294901760
      %5417 = vmatmul.f32.gmra.mxu0 %v5416
      %v5418 = vpop.f32.mrf.mxu0
      %v5419 = vadd.f32 %v5362, %v5418
      %5420 = vdwg.mxu0
      %v5421 = vand.u32 %v5100, 4294901760
      %v5422 = vsub.f32 %v5100, %v5421
      %v5423 = vand.u32 %v5422, 4294901760
      %5424 = vmatpush.msra.mxu0 %v5423
      %v5425 = vand.u32 %v5099, 4294901760
      %v5426 = vsub.f32 %v5099, %v5425
      %v5427 = vand.u32 %v5426, 4294901760
      %5428 = vmatpush.msra.mxu0 %v5427
      %v5429 = vand.u32 %v5098, 4294901760
      %v5430 = vsub.f32 %v5098, %v5429
      %v5431 = vand.u32 %v5430, 4294901760
      %5432 = vmatpush.msra.mxu0 %v5431
      %v5433 = vand.u32 %v5097, 4294901760
      %v5434 = vsub.f32 %v5097, %v5433
      %v5435 = vand.u32 %v5434, 4294901760
      %5436 = vmatpush.msra.mxu0 %v5435
      %v5437 = vand.u32 %v5096, 4294901760
      %v5438 = vsub.f32 %v5096, %v5437
      %v5439 = vand.u32 %v5438, 4294901760
      %5440 = vmatpush.msra.mxu0 %v5439
      %v5441 = vand.u32 %v5095, 4294901760
      %v5442 = vsub.f32 %v5095, %v5441
      %v5443 = vand.u32 %v5442, 4294901760
      %5444 = vmatpush.msra.mxu0 %v5443
      %v5445 = vand.u32 %v5094, 4294901760
      %v5446 = vsub.f32 %v5094, %v5445
      %v5447 = vand.u32 %v5446, 4294901760
      %5448 = vmatpush.msra.mxu0 %v5447
      %v5449 = vand.u32 %v5093, 4294901760
      %v5450 = vsub.f32 %v5093, %v5449
      %v5451 = vand.u32 %v5450, 4294901760
      %5452 = vmatpush.msra.mxu0 %v5451
      %v5453 = vand.u32 %v5092, 4294901760
      %v5454 = vsub.f32 %v5092, %v5453
      %v5455 = vand.u32 %v5454, 4294901760
      %5456 = vmatpush.msra.mxu0 %v5455
      %v5457 = vand.u32 %v5091, 4294901760
      %v5458 = vsub.f32 %v5091, %v5457
      %v5459 = vand.u32 %v5458, 4294901760
      %5460 = vmatpush.msra.mxu0 %v5459
      %v5461 = vand.u32 %v5090, 4294901760
      %v5462 = vsub.f32 %v5090, %v5461
      %v5463 = vand.u32 %v5462, 4294901760
      %5464 = vmatpush.msra.mxu0 %v5463
      %v5465 = vand.u32 %v5089, 4294901760
      %v5466 = vsub.f32 %v5089, %v5465
      %v5467 = vand.u32 %v5466, 4294901760
      %5468 = vmatpush.msra.mxu0 %v5467
      %v5469 = vand.u32 %v5088, 4294901760
      %v5470 = vsub.f32 %v5088, %v5469
      %v5471 = vand.u32 %v5470, 4294901760
      %5472 = vmatpush.msra.mxu0 %v5471
      %v5473 = vand.u32 %v5087, 4294901760
      %v5474 = vsub.f32 %v5087, %v5473
      %v5475 = vand.u32 %v5474, 4294901760
      %5476 = vmatpush.msra.mxu0 %v5475
      %v5477 = vand.u32 %v5086, 4294901760
      %v5478 = vsub.f32 %v5086, %v5477
      %v5479 = vand.u32 %v5478, 4294901760
      %5480 = vmatpush.msra.mxu0 %v5479
      %v5481 = vand.u32 %v5085, 4294901760
      %v5482 = vsub.f32 %v5085, %v5481
      %v5483 = vand.u32 %v5482, 4294901760
      %5484 = vmatpush.msra.mxu0 %v5483
      %v5485 = vand.u32 %v5077, 4294901760
      %5486 = vmatmul.f32.gmra.mxu0 %v5485
      %v5487 = vpop.f32.mrf.mxu0
      %v5488 = vadd.f32 %v5401, %v5487
      %v5489 = vand.u32 %v5079, 4294901760
      %5490 = vmatmul.f32.gmra.mxu0 %v5489
      %v5491 = vpop.f32.mrf.mxu0
      %v5492 = vadd.f32 %v5407, %v5491
      %v5493 = vand.u32 %v5081, 4294901760
      %5494 = vmatmul.f32.gmra.mxu0 %v5493
      %v5495 = vpop.f32.mrf.mxu0
      %v5496 = vadd.f32 %v5413, %v5495
      %v5497 = vand.u32 %v5083, 4294901760
      %5498 = vmatmul.f32.gmra.mxu0 %v5497
      %v5499 = vpop.f32.mrf.mxu0
      %v5500 = vadd.f32 %v5419, %v5499
      %5501 = vdwg.mxu0
      %v5502 = vand.u32 %v5100, 4294901760
      %5503 = vmatpush.msra.mxu0 %v5502
      %v5504 = vand.u32 %v5099, 4294901760
      %5505 = vmatpush.msra.mxu0 %v5504
      %v5506 = vand.u32 %v5098, 4294901760
      %5507 = vmatpush.msra.mxu0 %v5506
      %v5508 = vand.u32 %v5097, 4294901760
      %5509 = vmatpush.msra.mxu0 %v5508
      %v5510 = vand.u32 %v5096, 4294901760
      %5511 = vmatpush.msra.mxu0 %v5510
      %v5512 = vand.u32 %v5095, 4294901760
      %5513 = vmatpush.msra.mxu0 %v5512
      %v5514 = vand.u32 %v5094, 4294901760
      %5515 = vmatpush.msra.mxu0 %v5514
      %v5516 = vand.u32 %v5093, 4294901760
      %5517 = vmatpush.msra.mxu0 %v5516
      %v5518 = vand.u32 %v5092, 4294901760
      %5519 = vmatpush.msra.mxu0 %v5518
      %v5520 = vand.u32 %v5091, 4294901760
      %5521 = vmatpush.msra.mxu0 %v5520
      %v5522 = vand.u32 %v5090, 4294901760
      %5523 = vmatpush.msra.mxu0 %v5522
      %v5524 = vand.u32 %v5089, 4294901760
      %5525 = vmatpush.msra.mxu0 %v5524
      %v5526 = vand.u32 %v5088, 4294901760
      %5527 = vmatpush.msra.mxu0 %v5526
      %v5528 = vand.u32 %v5087, 4294901760
      %5529 = vmatpush.msra.mxu0 %v5528
      %v5530 = vand.u32 %v5086, 4294901760
      %5531 = vmatpush.msra.mxu0 %v5530
      %v5532 = vand.u32 %v5085, 4294901760
      %5533 = vmatpush.msra.mxu0 %v5532
      %v5534 = vand.u32 %v5077, 4294901760
      %5535 = vmatmul.f32.gmra.mxu0 %v5534
      %v5536 = vpop.f32.mrf.mxu0
      %v5537 = vadd.f32 %v5488, %v5536
      %v5538 = vand.u32 %v5079, 4294901760
      %5539 = vmatmul.f32.gmra.mxu0 %v5538
      %v5540 = vpop.f32.mrf.mxu0
      %v5541 = vadd.f32 %v5492, %v5540
      %v5542 = vand.u32 %v5081, 4294901760
      %5543 = vmatmul.f32.gmra.mxu0 %v5542
      %v5544 = vpop.f32.mrf.mxu0
      %v5545 = vadd.f32 %v5496, %v5544
      %v5546 = vand.u32 %v5083, 4294901760
      %5547 = vmatmul.f32.gmra.mxu0 %v5546
      %v5548 = vpop.f32.mrf.mxu0
      %v5549 = vadd.f32 %v5500, %v5548
      %5550 = vdwg.mxu0
      %v5551 = vand.u32 %v5116, 4294901760
      %5552 = vmatpush.msra.mxu0 %v5551
      %v5553 = vand.u32 %v5115, 4294901760
      %5554 = vmatpush.msra.mxu0 %v5553
      %v5555 = vand.u32 %v5114, 4294901760
      %5556 = vmatpush.msra.mxu0 %v5555
      %v5557 = vand.u32 %v5113, 4294901760
      %5558 = vmatpush.msra.mxu0 %v5557
      %v5559 = vand.u32 %v5112, 4294901760
      %5560 = vmatpush.msra.mxu0 %v5559
      %v5561 = vand.u32 %v5111, 4294901760
      %5562 = vmatpush.msra.mxu0 %v5561
      %v5563 = vand.u32 %v5110, 4294901760
      %5564 = vmatpush.msra.mxu0 %v5563
      %v5565 = vand.u32 %v5109, 4294901760
      %5566 = vmatpush.msra.mxu0 %v5565
      %v5567 = vand.u32 %v5108, 4294901760
      %5568 = vmatpush.msra.mxu0 %v5567
      %v5569 = vand.u32 %v5107, 4294901760
      %5570 = vmatpush.msra.mxu0 %v5569
      %v5571 = vand.u32 %v5106, 4294901760
      %5572 = vmatpush.msra.mxu0 %v5571
      %v5573 = vand.u32 %v5105, 4294901760
      %5574 = vmatpush.msra.mxu0 %v5573
      %v5575 = vand.u32 %v5104, 4294901760
      %5576 = vmatpush.msra.mxu0 %v5575
      %v5577 = vand.u32 %v5103, 4294901760
      %5578 = vmatpush.msra.mxu0 %v5577
      %v5579 = vand.u32 %v5102, 4294901760
      %5580 = vmatpush.msra.mxu0 %v5579
      %v5581 = vand.u32 %v5101, 4294901760
      %5582 = vmatpush.msra.mxu0 %v5581
      %v5583 = vand.u32 %v5078, 4294901760
      %v5584 = vsub.f32 %v5078, %v5583
      %v5585 = vand.u32 %v5584, 4294901760
      %v5586 = vsub.f32 %v5584, %v5585
      %v5587 = vand.u32 %v5586, 4294901760
      %5588 = vmatmul.f32.gmra.mxu0 %v5587
      %v5589 = vpop.f32.mrf.mxu0
      %v5590 = vadd.f32 %v5537, %v5589
      %v5591 = vand.u32 %v5080, 4294901760
      %v5592 = vsub.f32 %v5080, %v5591
      %v5593 = vand.u32 %v5592, 4294901760
      %v5594 = vsub.f32 %v5592, %v5593
      %v5595 = vand.u32 %v5594, 4294901760
      %5596 = vmatmul.f32.gmra.mxu0 %v5595
      %v5597 = vpop.f32.mrf.mxu0
      %v5598 = vadd.f32 %v5541, %v5597
      %v5599 = vand.u32 %v5082, 4294901760
      %v5600 = vsub.f32 %v5082, %v5599
      %v5601 = vand.u32 %v5600, 4294901760
      %v5602 = vsub.f32 %v5600, %v5601
      %v5603 = vand.u32 %v5602, 4294901760
      %5604 = vmatmul.f32.gmra.mxu0 %v5603
      %v5605 = vpop.f32.mrf.mxu0
      %v5606 = vadd.f32 %v5545, %v5605
      %v5607 = vand.u32 %v5084, 4294901760
      %v5608 = vsub.f32 %v5084, %v5607
      %v5609 = vand.u32 %v5608, 4294901760
      %v5610 = vsub.f32 %v5608, %v5609
      %v5611 = vand.u32 %v5610, 4294901760
      %5612 = vmatmul.f32.gmra.mxu0 %v5611
      %v5613 = vpop.f32.mrf.mxu0
      %v5614 = vadd.f32 %v5549, %v5613
      %5615 = vdwg.mxu0
      %v5616 = vand.u32 %v5116, 4294901760
      %v5617 = vsub.f32 %v5116, %v5616
      %v5618 = vand.u32 %v5617, 4294901760
      %v5619 = vsub.f32 %v5617, %v5618
      %v5620 = vand.u32 %v5619, 4294901760
      %5621 = vmatpush.msra.mxu0 %v5620
      %v5622 = vand.u32 %v5115, 4294901760
      %v5623 = vsub.f32 %v5115, %v5622
      %v5624 = vand.u32 %v5623, 4294901760
      %v5625 = vsub.f32 %v5623, %v5624
      %v5626 = vand.u32 %v5625, 4294901760
      %5627 = vmatpush.msra.mxu0 %v5626
      %v5628 = vand.u32 %v5114, 4294901760
      %v5629 = vsub.f32 %v5114, %v5628
      %v5630 = vand.u32 %v5629, 4294901760
      %v5631 = vsub.f32 %v5629, %v5630
      %v5632 = vand.u32 %v5631, 4294901760
      %5633 = vmatpush.msra.mxu0 %v5632
      %v5634 = vand.u32 %v5113, 4294901760
      %v5635 = vsub.f32 %v5113, %v5634
      %v5636 = vand.u32 %v5635, 4294901760
      %v5637 = vsub.f32 %v5635, %v5636
      %v5638 = vand.u32 %v5637, 4294901760
      %5639 = vmatpush.msra.mxu0 %v5638
      %v5640 = vand.u32 %v5112, 4294901760
      %v5641 = vsub.f32 %v5112, %v5640
      %v5642 = vand.u32 %v5641, 4294901760
      %v5643 = vsub.f32 %v5641, %v5642
      %v5644 = vand.u32 %v5643, 4294901760
      %5645 = vmatpush.msra.mxu0 %v5644
      %v5646 = vand.u32 %v5111, 4294901760
      %v5647 = vsub.f32 %v5111, %v5646
      %v5648 = vand.u32 %v5647, 4294901760
      %v5649 = vsub.f32 %v5647, %v5648
      %v5650 = vand.u32 %v5649, 4294901760
      %5651 = vmatpush.msra.mxu0 %v5650
      %v5652 = vand.u32 %v5110, 4294901760
      %v5653 = vsub.f32 %v5110, %v5652
      %v5654 = vand.u32 %v5653, 4294901760
      %v5655 = vsub.f32 %v5653, %v5654
      %v5656 = vand.u32 %v5655, 4294901760
      %5657 = vmatpush.msra.mxu0 %v5656
      %v5658 = vand.u32 %v5109, 4294901760
      %v5659 = vsub.f32 %v5109, %v5658
      %v5660 = vand.u32 %v5659, 4294901760
      %v5661 = vsub.f32 %v5659, %v5660
      %v5662 = vand.u32 %v5661, 4294901760
      %5663 = vmatpush.msra.mxu0 %v5662
      %v5664 = vand.u32 %v5108, 4294901760
      %v5665 = vsub.f32 %v5108, %v5664
      %v5666 = vand.u32 %v5665, 4294901760
      %v5667 = vsub.f32 %v5665, %v5666
      %v5668 = vand.u32 %v5667, 4294901760
      %5669 = vmatpush.msra.mxu0 %v5668
      %v5670 = vand.u32 %v5107, 4294901760
      %v5671 = vsub.f32 %v5107, %v5670
      %v5672 = vand.u32 %v5671, 4294901760
      %v5673 = vsub.f32 %v5671, %v5672
      %v5674 = vand.u32 %v5673, 4294901760
      %5675 = vmatpush.msra.mxu0 %v5674
      %v5676 = vand.u32 %v5106, 4294901760
      %v5677 = vsub.f32 %v5106, %v5676
      %v5678 = vand.u32 %v5677, 4294901760
      %v5679 = vsub.f32 %v5677, %v5678
      %v5680 = vand.u32 %v5679, 4294901760
      %5681 = vmatpush.msra.mxu0 %v5680
      %v5682 = vand.u32 %v5105, 4294901760
      %v5683 = vsub.f32 %v5105, %v5682
      %v5684 = vand.u32 %v5683, 4294901760
      %v5685 = vsub.f32 %v5683, %v5684
      %v5686 = vand.u32 %v5685, 4294901760
      %5687 = vmatpush.msra.mxu0 %v5686
      %v5688 = vand.u32 %v5104, 4294901760
      %v5689 = vsub.f32 %v5104, %v5688
      %v5690 = vand.u32 %v5689, 4294901760
      %v5691 = vsub.f32 %v5689, %v5690
      %v5692 = vand.u32 %v5691, 4294901760
      %5693 = vmatpush.msra.mxu0 %v5692
      %v5694 = vand.u32 %v5103, 4294901760
      %v5695 = vsub.f32 %v5103, %v5694
      %v5696 = vand.u32 %v5695, 4294901760
      %v5697 = vsub.f32 %v5695, %v5696
      %v5698 = vand.u32 %v5697, 4294901760
      %5699 = vmatpush.msra.mxu0 %v5698
      %v5700 = vand.u32 %v5102, 4294901760
      %v5701 = vsub.f32 %v5102, %v5700
      %v5702 = vand.u32 %v5701, 4294901760
      %v5703 = vsub.f32 %v5701, %v5702
      %v5704 = vand.u32 %v5703, 4294901760
      %5705 = vmatpush.msra.mxu0 %v5704
      %v5706 = vand.u32 %v5101, 4294901760
      %v5707 = vsub.f32 %v5101, %v5706
      %v5708 = vand.u32 %v5707, 4294901760
      %v5709 = vsub.f32 %v5707, %v5708
      %v5710 = vand.u32 %v5709, 4294901760
      %5711 = vmatpush.msra.mxu0 %v5710
      %v5712 = vand.u32 %v5078, 4294901760
      %5713 = vmatmul.f32.gmra.mxu0 %v5712
      %v5714 = vpop.f32.mrf.mxu0
      %v5715 = vadd.f32 %v5590, %v5714
      %v5716 = vand.u32 %v5080, 4294901760
      %5717 = vmatmul.f32.gmra.mxu0 %v5716
      %v5718 = vpop.f32.mrf.mxu0
      %v5719 = vadd.f32 %v5598, %v5718
      %v5720 = vand.u32 %v5082, 4294901760
      %5721 = vmatmul.f32.gmra.mxu0 %v5720
      %v5722 = vpop.f32.mrf.mxu0
      %v5723 = vadd.f32 %v5606, %v5722
      %v5724 = vand.u32 %v5084, 4294901760
      %5725 = vmatmul.f32.gmra.mxu0 %v5724
      %v5726 = vpop.f32.mrf.mxu0
      %v5727 = vadd.f32 %v5614, %v5726
      %5728 = vdwg.mxu0
      %v5729 = vand.u32 %v5116, 4294901760
      %v5730 = vsub.f32 %v5116, %v5729
      %5731 = vmatpush.msra.mxu0 %v5730
      %v5732 = vand.u32 %v5115, 4294901760
      %v5733 = vsub.f32 %v5115, %v5732
      %5734 = vmatpush.msra.mxu0 %v5733
      %v5735 = vand.u32 %v5114, 4294901760
      %v5736 = vsub.f32 %v5114, %v5735
      %5737 = vmatpush.msra.mxu0 %v5736
      %v5738 = vand.u32 %v5113, 4294901760
      %v5739 = vsub.f32 %v5113, %v5738
      %5740 = vmatpush.msra.mxu0 %v5739
      %v5741 = vand.u32 %v5112, 4294901760
      %v5742 = vsub.f32 %v5112, %v5741
      %5743 = vmatpush.msra.mxu0 %v5742
      %v5744 = vand.u32 %v5111, 4294901760
      %v5745 = vsub.f32 %v5111, %v5744
      %5746 = vmatpush.msra.mxu0 %v5745
      %v5747 = vand.u32 %v5110, 4294901760
      %v5748 = vsub.f32 %v5110, %v5747
      %5749 = vmatpush.msra.mxu0 %v5748
      %v5750 = vand.u32 %v5109, 4294901760
      %v5751 = vsub.f32 %v5109, %v5750
      %5752 = vmatpush.msra.mxu0 %v5751
      %v5753 = vand.u32 %v5108, 4294901760
      %v5754 = vsub.f32 %v5108, %v5753
      %5755 = vmatpush.msra.mxu0 %v5754
      %v5756 = vand.u32 %v5107, 4294901760
      %v5757 = vsub.f32 %v5107, %v5756
      %5758 = vmatpush.msra.mxu0 %v5757
      %v5759 = vand.u32 %v5106, 4294901760
      %v5760 = vsub.f32 %v5106, %v5759
      %5761 = vmatpush.msra.mxu0 %v5760
      %v5762 = vand.u32 %v5105, 4294901760
      %v5763 = vsub.f32 %v5105, %v5762
      %5764 = vmatpush.msra.mxu0 %v5763
      %v5765 = vand.u32 %v5104, 4294901760
      %v5766 = vsub.f32 %v5104, %v5765
      %5767 = vmatpush.msra.mxu0 %v5766
      %v5768 = vand.u32 %v5103, 4294901760
      %v5769 = vsub.f32 %v5103, %v5768
      %5770 = vmatpush.msra.mxu0 %v5769
      %v5771 = vand.u32 %v5102, 4294901760
      %v5772 = vsub.f32 %v5102, %v5771
      %5773 = vmatpush.msra.mxu0 %v5772
      %v5774 = vand.u32 %v5101, 4294901760
      %v5775 = vsub.f32 %v5101, %v5774
      %5776 = vmatpush.msra.mxu0 %v5775
      %v5777 = vand.u32 %v5078, 4294901760
      %v5778 = vsub.f32 %v5078, %v5777
      %5779 = vmatmul.f32.gmra.mxu0 %v5778
      %v5780 = vpop.f32.mrf.mxu0
      %v5781 = vadd.f32 %v5715, %v5780
      %v5782 = vand.u32 %v5080, 4294901760
      %v5783 = vsub.f32 %v5080, %v5782
      %5784 = vmatmul.f32.gmra.mxu0 %v5783
      %v5785 = vpop.f32.mrf.mxu0
      %v5786 = vadd.f32 %v5719, %v5785
      %v5787 = vand.u32 %v5082, 4294901760
      %v5788 = vsub.f32 %v5082, %v5787
      %5789 = vmatmul.f32.gmra.mxu0 %v5788
      %v5790 = vpop.f32.mrf.mxu0
      %v5791 = vadd.f32 %v5723, %v5790
      %v5792 = vand.u32 %v5084, 4294901760
      %v5793 = vsub.f32 %v5084, %v5792
      %5794 = vmatmul.f32.gmra.mxu0 %v5793
      %v5795 = vpop.f32.mrf.mxu0
      %v5796 = vadd.f32 %v5727, %v5795
      %5797 = vdwg.mxu0
      %v5798 = vand.u32 %v5116, 4294901760
      %5799 = vmatpush.msra.mxu0 %v5798
      %v5800 = vand.u32 %v5115, 4294901760
      %5801 = vmatpush.msra.mxu0 %v5800
      %v5802 = vand.u32 %v5114, 4294901760
      %5803 = vmatpush.msra.mxu0 %v5802
      %v5804 = vand.u32 %v5113, 4294901760
      %5805 = vmatpush.msra.mxu0 %v5804
      %v5806 = vand.u32 %v5112, 4294901760
      %5807 = vmatpush.msra.mxu0 %v5806
      %v5808 = vand.u32 %v5111, 4294901760
      %5809 = vmatpush.msra.mxu0 %v5808
      %v5810 = vand.u32 %v5110, 4294901760
      %5811 = vmatpush.msra.mxu0 %v5810
      %v5812 = vand.u32 %v5109, 4294901760
      %5813 = vmatpush.msra.mxu0 %v5812
      %v5814 = vand.u32 %v5108, 4294901760
      %5815 = vmatpush.msra.mxu0 %v5814
      %v5816 = vand.u32 %v5107, 4294901760
      %5817 = vmatpush.msra.mxu0 %v5816
      %v5818 = vand.u32 %v5106, 4294901760
      %5819 = vmatpush.msra.mxu0 %v5818
      %v5820 = vand.u32 %v5105, 4294901760
      %5821 = vmatpush.msra.mxu0 %v5820
      %v5822 = vand.u32 %v5104, 4294901760
      %5823 = vmatpush.msra.mxu0 %v5822
      %v5824 = vand.u32 %v5103, 4294901760
      %5825 = vmatpush.msra.mxu0 %v5824
      %v5826 = vand.u32 %v5102, 4294901760
      %5827 = vmatpush.msra.mxu0 %v5826
      %v5828 = vand.u32 %v5101, 4294901760
      %5829 = vmatpush.msra.mxu0 %v5828
      %v5830 = vand.u32 %v5078, 4294901760
      %v5831 = vsub.f32 %v5078, %v5830
      %v5832 = vand.u32 %v5831, 4294901760
      %5833 = vmatmul.f32.gmra.mxu0 %v5832
      %v5834 = vpop.f32.mrf.mxu0
      %v5835 = vadd.f32 %v5781, %v5834
      %v5836 = vand.u32 %v5080, 4294901760
      %v5837 = vsub.f32 %v5080, %v5836
      %v5838 = vand.u32 %v5837, 4294901760
      %5839 = vmatmul.f32.gmra.mxu0 %v5838
      %v5840 = vpop.f32.mrf.mxu0
      %v5841 = vadd.f32 %v5786, %v5840
      %v5842 = vand.u32 %v5082, 4294901760
      %v5843 = vsub.f32 %v5082, %v5842
      %v5844 = vand.u32 %v5843, 4294901760
      %5845 = vmatmul.f32.gmra.mxu0 %v5844
      %v5846 = vpop.f32.mrf.mxu0
      %v5847 = vadd.f32 %v5791, %v5846
      %v5848 = vand.u32 %v5084, 4294901760
      %v5849 = vsub.f32 %v5084, %v5848
      %v5850 = vand.u32 %v5849, 4294901760
      %5851 = vmatmul.f32.gmra.mxu0 %v5850
      %v5852 = vpop.f32.mrf.mxu0
      %v5853 = vadd.f32 %v5796, %v5852
      %5854 = vdwg.mxu0
      %v5855 = vand.u32 %v5116, 4294901760
      %v5856 = vsub.f32 %v5116, %v5855
      %v5857 = vand.u32 %v5856, 4294901760
      %5858 = vmatpush.msra.mxu0 %v5857
      %v5859 = vand.u32 %v5115, 4294901760
      %v5860 = vsub.f32 %v5115, %v5859
      %v5861 = vand.u32 %v5860, 4294901760
      %5862 = vmatpush.msra.mxu0 %v5861
      %v5863 = vand.u32 %v5114, 4294901760
      %v5864 = vsub.f32 %v5114, %v5863
      %v5865 = vand.u32 %v5864, 4294901760
      %5866 = vmatpush.msra.mxu0 %v5865
      %v5867 = vand.u32 %v5113, 4294901760
      %v5868 = vsub.f32 %v5113, %v5867
      %v5869 = vand.u32 %v5868, 4294901760
      %5870 = vmatpush.msra.mxu0 %v5869
      %v5871 = vand.u32 %v5112, 4294901760
      %v5872 = vsub.f32 %v5112, %v5871
      %v5873 = vand.u32 %v5872, 4294901760
      %5874 = vmatpush.msra.mxu0 %v5873
      %v5875 = vand.u32 %v5111, 4294901760
      %v5876 = vsub.f32 %v5111, %v5875
      %v5877 = vand.u32 %v5876, 4294901760
      %5878 = vmatpush.msra.mxu0 %v5877
      %v5879 = vand.u32 %v5110, 4294901760
      %v5880 = vsub.f32 %v5110, %v5879
      %v5881 = vand.u32 %v5880, 4294901760
      %5882 = vmatpush.msra.mxu0 %v5881
      %v5883 = vand.u32 %v5109, 4294901760
      %v5884 = vsub.f32 %v5109, %v5883
      %v5885 = vand.u32 %v5884, 4294901760
      %5886 = vmatpush.msra.mxu0 %v5885
      %v5887 = vand.u32 %v5108, 4294901760
      %v5888 = vsub.f32 %v5108, %v5887
      %v5889 = vand.u32 %v5888, 4294901760
      %5890 = vmatpush.msra.mxu0 %v5889
      %v5891 = vand.u32 %v5107, 4294901760
      %v5892 = vsub.f32 %v5107, %v5891
      %v5893 = vand.u32 %v5892, 4294901760
      %5894 = vmatpush.msra.mxu0 %v5893
      %v5895 = vand.u32 %v5106, 4294901760
      %v5896 = vsub.f32 %v5106, %v5895
      %v5897 = vand.u32 %v5896, 4294901760
      %5898 = vmatpush.msra.mxu0 %v5897
      %v5899 = vand.u32 %v5105, 4294901760
      %v5900 = vsub.f32 %v5105, %v5899
      %v5901 = vand.u32 %v5900, 4294901760
      %5902 = vmatpush.msra.mxu0 %v5901
      %v5903 = vand.u32 %v5104, 4294901760
      %v5904 = vsub.f32 %v5104, %v5903
      %v5905 = vand.u32 %v5904, 4294901760
      %5906 = vmatpush.msra.mxu0 %v5905
      %v5907 = vand.u32 %v5103, 4294901760
      %v5908 = vsub.f32 %v5103, %v5907
      %v5909 = vand.u32 %v5908, 4294901760
      %5910 = vmatpush.msra.mxu0 %v5909
      %v5911 = vand.u32 %v5102, 4294901760
      %v5912 = vsub.f32 %v5102, %v5911
      %v5913 = vand.u32 %v5912, 4294901760
      %5914 = vmatpush.msra.mxu0 %v5913
      %v5915 = vand.u32 %v5101, 4294901760
      %v5916 = vsub.f32 %v5101, %v5915
      %v5917 = vand.u32 %v5916, 4294901760
      %5918 = vmatpush.msra.mxu0 %v5917
      %v5919 = vand.u32 %v5078, 4294901760
      %5920 = vmatmul.f32.gmra.mxu0 %v5919
      %v5921 = vpop.f32.mrf.mxu0
      %v5922 = vadd.f32 %v5835, %v5921
      %v5923 = vand.u32 %v5080, 4294901760
      %5924 = vmatmul.f32.gmra.mxu0 %v5923
      %v5925 = vpop.f32.mrf.mxu0
      %v5926 = vadd.f32 %v5841, %v5925
      %v5927 = vand.u32 %v5082, 4294901760
      %5928 = vmatmul.f32.gmra.mxu0 %v5927
      %v5929 = vpop.f32.mrf.mxu0
      %v5930 = vadd.f32 %v5847, %v5929
      %v5931 = vand.u32 %v5084, 4294901760
      %5932 = vmatmul.f32.gmra.mxu0 %v5931
      %v5933 = vpop.f32.mrf.mxu0
      %v5934 = vadd.f32 %v5853, %v5933
      %5935 = vdwg.mxu0
      %v5936 = vand.u32 %v5116, 4294901760
      %5937 = vmatpush.msra.mxu0 %v5936
      %v5938 = vand.u32 %v5115, 4294901760
      %5939 = vmatpush.msra.mxu0 %v5938
      %v5940 = vand.u32 %v5114, 4294901760
      %5941 = vmatpush.msra.mxu0 %v5940
      %v5942 = vand.u32 %v5113, 4294901760
      %5943 = vmatpush.msra.mxu0 %v5942
      %v5944 = vand.u32 %v5112, 4294901760
      %5945 = vmatpush.msra.mxu0 %v5944
      %v5946 = vand.u32 %v5111, 4294901760
      %5947 = vmatpush.msra.mxu0 %v5946
      %v5948 = vand.u32 %v5110, 4294901760
      %5949 = vmatpush.msra.mxu0 %v5948
      %v5950 = vand.u32 %v5109, 4294901760
      %5951 = vmatpush.msra.mxu0 %v5950
      %v5952 = vand.u32 %v5108, 4294901760
      %5953 = vmatpush.msra.mxu0 %v5952
      %v5954 = vand.u32 %v5107, 4294901760
      %5955 = vmatpush.msra.mxu0 %v5954
      %v5956 = vand.u32 %v5106, 4294901760
      %5957 = vmatpush.msra.mxu0 %v5956
      %v5958 = vand.u32 %v5105, 4294901760
      %5959 = vmatpush.msra.mxu0 %v5958
      %v5960 = vand.u32 %v5104, 4294901760
      %5961 = vmatpush.msra.mxu0 %v5960
      %v5962 = vand.u32 %v5103, 4294901760
      %5963 = vmatpush.msra.mxu0 %v5962
      %v5964 = vand.u32 %v5102, 4294901760
      %5965 = vmatpush.msra.mxu0 %v5964
      %v5966 = vand.u32 %v5101, 4294901760
      %5967 = vmatpush.msra.mxu0 %v5966
      %v5968 = vand.u32 %v5078, 4294901760
      %5969 = vmatmul.f32.gmra.mxu0 %v5968
      %v5970 = vpop.f32.mrf.mxu0
      %v5971 = vadd.f32 %v5922, %v5970
      %v5972 = vand.u32 %v5080, 4294901760
      %5973 = vmatmul.f32.gmra.mxu0 %v5972
      %v5974 = vpop.f32.mrf.mxu0
      %v5975 = vadd.f32 %v5926, %v5974
      %v5976 = vand.u32 %v5082, 4294901760
      %5977 = vmatmul.f32.gmra.mxu0 %v5976
      %v5978 = vpop.f32.mrf.mxu0
      %v5979 = vadd.f32 %v5930, %v5978
      %v5980 = vand.u32 %v5084, 4294901760
      %5981 = vmatmul.f32.gmra.mxu0 %v5980
      %v5982 = vpop.f32.mrf.mxu0
      %v5983 = vadd.f32 %v5934, %v5982
      %5984 = vdwg.mxu0
      %v5985 = vrsqrt.pop %v5971
      %v5986 = vmul.f32 %v5985, %v5971
      %v5987 = vmul.f32 %v5986, %v5985
      %v5988 = vmul.f32 0.5, %v5987
      %v5989 = vsub.f32 1.5, %v5988
      %v5990 = vmul.f32 %v5985, %v5989
      %v5991 = vmul.f32 %v5971, %v5990
      %vm5992 = vcmp.eq.f32.partialorder %v5971, inf
      %v5993 = vsel %vm5992, %v5971, %v5991
      %vm5994 = vcmp.eq.f32.partialorder %v5971, 0.0
      %v5995 = vand.u32 %v5971, 2147483648
      %v5996 = vsel %vm5994, %v5995, %v5993
      %v5997 = vrsqrt.pop %v5975
      %v5998 = vmul.f32 %v5997, %v5975
      %v5999 = vmul.f32 %v5998, %v5997
      %v6000 = vmul.f32 0.5, %v5999
      %v6001 = vsub.f32 1.5, %v6000
      %v6002 = vmul.f32 %v5997, %v6001
      %v6003 = vmul.f32 %v5975, %v6002
      %vm6004 = vcmp.eq.f32.partialorder %v5975, inf
      %v6005 = vsel %vm6004, %v5975, %v6003
      %vm6006 = vcmp.eq.f32.partialorder %v5975, 0.0
      %v6007 = vand.u32 %v5975, 2147483648
      %v6008 = vsel %vm6006, %v6007, %v6005
      %v6009 = vrsqrt.pop %v5979
      %v6010 = vmul.f32 %v6009, %v5979
      %v6011 = vmul.f32 %v6010, %v6009
      %v6012 = vmul.f32 0.5, %v6011
      %v6013 = vsub.f32 1.5, %v6012
      %v6014 = vmul.f32 %v6009, %v6013
      %v6015 = vmul.f32 %v5979, %v6014
      %vm6016 = vcmp.eq.f32.partialorder %v5979, inf
      %v6017 = vsel %vm6016, %v5979, %v6015
      %vm6018 = vcmp.eq.f32.partialorder %v5979, 0.0
      %v6019 = vand.u32 %v5979, 2147483648
      %v6020 = vsel %vm6018, %v6019, %v6017
      %v6021 = vrsqrt.pop %v5983
      %v6022 = vmul.f32 %v6021, %v5983
      %v6023 = vmul.f32 %v6022, %v6021
      %v6024 = vmul.f32 0.5, %v6023
      %v6025 = vsub.f32 1.5, %v6024
      %v6026 = vmul.f32 %v6021, %v6025
      %v6027 = vmul.f32 %v5983, %v6026
      %vm6028 = vcmp.eq.f32.partialorder %v5983, inf
      %v6029 = vsel %vm6028, %v5983, %v6027
      %vm6030 = vcmp.eq.f32.partialorder %v5983, 0.0
      %v6031 = vand.u32 %v5983, 2147483648
      %v6032 = vsel %vm6030, %v6031, %v6029
      %v6033 = vadd.f32 %v5971, 1.0
      %v6034 = vadd.f32 %v5975, 1.0
      %v6035 = vadd.f32 %v5979, 1.0
      %v6036 = vadd.f32 %v5983, 1.0
      %v6037 = vrcp.pop %v6033
      %v6038 = vmul.f32 %v6033, %v6037
      %v6039 = vsub.f32 1.0, %v6038
      %v6040 = vmul.f32 %v6037, %v6039
      %v6041 = vadd.f32 %v6037, %v6040
      %vm6042 = vweird.f32 %v6033
      %vm6043 = vweird.f32 %v6037
      %vm6044 = vmor %vm6042, %vm6043
      %v6045 = vsel %vm6044, %v6037, %v6041
      %v6046 = vand.u32 2147483647, %v6033
      %vm6047 = vcmp.eq.f32.partialorder %v6046, 8.507059e+37
      %v6048 = vand.u32 %v6033, 2147483648
      %v6049 = vor.u32 1.1754944e-38, %v6048
      %v6050 = vsel %vm6047, %v6049, %v6045
      %v6051 = vmul.f32 %v5996, %v6050
      %v6052 = vrcp.pop %v6034
      %v6053 = vmul.f32 %v6034, %v6052
      %v6054 = vsub.f32 1.0, %v6053
      %v6055 = vmul.f32 %v6052, %v6054
      %v6056 = vadd.f32 %v6052, %v6055
      %vm6057 = vweird.f32 %v6034
      %vm6058 = vweird.f32 %v6052
      %vm6059 = vmor %vm6057, %vm6058
      %v6060 = vsel %vm6059, %v6052, %v6056
      %v6061 = vand.u32 2147483647, %v6034
      %vm6062 = vcmp.eq.f32.partialorder %v6061, 8.507059e+37
      %v6063 = vand.u32 %v6034, 2147483648
      %v6064 = vor.u32 1.1754944e-38, %v6063
      %v6065 = vsel %vm6062, %v6064, %v6060
      %v6066 = vmul.f32 %v6008, %v6065
      %v6067 = vrcp.pop %v6035
      %v6068 = vmul.f32 %v6035, %v6067
      %v6069 = vsub.f32 1.0, %v6068
      %v6070 = vmul.f32 %v6067, %v6069
      %v6071 = vadd.f32 %v6067, %v6070
      %vm6072 = vweird.f32 %v6035
      %vm6073 = vweird.f32 %v6067
      %vm6074 = vmor %vm6072, %vm6073
      %v6075 = vsel %vm6074, %v6067, %v6071
      %v6076 = vand.u32 2147483647, %v6035
      %vm6077 = vcmp.eq.f32.partialorder %v6076, 8.507059e+37
      %v6078 = vand.u32 %v6035, 2147483648
      %v6079 = vor.u32 1.1754944e-38, %v6078
      %v6080 = vsel %vm6077, %v6079, %v6075
      %v6081 = vmul.f32 %v6020, %v6080
      %v6082 = vrcp.pop %v6036
      %v6083 = vmul.f32 %v6036, %v6082
      %v6084 = vsub.f32 1.0, %v6083
      %v6085 = vmul.f32 %v6082, %v6084
      %v6086 = vadd.f32 %v6082, %v6085
      %vm6087 = vweird.f32 %v6036
      %vm6088 = vweird.f32 %v6082
      %vm6089 = vmor %vm6087, %vm6088
      %v6090 = vsel %vm6089, %v6082, %v6086
      %v6091 = vand.u32 2147483647, %v6036
      %vm6092 = vcmp.eq.f32.partialorder %v6091, 8.507059e+37
      %v6093 = vand.u32 %v6036, 2147483648
      %v6094 = vor.u32 1.1754944e-38, %v6093
      %v6095 = vsel %vm6092, %v6094, %v6090
      %v6096 = vmul.f32 %v6032, %v6095
      %v6097 = vld [vmem:[%s4] sm:$0xff]
      %v6098 = vld [vmem:[%s4 + $0x8] sm:$0xff]
      %v6099 = vld [vmem:[%s4 + $0x10] sm:$0xff]
      %v6100 = vld [vmem:[%s4 + $0x18] sm:$0xff]
      %v6101 = vld [vmem:[%s4 + $0x20] sm:$0xff]
      %v6102 = vld [vmem:[%s4 + $0x28] sm:$0xff]
      %v6103 = vld [vmem:[%s4 + $0x30] sm:$0xff]
      %v6104 = vld [vmem:[%s4 + $0x38] sm:$0xff]
      %vm6105 = vcmask 261120
      %v6107 = vsel %vm6105, %v6051, 0
      %v6110 = vsel %vm6105, %v6066, 0
      %v6113 = vsel %vm6105, %v6081, 0
      %v6116 = vsel %vm6105, %v6096, 0
      %6118 = vmatpush.msra.mxu0 0.0
      %6119 = vmatpush.msra.mxu0 0.0
      %6120 = vmatpush.msra.mxu0 0.0
      %6121 = vmatpush.msra.mxu0 0.0
      %6122 = vmatpush.msra.mxu0 0.0
      %6123 = vmatpush.msra.mxu0 0.0
      %6124 = vmatpush.msra.mxu0 0.0
      %6125 = vmatpush.msra.mxu0 0.0
      %6126 = vmatpush.msra.mxu0 0.0
      %6127 = vmatpush.msra.mxu0 0.0
      %6128 = vmatpush.msra.mxu0 0.0
      %6129 = vmatpush.msra.mxu0 0.0
      %v6130 = vand.u32 %v6103, 4294901760
      %6131 = vmatpush.msra.mxu0 %v6130
      %v6132 = vand.u32 %v6101, 4294901760
      %6133 = vmatpush.msra.mxu0 %v6132
      %v6134 = vand.u32 %v6099, 4294901760
      %6135 = vmatpush.msra.mxu0 %v6134
      %v6136 = vand.u32 %v6097, 4294901760
      %6137 = vmatpush.msra.mxu0 %v6136
      %v6138 = vand.u32 %v6107, 4294901760
      %v6139 = vsub.f32 %v6107, %v6138
      %v6140 = vand.u32 %v6139, 4294901760
      %v6141 = vsub.f32 %v6139, %v6140
      %v6142 = vand.u32 %v6141, 4294901760
      %6143 = vmatmul.f32.gmra.mxu0 %v6142
      %v6144 = vpop.f32.mrf.mxu0
      %v6145 = vadd.f32 0.0, %v6144
      %v6146 = vand.u32 %v6110, 4294901760
      %v6147 = vsub.f32 %v6110, %v6146
      %v6148 = vand.u32 %v6147, 4294901760
      %v6149 = vsub.f32 %v6147, %v6148
      %v6150 = vand.u32 %v6149, 4294901760
      %6151 = vmatmul.f32.gmra.mxu0 %v6150
      %v6152 = vpop.f32.mrf.mxu0
      %v6153 = vadd.f32 0.0, %v6152
      %v6154 = vand.u32 %v6113, 4294901760
      %v6155 = vsub.f32 %v6113, %v6154
      %v6156 = vand.u32 %v6155, 4294901760
      %v6157 = vsub.f32 %v6155, %v6156
      %v6158 = vand.u32 %v6157, 4294901760
      %6159 = vmatmul.f32.gmra.mxu0 %v6158
      %v6160 = vpop.f32.mrf.mxu0
      %v6161 = vadd.f32 0.0, %v6160
      %v6162 = vand.u32 %v6116, 4294901760
      %v6163 = vsub.f32 %v6116, %v6162
      %v6164 = vand.u32 %v6163, 4294901760
      %v6165 = vsub.f32 %v6163, %v6164
      %v6166 = vand.u32 %v6165, 4294901760
      %6167 = vmatmul.f32.gmra.mxu0 %v6166
      %v6168 = vpop.f32.mrf.mxu0
      %v6169 = vadd.f32 0.0, %v6168
      %6170 = vdwg.mxu0
      %6171 = vmatpush.msra.mxu0 0.0
      %6172 = vmatpush.msra.mxu0 0.0
      %6173 = vmatpush.msra.mxu0 0.0
      %6174 = vmatpush.msra.mxu0 0.0
      %6175 = vmatpush.msra.mxu0 0.0
      %6176 = vmatpush.msra.mxu0 0.0
      %6177 = vmatpush.msra.mxu0 0.0
      %6178 = vmatpush.msra.mxu0 0.0
      %6179 = vmatpush.msra.mxu0 0.0
      %6180 = vmatpush.msra.mxu0 0.0
      %6181 = vmatpush.msra.mxu0 0.0
      %6182 = vmatpush.msra.mxu0 0.0
      %v6183 = vand.u32 %v6103, 4294901760
      %v6184 = vsub.f32 %v6103, %v6183
      %v6185 = vand.u32 %v6184, 4294901760
      %v6186 = vsub.f32 %v6184, %v6185
      %v6187 = vand.u32 %v6186, 4294901760
      %6188 = vmatpush.msra.mxu0 %v6187
      %v6189 = vand.u32 %v6101, 4294901760
      %v6190 = vsub.f32 %v6101, %v6189
      %v6191 = vand.u32 %v6190, 4294901760
      %v6192 = vsub.f32 %v6190, %v6191
      %v6193 = vand.u32 %v6192, 4294901760
      %6194 = vmatpush.msra.mxu0 %v6193
      %v6195 = vand.u32 %v6099, 4294901760
      %v6196 = vsub.f32 %v6099, %v6195
      %v6197 = vand.u32 %v6196, 4294901760
      %v6198 = vsub.f32 %v6196, %v6197
      %v6199 = vand.u32 %v6198, 4294901760
      %6200 = vmatpush.msra.mxu0 %v6199
      %v6201 = vand.u32 %v6097, 4294901760
      %v6202 = vsub.f32 %v6097, %v6201
      %v6203 = vand.u32 %v6202, 4294901760
      %v6204 = vsub.f32 %v6202, %v6203
      %v6205 = vand.u32 %v6204, 4294901760
      %6206 = vmatpush.msra.mxu0 %v6205
      %v6207 = vand.u32 %v6107, 4294901760
      %6208 = vmatmul.f32.gmra.mxu0 %v6207
      %v6209 = vpop.f32.mrf.mxu0
      %v6210 = vadd.f32 %v6145, %v6209
      %v6211 = vand.u32 %v6110, 4294901760
      %6212 = vmatmul.f32.gmra.mxu0 %v6211
      %v6213 = vpop.f32.mrf.mxu0
      %v6214 = vadd.f32 %v6153, %v6213
      %v6215 = vand.u32 %v6113, 4294901760
      %6216 = vmatmul.f32.gmra.mxu0 %v6215
      %v6217 = vpop.f32.mrf.mxu0
      %v6218 = vadd.f32 %v6161, %v6217
      %v6219 = vand.u32 %v6116, 4294901760
      %6220 = vmatmul.f32.gmra.mxu0 %v6219
      %v6221 = vpop.f32.mrf.mxu0
      %v6222 = vadd.f32 %v6169, %v6221
      %6223 = vdwg.mxu0
      %6224 = vmatpush.msra.mxu0 0.0
      %6225 = vmatpush.msra.mxu0 0.0
      %6226 = vmatpush.msra.mxu0 0.0
      %6227 = vmatpush.msra.mxu0 0.0
      %6228 = vmatpush.msra.mxu0 0.0
      %6229 = vmatpush.msra.mxu0 0.0
      %6230 = vmatpush.msra.mxu0 0.0
      %6231 = vmatpush.msra.mxu0 0.0
      %6232 = vmatpush.msra.mxu0 0.0
      %6233 = vmatpush.msra.mxu0 0.0
      %6234 = vmatpush.msra.mxu0 0.0
      %6235 = vmatpush.msra.mxu0 0.0
      %v6236 = vand.u32 %v6103, 4294901760
      %v6237 = vsub.f32 %v6103, %v6236
      %6238 = vmatpush.msra.mxu0 %v6237
      %v6239 = vand.u32 %v6101, 4294901760
      %v6240 = vsub.f32 %v6101, %v6239
      %6241 = vmatpush.msra.mxu0 %v6240
      %v6242 = vand.u32 %v6099, 4294901760
      %v6243 = vsub.f32 %v6099, %v6242
      %6244 = vmatpush.msra.mxu0 %v6243
      %v6245 = vand.u32 %v6097, 4294901760
      %v6246 = vsub.f32 %v6097, %v6245
      %6247 = vmatpush.msra.mxu0 %v6246
      %v6248 = vand.u32 %v6107, 4294901760
      %v6249 = vsub.f32 %v6107, %v6248
      %6250 = vmatmul.f32.gmra.mxu0 %v6249
      %v6251 = vpop.f32.mrf.mxu0
      %v6252 = vadd.f32 %v6210, %v6251
      %v6253 = vand.u32 %v6110, 4294901760
      %v6254 = vsub.f32 %v6110, %v6253
      %6255 = vmatmul.f32.gmra.mxu0 %v6254
      %v6256 = vpop.f32.mrf.mxu0
      %v6257 = vadd.f32 %v6214, %v6256
      %v6258 = vand.u32 %v6113, 4294901760
      %v6259 = vsub.f32 %v6113, %v6258
      %6260 = vmatmul.f32.gmra.mxu0 %v6259
      %v6261 = vpop.f32.mrf.mxu0
      %v6262 = vadd.f32 %v6218, %v6261
      %v6263 = vand.u32 %v6116, 4294901760
      %v6264 = vsub.f32 %v6116, %v6263
      %6265 = vmatmul.f32.gmra.mxu0 %v6264
      %v6266 = vpop.f32.mrf.mxu0
      %v6267 = vadd.f32 %v6222, %v6266
      %6268 = vdwg.mxu0
      %6269 = vmatpush.msra.mxu0 0.0
      %6270 = vmatpush.msra.mxu0 0.0
      %6271 = vmatpush.msra.mxu0 0.0
      %6272 = vmatpush.msra.mxu0 0.0
      %6273 = vmatpush.msra.mxu0 0.0
      %6274 = vmatpush.msra.mxu0 0.0
      %6275 = vmatpush.msra.mxu0 0.0
      %6276 = vmatpush.msra.mxu0 0.0
      %6277 = vmatpush.msra.mxu0 0.0
      %6278 = vmatpush.msra.mxu0 0.0
      %6279 = vmatpush.msra.mxu0 0.0
      %6280 = vmatpush.msra.mxu0 0.0
      %v6281 = vand.u32 %v6103, 4294901760
      %6282 = vmatpush.msra.mxu0 %v6281
      %v6283 = vand.u32 %v6101, 4294901760
      %6284 = vmatpush.msra.mxu0 %v6283
      %v6285 = vand.u32 %v6099, 4294901760
      %6286 = vmatpush.msra.mxu0 %v6285
      %v6287 = vand.u32 %v6097, 4294901760
      %6288 = vmatpush.msra.mxu0 %v6287
      %v6289 = vand.u32 %v6107, 4294901760
      %v6290 = vsub.f32 %v6107, %v6289
      %v6291 = vand.u32 %v6290, 4294901760
      %6292 = vmatmul.f32.gmra.mxu0 %v6291
      %v6293 = vpop.f32.mrf.mxu0
      %v6294 = vadd.f32 %v6252, %v6293
      %v6295 = vand.u32 %v6110, 4294901760
      %v6296 = vsub.f32 %v6110, %v6295
      %v6297 = vand.u32 %v6296, 4294901760
      %6298 = vmatmul.f32.gmra.mxu0 %v6297
      %v6299 = vpop.f32.mrf.mxu0
      %v6300 = vadd.f32 %v6257, %v6299
      %v6301 = vand.u32 %v6113, 4294901760
      %v6302 = vsub.f32 %v6113, %v6301
      %v6303 = vand.u32 %v6302, 4294901760
      %6304 = vmatmul.f32.gmra.mxu0 %v6303
      %v6305 = vpop.f32.mrf.mxu0
      %v6306 = vadd.f32 %v6262, %v6305
      %v6307 = vand.u32 %v6116, 4294901760
      %v6308 = vsub.f32 %v6116, %v6307
      %v6309 = vand.u32 %v6308, 4294901760
      %6310 = vmatmul.f32.gmra.mxu0 %v6309
      %v6311 = vpop.f32.mrf.mxu0
      %v6312 = vadd.f32 %v6267, %v6311
      %6313 = vdwg.mxu0
      %6314 = vmatpush.msra.mxu0 0.0
      %6315 = vmatpush.msra.mxu0 0.0
      %6316 = vmatpush.msra.mxu0 0.0
      %6317 = vmatpush.msra.mxu0 0.0
      %6318 = vmatpush.msra.mxu0 0.0
      %6319 = vmatpush.msra.mxu0 0.0
      %6320 = vmatpush.msra.mxu0 0.0
      %6321 = vmatpush.msra.mxu0 0.0
      %6322 = vmatpush.msra.mxu0 0.0
      %6323 = vmatpush.msra.mxu0 0.0
      %6324 = vmatpush.msra.mxu0 0.0
      %6325 = vmatpush.msra.mxu0 0.0
      %v6326 = vand.u32 %v6103, 4294901760
      %v6327 = vsub.f32 %v6103, %v6326
      %v6328 = vand.u32 %v6327, 4294901760
      %6329 = vmatpush.msra.mxu0 %v6328
      %v6330 = vand.u32 %v6101, 4294901760
      %v6331 = vsub.f32 %v6101, %v6330
      %v6332 = vand.u32 %v6331, 4294901760
      %6333 = vmatpush.msra.mxu0 %v6332
      %v6334 = vand.u32 %v6099, 4294901760
      %v6335 = vsub.f32 %v6099, %v6334
      %v6336 = vand.u32 %v6335, 4294901760
      %6337 = vmatpush.msra.mxu0 %v6336
      %v6338 = vand.u32 %v6097, 4294901760
      %v6339 = vsub.f32 %v6097, %v6338
      %v6340 = vand.u32 %v6339, 4294901760
      %6341 = vmatpush.msra.mxu0 %v6340
      %v6342 = vand.u32 %v6107, 4294901760
      %6343 = vmatmul.f32.gmra.mxu0 %v6342
      %v6344 = vpop.f32.mrf.mxu0
      %v6345 = vadd.f32 %v6294, %v6344
      %v6346 = vand.u32 %v6110, 4294901760
      %6347 = vmatmul.f32.gmra.mxu0 %v6346
      %v6348 = vpop.f32.mrf.mxu0
      %v6349 = vadd.f32 %v6300, %v6348
      %v6350 = vand.u32 %v6113, 4294901760
      %6351 = vmatmul.f32.gmra.mxu0 %v6350
      %v6352 = vpop.f32.mrf.mxu0
      %v6353 = vadd.f32 %v6306, %v6352
      %v6354 = vand.u32 %v6116, 4294901760
      %6355 = vmatmul.f32.gmra.mxu0 %v6354
      %v6356 = vpop.f32.mrf.mxu0
      %v6357 = vadd.f32 %v6312, %v6356
      %6358 = vdwg.mxu0
      %6359 = vmatpush.msra.mxu0 0.0
      %6360 = vmatpush.msra.mxu0 0.0
      %6361 = vmatpush.msra.mxu0 0.0
      %6362 = vmatpush.msra.mxu0 0.0
      %6363 = vmatpush.msra.mxu0 0.0
      %6364 = vmatpush.msra.mxu0 0.0
      %6365 = vmatpush.msra.mxu0 0.0
      %6366 = vmatpush.msra.mxu0 0.0
      %6367 = vmatpush.msra.mxu0 0.0
      %6368 = vmatpush.msra.mxu0 0.0
      %6369 = vmatpush.msra.mxu0 0.0
      %6370 = vmatpush.msra.mxu0 0.0
      %v6371 = vand.u32 %v6103, 4294901760
      %6372 = vmatpush.msra.mxu0 %v6371
      %v6373 = vand.u32 %v6101, 4294901760
      %6374 = vmatpush.msra.mxu0 %v6373
      %v6375 = vand.u32 %v6099, 4294901760
      %6376 = vmatpush.msra.mxu0 %v6375
      %v6377 = vand.u32 %v6097, 4294901760
      %6378 = vmatpush.msra.mxu0 %v6377
      %v6379 = vand.u32 %v6107, 4294901760
      %6380 = vmatmul.f32.gmra.mxu0 %v6379
      %v6381 = vpop.f32.mrf.mxu0
      %v6382 = vadd.f32 %v6345, %v6381
      %v6383 = vand.u32 %v6110, 4294901760
      %6384 = vmatmul.f32.gmra.mxu0 %v6383
      %v6385 = vpop.f32.mrf.mxu0
      %v6386 = vadd.f32 %v6349, %v6385
      %v6387 = vand.u32 %v6113, 4294901760
      %6388 = vmatmul.f32.gmra.mxu0 %v6387
      %v6389 = vpop.f32.mrf.mxu0
      %v6390 = vadd.f32 %v6353, %v6389
      %v6391 = vand.u32 %v6116, 4294901760
      %6392 = vmatmul.f32.gmra.mxu0 %v6391
      %v6393 = vpop.f32.mrf.mxu0
      %v6394 = vadd.f32 %v6357, %v6393
      %6395 = vdwg.mxu0
      %6396 = vmatpush.msra.mxu0 0.0
      %6397 = vmatpush.msra.mxu0 0.0
      %6398 = vmatpush.msra.mxu0 0.0
      %6399 = vmatpush.msra.mxu0 0.0
      %6400 = vmatpush.msra.mxu0 0.0
      %6401 = vmatpush.msra.mxu0 0.0
      %6402 = vmatpush.msra.mxu0 0.0
      %6403 = vmatpush.msra.mxu0 0.0
      %6404 = vmatpush.msra.mxu0 0.0
      %6405 = vmatpush.msra.mxu0 0.0
      %6406 = vmatpush.msra.mxu0 0.0
      %6407 = vmatpush.msra.mxu0 0.0
      %v6408 = vand.u32 %v6104, 4294901760
      %6409 = vmatpush.msra.mxu0 %v6408
      %v6410 = vand.u32 %v6102, 4294901760
      %6411 = vmatpush.msra.mxu0 %v6410
      %v6412 = vand.u32 %v6100, 4294901760
      %6413 = vmatpush.msra.mxu0 %v6412
      %v6414 = vand.u32 %v6098, 4294901760
      %6415 = vmatpush.msra.mxu0 %v6414
      %v6416 = vand.u32 %v6107, 4294901760
      %v6417 = vsub.f32 %v6107, %v6416
      %v6418 = vand.u32 %v6417, 4294901760
      %v6419 = vsub.f32 %v6417, %v6418
      %v6420 = vand.u32 %v6419, 4294901760
      %6421 = vmatmul.f32.gmra.mxu0 %v6420
      %v6422 = vpop.f32.mrf.mxu0
      %v6423 = vadd.f32 0.0, %v6422
      %v6424 = vand.u32 %v6110, 4294901760
      %v6425 = vsub.f32 %v6110, %v6424
      %v6426 = vand.u32 %v6425, 4294901760
      %v6427 = vsub.f32 %v6425, %v6426
      %v6428 = vand.u32 %v6427, 4294901760
      %6429 = vmatmul.f32.gmra.mxu0 %v6428
      %v6430 = vpop.f32.mrf.mxu0
      %v6431 = vadd.f32 0.0, %v6430
      %v6432 = vand.u32 %v6113, 4294901760
      %v6433 = vsub.f32 %v6113, %v6432
      %v6434 = vand.u32 %v6433, 4294901760
      %v6435 = vsub.f32 %v6433, %v6434
      %v6436 = vand.u32 %v6435, 4294901760
      %6437 = vmatmul.f32.gmra.mxu0 %v6436
      %v6438 = vpop.f32.mrf.mxu0
      %v6439 = vadd.f32 0.0, %v6438
      %v6440 = vand.u32 %v6116, 4294901760
      %v6441 = vsub.f32 %v6116, %v6440
      %v6442 = vand.u32 %v6441, 4294901760
      %v6443 = vsub.f32 %v6441, %v6442
      %v6444 = vand.u32 %v6443, 4294901760
      %6445 = vmatmul.f32.gmra.mxu0 %v6444
      %v6446 = vpop.f32.mrf.mxu0
      %v6447 = vadd.f32 0.0, %v6446
      %6448 = vdwg.mxu0
      %6449 = vmatpush.msra.mxu0 0.0
      %6450 = vmatpush.msra.mxu0 0.0
      %6451 = vmatpush.msra.mxu0 0.0
      %6452 = vmatpush.msra.mxu0 0.0
      %6453 = vmatpush.msra.mxu0 0.0
      %6454 = vmatpush.msra.mxu0 0.0
      %6455 = vmatpush.msra.mxu0 0.0
      %6456 = vmatpush.msra.mxu0 0.0
      %6457 = vmatpush.msra.mxu0 0.0
      %6458 = vmatpush.msra.mxu0 0.0
      %6459 = vmatpush.msra.mxu0 0.0
      %6460 = vmatpush.msra.mxu0 0.0
      %v6461 = vand.u32 %v6104, 4294901760
      %v6462 = vsub.f32 %v6104, %v6461
      %v6463 = vand.u32 %v6462, 4294901760
      %v6464 = vsub.f32 %v6462, %v6463
      %v6465 = vand.u32 %v6464, 4294901760
      %6466 = vmatpush.msra.mxu0 %v6465
      %v6467 = vand.u32 %v6102, 4294901760
      %v6468 = vsub.f32 %v6102, %v6467
      %v6469 = vand.u32 %v6468, 4294901760
      %v6470 = vsub.f32 %v6468, %v6469
      %v6471 = vand.u32 %v6470, 4294901760
      %6472 = vmatpush.msra.mxu0 %v6471
      %v6473 = vand.u32 %v6100, 4294901760
      %v6474 = vsub.f32 %v6100, %v6473
      %v6475 = vand.u32 %v6474, 4294901760
      %v6476 = vsub.f32 %v6474, %v6475
      %v6477 = vand.u32 %v6476, 4294901760
      %6478 = vmatpush.msra.mxu0 %v6477
      %v6479 = vand.u32 %v6098, 4294901760
      %v6480 = vsub.f32 %v6098, %v6479
      %v6481 = vand.u32 %v6480, 4294901760
      %v6482 = vsub.f32 %v6480, %v6481
      %v6483 = vand.u32 %v6482, 4294901760
      %6484 = vmatpush.msra.mxu0 %v6483
      %v6485 = vand.u32 %v6107, 4294901760
      %6486 = vmatmul.f32.gmra.mxu0 %v6485
      %v6487 = vpop.f32.mrf.mxu0
      %v6488 = vadd.f32 %v6423, %v6487
      %v6489 = vand.u32 %v6110, 4294901760
      %6490 = vmatmul.f32.gmra.mxu0 %v6489
      %v6491 = vpop.f32.mrf.mxu0
      %v6492 = vadd.f32 %v6431, %v6491
      %v6493 = vand.u32 %v6113, 4294901760
      %6494 = vmatmul.f32.gmra.mxu0 %v6493
      %v6495 = vpop.f32.mrf.mxu0
      %v6496 = vadd.f32 %v6439, %v6495
      %v6497 = vand.u32 %v6116, 4294901760
      %6498 = vmatmul.f32.gmra.mxu0 %v6497
      %v6499 = vpop.f32.mrf.mxu0
      %v6500 = vadd.f32 %v6447, %v6499
      %6501 = vdwg.mxu0
      %6502 = vmatpush.msra.mxu0 0.0
      %6503 = vmatpush.msra.mxu0 0.0
      %6504 = vmatpush.msra.mxu0 0.0
      %6505 = vmatpush.msra.mxu0 0.0
      %6506 = vmatpush.msra.mxu0 0.0
      %6507 = vmatpush.msra.mxu0 0.0
      %6508 = vmatpush.msra.mxu0 0.0
      %6509 = vmatpush.msra.mxu0 0.0
      %6510 = vmatpush.msra.mxu0 0.0
      %6511 = vmatpush.msra.mxu0 0.0
      %6512 = vmatpush.msra.mxu0 0.0
      %6513 = vmatpush.msra.mxu0 0.0
      %v6514 = vand.u32 %v6104, 4294901760
      %v6515 = vsub.f32 %v6104, %v6514
      %6516 = vmatpush.msra.mxu0 %v6515
      %v6517 = vand.u32 %v6102, 4294901760
      %v6518 = vsub.f32 %v6102, %v6517
      %6519 = vmatpush.msra.mxu0 %v6518
      %v6520 = vand.u32 %v6100, 4294901760
      %v6521 = vsub.f32 %v6100, %v6520
      %6522 = vmatpush.msra.mxu0 %v6521
      %v6523 = vand.u32 %v6098, 4294901760
      %v6524 = vsub.f32 %v6098, %v6523
      %6525 = vmatpush.msra.mxu0 %v6524
      %v6526 = vand.u32 %v6107, 4294901760
      %v6527 = vsub.f32 %v6107, %v6526
      %6528 = vmatmul.f32.gmra.mxu0 %v6527
      %v6529 = vpop.f32.mrf.mxu0
      %v6530 = vadd.f32 %v6488, %v6529
      %v6531 = vand.u32 %v6110, 4294901760
      %v6532 = vsub.f32 %v6110, %v6531
      %6533 = vmatmul.f32.gmra.mxu0 %v6532
      %v6534 = vpop.f32.mrf.mxu0
      %v6535 = vadd.f32 %v6492, %v6534
      %v6536 = vand.u32 %v6113, 4294901760
      %v6537 = vsub.f32 %v6113, %v6536
      %6538 = vmatmul.f32.gmra.mxu0 %v6537
      %v6539 = vpop.f32.mrf.mxu0
      %v6540 = vadd.f32 %v6496, %v6539
      %v6541 = vand.u32 %v6116, 4294901760
      %v6542 = vsub.f32 %v6116, %v6541
      %6543 = vmatmul.f32.gmra.mxu0 %v6542
      %v6544 = vpop.f32.mrf.mxu0
      %v6545 = vadd.f32 %v6500, %v6544
      %6546 = vdwg.mxu0
      %6547 = vmatpush.msra.mxu0 0.0
      %6548 = vmatpush.msra.mxu0 0.0
      %6549 = vmatpush.msra.mxu0 0.0
      %6550 = vmatpush.msra.mxu0 0.0
      %6551 = vmatpush.msra.mxu0 0.0
      %6552 = vmatpush.msra.mxu0 0.0
      %6553 = vmatpush.msra.mxu0 0.0
      %6554 = vmatpush.msra.mxu0 0.0
      %6555 = vmatpush.msra.mxu0 0.0
      %6556 = vmatpush.msra.mxu0 0.0
      %6557 = vmatpush.msra.mxu0 0.0
      %6558 = vmatpush.msra.mxu0 0.0
      %v6559 = vand.u32 %v6104, 4294901760
      %6560 = vmatpush.msra.mxu0 %v6559
      %v6561 = vand.u32 %v6102, 4294901760
      %6562 = vmatpush.msra.mxu0 %v6561
      %v6563 = vand.u32 %v6100, 4294901760
      %6564 = vmatpush.msra.mxu0 %v6563
      %v6565 = vand.u32 %v6098, 4294901760
      %6566 = vmatpush.msra.mxu0 %v6565
      %v6567 = vand.u32 %v6107, 4294901760
      %v6568 = vsub.f32 %v6107, %v6567
      %v6569 = vand.u32 %v6568, 4294901760
      %6570 = vmatmul.f32.gmra.mxu0 %v6569
      %v6571 = vpop.f32.mrf.mxu0
      %v6572 = vadd.f32 %v6530, %v6571
      %v6573 = vand.u32 %v6110, 4294901760
      %v6574 = vsub.f32 %v6110, %v6573
      %v6575 = vand.u32 %v6574, 4294901760
      %6576 = vmatmul.f32.gmra.mxu0 %v6575
      %v6577 = vpop.f32.mrf.mxu0
      %v6578 = vadd.f32 %v6535, %v6577
      %v6579 = vand.u32 %v6113, 4294901760
      %v6580 = vsub.f32 %v6113, %v6579
      %v6581 = vand.u32 %v6580, 4294901760
      %6582 = vmatmul.f32.gmra.mxu0 %v6581
      %v6583 = vpop.f32.mrf.mxu0
      %v6584 = vadd.f32 %v6540, %v6583
      %v6585 = vand.u32 %v6116, 4294901760
      %v6586 = vsub.f32 %v6116, %v6585
      %v6587 = vand.u32 %v6586, 4294901760
      %6588 = vmatmul.f32.gmra.mxu0 %v6587
      %v6589 = vpop.f32.mrf.mxu0
      %v6590 = vadd.f32 %v6545, %v6589
      %6591 = vdwg.mxu0
      %6592 = vmatpush.msra.mxu0 0.0
      %6593 = vmatpush.msra.mxu0 0.0
      %6594 = vmatpush.msra.mxu0 0.0
      %6595 = vmatpush.msra.mxu0 0.0
      %6596 = vmatpush.msra.mxu0 0.0
      %6597 = vmatpush.msra.mxu0 0.0
      %6598 = vmatpush.msra.mxu0 0.0
      %6599 = vmatpush.msra.mxu0 0.0
      %6600 = vmatpush.msra.mxu0 0.0
      %6601 = vmatpush.msra.mxu0 0.0
      %6602 = vmatpush.msra.mxu0 0.0
      %6603 = vmatpush.msra.mxu0 0.0
      %v6604 = vand.u32 %v6104, 4294901760
      %v6605 = vsub.f32 %v6104, %v6604
      %v6606 = vand.u32 %v6605, 4294901760
      %6607 = vmatpush.msra.mxu0 %v6606
      %v6608 = vand.u32 %v6102, 4294901760
      %v6609 = vsub.f32 %v6102, %v6608
      %v6610 = vand.u32 %v6609, 4294901760
      %6611 = vmatpush.msra.mxu0 %v6610
      %v6612 = vand.u32 %v6100, 4294901760
      %v6613 = vsub.f32 %v6100, %v6612
      %v6614 = vand.u32 %v6613, 4294901760
      %6615 = vmatpush.msra.mxu0 %v6614
      %v6616 = vand.u32 %v6098, 4294901760
      %v6617 = vsub.f32 %v6098, %v6616
      %v6618 = vand.u32 %v6617, 4294901760
      %6619 = vmatpush.msra.mxu0 %v6618
      %v6620 = vand.u32 %v6107, 4294901760
      %6621 = vmatmul.f32.gmra.mxu0 %v6620
      %v6622 = vpop.f32.mrf.mxu0
      %v6623 = vadd.f32 %v6572, %v6622
      %v6624 = vand.u32 %v6110, 4294901760
      %6625 = vmatmul.f32.gmra.mxu0 %v6624
      %v6626 = vpop.f32.mrf.mxu0
      %v6627 = vadd.f32 %v6578, %v6626
      %v6628 = vand.u32 %v6113, 4294901760
      %6629 = vmatmul.f32.gmra.mxu0 %v6628
      %v6630 = vpop.f32.mrf.mxu0
      %v6631 = vadd.f32 %v6584, %v6630
      %v6632 = vand.u32 %v6116, 4294901760
      %6633 = vmatmul.f32.gmra.mxu0 %v6632
      %v6634 = vpop.f32.mrf.mxu0
      %v6635 = vadd.f32 %v6590, %v6634
      %6636 = vdwg.mxu0
      %6637 = vmatpush.msra.mxu0 0.0
      %6638 = vmatpush.msra.mxu0 0.0
      %6639 = vmatpush.msra.mxu0 0.0
      %6640 = vmatpush.msra.mxu0 0.0
      %6641 = vmatpush.msra.mxu0 0.0
      %6642 = vmatpush.msra.mxu0 0.0
      %6643 = vmatpush.msra.mxu0 0.0
      %6644 = vmatpush.msra.mxu0 0.0
      %6645 = vmatpush.msra.mxu0 0.0
      %6646 = vmatpush.msra.mxu0 0.0
      %6647 = vmatpush.msra.mxu0 0.0
      %6648 = vmatpush.msra.mxu0 0.0
      %v6649 = vand.u32 %v6104, 4294901760
      %6650 = vmatpush.msra.mxu0 %v6649
      %v6651 = vand.u32 %v6102, 4294901760
      %6652 = vmatpush.msra.mxu0 %v6651
      %v6653 = vand.u32 %v6100, 4294901760
      %6654 = vmatpush.msra.mxu0 %v6653
      %v6655 = vand.u32 %v6098, 4294901760
      %6656 = vmatpush.msra.mxu0 %v6655
      %v6657 = vand.u32 %v6107, 4294901760
      %6658 = vmatmul.f32.gmra.mxu0 %v6657
      %v6659 = vpop.f32.mrf.mxu0
      %v6660 = vadd.f32 %v6623, %v6659
      %v6661 = vand.u32 %v6110, 4294901760
      %6662 = vmatmul.f32.gmra.mxu0 %v6661
      %v6663 = vpop.f32.mrf.mxu0
      %v6664 = vadd.f32 %v6627, %v6663
      %v6665 = vand.u32 %v6113, 4294901760
      %6666 = vmatmul.f32.gmra.mxu0 %v6665
      %v6667 = vpop.f32.mrf.mxu0
      %v6668 = vadd.f32 %v6631, %v6667
      %v6669 = vand.u32 %v6116, 4294901760
      %6670 = vmatmul.f32.gmra.mxu0 %v6669
      %v6671 = vpop.f32.mrf.mxu0
      %v6672 = vadd.f32 %v6635, %v6671
      %6673 = vdwg.mxu0
      %v6674 = vmul.f32 %v5069, %v6382
      %v6675 = vmul.f32 %v5070, %v6660
      %v6676 = vmul.f32 %v5071, %v6386
      %v6677 = vmul.f32 %v5072, %v6664
      %v6678 = vmul.f32 %v5073, %v6390
      %v6679 = vmul.f32 %v5074, %v6668
      %v6680 = vmul.f32 %v5075, %v6394
      %v6681 = vmul.f32 %v5076, %v6672
      %6682 = vst [vmem:[%s224] sm:$0xff] %v6674
      %6683 = vst [vmem:[%s224 + $0x8] sm:$0xff] %v6675
      %6684 = vst [vmem:[%s224 + $0x10] sm:$0xff] %v6676
      %6685 = vst [vmem:[%s224 + $0x18] sm:$0xff] %v6677
      %6686 = vst [vmem:[%s224 + $0x20] sm:$0xff] %v6678
      %6687 = vst [vmem:[%s224 + $0x28] sm:$0xff] %v6679
      %6688 = vst [vmem:[%s224 + $0x30] sm:$0xff] %v6680
      %6689 = vst [vmem:[%s224 + $0x38] sm:$0xff] %v6681
      %p6690 = scmp.lt.s32.totalorder %s16, 1
      %s6691 = scalar_select %p6690, %s16, 1
      %s6692 = smul.addr %s6691, 8
      %s6693 = smul.addr %s6692, 8
      %s6694 = scalar_lea.vmem %s5, %s6693
      // Predicated region
      $region41: #{primary_cap_forward.1} parent=39 // pred_check
        %p6695 = pneg %p144
      $region42: #{primary_cap_forward.1} parent=39 // pred_check_branch
        %6697 = sbr.rel (%p6695) target = $region44
      $region43: #{primary_cap_forward.1} parent=39 // pred_region
        _
      $region44: #{primary_cap_forward.1} parent=39 // pred_fallthru
        _
    $region40: #{primary_cap_forward.1} parent=5 // pred_fallthru
      _
    %p6698 = scmp.le.s32.totalorder 2, %s11
    // Predicated region
    $region45: #{primary_cap_forward.1} parent=5 // pred_check
      %p6699 = pneg %p6698
    $region46: #{primary_cap_forward.1} parent=5 // pred_check_branch
      %6701 = sbr.rel (%p6699) target = $region48
    $region47: #{primary_cap_forward.1} parent=5 // pred_region
      %s6702 = ssub.s32 %s11, 2
      // Predicated region
      $region49: #{primary_cap_forward.1} parent=47 // pred_check
        %p6703 = pneg %p150
      $region50: #{primary_cap_forward.1} parent=47 // pred_check_branch
        %6705 = sbr.rel (%p6703) target = $region52
      $region51: #{primary_cap_forward.1} parent=47 // pred_region
        %p6706 = scmp.lt.s32.totalorder %s17, 1
        %s6707 = scalar_select %p6706, %s17, 1
        %s6708 = smul.addr %s6707, 8
        %s6709 = smul.addr %s6708, 8
        %s6710 = scalar_lea.vmem %s5, %s6709
      $region52: #{primary_cap_forward.1} parent=47 // pred_fallthru
        _
    $region48: #{primary_cap_forward.1} parent=5 // pred_fallthru
      _
  $region6: #{primary_cap_forward.1} parent=0 // loop_footer
    %s15 = sadd.s32 1, %s11
  $region7: #{primary_cap_forward.1} parent=0 // loop_footer_branch
    %10 = sbr.rel target = $region3
  $region8: #{primary_cap_forward.1} parent=0 // loop_exit
    _

</llo_original>
